<compile_context>
chip_gen: v7x
topology: tpu7x:2x2x1
jax: 0.10.0
libtpu: 0.0.40
codegen_flags: <defaults>
</compile_context>

<pallas_src>
import jax
import jax.numpy as jnp
from jax.experimental import pallas as pl
from jax.experimental.pallas import tpu as pltpu


# ---------------------------------------------------------------------------
# Module configuration (matches the PyTorch ctor args / spec shapes)
# ---------------------------------------------------------------------------
B, T = 2, 8
IN_CHANNELS = 4
OUT_CHANNELS = [8, 16]
KERNEL_SIZES = [3, 3]
STRIDES = [2, 2]
PADDING = [1, 1]
IMG_HW = (16, 16)
LSTM_HIDDEN = 32

N = B * T                      # flattened (t, b) frames; n = t*B + b (time-major)
C1, C2 = OUT_CHANNELS          # 8, 16
OH1 = OW1 = 8                  # conv1 output spatial: 16 -> 8  (k=3, s=2, p=1)
OH2 = OW2 = 4                  # conv2 output spatial: 8 -> 4
K1 = 9 * IN_CHANNELS           # conv1 im2col contraction (36)
K1P = 40                       # ... zero-padded to a multiple of 8 sublanes
S2 = OH2 * OW2                 # spatial positions after conv2 (16)
FE_OUT = C2 * S2               # flattened conv features per frame (256)
HID = LSTM_HIDDEN
H4 = 4 * HID                   # stacked LSTM gate width (128)


# ---------------------------------------------------------------------------
# The single fused kernel
# ---------------------------------------------------------------------------
def _fused_kernel(p1_ref, w1_ref, b1_ref, w2_ref, b2_ref,
                  wih_ref, bl_ref, whh_ref, out_ref, y1_ref):
    # ---- conv1: one GEMM over the host-prepared im2col patches -------------
    h1 = jnp.dot(p1_ref[...], w1_ref[...], preferred_element_type=jnp.float32)
    h1 = jnp.maximum(h1 + b1_ref[...], 0.0)                      # (1024, C1)

    # Rows are ordered (plane=hp*2+wp, a, b, n); scatter into the zero-padded
    # scratch so conv2's patch extraction below is static slicing only.
    # y1_ref[plane, a+1, b+1, n, c1] holds conv1 output at spatial
    # (h1=2a+hp, w1=2b+wp); index 0 along a/b axes stays zero (= padding).
    y1_ref[...] = jnp.zeros_like(y1_ref)
    y1_ref[:, 1:1 + OH2, 1:1 + OW2, :, :] = h1.reshape(4, OH2, OW2, N, C1)

    # ---- conv2: 9 accumulated GEMMs on statically sliced patch blocks ------
    acc2 = jnp.zeros((S2 * N, C2), jnp.float32)
    for kh in range(3):
        hp, ia0 = (1, 0) if kh == 0 else (kh - 1, 1)
        for kw in range(3):
            wp, ib0 = (1, 0) if kw == 0 else (kw - 1, 1)
            lhs = y1_ref[hp * 2 + wp, ia0:ia0 + OH2, ib0:ib0 + OW2, :, :]
            lhs = lhs.reshape(S2 * N, C1)                 # rows (oh2, ow2, n)
            acc2 = acc2 + jnp.dot(lhs, w2_ref[kh * 3 + kw],
                                  preferred_element_type=jnp.float32)
    fe = jnp.maximum(acc2 + b2_ref[...], 0.0)             # (S2*N, C2)
    fe = fe.reshape(S2, N, C2)

    # ---- LSTM input projection (NCHW flatten folded into wih column order) -
    gx = jnp.zeros((N, H4), jnp.float32)
    for s in range(S2):
        gx = gx + jnp.dot(fe[s], wih_ref[s],
                          preferred_element_type=jnp.float32)
    gx = gx + bl_ref[...]                                  # (N, 4H), rows (t, b)

    # ---- LSTM recurrence: fully unrolled, h/c carried in vregs -------------
    whh = whh_ref[...]                                     # (H, 4H)
    h = jnp.zeros((B, HID), jnp.float32)
    c = jnp.zeros((B, HID), jnp.float32)
    for t in range(T):
        g = gx[t * B:(t + 1) * B, :] + jnp.dot(
            h, whh, preferred_element_type=jnp.float32)    # (B, 4H)
        i_g = jax.nn.sigmoid(g[:, 0:HID])
        f_g = jax.nn.sigmoid(g[:, HID:2 * HID])
        g_g = jnp.tanh(g[:, 2 * HID:3 * HID])
        o_g = jax.nn.sigmoid(g[:, 3 * HID:4 * HID])
        c = f_g * c + i_g * g_g
        h = o_g * jnp.tanh(c)
        out_ref[:, t, :] = h                               # (B, T, H) directly


# ---------------------------------------------------------------------------
# Host-side glue (single tiny XLA fusion): conv1 im2col in kernel row order
# ---------------------------------------------------------------------------
def _build_conv1_patches(obs):
    """(B,T,C,16,16) -> (1024, K1P) patches; rows ordered (hp, wp, a, b, n)
    with n = t*B + b (time-major), cols ordered (kh, kw, c)."""
    Bb, Tt, C, Hi, Wi = obs.shape
    x = jnp.transpose(obs, (1, 0, 2, 3, 4)).reshape(Bb * Tt, C, Hi, Wi)
    xp = jnp.pad(x, ((0, 0), (0, 0), (1, 1), (1, 1)))
    cols = [xp[:, :, kh:kh + Hi:2, kw:kw + Wi:2]            # (N, C, 8, 8)
            for kh in range(3) for kw in range(3)]
    p = jnp.stack(cols, axis=0)                             # (9, N, C, 8, 8)
    p = p.reshape(9, Bb * Tt, C, OH2, 2, OW2, 2)            # oh1 = 2a + hp
    p = jnp.transpose(p, (4, 6, 3, 5, 1, 0, 2))             # (hp,wp,a,b,n,kpos,c)
    p = p.reshape(4 * OH2 * OW2 * Bb * Tt, 9 * C)
    return jnp.pad(p, ((0, 0), (0, K1P - 9 * C)))


def prepare_kernel_params(params):
    """One-time (init) weight-side transforms: conv weight flattening, the
    NCHW-flatten permutation of W_ih, zero-padding of the conv1 contraction."""
    (w1, b1), (w2, b2) = params["convs"]
    lp = params["lstm"]
    w1_2d = jnp.transpose(w1, (2, 3, 1, 0)).reshape(9 * IN_CHANNELS, C1)
    w1_2d = jnp.pad(w1_2d, ((0, K1P - K1), (0, 0)))          # (K1P, C1)
    w2_k = jnp.transpose(w2, (2, 3, 1, 0)).reshape(9, C1, C2)
    wih_s = jnp.transpose(lp["w_ih"].reshape(H4, C2, S2), (2, 1, 0))  # (s,c2,4H)
    return dict(
        w1=w1_2d.astype(jnp.float32),
        b1=b1.reshape(1, C1).astype(jnp.float32),
        w2=w2_k.astype(jnp.float32),
        b2=b2.reshape(1, C2).astype(jnp.float32),
        wih=wih_s.astype(jnp.float32),
        bl=(lp["b_ih"] + lp["b_hh"]).reshape(1, H4).astype(jnp.float32),
        whh=jnp.transpose(lp["w_hh"]).astype(jnp.float32),   # (H, 4H)
    )


@jax.jit
def feature_extractor_forward(kparams, obs):
    """obs: (B, T, C, 16, 16) f32 -> (B, T, LSTM_HIDDEN) f32."""
    patches = _build_conv1_patches(obs)
    vmem = pl.BlockSpec(memory_space=pltpu.MemorySpace.VMEM)
    return pl.pallas_call(
        _fused_kernel,
        out_shape=jax.ShapeDtypeStruct((B, T, HID), jnp.float32),
        in_specs=[vmem] * 8,
        out_specs=vmem,
        scratch_shapes=[pltpu.VMEM((4, OH2 + 1, OW2 + 1, N, C1), jnp.float32)],
    )(patches, kparams["w1"], kparams["b1"], kparams["w2"], kparams["b2"],
      kparams["wih"], kparams["bl"], kparams["whh"])


# ---------------------------------------------------------------------------
# Deterministic params (PyTorch layout) + pure-JAX reference for sanity check
# ---------------------------------------------------------------------------
def init_params(key):
    params = {"convs": [], "lstm": None}
    channels = [IN_CHANNELS] + OUT_CHANNELS
    for i, k in enumerate(KERNEL_SIZES):
        key, k1, k2 = jax.random.split(key, 3)
        w = 0.1 * jax.random.normal(
            k1, (channels[i + 1], channels[i], k, k), jnp.float32)
        b = 0.1 * jax.random.normal(k2, (channels[i + 1],), jnp.float32)
        params["convs"].append((w, b))
    key, k1, k2, k3, k4 = jax.random.split(key, 5)
    params["lstm"] = dict(
        w_ih=0.1 * jax.random.normal(k1, (H4, FE_OUT), jnp.float32),
        w_hh=0.1 * jax.random.normal(k2, (H4, HID), jnp.float32),
        b_ih=0.1 * jax.random.normal(k3, (H4,), jnp.float32),
        b_hh=0.1 * jax.random.normal(k4, (H4,), jnp.float32),
    )
    return params, key


def reference_forward(params, obs):
    """Pure-JAX reference with PyTorch semantics (zero initial hidden state)."""
    Bb, Tt = obs.shape[:2]
    x = obs.reshape(Bb * Tt, *obs.shape[2:])
    for (w, b), s, p in zip(params["convs"], STRIDES, PADDING):
        x = jax.lax.conv_general_dilated(
            x, w, window_strides=(s, s), padding=[(p, p), (p, p)],
            dimension_numbers=("NCHW", "OIHW", "NCHW"),
            precision=jax.lax.Precision.HIGHEST)
        x = jnp.maximum(x + b.reshape(1, -1, 1, 1), 0.0)
    fe = x.reshape(Bb, Tt, -1)
    lp = params["lstm"]
    h = jnp.zeros((Bb, HID), jnp.float32)
    c = jnp.zeros((Bb, HID), jnp.float32)
    outs = []
    for t in range(Tt):
        g = (fe[:, t, :] @ lp["w_ih"].T + h @ lp["w_hh"].T
             + lp["b_ih"] + lp["b_hh"])
        i_g = jax.nn.sigmoid(g[:, 0:HID])
        f_g = jax.nn.sigmoid(g[:, HID:2 * HID])
        g_g = jnp.tanh(g[:, 2 * HID:3 * HID])
        o_g = jax.nn.sigmoid(g[:, 3 * HID:4 * HID])
        c = f_g * c + i_g * g_g
        h = o_g * jnp.tanh(c)
        outs.append(h)
    return jnp.stack(outs, axis=1)


if __name__ == "__main__":
    key = jax.random.PRNGKey(0)
    params, key = init_params(key)
    kparams = prepare_kernel_params(params)

    key, kobs = jax.random.split(key)
    obs = jax.random.normal(kobs, (B, T, IN_CHANNELS, *IMG_HW), jnp.float32)

    out = feature_extractor_forward(kparams, obs)
    out = jax.block_until_ready(out)
    assert out.shape == (B, T, HID), out.shape
    assert out.dtype == jnp.float32

    with jax.default_matmul_precision("highest"):
        ref = reference_forward(params, obs)
    err = float(jnp.max(jnp.abs(out - ref)))
    assert err < 5e-2, f"kernel/reference mismatch: max abs err {err}"
    print("KERNEL_OK")
</pallas_src>

<mosaic_0001>
module attributes {stable_mosaic.version = 11 : i64} {
  func.func @_fused_kernel(%arg0: memref<1024x40xf32, #tpu.memory_space<vmem>>, %arg1: memref<40x8xf32, #tpu.memory_space<vmem>>, %arg2: memref<1x8xf32, #tpu.memory_space<vmem>>, %arg3: memref<9x8x16xf32, #tpu.memory_space<vmem>>, %arg4: memref<1x16xf32, #tpu.memory_space<vmem>>, %arg5: memref<16x16x128xf32, #tpu.memory_space<vmem>>, %arg6: memref<1x128xf32, #tpu.memory_space<vmem>>, %arg7: memref<32x128xf32, #tpu.memory_space<vmem>>, %arg8: memref<2x8x32xf32, #tpu.memory_space<vmem>>, %arg9: memref<4x5x5x16x8xf32, #tpu.memory_space<vmem>>) attributes {dimension_semantics = [], scalar_prefetch = 0 : i64, scratch_operands = 1 : i64, tpu.core_type = #tpu.core_type<tc>} {
    %c0 = arith.constant 0 : index
    %c0_0 = arith.constant 0 : index
    %0 = vector.load %arg0[%c0, %c0_0] : memref<1024x40xf32, #tpu.memory_space<vmem>>, vector<1024x40xf32>
    %c0_1 = arith.constant 0 : index
    %c0_2 = arith.constant 0 : index
    %1 = vector.load %arg1[%c0_1, %c0_2] : memref<40x8xf32, #tpu.memory_space<vmem>>, vector<40x8xf32>
    %cst = arith.constant dense<0.000000e+00> : vector<1024x8xf32>
    %2 = tpu.matmul %0, %1, %cst {dimension_numbers = #tpu.dot_dimension_numbers<[1], [0], [0], [1], [0, 0, 1, 1], [], []>} : vector<1024x40xf32>, vector<40x8xf32>, vector<1024x8xf32> -> vector<1024x8xf32>
    %c0_3 = arith.constant 0 : index
    %c0_4 = arith.constant 0 : index
    %3 = vector.load %arg2[%c0_3, %c0_4] : memref<1x8xf32, #tpu.memory_space<vmem>>, vector<1x8xf32>
    %4 = vector.broadcast %3 : vector<1x8xf32> to vector<1024x8xf32>
    %5 = arith.addf %2, %4 : vector<1024x8xf32>
    %cst_5 = arith.constant 0.000000e+00 : f32
    %6 = vector.broadcast %cst_5 : f32 to vector<1024x8xf32>
    %7 = arith.maximumf %5, %6 : vector<1024x8xf32>
    %cst_6 = arith.constant 0.000000e+00 : f32
    %8 = vector.broadcast %cst_6 : f32 to vector<4x5x5x16x8xf32>
    %c0_7 = arith.constant 0 : index
    %c0_8 = arith.constant 0 : index
    %c0_9 = arith.constant 0 : index
    %c0_10 = arith.constant 0 : index
    %c0_11 = arith.constant 0 : index
    %9 = vector.load %arg9[%c0_7, %c0_8, %c0_9, %c0_10, %c0_11] : memref<4x5x5x16x8xf32, #tpu.memory_space<vmem>>, vector<4x5x5x16x8xf32>
    tpu.vector_store %arg9[%c0_7, %c0_8, %c0_9, %c0_10, %c0_11], %8 {strides = array<i32>} : memref<4x5x5x16x8xf32, #tpu.memory_space<vmem>>, vector<4x5x5x16x8xf32>,
    %10 = vector.shape_cast %7 : vector<1024x8xf32> to vector<4x4x4x16x8xf32>
    %c0_12 = arith.constant 0 : index
    %c1 = arith.constant 1 : index
    %c1_13 = arith.constant 1 : index
    %c0_14 = arith.constant 0 : index
    %c0_15 = arith.constant 0 : index
    %11 = vector.load %arg9[%c0_12, %c1, %c1_13, %c0_14, %c0_15] : memref<4x5x5x16x8xf32, #tpu.memory_space<vmem>>, vector<4x4x4x16x8xf32>
    tpu.vector_store %arg9[%c0_12, %c1, %c1_13, %c0_14, %c0_15], %10 {strides = array<i32>} : memref<4x5x5x16x8xf32, #tpu.memory_space<vmem>>, vector<4x4x4x16x8xf32>,
    %cst_16 = arith.constant 0.000000e+00 : f32
    %12 = vector.broadcast %cst_16 : f32 to vector<256x16xf32>
    %c3 = arith.constant 3 : index
    %c0_17 = arith.constant 0 : index
    %c0_18 = arith.constant 0 : index
    %c0_19 = arith.constant 0 : index
    %c0_20 = arith.constant 0 : index
    %13 = vector.load %arg9[%c3, %c0_17, %c0_18, %c0_19, %c0_20] : memref<4x5x5x16x8xf32, #tpu.memory_space<vmem>>, vector<1x4x4x16x8xf32>
    %14 = vector.shape_cast %13 : vector<1x4x4x16x8xf32> to vector<4x4x16x8xf32>
    %15 = vector.shape_cast %14 : vector<4x4x16x8xf32> to vector<256x8xf32>
    %c0_21 = arith.constant 0 : index
    %c0_22 = arith.constant 0 : index
    %c0_23 = arith.constant 0 : index
    %16 = vector.load %arg3[%c0_21, %c0_22, %c0_23] : memref<9x8x16xf32, #tpu.memory_space<vmem>>, vector<1x8x16xf32>
    %17 = vector.shape_cast %16 : vector<1x8x16xf32> to vector<8x16xf32>
    %cst_24 = arith.constant dense<0.000000e+00> : vector<256x16xf32>
    %18 = tpu.matmul %15, %17, %cst_24 {dimension_numbers = #tpu.dot_dimension_numbers<[1], [0], [0], [1], [0, 0, 1, 1], [], []>} : vector<256x8xf32>, vector<8x16xf32>, vector<256x16xf32> -> vector<256x16xf32>
    %19 = arith.addf %12, %18 : vector<256x16xf32>
    %c2 = arith.constant 2 : index
    %c0_25 = arith.constant 0 : index
    %c1_26 = arith.constant 1 : index
    %c0_27 = arith.constant 0 : index
    %c0_28 = arith.constant 0 : index
    %20 = vector.load %arg9[%c2, %c0_25, %c1_26, %c0_27, %c0_28] : memref<4x5x5x16x8xf32, #tpu.memory_space<vmem>>, vector<1x4x4x16x8xf32>
    %21 = vector.shape_cast %20 : vector<1x4x4x16x8xf32> to vector<4x4x16x8xf32>
    %22 = vector.shape_cast %21 : vector<4x4x16x8xf32> to vector<256x8xf32>
    %c1_29 = arith.constant 1 : index
    %c0_30 = arith.constant 0 : index
    %c0_31 = arith.constant 0 : index
    %23 = vector.load %arg3[%c1_29, %c0_30, %c0_31] : memref<9x8x16xf32, #tpu.memory_space<vmem>>, vector<1x8x16xf32>
    %24 = vector.shape_cast %23 : vector<1x8x16xf32> to vector<8x16xf32>
    %cst_32 = arith.constant dense<0.000000e+00> : vector<256x16xf32>
    %25 = tpu.matmul %22, %24, %cst_32 {dimension_numbers = #tpu.dot_dimension_numbers<[1], [0], [0], [1], [0, 0, 1, 1], [], []>} : vector<256x8xf32>, vector<8x16xf32>, vector<256x16xf32> -> vector<256x16xf32>
    %26 = arith.addf %19, %25 : vector<256x16xf32>
    %c3_33 = arith.constant 3 : index
    %c0_34 = arith.constant 0 : index
    %c1_35 = arith.constant 1 : index
    %c0_36 = arith.constant 0 : index
    %c0_37 = arith.constant 0 : index
    %27 = vector.load %arg9[%c3_33, %c0_34, %c1_35, %c0_36, %c0_37] : memref<4x5x5x16x8xf32, #tpu.memory_space<vmem>>, vector<1x4x4x16x8xf32>
    %28 = vector.shape_cast %27 : vector<1x4x4x16x8xf32> to vector<4x4x16x8xf32>
    %29 = vector.shape_cast %28 : vector<4x4x16x8xf32> to vector<256x8xf32>
    %c2_38 = arith.constant 2 : index
    %c0_39 = arith.constant 0 : index
    %c0_40 = arith.constant 0 : index
    %30 = vector.load %arg3[%c2_38, %c0_39, %c0_40] : memref<9x8x16xf32, #tpu.memory_space<vmem>>, vector<1x8x16xf32>
    %31 = vector.shape_cast %30 : vector<1x8x16xf32> to vector<8x16xf32>
    %cst_41 = arith.constant dense<0.000000e+00> : vector<256x16xf32>
    %32 = tpu.matmul %29, %31, %cst_41 {dimension_numbers = #tpu.dot_dimension_numbers<[1], [0], [0], [1], [0, 0, 1, 1], [], []>} : vector<256x8xf32>, vector<8x16xf32>, vector<256x16xf32> -> vector<256x16xf32>
    %33 = arith.addf %26, %32 : vector<256x16xf32>
    %c1_42 = arith.constant 1 : index
    %c1_43 = arith.constant 1 : index
    %c0_44 = arith.constant 0 : index
    %c0_45 = arith.constant 0 : index
    %c0_46 = arith.constant 0 : index
    %34 = vector.load %arg9[%c1_42, %c1_43, %c0_44, %c0_45, %c0_46] : memref<4x5x5x16x8xf32, #tpu.memory_space<vmem>>, vector<1x4x4x16x8xf32>
    %35 = vector.shape_cast %34 : vector<1x4x4x16x8xf32> to vector<4x4x16x8xf32>
    %36 = vector.shape_cast %35 : vector<4x4x16x8xf32> to vector<256x8xf32>
    %c3_47 = arith.constant 3 : index
    %c0_48 = arith.constant 0 : index
    %c0_49 = arith.constant 0 : index
    %37 = vector.load %arg3[%c3_47, %c0_48, %c0_49] : memref<9x8x16xf32, #tpu.memory_space<vmem>>, vector<1x8x16xf32>
    %38 = vector.shape_cast %37 : vector<1x8x16xf32> to vector<8x16xf32>
    %cst_50 = arith.constant dense<0.000000e+00> : vector<256x16xf32>
    %39 = tpu.matmul %36, %38, %cst_50 {dimension_numbers = #tpu.dot_dimension_numbers<[1], [0], [0], [1], [0, 0, 1, 1], [], []>} : vector<256x8xf32>, vector<8x16xf32>, vector<256x16xf32> -> vector<256x16xf32>
    %40 = arith.addf %33, %39 : vector<256x16xf32>
    %c0_51 = arith.constant 0 : index
    %c1_52 = arith.constant 1 : index
    %c1_53 = arith.constant 1 : index
    %c0_54 = arith.constant 0 : index
    %c0_55 = arith.constant 0 : index
    %41 = vector.load %arg9[%c0_51, %c1_52, %c1_53, %c0_54, %c0_55] : memref<4x5x5x16x8xf32, #tpu.memory_space<vmem>>, vector<1x4x4x16x8xf32>
    %42 = vector.shape_cast %41 : vector<1x4x4x16x8xf32> to vector<4x4x16x8xf32>
    %43 = vector.shape_cast %42 : vector<4x4x16x8xf32> to vector<256x8xf32>
    %c4 = arith.constant 4 : index
    %c0_56 = arith.constant 0 : index
    %c0_57 = arith.constant 0 : index
    %44 = vector.load %arg3[%c4, %c0_56, %c0_57] : memref<9x8x16xf32, #tpu.memory_space<vmem>>, vector<1x8x16xf32>
    %45 = vector.shape_cast %44 : vector<1x8x16xf32> to vector<8x16xf32>
    %cst_58 = arith.constant dense<0.000000e+00> : vector<256x16xf32>
    %46 = tpu.matmul %43, %45, %cst_58 {dimension_numbers = #tpu.dot_dimension_numbers<[1], [0], [0], [1], [0, 0, 1, 1], [], []>} : vector<256x8xf32>, vector<8x16xf32>, vector<256x16xf32> -> vector<256x16xf32>
    %47 = arith.addf %40, %46 : vector<256x16xf32>
    %c1_59 = arith.constant 1 : index
    %c1_60 = arith.constant 1 : index
    %c1_61 = arith.constant 1 : index
    %c0_62 = arith.constant 0 : index
    %c0_63 = arith.constant 0 : index
    %48 = vector.load %arg9[%c1_59, %c1_60, %c1_61, %c0_62, %c0_63] : memref<4x5x5x16x8xf32, #tpu.memory_space<vmem>>, vector<1x4x4x16x8xf32>
    %49 = vector.shape_cast %48 : vector<1x4x4x16x8xf32> to vector<4x4x16x8xf32>
    %50 = vector.shape_cast %49 : vector<4x4x16x8xf32> to vector<256x8xf32>
    %c5 = arith.constant 5 : index
    %c0_64 = arith.constant 0 : index
    %c0_65 = arith.constant 0 : index
    %51 = vector.load %arg3[%c5, %c0_64, %c0_65] : memref<9x8x16xf32, #tpu.memory_space<vmem>>, vector<1x8x16xf32>
    %52 = vector.shape_cast %51 : vector<1x8x16xf32> to vector<8x16xf32>
    %cst_66 = arith.constant dense<0.000000e+00> : vector<256x16xf32>
    %53 = tpu.matmul %50, %52, %cst_66 {dimension_numbers = #tpu.dot_dimension_numbers<[1], [0], [0], [1], [0, 0, 1, 1], [], []>} : vector<256x8xf32>, vector<8x16xf32>, vector<256x16xf32> -> vector<256x16xf32>
    %54 = arith.addf %47, %53 : vector<256x16xf32>
    %c3_67 = arith.constant 3 : index
    %c1_68 = arith.constant 1 : index
    %c0_69 = arith.constant 0 : index
    %c0_70 = arith.constant 0 : index
    %c0_71 = arith.constant 0 : index
    %55 = vector.load %arg9[%c3_67, %c1_68, %c0_69, %c0_70, %c0_71] : memref<4x5x5x16x8xf32, #tpu.memory_space<vmem>>, vector<1x4x4x16x8xf32>
    %56 = vector.shape_cast %55 : vector<1x4x4x16x8xf32> to vector<4x4x16x8xf32>
    %57 = vector.shape_cast %56 : vector<4x4x16x8xf32> to vector<256x8xf32>
    %c6 = arith.constant 6 : index
    %c0_72 = arith.constant 0 : index
    %c0_73 = arith.constant 0 : index
    %58 = vector.load %arg3[%c6, %c0_72, %c0_73] : memref<9x8x16xf32, #tpu.memory_space<vmem>>, vector<1x8x16xf32>
    %59 = vector.shape_cast %58 : vector<1x8x16xf32> to vector<8x16xf32>
    %cst_74 = arith.constant dense<0.000000e+00> : vector<256x16xf32>
    %60 = tpu.matmul %57, %59, %cst_74 {dimension_numbers = #tpu.dot_dimension_numbers<[1], [0], [0], [1], [0, 0, 1, 1], [], []>} : vector<256x8xf32>, vector<8x16xf32>, vector<256x16xf32> -> vector<256x16xf32>
    %61 = arith.addf %54, %60 : vector<256x16xf32>
    %c2_75 = arith.constant 2 : index
    %c1_76 = arith.constant 1 : index
    %c1_77 = arith.constant 1 : index
    %c0_78 = arith.constant 0 : index
    %c0_79 = arith.constant 0 : index
    %62 = vector.load %arg9[%c2_75, %c1_76, %c1_77, %c0_78, %c0_79] : memref<4x5x5x16x8xf32, #tpu.memory_space<vmem>>, vector<1x4x4x16x8xf32>
    %63 = vector.shape_cast %62 : vector<1x4x4x16x8xf32> to vector<4x4x16x8xf32>
    %64 = vector.shape_cast %63 : vector<4x4x16x8xf32> to vector<256x8xf32>
    %c7 = arith.constant 7 : index
    %c0_80 = arith.constant 0 : index
    %c0_81 = arith.constant 0 : index
    %65 = vector.load %arg3[%c7, %c0_80, %c0_81] : memref<9x8x16xf32, #tpu.memory_space<vmem>>, vector<1x8x16xf32>
    %66 = vector.shape_cast %65 : vector<1x8x16xf32> to vector<8x16xf32>
    %cst_82 = arith.constant dense<0.000000e+00> : vector<256x16xf32>
    %67 = tpu.matmul %64, %66, %cst_82 {dimension_numbers = #tpu.dot_dimension_numbers<[1], [0], [0], [1], [0, 0, 1, 1], [], []>} : vector<256x8xf32>, vector<8x16xf32>, vector<256x16xf32> -> vector<256x16xf32>
    %68 = arith.addf %61, %67 : vector<256x16xf32>
    %c3_83 = arith.constant 3 : index
    %c1_84 = arith.constant 1 : index
    %c1_85 = arith.constant 1 : index
    %c0_86 = arith.constant 0 : index
    %c0_87 = arith.constant 0 : index
    %69 = vector.load %arg9[%c3_83, %c1_84, %c1_85, %c0_86, %c0_87] : memref<4x5x5x16x8xf32, #tpu.memory_space<vmem>>, vector<1x4x4x16x8xf32>
    %70 = vector.shape_cast %69 : vector<1x4x4x16x8xf32> to vector<4x4x16x8xf32>
    %71 = vector.shape_cast %70 : vector<4x4x16x8xf32> to vector<256x8xf32>
    %c8 = arith.constant 8 : index
    %c0_88 = arith.constant 0 : index
    %c0_89 = arith.constant 0 : index
    %72 = vector.load %arg3[%c8, %c0_88, %c0_89] : memref<9x8x16xf32, #tpu.memory_space<vmem>>, vector<1x8x16xf32>
    %73 = vector.shape_cast %72 : vector<1x8x16xf32> to vector<8x16xf32>
    %cst_90 = arith.constant dense<0.000000e+00> : vector<256x16xf32>
    %74 = tpu.matmul %71, %73, %cst_90 {dimension_numbers = #tpu.dot_dimension_numbers<[1], [0], [0], [1], [0, 0, 1, 1], [], []>} : vector<256x8xf32>, vector<8x16xf32>, vector<256x16xf32> -> vector<256x16xf32>
    %75 = arith.addf %68, %74 : vector<256x16xf32>
    %c0_91 = arith.constant 0 : index
    %c0_92 = arith.constant 0 : index
    %76 = vector.load %arg4[%c0_91, %c0_92] : memref<1x16xf32, #tpu.memory_space<vmem>>, vector<1x16xf32>
    %77 = vector.broadcast %76 : vector<1x16xf32> to vector<256x16xf32>
    %78 = arith.addf %75, %77 : vector<256x16xf32>
    %cst_93 = arith.constant 0.000000e+00 : f32
    %79 = vector.broadcast %cst_93 : f32 to vector<256x16xf32>
    %80 = arith.maximumf %78, %79 : vector<256x16xf32>
    %81 = vector.shape_cast %80 : vector<256x16xf32> to vector<16x16x16xf32>
    %cst_94 = arith.constant 0.000000e+00 : f32
    %82 = vector.broadcast %cst_94 : f32 to vector<16x128xf32>
    %83 = vector.extract_strided_slice %81 {offsets = [0, 0, 0], sizes = [1, 16, 16], strides = [1, 1, 1]} : vector<16x16x16xf32> to vector<1x16x16xf32>
    %84 = vector.shape_cast %83 : vector<1x16x16xf32> to vector<16x16xf32>
    %c0_95 = arith.constant 0 : index
    %c0_96 = arith.constant 0 : index
    %c0_97 = arith.constant 0 : index
    %85 = vector.load %arg5[%c0_95, %c0_96, %c0_97] : memref<16x16x128xf32, #tpu.memory_space<vmem>>, vector<1x16x128xf32>
    %86 = vector.shape_cast %85 : vector<1x16x128xf32> to vector<16x128xf32>
    %cst_98 = arith.constant dense<0.000000e+00> : vector<16x128xf32>
    %87 = tpu.matmul %84, %86, %cst_98 {dimension_numbers = #tpu.dot_dimension_numbers<[1], [0], [0], [1], [0, 0, 1, 1], [], []>} : vector<16x16xf32>, vector<16x128xf32>, vector<16x128xf32> -> vector<16x128xf32>
    %88 = arith.addf %82, %87 : vector<16x128xf32>
    %89 = vector.extract_strided_slice %81 {offsets = [1, 0, 0], sizes = [1, 16, 16], strides = [1, 1, 1]} : vector<16x16x16xf32> to vector<1x16x16xf32>
    %90 = vector.shape_cast %89 : vector<1x16x16xf32> to vector<16x16xf32>
    %c1_99 = arith.constant 1 : index
    %c0_100 = arith.constant 0 : index
    %c0_101 = arith.constant 0 : index
    %91 = vector.load %arg5[%c1_99, %c0_100, %c0_101] : memref<16x16x128xf32, #tpu.memory_space<vmem>>, vector<1x16x128xf32>
    %92 = vector.shape_cast %91 : vector<1x16x128xf32> to vector<16x128xf32>
    %cst_102 = arith.constant dense<0.000000e+00> : vector<16x128xf32>
    %93 = tpu.matmul %90, %92, %cst_102 {dimension_numbers = #tpu.dot_dimension_numbers<[1], [0], [0], [1], [0, 0, 1, 1], [], []>} : vector<16x16xf32>, vector<16x128xf32>, vector<16x128xf32> -> vector<16x128xf32>
    %94 = arith.addf %88, %93 : vector<16x128xf32>
    %95 = vector.extract_strided_slice %81 {offsets = [2, 0, 0], sizes = [1, 16, 16], strides = [1, 1, 1]} : vector<16x16x16xf32> to vector<1x16x16xf32>
    %96 = vector.shape_cast %95 : vector<1x16x16xf32> to vector<16x16xf32>
    %c2_103 = arith.constant 2 : index
    %c0_104 = arith.constant 0 : index
    %c0_105 = arith.constant 0 : index
    %97 = vector.load %arg5[%c2_103, %c0_104, %c0_105] : memref<16x16x128xf32, #tpu.memory_space<vmem>>, vector<1x16x128xf32>
    %98 = vector.shape_cast %97 : vector<1x16x128xf32> to vector<16x128xf32>
    %cst_106 = arith.constant dense<0.000000e+00> : vector<16x128xf32>
    %99 = tpu.matmul %96, %98, %cst_106 {dimension_numbers = #tpu.dot_dimension_numbers<[1], [0], [0], [1], [0, 0, 1, 1], [], []>} : vector<16x16xf32>, vector<16x128xf32>, vector<16x128xf32> -> vector<16x128xf32>
    %100 = arith.addf %94, %99 : vector<16x128xf32>
    %101 = vector.extract_strided_slice %81 {offsets = [3, 0, 0], sizes = [1, 16, 16], strides = [1, 1, 1]} : vector<16x16x16xf32> to vector<1x16x16xf32>
    %102 = vector.shape_cast %101 : vector<1x16x16xf32> to vector<16x16xf32>
    %c3_107 = arith.constant 3 : index
    %c0_108 = arith.constant 0 : index
    %c0_109 = arith.constant 0 : index
    %103 = vector.load %arg5[%c3_107, %c0_108, %c0_109] : memref<16x16x128xf32, #tpu.memory_space<vmem>>, vector<1x16x128xf32>
    %104 = vector.shape_cast %103 : vector<1x16x128xf32> to vector<16x128xf32>
    %cst_110 = arith.constant dense<0.000000e+00> : vector<16x128xf32>
    %105 = tpu.matmul %102, %104, %cst_110 {dimension_numbers = #tpu.dot_dimension_numbers<[1], [0], [0], [1], [0, 0, 1, 1], [], []>} : vector<16x16xf32>, vector<16x128xf32>, vector<16x128xf32> -> vector<16x128xf32>
    %106 = arith.addf %100, %105 : vector<16x128xf32>
    %107 = vector.extract_strided_slice %81 {offsets = [4, 0, 0], sizes = [1, 16, 16], strides = [1, 1, 1]} : vector<16x16x16xf32> to vector<1x16x16xf32>
    %108 = vector.shape_cast %107 : vector<1x16x16xf32> to vector<16x16xf32>
    %c4_111 = arith.constant 4 : index
    %c0_112 = arith.constant 0 : index
    %c0_113 = arith.constant 0 : index
    %109 = vector.load %arg5[%c4_111, %c0_112, %c0_113] : memref<16x16x128xf32, #tpu.memory_space<vmem>>, vector<1x16x128xf32>
    %110 = vector.shape_cast %109 : vector<1x16x128xf32> to vector<16x128xf32>
    %cst_114 = arith.constant dense<0.000000e+00> : vector<16x128xf32>
    %111 = tpu.matmul %108, %110, %cst_114 {dimension_numbers = #tpu.dot_dimension_numbers<[1], [0], [0], [1], [0, 0, 1, 1], [], []>} : vector<16x16xf32>, vector<16x128xf32>, vector<16x128xf32> -> vector<16x128xf32>
    %112 = arith.addf %106, %111 : vector<16x128xf32>
    %113 = vector.extract_strided_slice %81 {offsets = [5, 0, 0], sizes = [1, 16, 16], strides = [1, 1, 1]} : vector<16x16x16xf32> to vector<1x16x16xf32>
    %114 = vector.shape_cast %113 : vector<1x16x16xf32> to vector<16x16xf32>
    %c5_115 = arith.constant 5 : index
    %c0_116 = arith.constant 0 : index
    %c0_117 = arith.constant 0 : index
    %115 = vector.load %arg5[%c5_115, %c0_116, %c0_117] : memref<16x16x128xf32, #tpu.memory_space<vmem>>, vector<1x16x128xf32>
    %116 = vector.shape_cast %115 : vector<1x16x128xf32> to vector<16x128xf32>
    %cst_118 = arith.constant dense<0.000000e+00> : vector<16x128xf32>
    %117 = tpu.matmul %114, %116, %cst_118 {dimension_numbers = #tpu.dot_dimension_numbers<[1], [0], [0], [1], [0, 0, 1, 1], [], []>} : vector<16x16xf32>, vector<16x128xf32>, vector<16x128xf32> -> vector<16x128xf32>
    %118 = arith.addf %112, %117 : vector<16x128xf32>
    %119 = vector.extract_strided_slice %81 {offsets = [6, 0, 0], sizes = [1, 16, 16], strides = [1, 1, 1]} : vector<16x16x16xf32> to vector<1x16x16xf32>
    %120 = vector.shape_cast %119 : vector<1x16x16xf32> to vector<16x16xf32>
    %c6_119 = arith.constant 6 : index
    %c0_120 = arith.constant 0 : index
    %c0_121 = arith.constant 0 : index
    %121 = vector.load %arg5[%c6_119, %c0_120, %c0_121] : memref<16x16x128xf32, #tpu.memory_space<vmem>>, vector<1x16x128xf32>
    %122 = vector.shape_cast %121 : vector<1x16x128xf32> to vector<16x128xf32>
    %cst_122 = arith.constant dense<0.000000e+00> : vector<16x128xf32>
    %123 = tpu.matmul %120, %122, %cst_122 {dimension_numbers = #tpu.dot_dimension_numbers<[1], [0], [0], [1], [0, 0, 1, 1], [], []>} : vector<16x16xf32>, vector<16x128xf32>, vector<16x128xf32> -> vector<16x128xf32>
    %124 = arith.addf %118, %123 : vector<16x128xf32>
    %125 = vector.extract_strided_slice %81 {offsets = [7, 0, 0], sizes = [1, 16, 16], strides = [1, 1, 1]} : vector<16x16x16xf32> to vector<1x16x16xf32>
    %126 = vector.shape_cast %125 : vector<1x16x16xf32> to vector<16x16xf32>
    %c7_123 = arith.constant 7 : index
    %c0_124 = arith.constant 0 : index
    %c0_125 = arith.constant 0 : index
    %127 = vector.load %arg5[%c7_123, %c0_124, %c0_125] : memref<16x16x128xf32, #tpu.memory_space<vmem>>, vector<1x16x128xf32>
    %128 = vector.shape_cast %127 : vector<1x16x128xf32> to vector<16x128xf32>
    %cst_126 = arith.constant dense<0.000000e+00> : vector<16x128xf32>
    %129 = tpu.matmul %126, %128, %cst_126 {dimension_numbers = #tpu.dot_dimension_numbers<[1], [0], [0], [1], [0, 0, 1, 1], [], []>} : vector<16x16xf32>, vector<16x128xf32>, vector<16x128xf32> -> vector<16x128xf32>
    %130 = arith.addf %124, %129 : vector<16x128xf32>
    %131 = vector.extract_strided_slice %81 {offsets = [8, 0, 0], sizes = [1, 16, 16], strides = [1, 1, 1]} : vector<16x16x16xf32> to vector<1x16x16xf32>
    %132 = vector.shape_cast %131 : vector<1x16x16xf32> to vector<16x16xf32>
    %c8_127 = arith.constant 8 : index
    %c0_128 = arith.constant 0 : index
    %c0_129 = arith.constant 0 : index
    %133 = vector.load %arg5[%c8_127, %c0_128, %c0_129] : memref<16x16x128xf32, #tpu.memory_space<vmem>>, vector<1x16x128xf32>
    %134 = vector.shape_cast %133 : vector<1x16x128xf32> to vector<16x128xf32>
    %cst_130 = arith.constant dense<0.000000e+00> : vector<16x128xf32>
    %135 = tpu.matmul %132, %134, %cst_130 {dimension_numbers = #tpu.dot_dimension_numbers<[1], [0], [0], [1], [0, 0, 1, 1], [], []>} : vector<16x16xf32>, vector<16x128xf32>, vector<16x128xf32> -> vector<16x128xf32>
    %136 = arith.addf %130, %135 : vector<16x128xf32>
    %137 = vector.extract_strided_slice %81 {offsets = [9, 0, 0], sizes = [1, 16, 16], strides = [1, 1, 1]} : vector<16x16x16xf32> to vector<1x16x16xf32>
    %138 = vector.shape_cast %137 : vector<1x16x16xf32> to vector<16x16xf32>
    %c9 = arith.constant 9 : index
    %c0_131 = arith.constant 0 : index
    %c0_132 = arith.constant 0 : index
    %139 = vector.load %arg5[%c9, %c0_131, %c0_132] : memref<16x16x128xf32, #tpu.memory_space<vmem>>, vector<1x16x128xf32>
    %140 = vector.shape_cast %139 : vector<1x16x128xf32> to vector<16x128xf32>
    %cst_133 = arith.constant dense<0.000000e+00> : vector<16x128xf32>
    %141 = tpu.matmul %138, %140, %cst_133 {dimension_numbers = #tpu.dot_dimension_numbers<[1], [0], [0], [1], [0, 0, 1, 1], [], []>} : vector<16x16xf32>, vector<16x128xf32>, vector<16x128xf32> -> vector<16x128xf32>
    %142 = arith.addf %136, %141 : vector<16x128xf32>
    %143 = vector.extract_strided_slice %81 {offsets = [10, 0, 0], sizes = [1, 16, 16], strides = [1, 1, 1]} : vector<16x16x16xf32> to vector<1x16x16xf32>
    %144 = vector.shape_cast %143 : vector<1x16x16xf32> to vector<16x16xf32>
    %c10 = arith.constant 10 : index
    %c0_134 = arith.constant 0 : index
    %c0_135 = arith.constant 0 : index
    %145 = vector.load %arg5[%c10, %c0_134, %c0_135] : memref<16x16x128xf32, #tpu.memory_space<vmem>>, vector<1x16x128xf32>
    %146 = vector.shape_cast %145 : vector<1x16x128xf32> to vector<16x128xf32>
    %cst_136 = arith.constant dense<0.000000e+00> : vector<16x128xf32>
    %147 = tpu.matmul %144, %146, %cst_136 {dimension_numbers = #tpu.dot_dimension_numbers<[1], [0], [0], [1], [0, 0, 1, 1], [], []>} : vector<16x16xf32>, vector<16x128xf32>, vector<16x128xf32> -> vector<16x128xf32>
    %148 = arith.addf %142, %147 : vector<16x128xf32>
    %149 = vector.extract_strided_slice %81 {offsets = [11, 0, 0], sizes = [1, 16, 16], strides = [1, 1, 1]} : vector<16x16x16xf32> to vector<1x16x16xf32>
    %150 = vector.shape_cast %149 : vector<1x16x16xf32> to vector<16x16xf32>
    %c11 = arith.constant 11 : index
    %c0_137 = arith.constant 0 : index
    %c0_138 = arith.constant 0 : index
    %151 = vector.load %arg5[%c11, %c0_137, %c0_138] : memref<16x16x128xf32, #tpu.memory_space<vmem>>, vector<1x16x128xf32>
    %152 = vector.shape_cast %151 : vector<1x16x128xf32> to vector<16x128xf32>
    %cst_139 = arith.constant dense<0.000000e+00> : vector<16x128xf32>
    %153 = tpu.matmul %150, %152, %cst_139 {dimension_numbers = #tpu.dot_dimension_numbers<[1], [0], [0], [1], [0, 0, 1, 1], [], []>} : vector<16x16xf32>, vector<16x128xf32>, vector<16x128xf32> -> vector<16x128xf32>
    %154 = arith.addf %148, %153 : vector<16x128xf32>
    %155 = vector.extract_strided_slice %81 {offsets = [12, 0, 0], sizes = [1, 16, 16], strides = [1, 1, 1]} : vector<16x16x16xf32> to vector<1x16x16xf32>
    %156 = vector.shape_cast %155 : vector<1x16x16xf32> to vector<16x16xf32>
    %c12 = arith.constant 12 : index
    %c0_140 = arith.constant 0 : index
    %c0_141 = arith.constant 0 : index
    %157 = vector.load %arg5[%c12, %c0_140, %c0_141] : memref<16x16x128xf32, #tpu.memory_space<vmem>>, vector<1x16x128xf32>
    %158 = vector.shape_cast %157 : vector<1x16x128xf32> to vector<16x128xf32>
    %cst_142 = arith.constant dense<0.000000e+00> : vector<16x128xf32>
    %159 = tpu.matmul %156, %158, %cst_142 {dimension_numbers = #tpu.dot_dimension_numbers<[1], [0], [0], [1], [0, 0, 1, 1], [], []>} : vector<16x16xf32>, vector<16x128xf32>, vector<16x128xf32> -> vector<16x128xf32>
    %160 = arith.addf %154, %159 : vector<16x128xf32>
    %161 = vector.extract_strided_slice %81 {offsets = [13, 0, 0], sizes = [1, 16, 16], strides = [1, 1, 1]} : vector<16x16x16xf32> to vector<1x16x16xf32>
    %162 = vector.shape_cast %161 : vector<1x16x16xf32> to vector<16x16xf32>
    %c13 = arith.constant 13 : index
    %c0_143 = arith.constant 0 : index
    %c0_144 = arith.constant 0 : index
    %163 = vector.load %arg5[%c13, %c0_143, %c0_144] : memref<16x16x128xf32, #tpu.memory_space<vmem>>, vector<1x16x128xf32>
    %164 = vector.shape_cast %163 : vector<1x16x128xf32> to vector<16x128xf32>
    %cst_145 = arith.constant dense<0.000000e+00> : vector<16x128xf32>
    %165 = tpu.matmul %162, %164, %cst_145 {dimension_numbers = #tpu.dot_dimension_numbers<[1], [0], [0], [1], [0, 0, 1, 1], [], []>} : vector<16x16xf32>, vector<16x128xf32>, vector<16x128xf32> -> vector<16x128xf32>
    %166 = arith.addf %160, %165 : vector<16x128xf32>
    %167 = vector.extract_strided_slice %81 {offsets = [14, 0, 0], sizes = [1, 16, 16], strides = [1, 1, 1]} : vector<16x16x16xf32> to vector<1x16x16xf32>
    %168 = vector.shape_cast %167 : vector<1x16x16xf32> to vector<16x16xf32>
    %c14 = arith.constant 14 : index
    %c0_146 = arith.constant 0 : index
    %c0_147 = arith.constant 0 : index
    %169 = vector.load %arg5[%c14, %c0_146, %c0_147] : memref<16x16x128xf32, #tpu.memory_space<vmem>>, vector<1x16x128xf32>
    %170 = vector.shape_cast %169 : vector<1x16x128xf32> to vector<16x128xf32>
    %cst_148 = arith.constant dense<0.000000e+00> : vector<16x128xf32>
    %171 = tpu.matmul %168, %170, %cst_148 {dimension_numbers = #tpu.dot_dimension_numbers<[1], [0], [0], [1], [0, 0, 1, 1], [], []>} : vector<16x16xf32>, vector<16x128xf32>, vector<16x128xf32> -> vector<16x128xf32>
    %172 = arith.addf %166, %171 : vector<16x128xf32>
    %173 = vector.extract_strided_slice %81 {offsets = [15, 0, 0], sizes = [1, 16, 16], strides = [1, 1, 1]} : vector<16x16x16xf32> to vector<1x16x16xf32>
    %174 = vector.shape_cast %173 : vector<1x16x16xf32> to vector<16x16xf32>
    %c15 = arith.constant 15 : index
    %c0_149 = arith.constant 0 : index
    %c0_150 = arith.constant 0 : index
    %175 = vector.load %arg5[%c15, %c0_149, %c0_150] : memref<16x16x128xf32, #tpu.memory_space<vmem>>, vector<1x16x128xf32>
    %176 = vector.shape_cast %175 : vector<1x16x128xf32> to vector<16x128xf32>
    %cst_151 = arith.constant dense<0.000000e+00> : vector<16x128xf32>
    %177 = tpu.matmul %174, %176, %cst_151 {dimension_numbers = #tpu.dot_dimension_numbers<[1], [0], [0], [1], [0, 0, 1, 1], [], []>} : vector<16x16xf32>, vector<16x128xf32>, vector<16x128xf32> -> vector<16x128xf32>
    %178 = arith.addf %172, %177 : vector<16x128xf32>
    %c0_152 = arith.constant 0 : index
    %c0_153 = arith.constant 0 : index
    %179 = vector.load %arg6[%c0_152, %c0_153] : memref<1x128xf32, #tpu.memory_space<vmem>>, vector<1x128xf32>
    %180 = vector.broadcast %179 : vector<1x128xf32> to vector<16x128xf32>
    %181 = arith.addf %178, %180 : vector<16x128xf32>
    %c0_154 = arith.constant 0 : index
    %c0_155 = arith.constant 0 : index
    %182 = vector.load %arg7[%c0_154, %c0_155] : memref<32x128xf32, #tpu.memory_space<vmem>>, vector<32x128xf32>
    %cst_156 = arith.constant 0.000000e+00 : f32
    %183 = vector.broadcast %cst_156 : f32 to vector<2x32xf32>
    %cst_157 = arith.constant 0.000000e+00 : f32
    %184 = vector.broadcast %cst_157 : f32 to vector<2x32xf32>
    %185 = vector.extract_strided_slice %181 {offsets = [0, 0], sizes = [2, 128], strides = [1, 1]} : vector<16x128xf32> to vector<2x128xf32>
    %cst_158 = arith.constant dense<0.000000e+00> : vector<2x128xf32>
    %186 = tpu.matmul %183, %182, %cst_158 {dimension_numbers = #tpu.dot_dimension_numbers<[1], [0], [0], [1], [0, 0, 1, 1], [], []>} : vector<2x32xf32>, vector<32x128xf32>, vector<2x128xf32> -> vector<2x128xf32>
    %187 = arith.addf %185, %186 : vector<2x128xf32>
    %188 = vector.extract_strided_slice %187 {offsets = [0, 0], sizes = [2, 32], strides = [1, 1]} : vector<2x128xf32> to vector<2x32xf32>
    %189 = arith.negf %188 : vector<2x32xf32>
    %190 = math.exp %189 : vector<2x32xf32>
    %cst_159 = arith.constant 1.000000e+00 : f32
    %191 = vector.broadcast %cst_159 : f32 to vector<2x32xf32>
    %192 = arith.addf %191, %190 : vector<2x32xf32>
    %193 = arith.divf %191, %192 : vector<2x32xf32>
    %194 = vector.extract_strided_slice %187 {offsets = [0, 32], sizes = [2, 32], strides = [1, 1]} : vector<2x128xf32> to vector<2x32xf32>
    %195 = arith.negf %194 : vector<2x32xf32>
    %196 = math.exp %195 : vector<2x32xf32>
    %cst_160 = arith.constant 1.000000e+00 : f32
    %197 = vector.broadcast %cst_160 : f32 to vector<2x32xf32>
    %198 = arith.addf %197, %196 : vector<2x32xf32>
    %199 = arith.divf %197, %198 : vector<2x32xf32>
    %200 = vector.extract_strided_slice %187 {offsets = [0, 64], sizes = [2, 32], strides = [1, 1]} : vector<2x128xf32> to vector<2x32xf32>
    %201 = math.tanh %200 : vector<2x32xf32>
    %202 = vector.extract_strided_slice %187 {offsets = [0, 96], sizes = [2, 32], strides = [1, 1]} : vector<2x128xf32> to vector<2x32xf32>
    %203 = arith.negf %202 : vector<2x32xf32>
    %204 = math.exp %203 : vector<2x32xf32>
    %cst_161 = arith.constant 1.000000e+00 : f32
    %205 = vector.broadcast %cst_161 : f32 to vector<2x32xf32>
    %206 = arith.addf %205, %204 : vector<2x32xf32>
    %207 = arith.divf %205, %206 : vector<2x32xf32>
    %208 = arith.mulf %199, %184 : vector<2x32xf32>
    %209 = arith.mulf %193, %201 : vector<2x32xf32>
    %210 = arith.addf %208, %209 : vector<2x32xf32>
    %211 = math.tanh %210 : vector<2x32xf32>
    %212 = arith.mulf %207, %211 : vector<2x32xf32>
    %c0_162 = arith.constant 0 : index
    %c0_163 = arith.constant 0 : index
    %c0_164 = arith.constant 0 : index
    %213 = vector.load %arg8[%c0_162, %c0_163, %c0_164] : memref<2x8x32xf32, #tpu.memory_space<vmem>>, vector<2x1x32xf32>
    %214 = vector.shape_cast %213 : vector<2x1x32xf32> to vector<2x32xf32>
    %215 = vector.shape_cast %212 : vector<2x32xf32> to vector<2x1x32xf32>
    tpu.vector_store %arg8[%c0_162, %c0_163, %c0_164], %215 {strides = array<i32>} : memref<2x8x32xf32, #tpu.memory_space<vmem>>, vector<2x1x32xf32>,
    %216 = vector.extract_strided_slice %181 {offsets = [2, 0], sizes = [2, 128], strides = [1, 1]} : vector<16x128xf32> to vector<2x128xf32>
    %cst_165 = arith.constant dense<0.000000e+00> : vector<2x128xf32>
    %217 = tpu.matmul %212, %182, %cst_165 {dimension_numbers = #tpu.dot_dimension_numbers<[1], [0], [0], [1], [0, 0, 1, 1], [], []>} : vector<2x32xf32>, vector<32x128xf32>, vector<2x128xf32> -> vector<2x128xf32>
    %218 = arith.addf %216, %217 : vector<2x128xf32>
    %219 = vector.extract_strided_slice %218 {offsets = [0, 0], sizes = [2, 32], strides = [1, 1]} : vector<2x128xf32> to vector<2x32xf32>
    %220 = arith.negf %219 : vector<2x32xf32>
    %221 = math.exp %220 : vector<2x32xf32>
    %cst_166 = arith.constant 1.000000e+00 : f32
    %222 = vector.broadcast %cst_166 : f32 to vector<2x32xf32>
    %223 = arith.addf %222, %221 : vector<2x32xf32>
    %224 = arith.divf %222, %223 : vector<2x32xf32>
    %225 = vector.extract_strided_slice %218 {offsets = [0, 32], sizes = [2, 32], strides = [1, 1]} : vector<2x128xf32> to vector<2x32xf32>
    %226 = arith.negf %225 : vector<2x32xf32>
    %227 = math.exp %226 : vector<2x32xf32>
    %cst_167 = arith.constant 1.000000e+00 : f32
    %228 = vector.broadcast %cst_167 : f32 to vector<2x32xf32>
    %229 = arith.addf %228, %227 : vector<2x32xf32>
    %230 = arith.divf %228, %229 : vector<2x32xf32>
    %231 = vector.extract_strided_slice %218 {offsets = [0, 64], sizes = [2, 32], strides = [1, 1]} : vector<2x128xf32> to vector<2x32xf32>
    %232 = math.tanh %231 : vector<2x32xf32>
    %233 = vector.extract_strided_slice %218 {offsets = [0, 96], sizes = [2, 32], strides = [1, 1]} : vector<2x128xf32> to vector<2x32xf32>
    %234 = arith.negf %233 : vector<2x32xf32>
    %235 = math.exp %234 : vector<2x32xf32>
    %cst_168 = arith.constant 1.000000e+00 : f32
    %236 = vector.broadcast %cst_168 : f32 to vector<2x32xf32>
    %237 = arith.addf %236, %235 : vector<2x32xf32>
    %238 = arith.divf %236, %237 : vector<2x32xf32>
    %239 = arith.mulf %230, %210 : vector<2x32xf32>
    %240 = arith.mulf %224, %232 : vector<2x32xf32>
    %241 = arith.addf %239, %240 : vector<2x32xf32>
    %242 = math.tanh %241 : vector<2x32xf32>
    %243 = arith.mulf %238, %242 : vector<2x32xf32>
    %c0_169 = arith.constant 0 : index
    %c1_170 = arith.constant 1 : index
    %c0_171 = arith.constant 0 : index
    %244 = vector.load %arg8[%c0_169, %c1_170, %c0_171] : memref<2x8x32xf32, #tpu.memory_space<vmem>>, vector<2x1x32xf32>
    %245 = vector.shape_cast %244 : vector<2x1x32xf32> to vector<2x32xf32>
    %246 = vector.shape_cast %243 : vector<2x32xf32> to vector<2x1x32xf32>
    tpu.vector_store %arg8[%c0_169, %c1_170, %c0_171], %246 {strides = array<i32>} : memref<2x8x32xf32, #tpu.memory_space<vmem>>, vector<2x1x32xf32>,
    %247 = vector.extract_strided_slice %181 {offsets = [4, 0], sizes = [2, 128], strides = [1, 1]} : vector<16x128xf32> to vector<2x128xf32>
    %cst_172 = arith.constant dense<0.000000e+00> : vector<2x128xf32>
    %248 = tpu.matmul %243, %182, %cst_172 {dimension_numbers = #tpu.dot_dimension_numbers<[1], [0], [0], [1], [0, 0, 1, 1], [], []>} : vector<2x32xf32>, vector<32x128xf32>, vector<2x128xf32> -> vector<2x128xf32>
    %249 = arith.addf %247, %248 : vector<2x128xf32>
    %250 = vector.extract_strided_slice %249 {offsets = [0, 0], sizes = [2, 32], strides = [1, 1]} : vector<2x128xf32> to vector<2x32xf32>
    %251 = arith.negf %250 : vector<2x32xf32>
    %252 = math.exp %251 : vector<2x32xf32>
    %cst_173 = arith.constant 1.000000e+00 : f32
    %253 = vector.broadcast %cst_173 : f32 to vector<2x32xf32>
    %254 = arith.addf %253, %252 : vector<2x32xf32>
    %255 = arith.divf %253, %254 : vector<2x32xf32>
    %256 = vector.extract_strided_slice %249 {offsets = [0, 32], sizes = [2, 32], strides = [1, 1]} : vector<2x128xf32> to vector<2x32xf32>
    %257 = arith.negf %256 : vector<2x32xf32>
    %258 = math.exp %257 : vector<2x32xf32>
    %cst_174 = arith.constant 1.000000e+00 : f32
    %259 = vector.broadcast %cst_174 : f32 to vector<2x32xf32>
    %260 = arith.addf %259, %258 : vector<2x32xf32>
    %261 = arith.divf %259, %260 : vector<2x32xf32>
    %262 = vector.extract_strided_slice %249 {offsets = [0, 64], sizes = [2, 32], strides = [1, 1]} : vector<2x128xf32> to vector<2x32xf32>
    %263 = math.tanh %262 : vector<2x32xf32>
    %264 = vector.extract_strided_slice %249 {offsets = [0, 96], sizes = [2, 32], strides = [1, 1]} : vector<2x128xf32> to vector<2x32xf32>
    %265 = arith.negf %264 : vector<2x32xf32>
    %266 = math.exp %265 : vector<2x32xf32>
    %cst_175 = arith.constant 1.000000e+00 : f32
    %267 = vector.broadcast %cst_175 : f32 to vector<2x32xf32>
    %268 = arith.addf %267, %266 : vector<2x32xf32>
    %269 = arith.divf %267, %268 : vector<2x32xf32>
    %270 = arith.mulf %261, %241 : vector<2x32xf32>
    %271 = arith.mulf %255, %263 : vector<2x32xf32>
    %272 = arith.addf %270, %271 : vector<2x32xf32>
    %273 = math.tanh %272 : vector<2x32xf32>
    %274 = arith.mulf %269, %273 : vector<2x32xf32>
    %c0_176 = arith.constant 0 : index
    %c2_177 = arith.constant 2 : index
    %c0_178 = arith.constant 0 : index
    %275 = vector.load %arg8[%c0_176, %c2_177, %c0_178] : memref<2x8x32xf32, #tpu.memory_space<vmem>>, vector<2x1x32xf32>
    %276 = vector.shape_cast %275 : vector<2x1x32xf32> to vector<2x32xf32>
    %277 = vector.shape_cast %274 : vector<2x32xf32> to vector<2x1x32xf32>
    tpu.vector_store %arg8[%c0_176, %c2_177, %c0_178], %277 {strides = array<i32>} : memref<2x8x32xf32, #tpu.memory_space<vmem>>, vector<2x1x32xf32>,
    %278 = vector.extract_strided_slice %181 {offsets = [6, 0], sizes = [2, 128], strides = [1, 1]} : vector<16x128xf32> to vector<2x128xf32>
    %cst_179 = arith.constant dense<0.000000e+00> : vector<2x128xf32>
    %279 = tpu.matmul %274, %182, %cst_179 {dimension_numbers = #tpu.dot_dimension_numbers<[1], [0], [0], [1], [0, 0, 1, 1], [], []>} : vector<2x32xf32>, vector<32x128xf32>, vector<2x128xf32> -> vector<2x128xf32>
    %280 = arith.addf %278, %279 : vector<2x128xf32>
    %281 = vector.extract_strided_slice %280 {offsets = [0, 0], sizes = [2, 32], strides = [1, 1]} : vector<2x128xf32> to vector<2x32xf32>
    %282 = arith.negf %281 : vector<2x32xf32>
    %283 = math.exp %282 : vector<2x32xf32>
    %cst_180 = arith.constant 1.000000e+00 : f32
    %284 = vector.broadcast %cst_180 : f32 to vector<2x32xf32>
    %285 = arith.addf %284, %283 : vector<2x32xf32>
    %286 = arith.divf %284, %285 : vector<2x32xf32>
    %287 = vector.extract_strided_slice %280 {offsets = [0, 32], sizes = [2, 32], strides = [1, 1]} : vector<2x128xf32> to vector<2x32xf32>
    %288 = arith.negf %287 : vector<2x32xf32>
    %289 = math.exp %288 : vector<2x32xf32>
    %cst_181 = arith.constant 1.000000e+00 : f32
    %290 = vector.broadcast %cst_181 : f32 to vector<2x32xf32>
    %291 = arith.addf %290, %289 : vector<2x32xf32>
    %292 = arith.divf %290, %291 : vector<2x32xf32>
    %293 = vector.extract_strided_slice %280 {offsets = [0, 64], sizes = [2, 32], strides = [1, 1]} : vector<2x128xf32> to vector<2x32xf32>
    %294 = math.tanh %293 : vector<2x32xf32>
    %295 = vector.extract_strided_slice %280 {offsets = [0, 96], sizes = [2, 32], strides = [1, 1]} : vector<2x128xf32> to vector<2x32xf32>
    %296 = arith.negf %295 : vector<2x32xf32>
    %297 = math.exp %296 : vector<2x32xf32>
    %cst_182 = arith.constant 1.000000e+00 : f32
    %298 = vector.broadcast %cst_182 : f32 to vector<2x32xf32>
    %299 = arith.addf %298, %297 : vector<2x32xf32>
    %300 = arith.divf %298, %299 : vector<2x32xf32>
    %301 = arith.mulf %292, %272 : vector<2x32xf32>
    %302 = arith.mulf %286, %294 : vector<2x32xf32>
    %303 = arith.addf %301, %302 : vector<2x32xf32>
    %304 = math.tanh %303 : vector<2x32xf32>
    %305 = arith.mulf %300, %304 : vector<2x32xf32>
    %c0_183 = arith.constant 0 : index
    %c3_184 = arith.constant 3 : index
    %c0_185 = arith.constant 0 : index
    %306 = vector.load %arg8[%c0_183, %c3_184, %c0_185] : memref<2x8x32xf32, #tpu.memory_space<vmem>>, vector<2x1x32xf32>
    %307 = vector.shape_cast %306 : vector<2x1x32xf32> to vector<2x32xf32>
    %308 = vector.shape_cast %305 : vector<2x32xf32> to vector<2x1x32xf32>
    tpu.vector_store %arg8[%c0_183, %c3_184, %c0_185], %308 {strides = array<i32>} : memref<2x8x32xf32, #tpu.memory_space<vmem>>, vector<2x1x32xf32>,
    %309 = vector.extract_strided_slice %181 {offsets = [8, 0], sizes = [2, 128], strides = [1, 1]} : vector<16x128xf32> to vector<2x128xf32>
    %cst_186 = arith.constant dense<0.000000e+00> : vector<2x128xf32>
    %310 = tpu.matmul %305, %182, %cst_186 {dimension_numbers = #tpu.dot_dimension_numbers<[1], [0], [0], [1], [0, 0, 1, 1], [], []>} : vector<2x32xf32>, vector<32x128xf32>, vector<2x128xf32> -> vector<2x128xf32>
    %311 = arith.addf %309, %310 : vector<2x128xf32>
    %312 = vector.extract_strided_slice %311 {offsets = [0, 0], sizes = [2, 32], strides = [1, 1]} : vector<2x128xf32> to vector<2x32xf32>
    %313 = arith.negf %312 : vector<2x32xf32>
    %314 = math.exp %313 : vector<2x32xf32>
    %cst_187 = arith.constant 1.000000e+00 : f32
    %315 = vector.broadcast %cst_187 : f32 to vector<2x32xf32>
    %316 = arith.addf %315, %314 : vector<2x32xf32>
    %317 = arith.divf %315, %316 : vector<2x32xf32>
    %318 = vector.extract_strided_slice %311 {offsets = [0, 32], sizes = [2, 32], strides = [1, 1]} : vector<2x128xf32> to vector<2x32xf32>
    %319 = arith.negf %318 : vector<2x32xf32>
    %320 = math.exp %319 : vector<2x32xf32>
    %cst_188 = arith.constant 1.000000e+00 : f32
    %321 = vector.broadcast %cst_188 : f32 to vector<2x32xf32>
    %322 = arith.addf %321, %320 : vector<2x32xf32>
    %323 = arith.divf %321, %322 : vector<2x32xf32>
    %324 = vector.extract_strided_slice %311 {offsets = [0, 64], sizes = [2, 32], strides = [1, 1]} : vector<2x128xf32> to vector<2x32xf32>
    %325 = math.tanh %324 : vector<2x32xf32>
    %326 = vector.extract_strided_slice %311 {offsets = [0, 96], sizes = [2, 32], strides = [1, 1]} : vector<2x128xf32> to vector<2x32xf32>
    %327 = arith.negf %326 : vector<2x32xf32>
    %328 = math.exp %327 : vector<2x32xf32>
    %cst_189 = arith.constant 1.000000e+00 : f32
    %329 = vector.broadcast %cst_189 : f32 to vector<2x32xf32>
    %330 = arith.addf %329, %328 : vector<2x32xf32>
    %331 = arith.divf %329, %330 : vector<2x32xf32>
    %332 = arith.mulf %323, %303 : vector<2x32xf32>
    %333 = arith.mulf %317, %325 : vector<2x32xf32>
    %334 = arith.addf %332, %333 : vector<2x32xf32>
    %335 = math.tanh %334 : vector<2x32xf32>
    %336 = arith.mulf %331, %335 : vector<2x32xf32>
    %c0_190 = arith.constant 0 : index
    %c4_191 = arith.constant 4 : index
    %c0_192 = arith.constant 0 : index
    %337 = vector.load %arg8[%c0_190, %c4_191, %c0_192] : memref<2x8x32xf32, #tpu.memory_space<vmem>>, vector<2x1x32xf32>
    %338 = vector.shape_cast %337 : vector<2x1x32xf32> to vector<2x32xf32>
    %339 = vector.shape_cast %336 : vector<2x32xf32> to vector<2x1x32xf32>
    tpu.vector_store %arg8[%c0_190, %c4_191, %c0_192], %339 {strides = array<i32>} : memref<2x8x32xf32, #tpu.memory_space<vmem>>, vector<2x1x32xf32>,
    %340 = vector.extract_strided_slice %181 {offsets = [10, 0], sizes = [2, 128], strides = [1, 1]} : vector<16x128xf32> to vector<2x128xf32>
    %cst_193 = arith.constant dense<0.000000e+00> : vector<2x128xf32>
    %341 = tpu.matmul %336, %182, %cst_193 {dimension_numbers = #tpu.dot_dimension_numbers<[1], [0], [0], [1], [0, 0, 1, 1], [], []>} : vector<2x32xf32>, vector<32x128xf32>, vector<2x128xf32> -> vector<2x128xf32>
    %342 = arith.addf %340, %341 : vector<2x128xf32>
    %343 = vector.extract_strided_slice %342 {offsets = [0, 0], sizes = [2, 32], strides = [1, 1]} : vector<2x128xf32> to vector<2x32xf32>
    %344 = arith.negf %343 : vector<2x32xf32>
    %345 = math.exp %344 : vector<2x32xf32>
    %cst_194 = arith.constant 1.000000e+00 : f32
    %346 = vector.broadcast %cst_194 : f32 to vector<2x32xf32>
    %347 = arith.addf %346, %345 : vector<2x32xf32>
    %348 = arith.divf %346, %347 : vector<2x32xf32>
    %349 = vector.extract_strided_slice %342 {offsets = [0, 32], sizes = [2, 32], strides = [1, 1]} : vector<2x128xf32> to vector<2x32xf32>
    %350 = arith.negf %349 : vector<2x32xf32>
    %351 = math.exp %350 : vector<2x32xf32>
    %cst_195 = arith.constant 1.000000e+00 : f32
    %352 = vector.broadcast %cst_195 : f32 to vector<2x32xf32>
    %353 = arith.addf %352, %351 : vector<2x32xf32>
    %354 = arith.divf %352, %353 : vector<2x32xf32>
    %355 = vector.extract_strided_slice %342 {offsets = [0, 64], sizes = [2, 32], strides = [1, 1]} : vector<2x128xf32> to vector<2x32xf32>
    %356 = math.tanh %355 : vector<2x32xf32>
    %357 = vector.extract_strided_slice %342 {offsets = [0, 96], sizes = [2, 32], strides = [1, 1]} : vector<2x128xf32> to vector<2x32xf32>
    %358 = arith.negf %357 : vector<2x32xf32>
    %359 = math.exp %358 : vector<2x32xf32>
    %cst_196 = arith.constant 1.000000e+00 : f32
    %360 = vector.broadcast %cst_196 : f32 to vector<2x32xf32>
    %361 = arith.addf %360, %359 : vector<2x32xf32>
    %362 = arith.divf %360, %361 : vector<2x32xf32>
    %363 = arith.mulf %354, %334 : vector<2x32xf32>
    %364 = arith.mulf %348, %356 : vector<2x32xf32>
    %365 = arith.addf %363, %364 : vector<2x32xf32>
    %366 = math.tanh %365 : vector<2x32xf32>
    %367 = arith.mulf %362, %366 : vector<2x32xf32>
    %c0_197 = arith.constant 0 : index
    %c5_198 = arith.constant 5 : index
    %c0_199 = arith.constant 0 : index
    %368 = vector.load %arg8[%c0_197, %c5_198, %c0_199] : memref<2x8x32xf32, #tpu.memory_space<vmem>>, vector<2x1x32xf32>
    %369 = vector.shape_cast %368 : vector<2x1x32xf32> to vector<2x32xf32>
    %370 = vector.shape_cast %367 : vector<2x32xf32> to vector<2x1x32xf32>
    tpu.vector_store %arg8[%c0_197, %c5_198, %c0_199], %370 {strides = array<i32>} : memref<2x8x32xf32, #tpu.memory_space<vmem>>, vector<2x1x32xf32>,
    %371 = vector.extract_strided_slice %181 {offsets = [12, 0], sizes = [2, 128], strides = [1, 1]} : vector<16x128xf32> to vector<2x128xf32>
    %cst_200 = arith.constant dense<0.000000e+00> : vector<2x128xf32>
    %372 = tpu.matmul %367, %182, %cst_200 {dimension_numbers = #tpu.dot_dimension_numbers<[1], [0], [0], [1], [0, 0, 1, 1], [], []>} : vector<2x32xf32>, vector<32x128xf32>, vector<2x128xf32> -> vector<2x128xf32>
    %373 = arith.addf %371, %372 : vector<2x128xf32>
    %374 = vector.extract_strided_slice %373 {offsets = [0, 0], sizes = [2, 32], strides = [1, 1]} : vector<2x128xf32> to vector<2x32xf32>
    %375 = arith.negf %374 : vector<2x32xf32>
    %376 = math.exp %375 : vector<2x32xf32>
    %cst_201 = arith.constant 1.000000e+00 : f32
    %377 = vector.broadcast %cst_201 : f32 to vector<2x32xf32>
    %378 = arith.addf %377, %376 : vector<2x32xf32>
    %379 = arith.divf %377, %378 : vector<2x32xf32>
    %380 = vector.extract_strided_slice %373 {offsets = [0, 32], sizes = [2, 32], strides = [1, 1]} : vector<2x128xf32> to vector<2x32xf32>
    %381 = arith.negf %380 : vector<2x32xf32>
    %382 = math.exp %381 : vector<2x32xf32>
    %cst_202 = arith.constant 1.000000e+00 : f32
    %383 = vector.broadcast %cst_202 : f32 to vector<2x32xf32>
    %384 = arith.addf %383, %382 : vector<2x32xf32>
    %385 = arith.divf %383, %384 : vector<2x32xf32>
    %386 = vector.extract_strided_slice %373 {offsets = [0, 64], sizes = [2, 32], strides = [1, 1]} : vector<2x128xf32> to vector<2x32xf32>
    %387 = math.tanh %386 : vector<2x32xf32>
    %388 = vector.extract_strided_slice %373 {offsets = [0, 96], sizes = [2, 32], strides = [1, 1]} : vector<2x128xf32> to vector<2x32xf32>
    %389 = arith.negf %388 : vector<2x32xf32>
    %390 = math.exp %389 : vector<2x32xf32>
    %cst_203 = arith.constant 1.000000e+00 : f32
    %391 = vector.broadcast %cst_203 : f32 to vector<2x32xf32>
    %392 = arith.addf %391, %390 : vector<2x32xf32>
    %393 = arith.divf %391, %392 : vector<2x32xf32>
    %394 = arith.mulf %385, %365 : vector<2x32xf32>
    %395 = arith.mulf %379, %387 : vector<2x32xf32>
    %396 = arith.addf %394, %395 : vector<2x32xf32>
    %397 = math.tanh %396 : vector<2x32xf32>
    %398 = arith.mulf %393, %397 : vector<2x32xf32>
    %c0_204 = arith.constant 0 : index
    %c6_205 = arith.constant 6 : index
    %c0_206 = arith.constant 0 : index
    %399 = vector.load %arg8[%c0_204, %c6_205, %c0_206] : memref<2x8x32xf32, #tpu.memory_space<vmem>>, vector<2x1x32xf32>
    %400 = vector.shape_cast %399 : vector<2x1x32xf32> to vector<2x32xf32>
    %401 = vector.shape_cast %398 : vector<2x32xf32> to vector<2x1x32xf32>
    tpu.vector_store %arg8[%c0_204, %c6_205, %c0_206], %401 {strides = array<i32>} : memref<2x8x32xf32, #tpu.memory_space<vmem>>, vector<2x1x32xf32>,
    %402 = vector.extract_strided_slice %181 {offsets = [14, 0], sizes = [2, 128], strides = [1, 1]} : vector<16x128xf32> to vector<2x128xf32>
    %cst_207 = arith.constant dense<0.000000e+00> : vector<2x128xf32>
    %403 = tpu.matmul %398, %182, %cst_207 {dimension_numbers = #tpu.dot_dimension_numbers<[1], [0], [0], [1], [0, 0, 1, 1], [], []>} : vector<2x32xf32>, vector<32x128xf32>, vector<2x128xf32> -> vector<2x128xf32>
    %404 = arith.addf %402, %403 : vector<2x128xf32>
    %405 = vector.extract_strided_slice %404 {offsets = [0, 0], sizes = [2, 32], strides = [1, 1]} : vector<2x128xf32> to vector<2x32xf32>
    %406 = arith.negf %405 : vector<2x32xf32>
    %407 = math.exp %406 : vector<2x32xf32>
    %cst_208 = arith.constant 1.000000e+00 : f32
    %408 = vector.broadcast %cst_208 : f32 to vector<2x32xf32>
    %409 = arith.addf %408, %407 : vector<2x32xf32>
    %410 = arith.divf %408, %409 : vector<2x32xf32>
    %411 = vector.extract_strided_slice %404 {offsets = [0, 32], sizes = [2, 32], strides = [1, 1]} : vector<2x128xf32> to vector<2x32xf32>
    %412 = arith.negf %411 : vector<2x32xf32>
    %413 = math.exp %412 : vector<2x32xf32>
    %cst_209 = arith.constant 1.000000e+00 : f32
    %414 = vector.broadcast %cst_209 : f32 to vector<2x32xf32>
    %415 = arith.addf %414, %413 : vector<2x32xf32>
    %416 = arith.divf %414, %415 : vector<2x32xf32>
    %417 = vector.extract_strided_slice %404 {offsets = [0, 64], sizes = [2, 32], strides = [1, 1]} : vector<2x128xf32> to vector<2x32xf32>
    %418 = math.tanh %417 : vector<2x32xf32>
    %419 = vector.extract_strided_slice %404 {offsets = [0, 96], sizes = [2, 32], strides = [1, 1]} : vector<2x128xf32> to vector<2x32xf32>
    %420 = arith.negf %419 : vector<2x32xf32>
    %421 = math.exp %420 : vector<2x32xf32>
    %cst_210 = arith.constant 1.000000e+00 : f32
    %422 = vector.broadcast %cst_210 : f32 to vector<2x32xf32>
    %423 = arith.addf %422, %421 : vector<2x32xf32>
    %424 = arith.divf %422, %423 : vector<2x32xf32>
    %425 = arith.mulf %416, %396 : vector<2x32xf32>
    %426 = arith.mulf %410, %418 : vector<2x32xf32>
    %427 = arith.addf %425, %426 : vector<2x32xf32>
    %428 = math.tanh %427 : vector<2x32xf32>
    %429 = arith.mulf %424, %428 : vector<2x32xf32>
    %c0_211 = arith.constant 0 : index
    %c7_212 = arith.constant 7 : index
    %c0_213 = arith.constant 0 : index
    %430 = vector.load %arg8[%c0_211, %c7_212, %c0_213] : memref<2x8x32xf32, #tpu.memory_space<vmem>>, vector<2x1x32xf32>
    %431 = vector.shape_cast %430 : vector<2x1x32xf32> to vector<2x32xf32>
    %432 = vector.shape_cast %429 : vector<2x32xf32> to vector<2x1x32xf32>
    tpu.vector_store %arg8[%c0_211, %c7_212, %c0_213], %432 {strides = array<i32>} : memref<2x8x32xf32, #tpu.memory_space<vmem>>, vector<2x1x32xf32>,
    return
  }
}

</mosaic_0001>

<llo_original>
// kernel: feature_extractor_forward.1
$region0: #{feature_extractor_forward.1}
  #allocation0 [shape = 'u32[]', space=smem, size = 0x4, offset = 0x4, fixed_abs, tag = 'smem constant byte address 0x4 - core index']
  #allocation1 [shape = 'u32[144,128]{1,0:T(1,128)}', space=vmem, size = 0x12000, scoped, tag = 'internal scratch']
  #allocation2 [shape = 'f32[4,5,5,16,8]{4,3,2,1,0:T(8,128)}', space=vmem, size = 0xc8000, scoped, tag = 'scratch operand']
  %s0 = inlined_call_operand.vmem [shape: f32[1024,40], index: 0, kind: input, shape index: {}]
  %s1 = inlined_call_operand.vmem [shape: f32[40,8], index: 1, kind: input, shape index: {}]
  %s2 = inlined_call_operand.vmem [shape: f32[1,8], index: 2, kind: input, shape index: {}]
  %s3 = inlined_call_operand.vmem [shape: f32[9,8,16], index: 3, kind: input, shape index: {}]
  %s4 = inlined_call_operand.vmem [shape: f32[1,16], index: 4, kind: input, shape index: {}]
  %s5 = inlined_call_operand.vmem [shape: f32[16,16,128], index: 5, kind: input, shape index: {}]
  %s6 = inlined_call_operand.vmem [shape: f32[1,128], index: 6, kind: input, shape index: {}]
  %s7 = inlined_call_operand.vmem [shape: f32[32,128], index: 7, kind: input, shape index: {}]
  %s8 = inlined_call_operand.hbm [shape: f32[2,8,32], index: 8, kind: output, shape index: {}]
  %s9 = sld [smem:[#allocation0]]
  $region42: #{feature_extractor_forward.1} parent=0
    _
  %s11 = ssub.s32 1, %s9
  %s12 = scalar_select 0, %s11, %s9
  $region1: #{feature_extractor_forward.1} parent=0
    #allocation3 [shape = 'u8[8192]{0}', space=vmem, size = 0x2000, scoped, tag = 'output window, operand 0, single buffered']
    #allocation4 [shape = 's32[1]{0}', space=sflag, size = 0x4, scoped, tag = 'scoped memory for feature_extractor_forward.1']
    %13 = vsyncpa [#allocation4], 0
    // Predicated region
    $region2: #{feature_extractor_forward.1} parent=1 // pred_check
      _
    $region3: #{feature_extractor_forward.1} parent=1 // pred_check_branch
      %15 = sbr.rel (0) target = $region5
    $region4: #{feature_extractor_forward.1} parent=1 // pred_region
      _
    $region5: #{feature_extractor_forward.1} parent=1 // pred_fallthru
      _
    // Predicated region
    $region6: #{feature_extractor_forward.1} parent=1 // pred_check
      _
    $region7: #{feature_extractor_forward.1} parent=1 // pred_check_branch
      %17 = sbr.rel (0) target = $region9
    $region8: #{feature_extractor_forward.1} parent=1 // pred_region
      _
    $region9: #{feature_extractor_forward.1} parent=1 // pred_fallthru
      _
    // Predicated region
    $region10: #{feature_extractor_forward.1} parent=1 // pred_check
      _
    $region11: #{feature_extractor_forward.1} parent=1 // pred_check_branch
      %19 = sbr.rel (0) target = $region13
    $region12: #{feature_extractor_forward.1} parent=1 // pred_region
      _
    $region13: #{feature_extractor_forward.1} parent=1 // pred_fallthru
      _
    // Predicated region
    $region14: #{feature_extractor_forward.1} parent=1 // pred_check
      _
    $region15: #{feature_extractor_forward.1} parent=1 // pred_check_branch
      %21 = sbr.rel (0) target = $region17
    $region16: #{feature_extractor_forward.1} parent=1 // pred_region
      _
    $region17: #{feature_extractor_forward.1} parent=1 // pred_fallthru
      _
    // Predicated region
    $region18: #{feature_extractor_forward.1} parent=1 // pred_check
      _
    $region19: #{feature_extractor_forward.1} parent=1 // pred_check_branch
      %23 = sbr.rel (0) target = $region21
    $region20: #{feature_extractor_forward.1} parent=1 // pred_region
      _
    $region21: #{feature_extractor_forward.1} parent=1 // pred_fallthru
      _
    // Predicated region
    $region22: #{feature_extractor_forward.1} parent=1 // pred_check
      _
    $region23: #{feature_extractor_forward.1} parent=1 // pred_check_branch
      %25 = sbr.rel (0) target = $region25
    $region24: #{feature_extractor_forward.1} parent=1 // pred_region
      _
    $region25: #{feature_extractor_forward.1} parent=1 // pred_fallthru
      _
    // Predicated region
    $region26: #{feature_extractor_forward.1} parent=1 // pred_check
      _
    $region27: #{feature_extractor_forward.1} parent=1 // pred_check_branch
      %27 = sbr.rel (0) target = $region29
    $region28: #{feature_extractor_forward.1} parent=1 // pred_region
      _
    $region29: #{feature_extractor_forward.1} parent=1 // pred_fallthru
      _
    // Predicated region
    $region30: #{feature_extractor_forward.1} parent=1 // pred_check
      _
    $region31: #{feature_extractor_forward.1} parent=1 // pred_check_branch
      %29 = sbr.rel (0) target = $region33
    $region32: #{feature_extractor_forward.1} parent=1 // pred_region
      _
    $region33: #{feature_extractor_forward.1} parent=1 // pred_fallthru
      _
    %v30 = vld [vmem:[%s0] sm:$0xff]
    %v31 = vld [vmem:[%s0 + $0x8] sm:$0xff]
    %v32 = vld [vmem:[%s0 + $0x10] sm:$0xff]
    %v33 = vld [vmem:[%s0 + $0x18] sm:$0xff]
    %v34 = vld [vmem:[%s0 + $0x20] sm:$0xff]
    %v35 = vld [vmem:[%s0 + $0x28] sm:$0xff]
    %v36 = vld [vmem:[%s0 + $0x30] sm:$0xff]
    %v37 = vld [vmem:[%s0 + $0x38] sm:$0xff]
    %v38 = vld [vmem:[%s0 + $0x40] sm:$0xff]
    %v39 = vld [vmem:[%s0 + $0x48] sm:$0xff]
    %v40 = vld [vmem:[%s0 + $0x50] sm:$0xff]
    %v41 = vld [vmem:[%s0 + $0x58] sm:$0xff]
    %v42 = vld [vmem:[%s0 + $0x60] sm:$0xff]
    %v43 = vld [vmem:[%s0 + $0x68] sm:$0xff]
    %v44 = vld [vmem:[%s0 + $0x70] sm:$0xff]
    %v45 = vld [vmem:[%s0 + $0x78] sm:$0xff]
    %v46 = vld [vmem:[%s0 + $0x80] sm:$0xff]
    %v47 = vld [vmem:[%s0 + $0x88] sm:$0xff]
    %v48 = vld [vmem:[%s0 + $0x90] sm:$0xff]
    %v49 = vld [vmem:[%s0 + $0x98] sm:$0xff]
    %v50 = vld [vmem:[%s0 + $0xa0] sm:$0xff]
    %v51 = vld [vmem:[%s0 + $0xa8] sm:$0xff]
    %v52 = vld [vmem:[%s0 + $0xb0] sm:$0xff]
    %v53 = vld [vmem:[%s0 + $0xb8] sm:$0xff]
    %v54 = vld [vmem:[%s0 + $0xc0] sm:$0xff]
    %v55 = vld [vmem:[%s0 + $0xc8] sm:$0xff]
    %v56 = vld [vmem:[%s0 + $0xd0] sm:$0xff]
    %v57 = vld [vmem:[%s0 + $0xd8] sm:$0xff]
    %v58 = vld [vmem:[%s0 + $0xe0] sm:$0xff]
    %v59 = vld [vmem:[%s0 + $0xe8] sm:$0xff]
    %v60 = vld [vmem:[%s0 + $0xf0] sm:$0xff]
    %v61 = vld [vmem:[%s0 + $0xf8] sm:$0xff]
    %v62 = vld [vmem:[%s0 + $0x100] sm:$0xff]
    %v63 = vld [vmem:[%s0 + $0x108] sm:$0xff]
    %v64 = vld [vmem:[%s0 + $0x110] sm:$0xff]
    %v65 = vld [vmem:[%s0 + $0x118] sm:$0xff]
    %v66 = vld [vmem:[%s0 + $0x120] sm:$0xff]
    %v67 = vld [vmem:[%s0 + $0x128] sm:$0xff]
    %v68 = vld [vmem:[%s0 + $0x130] sm:$0xff]
    %v69 = vld [vmem:[%s0 + $0x138] sm:$0xff]
    %v70 = vld [vmem:[%s0 + $0x140] sm:$0xff]
    %v71 = vld [vmem:[%s0 + $0x148] sm:$0xff]
    %v72 = vld [vmem:[%s0 + $0x150] sm:$0xff]
    %v73 = vld [vmem:[%s0 + $0x158] sm:$0xff]
    %v74 = vld [vmem:[%s0 + $0x160] sm:$0xff]
    %v75 = vld [vmem:[%s0 + $0x168] sm:$0xff]
    %v76 = vld [vmem:[%s0 + $0x170] sm:$0xff]
    %v77 = vld [vmem:[%s0 + $0x178] sm:$0xff]
    %v78 = vld [vmem:[%s0 + $0x180] sm:$0xff]
    %v79 = vld [vmem:[%s0 + $0x188] sm:$0xff]
    %v80 = vld [vmem:[%s0 + $0x190] sm:$0xff]
    %v81 = vld [vmem:[%s0 + $0x198] sm:$0xff]
    %v82 = vld [vmem:[%s0 + $0x1a0] sm:$0xff]
    %v83 = vld [vmem:[%s0 + $0x1a8] sm:$0xff]
    %v84 = vld [vmem:[%s0 + $0x1b0] sm:$0xff]
    %v85 = vld [vmem:[%s0 + $0x1b8] sm:$0xff]
    %v86 = vld [vmem:[%s0 + $0x1c0] sm:$0xff]
    %v87 = vld [vmem:[%s0 + $0x1c8] sm:$0xff]
    %v88 = vld [vmem:[%s0 + $0x1d0] sm:$0xff]
    %v89 = vld [vmem:[%s0 + $0x1d8] sm:$0xff]
    %v90 = vld [vmem:[%s0 + $0x1e0] sm:$0xff]
    %v91 = vld [vmem:[%s0 + $0x1e8] sm:$0xff]
    %v92 = vld [vmem:[%s0 + $0x1f0] sm:$0xff]
    %v93 = vld [vmem:[%s0 + $0x1f8] sm:$0xff]
    %v94 = vld [vmem:[%s0 + $0x200] sm:$0xff]
    %v95 = vld [vmem:[%s0 + $0x208] sm:$0xff]
    %v96 = vld [vmem:[%s0 + $0x210] sm:$0xff]
    %v97 = vld [vmem:[%s0 + $0x218] sm:$0xff]
    %v98 = vld [vmem:[%s0 + $0x220] sm:$0xff]
    %v99 = vld [vmem:[%s0 + $0x228] sm:$0xff]
    %v100 = vld [vmem:[%s0 + $0x230] sm:$0xff]
    %v101 = vld [vmem:[%s0 + $0x238] sm:$0xff]
    %v102 = vld [vmem:[%s0 + $0x240] sm:$0xff]
    %v103 = vld [vmem:[%s0 + $0x248] sm:$0xff]
    %v104 = vld [vmem:[%s0 + $0x250] sm:$0xff]
    %v105 = vld [vmem:[%s0 + $0x258] sm:$0xff]
    %v106 = vld [vmem:[%s0 + $0x260] sm:$0xff]
    %v107 = vld [vmem:[%s0 + $0x268] sm:$0xff]
    %v108 = vld [vmem:[%s0 + $0x270] sm:$0xff]
    %v109 = vld [vmem:[%s0 + $0x278] sm:$0xff]
    %v110 = vld [vmem:[%s0 + $0x280] sm:$0xff]
    %v111 = vld [vmem:[%s0 + $0x288] sm:$0xff]
    %v112 = vld [vmem:[%s0 + $0x290] sm:$0xff]
    %v113 = vld [vmem:[%s0 + $0x298] sm:$0xff]
    %v114 = vld [vmem:[%s0 + $0x2a0] sm:$0xff]
    %v115 = vld [vmem:[%s0 + $0x2a8] sm:$0xff]
    %v116 = vld [vmem:[%s0 + $0x2b0] sm:$0xff]
    %v117 = vld [vmem:[%s0 + $0x2b8] sm:$0xff]
    %v118 = vld [vmem:[%s0 + $0x2c0] sm:$0xff]
    %v119 = vld [vmem:[%s0 + $0x2c8] sm:$0xff]
    %v120 = vld [vmem:[%s0 + $0x2d0] sm:$0xff]
    %v121 = vld [vmem:[%s0 + $0x2d8] sm:$0xff]
    %v122 = vld [vmem:[%s0 + $0x2e0] sm:$0xff]
    %v123 = vld [vmem:[%s0 + $0x2e8] sm:$0xff]
    %v124 = vld [vmem:[%s0 + $0x2f0] sm:$0xff]
    %v125 = vld [vmem:[%s0 + $0x2f8] sm:$0xff]
    %v126 = vld [vmem:[%s0 + $0x300] sm:$0xff]
    %v127 = vld [vmem:[%s0 + $0x308] sm:$0xff]
    %v128 = vld [vmem:[%s0 + $0x310] sm:$0xff]
    %v129 = vld [vmem:[%s0 + $0x318] sm:$0xff]
    %v130 = vld [vmem:[%s0 + $0x320] sm:$0xff]
    %v131 = vld [vmem:[%s0 + $0x328] sm:$0xff]
    %v132 = vld [vmem:[%s0 + $0x330] sm:$0xff]
    %v133 = vld [vmem:[%s0 + $0x338] sm:$0xff]
    %v134 = vld [vmem:[%s0 + $0x340] sm:$0xff]
    %v135 = vld [vmem:[%s0 + $0x348] sm:$0xff]
    %v136 = vld [vmem:[%s0 + $0x350] sm:$0xff]
    %v137 = vld [vmem:[%s0 + $0x358] sm:$0xff]
    %v138 = vld [vmem:[%s0 + $0x360] sm:$0xff]
    %v139 = vld [vmem:[%s0 + $0x368] sm:$0xff]
    %v140 = vld [vmem:[%s0 + $0x370] sm:$0xff]
    %v141 = vld [vmem:[%s0 + $0x378] sm:$0xff]
    %v142 = vld [vmem:[%s0 + $0x380] sm:$0xff]
    %v143 = vld [vmem:[%s0 + $0x388] sm:$0xff]
    %v144 = vld [vmem:[%s0 + $0x390] sm:$0xff]
    %v145 = vld [vmem:[%s0 + $0x398] sm:$0xff]
    %v146 = vld [vmem:[%s0 + $0x3a0] sm:$0xff]
    %v147 = vld [vmem:[%s0 + $0x3a8] sm:$0xff]
    %v148 = vld [vmem:[%s0 + $0x3b0] sm:$0xff]
    %v149 = vld [vmem:[%s0 + $0x3b8] sm:$0xff]
    %v150 = vld [vmem:[%s0 + $0x3c0] sm:$0xff]
    %v151 = vld [vmem:[%s0 + $0x3c8] sm:$0xff]
    %v152 = vld [vmem:[%s0 + $0x3d0] sm:$0xff]
    %v153 = vld [vmem:[%s0 + $0x3d8] sm:$0xff]
    %v154 = vld [vmem:[%s0 + $0x3e0] sm:$0xff]
    %v155 = vld [vmem:[%s0 + $0x3e8] sm:$0xff]
    %v156 = vld [vmem:[%s0 + $0x3f0] sm:$0xff]
    %v157 = vld [vmem:[%s0 + $0x3f8] sm:$0xff]
    %v158 = vld [vmem:[%s1] sm:$0xff]
    %v159 = vld [vmem:[%s1 + $0x8] sm:$0xff]
    %v160 = vld [vmem:[%s1 + $0x10] sm:$0xff]
    %v161 = vld [vmem:[%s1 + $0x18] sm:$0xff]
    %v162 = vld [vmem:[%s1 + $0x20] sm:$0xff]
    %v163 = vld [vmem:[%s2] sm:$0x1]
    %v165 = vlaneseq
    %v166 = vshrl.u32 %v165, 7
    %v167 = vsub.s32 0, %v166
    %v168 = vrot.slane %v163, %v167
    %vm170 = vcmask 326656
    %v172 = vsel %vm170, %v30, 0
    %v175 = vsel %vm170, %v31, 0
    %v178 = vsel %vm170, %v32, 0
    %v181 = vsel %vm170, %v33, 0
    %v184 = vsel %vm170, %v34, 0
    %v187 = vsel %vm170, %v35, 0
    %v190 = vsel %vm170, %v36, 0
    %v193 = vsel %vm170, %v37, 0
    %v196 = vsel %vm170, %v38, 0
    %v199 = vsel %vm170, %v39, 0
    %v202 = vsel %vm170, %v40, 0
    %v205 = vsel %vm170, %v41, 0
    %v208 = vsel %vm170, %v42, 0
    %v211 = vsel %vm170, %v43, 0
    %v214 = vsel %vm170, %v44, 0
    %v217 = vsel %vm170, %v45, 0
    %v220 = vsel %vm170, %v46, 0
    %v223 = vsel %vm170, %v47, 0
    %v226 = vsel %vm170, %v48, 0
    %v229 = vsel %vm170, %v49, 0
    %v232 = vsel %vm170, %v50, 0
    %v235 = vsel %vm170, %v51, 0
    %v238 = vsel %vm170, %v52, 0
    %v241 = vsel %vm170, %v53, 0
    %v244 = vsel %vm170, %v54, 0
    %v247 = vsel %vm170, %v55, 0
    %v250 = vsel %vm170, %v56, 0
    %v253 = vsel %vm170, %v57, 0
    %v256 = vsel %vm170, %v58, 0
    %v259 = vsel %vm170, %v59, 0
    %v262 = vsel %vm170, %v60, 0
    %v265 = vsel %vm170, %v61, 0
    %v268 = vsel %vm170, %v62, 0
    %v271 = vsel %vm170, %v63, 0
    %v274 = vsel %vm170, %v64, 0
    %v277 = vsel %vm170, %v65, 0
    %v280 = vsel %vm170, %v66, 0
    %v283 = vsel %vm170, %v67, 0
    %v286 = vsel %vm170, %v68, 0
    %v289 = vsel %vm170, %v69, 0
    %v292 = vsel %vm170, %v70, 0
    %v295 = vsel %vm170, %v71, 0
    %v298 = vsel %vm170, %v72, 0
    %v301 = vsel %vm170, %v73, 0
    %v304 = vsel %vm170, %v74, 0
    %v307 = vsel %vm170, %v75, 0
    %v310 = vsel %vm170, %v76, 0
    %v313 = vsel %vm170, %v77, 0
    %v316 = vsel %vm170, %v78, 0
    %v319 = vsel %vm170, %v79, 0
    %v322 = vsel %vm170, %v80, 0
    %v325 = vsel %vm170, %v81, 0
    %v328 = vsel %vm170, %v82, 0
    %v331 = vsel %vm170, %v83, 0
    %v334 = vsel %vm170, %v84, 0
    %v337 = vsel %vm170, %v85, 0
    %v340 = vsel %vm170, %v86, 0
    %v343 = vsel %vm170, %v87, 0
    %v346 = vsel %vm170, %v88, 0
    %v349 = vsel %vm170, %v89, 0
    %v352 = vsel %vm170, %v90, 0
    %v355 = vsel %vm170, %v91, 0
    %v358 = vsel %vm170, %v92, 0
    %v361 = vsel %vm170, %v93, 0
    %v364 = vsel %vm170, %v94, 0
    %v367 = vsel %vm170, %v95, 0
    %v370 = vsel %vm170, %v96, 0
    %v373 = vsel %vm170, %v97, 0
    %v376 = vsel %vm170, %v98, 0
    %v379 = vsel %vm170, %v99, 0
    %v382 = vsel %vm170, %v100, 0
    %v385 = vsel %vm170, %v101, 0
    %v388 = vsel %vm170, %v102, 0
    %v391 = vsel %vm170, %v103, 0
    %v394 = vsel %vm170, %v104, 0
    %v397 = vsel %vm170, %v105, 0
    %v400 = vsel %vm170, %v106, 0
    %v403 = vsel %vm170, %v107, 0
    %v406 = vsel %vm170, %v108, 0
    %v409 = vsel %vm170, %v109, 0
    %v412 = vsel %vm170, %v110, 0
    %v415 = vsel %vm170, %v111, 0
    %v418 = vsel %vm170, %v112, 0
    %v421 = vsel %vm170, %v113, 0
    %v424 = vsel %vm170, %v114, 0
    %v427 = vsel %vm170, %v115, 0
    %v430 = vsel %vm170, %v116, 0
    %v433 = vsel %vm170, %v117, 0
    %v436 = vsel %vm170, %v118, 0
    %v439 = vsel %vm170, %v119, 0
    %v442 = vsel %vm170, %v120, 0
    %v445 = vsel %vm170, %v121, 0
    %v448 = vsel %vm170, %v122, 0
    %v451 = vsel %vm170, %v123, 0
    %v454 = vsel %vm170, %v124, 0
    %v457 = vsel %vm170, %v125, 0
    %v460 = vsel %vm170, %v126, 0
    %v463 = vsel %vm170, %v127, 0
    %v466 = vsel %vm170, %v128, 0
    %v469 = vsel %vm170, %v129, 0
    %v472 = vsel %vm170, %v130, 0
    %v475 = vsel %vm170, %v131, 0
    %v478 = vsel %vm170, %v132, 0
    %v481 = vsel %vm170, %v133, 0
    %v484 = vsel %vm170, %v134, 0
    %v487 = vsel %vm170, %v135, 0
    %v490 = vsel %vm170, %v136, 0
    %v493 = vsel %vm170, %v137, 0
    %v496 = vsel %vm170, %v138, 0
    %v499 = vsel %vm170, %v139, 0
    %v502 = vsel %vm170, %v140, 0
    %v505 = vsel %vm170, %v141, 0
    %v508 = vsel %vm170, %v142, 0
    %v511 = vsel %vm170, %v143, 0
    %v514 = vsel %vm170, %v144, 0
    %v517 = vsel %vm170, %v145, 0
    %v520 = vsel %vm170, %v146, 0
    %v523 = vsel %vm170, %v147, 0
    %v526 = vsel %vm170, %v148, 0
    %v529 = vsel %vm170, %v149, 0
    %v532 = vsel %vm170, %v150, 0
    %v535 = vsel %vm170, %v151, 0
    %v538 = vsel %vm170, %v152, 0
    %v541 = vsel %vm170, %v153, 0
    %v544 = vsel %vm170, %v154, 0
    %v547 = vsel %vm170, %v155, 0
    %v550 = vsel %vm170, %v156, 0
    %v553 = vsel %vm170, %v157, 0
    %555 = vmatprep.subr.mxu0 0.0
    %556 = vmatpush1.msra.mxu0 %v158
    %557 = vmatprep.subr.mxu0 0.0
    %558 = vmatpush1.msra.mxu0 %v159
    %559 = vmatprep.subr.mxu0 0.0
    %560 = vmatpush1.msra.mxu0 %v160
    %561 = vmatprep.subr.mxu0 0.0
    %562 = vmatpush1.msra.mxu0 %v161
    %563 = vmatprep.subr.mxu0 0.0
    %564 = vmatpush1.msra.mxu0 %v162
    %565 = vmatprep.subr.mxu0 0.0
    %566 = vmatpush1.msra.mxu0 0.0
    %567 = vmatprep.subr.mxu0 0.0
    %568 = vmatpush1.msra.mxu0 0.0
    %569 = vmatprep.subr.mxu0 0.0
    %570 = vmatpush1.msra.mxu0 0.0
    %571 = vmatprep.subr.mxu0 0.0
    %572 = vmatpush1.msra.mxu0 0.0
    %573 = vmatprep.subr.mxu0 0.0
    %574 = vmatpush1.msra.mxu0 0.0
    %575 = vmatprep.subr.mxu0 0.0
    %576 = vmatpush1.msra.mxu0 0.0
    %577 = vmatprep.subr.mxu0 0.0
    %578 = vmatpush1.msra.mxu0 0.0
    %579 = vmatprep.subr.mxu0 0.0
    %580 = vmatpush1.msra.mxu0 0.0
    %581 = vmatprep.subr.mxu0 0.0
    %582 = vmatpush1.msra.mxu0 0.0
    %583 = vmatprep.subr.mxu0 0.0
    %584 = vmatpush1.msra.mxu0 0.0
    %585 = vmatprep.subr.mxu0 0.0
    %586 = vmatpush1.msra.mxu0 0.0
    %587 = vmatprep.subr.mxu0 0.0
    %588 = vmatpush1.msra.mxu0 0.0
    %589 = vmatprep.subr.mxu0 0.0
    %590 = vmatpush1.msra.mxu0 0.0
    %591 = vmatprep.subr.mxu0 0.0
    %592 = vmatpush1.msra.mxu0 0.0
    %593 = vmatprep.subr.mxu0 0.0
    %594 = vmatpush1.msra.mxu0 0.0
    %595 = vmatprep.subr.mxu0 0.0
    %596 = vmatpush1.msra.mxu0 0.0
    %597 = vmatprep.subr.mxu0 0.0
    %598 = vmatpush1.msra.mxu0 0.0
    %599 = vmatprep.subr.mxu0 0.0
    %600 = vmatpush1.msra.mxu0 0.0
    %601 = vmatprep.subr.mxu0 0.0
    %602 = vmatpush1.msra.mxu0 0.0
    %603 = vmatprep.subr.mxu0 0.0
    %604 = vmatpush1.msra.mxu0 0.0
    %605 = vmatprep.subr.mxu0 0.0
    %606 = vmatpush1.msra.mxu0 0.0
    %607 = vmatprep.subr.mxu0 0.0
    %608 = vmatpush1.msra.mxu0 0.0
    %609 = vmatprep.subr.mxu0 0.0
    %610 = vmatpush1.msra.mxu0 0.0
    %611 = vmatprep.subr.mxu0 0.0
    %612 = vmatpush1.msra.mxu0 0.0
    %613 = vmatprep.subr.mxu0 0.0
    %614 = vmatpush1.msra.mxu0 0.0
    %615 = vmatprep.subr.mxu0 0.0
    %616 = vmatpush1.msra.mxu0 0.0
    %617 = vmatprep.subr.mxu0 0.0
    %618 = vmatpush1.msra.mxu0 0.0
    %619 = vmatprep.mubr.f32.mxu0 0.0
    %620 = vmatmul.mubr.f32.gmra.mrb[0].mxu0 %v172
    %v621 = vpop.f32.mrb[0].mxu0
    %v622 = vadd.f32 %v168, %v621
    %v623 = vpop.f32.mrb[0].mxu0
    %624 = vmatprep.mubr.f32.mxu0 0.0
    %625 = vmatmul.mubr.f32.gmra.mrb[0].mxu0 %v175
    %v626 = vpop.f32.mrb[0].mxu0
    %v627 = vadd.f32 %v168, %v626
    %v628 = vpop.f32.mrb[0].mxu0
    %629 = vmatprep.mubr.f32.mxu0 0.0
    %630 = vmatmul.mubr.f32.gmra.mrb[0].mxu0 %v178
    %v631 = vpop.f32.mrb[0].mxu0
    %v632 = vadd.f32 %v168, %v631
    %v633 = vpop.f32.mrb[0].mxu0
    %634 = vmatprep.mubr.f32.mxu0 0.0
    %635 = vmatmul.mubr.f32.gmra.mrb[0].mxu0 %v181
    %v636 = vpop.f32.mrb[0].mxu0
    %v637 = vadd.f32 %v168, %v636
    %v638 = vpop.f32.mrb[0].mxu0
    %639 = vmatprep.mubr.f32.mxu0 0.0
    %640 = vmatmul.mubr.f32.gmra.mrb[0].mxu0 %v184
    %v641 = vpop.f32.mrb[0].mxu0
    %v642 = vadd.f32 %v168, %v641
    %v643 = vpop.f32.mrb[0].mxu0
    %644 = vmatprep.mubr.f32.mxu0 0.0
    %645 = vmatmul.mubr.f32.gmra.mrb[0].mxu0 %v187
    %v646 = vpop.f32.mrb[0].mxu0
    %v647 = vadd.f32 %v168, %v646
    %v648 = vpop.f32.mrb[0].mxu0
    %649 = vmatprep.mubr.f32.mxu0 0.0
    %650 = vmatmul.mubr.f32.gmra.mrb[0].mxu0 %v190
    %v651 = vpop.f32.mrb[0].mxu0
    %v652 = vadd.f32 %v168, %v651
    %v653 = vpop.f32.mrb[0].mxu0
    %654 = vmatprep.mubr.f32.mxu0 0.0
    %655 = vmatmul.mubr.f32.gmra.mrb[0].mxu0 %v193
    %v656 = vpop.f32.mrb[0].mxu0
    %v657 = vadd.f32 %v168, %v656
    %v658 = vpop.f32.mrb[0].mxu0
    %659 = vmatprep.mubr.f32.mxu0 0.0
    %660 = vmatmul.mubr.f32.gmra.mrb[0].mxu0 %v196
    %v661 = vpop.f32.mrb[0].mxu0
    %v662 = vadd.f32 %v168, %v661
    %v663 = vpop.f32.mrb[0].mxu0
    %664 = vmatprep.mubr.f32.mxu0 0.0
    %665 = vmatmul.mubr.f32.gmra.mrb[0].mxu0 %v199
    %v666 = vpop.f32.mrb[0].mxu0
    %v667 = vadd.f32 %v168, %v666
    %v668 = vpop.f32.mrb[0].mxu0
    %669 = vmatprep.mubr.f32.mxu0 0.0
    %670 = vmatmul.mubr.f32.gmra.mrb[0].mxu0 %v202
    %v671 = vpop.f32.mrb[0].mxu0
    %v672 = vadd.f32 %v168, %v671
    %v673 = vpop.f32.mrb[0].mxu0
    %674 = vmatprep.mubr.f32.mxu0 0.0
    %675 = vmatmul.mubr.f32.gmra.mrb[0].mxu0 %v205
    %v676 = vpop.f32.mrb[0].mxu0
    %v677 = vadd.f32 %v168, %v676
    %v678 = vpop.f32.mrb[0].mxu0
    %679 = vmatprep.mubr.f32.mxu0 0.0
    %680 = vmatmul.mubr.f32.gmra.mrb[0].mxu0 %v208
    %v681 = vpop.f32.mrb[0].mxu0
    %v682 = vadd.f32 %v168, %v681
    %v683 = vpop.f32.mrb[0].mxu0
    %684 = vmatprep.mubr.f32.mxu0 0.0
    %685 = vmatmul.mubr.f32.gmra.mrb[0].mxu0 %v211
    %v686 = vpop.f32.mrb[0].mxu0
    %v687 = vadd.f32 %v168, %v686
    %v688 = vpop.f32.mrb[0].mxu0
    %689 = vmatprep.mubr.f32.mxu0 0.0
    %690 = vmatmul.mubr.f32.gmra.mrb[0].mxu0 %v214
    %v691 = vpop.f32.mrb[0].mxu0
    %v692 = vadd.f32 %v168, %v691
    %v693 = vpop.f32.mrb[0].mxu0
    %694 = vmatprep.mubr.f32.mxu0 0.0
    %695 = vmatmul.mubr.f32.gmra.mrb[0].mxu0 %v217
    %v696 = vpop.f32.mrb[0].mxu0
    %v697 = vadd.f32 %v168, %v696
    %v698 = vpop.f32.mrb[0].mxu0
    %699 = vmatprep.mubr.f32.mxu0 0.0
    %700 = vmatmul.mubr.f32.gmra.mrb[0].mxu0 %v220
    %v701 = vpop.f32.mrb[0].mxu0
    %v702 = vadd.f32 %v168, %v701
    %v703 = vpop.f32.mrb[0].mxu0
    %704 = vmatprep.mubr.f32.mxu0 0.0
    %705 = vmatmul.mubr.f32.gmra.mrb[0].mxu0 %v223
    %v706 = vpop.f32.mrb[0].mxu0
    %v707 = vadd.f32 %v168, %v706
    %v708 = vpop.f32.mrb[0].mxu0
    %709 = vmatprep.mubr.f32.mxu0 0.0
    %710 = vmatmul.mubr.f32.gmra.mrb[0].mxu0 %v226
    %v711 = vpop.f32.mrb[0].mxu0
    %v712 = vadd.f32 %v168, %v711
    %v713 = vpop.f32.mrb[0].mxu0
    %714 = vmatprep.mubr.f32.mxu0 0.0
    %715 = vmatmul.mubr.f32.gmra.mrb[0].mxu0 %v229
    %v716 = vpop.f32.mrb[0].mxu0
    %v717 = vadd.f32 %v168, %v716
    %v718 = vpop.f32.mrb[0].mxu0
    %719 = vmatprep.mubr.f32.mxu0 0.0
    %720 = vmatmul.mubr.f32.gmra.mrb[0].mxu0 %v232
    %v721 = vpop.f32.mrb[0].mxu0
    %v722 = vadd.f32 %v168, %v721
    %v723 = vpop.f32.mrb[0].mxu0
    %724 = vmatprep.mubr.f32.mxu0 0.0
    %725 = vmatmul.mubr.f32.gmra.mrb[0].mxu0 %v235
    %v726 = vpop.f32.mrb[0].mxu0
    %v727 = vadd.f32 %v168, %v726
    %v728 = vpop.f32.mrb[0].mxu0
    %729 = vmatprep.mubr.f32.mxu0 0.0
    %730 = vmatmul.mubr.f32.gmra.mrb[0].mxu0 %v238
    %v731 = vpop.f32.mrb[0].mxu0
    %v732 = vadd.f32 %v168, %v731
    %v733 = vpop.f32.mrb[0].mxu0
    %734 = vmatprep.mubr.f32.mxu0 0.0
    %735 = vmatmul.mubr.f32.gmra.mrb[0].mxu0 %v241
    %v736 = vpop.f32.mrb[0].mxu0
    %v737 = vadd.f32 %v168, %v736
    %v738 = vpop.f32.mrb[0].mxu0
    %739 = vmatprep.mubr.f32.mxu0 0.0
    %740 = vmatmul.mubr.f32.gmra.mrb[0].mxu0 %v244
    %v741 = vpop.f32.mrb[0].mxu0
    %v742 = vadd.f32 %v168, %v741
    %v743 = vpop.f32.mrb[0].mxu0
    %744 = vmatprep.mubr.f32.mxu0 0.0
    %745 = vmatmul.mubr.f32.gmra.mrb[0].mxu0 %v247
    %v746 = vpop.f32.mrb[0].mxu0
    %v747 = vadd.f32 %v168, %v746
    %v748 = vpop.f32.mrb[0].mxu0
    %749 = vmatprep.mubr.f32.mxu0 0.0
    %750 = vmatmul.mubr.f32.gmra.mrb[0].mxu0 %v250
    %v751 = vpop.f32.mrb[0].mxu0
    %v752 = vadd.f32 %v168, %v751
    %v753 = vpop.f32.mrb[0].mxu0
    %754 = vmatprep.mubr.f32.mxu0 0.0
    %755 = vmatmul.mubr.f32.gmra.mrb[0].mxu0 %v253
    %v756 = vpop.f32.mrb[0].mxu0
    %v757 = vadd.f32 %v168, %v756
    %v758 = vpop.f32.mrb[0].mxu0
    %759 = vmatprep.mubr.f32.mxu0 0.0
    %760 = vmatmul.mubr.f32.gmra.mrb[0].mxu0 %v256
    %v761 = vpop.f32.mrb[0].mxu0
    %v762 = vadd.f32 %v168, %v761
    %v763 = vpop.f32.mrb[0].mxu0
    %764 = vmatprep.mubr.f32.mxu0 0.0
    %765 = vmatmul.mubr.f32.gmra.mrb[0].mxu0 %v259
    %v766 = vpop.f32.mrb[0].mxu0
    %v767 = vadd.f32 %v168, %v766
    %v768 = vpop.f32.mrb[0].mxu0
    %769 = vmatprep.mubr.f32.mxu0 0.0
    %770 = vmatmul.mubr.f32.gmra.mrb[0].mxu0 %v262
    %v771 = vpop.f32.mrb[0].mxu0
    %v772 = vadd.f32 %v168, %v771
    %v773 = vpop.f32.mrb[0].mxu0
    %774 = vmatprep.mubr.f32.mxu0 0.0
    %775 = vmatmul.mubr.f32.gmra.mrb[0].mxu0 %v265
    %v776 = vpop.f32.mrb[0].mxu0
    %v777 = vadd.f32 %v168, %v776
    %v778 = vpop.f32.mrb[0].mxu0
    %779 = vmatprep.mubr.f32.mxu0 0.0
    %780 = vmatmul.mubr.f32.gmra.mrb[0].mxu0 %v268
    %v781 = vpop.f32.mrb[0].mxu0
    %v782 = vadd.f32 %v168, %v781
    %v783 = vpop.f32.mrb[0].mxu0
    %784 = vmatprep.mubr.f32.mxu0 0.0
    %785 = vmatmul.mubr.f32.gmra.mrb[0].mxu0 %v271
    %v786 = vpop.f32.mrb[0].mxu0
    %v787 = vadd.f32 %v168, %v786
    %v788 = vpop.f32.mrb[0].mxu0
    %789 = vmatprep.mubr.f32.mxu0 0.0
    %790 = vmatmul.mubr.f32.gmra.mrb[0].mxu0 %v274
    %v791 = vpop.f32.mrb[0].mxu0
    %v792 = vadd.f32 %v168, %v791
    %v793 = vpop.f32.mrb[0].mxu0
    %794 = vmatprep.mubr.f32.mxu0 0.0
    %795 = vmatmul.mubr.f32.gmra.mrb[0].mxu0 %v277
    %v796 = vpop.f32.mrb[0].mxu0
    %v797 = vadd.f32 %v168, %v796
    %v798 = vpop.f32.mrb[0].mxu0
    %799 = vmatprep.mubr.f32.mxu0 0.0
    %800 = vmatmul.mubr.f32.gmra.mrb[0].mxu0 %v280
    %v801 = vpop.f32.mrb[0].mxu0
    %v802 = vadd.f32 %v168, %v801
    %v803 = vpop.f32.mrb[0].mxu0
    %804 = vmatprep.mubr.f32.mxu0 0.0
    %805 = vmatmul.mubr.f32.gmra.mrb[0].mxu0 %v283
    %v806 = vpop.f32.mrb[0].mxu0
    %v807 = vadd.f32 %v168, %v806
    %v808 = vpop.f32.mrb[0].mxu0
    %809 = vmatprep.mubr.f32.mxu0 0.0
    %810 = vmatmul.mubr.f32.gmra.mrb[0].mxu0 %v286
    %v811 = vpop.f32.mrb[0].mxu0
    %v812 = vadd.f32 %v168, %v811
    %v813 = vpop.f32.mrb[0].mxu0
    %814 = vmatprep.mubr.f32.mxu0 0.0
    %815 = vmatmul.mubr.f32.gmra.mrb[0].mxu0 %v289
    %v816 = vpop.f32.mrb[0].mxu0
    %v817 = vadd.f32 %v168, %v816
    %v818 = vpop.f32.mrb[0].mxu0
    %819 = vmatprep.mubr.f32.mxu0 0.0
    %820 = vmatmul.mubr.f32.gmra.mrb[0].mxu0 %v292
    %v821 = vpop.f32.mrb[0].mxu0
    %v822 = vadd.f32 %v168, %v821
    %v823 = vpop.f32.mrb[0].mxu0
    %824 = vmatprep.mubr.f32.mxu0 0.0
    %825 = vmatmul.mubr.f32.gmra.mrb[0].mxu0 %v295
    %v826 = vpop.f32.mrb[0].mxu0
    %v827 = vadd.f32 %v168, %v826
    %v828 = vpop.f32.mrb[0].mxu0
    %829 = vmatprep.mubr.f32.mxu0 0.0
    %830 = vmatmul.mubr.f32.gmra.mrb[0].mxu0 %v298
    %v831 = vpop.f32.mrb[0].mxu0
    %v832 = vadd.f32 %v168, %v831
    %v833 = vpop.f32.mrb[0].mxu0
    %834 = vmatprep.mubr.f32.mxu0 0.0
    %835 = vmatmul.mubr.f32.gmra.mrb[0].mxu0 %v301
    %v836 = vpop.f32.mrb[0].mxu0
    %v837 = vadd.f32 %v168, %v836
    %v838 = vpop.f32.mrb[0].mxu0
    %839 = vmatprep.mubr.f32.mxu0 0.0
    %840 = vmatmul.mubr.f32.gmra.mrb[0].mxu0 %v304
    %v841 = vpop.f32.mrb[0].mxu0
    %v842 = vadd.f32 %v168, %v841
    %v843 = vpop.f32.mrb[0].mxu0
    %844 = vmatprep.mubr.f32.mxu0 0.0
    %845 = vmatmul.mubr.f32.gmra.mrb[0].mxu0 %v307
    %v846 = vpop.f32.mrb[0].mxu0
    %v847 = vadd.f32 %v168, %v846
    %v848 = vpop.f32.mrb[0].mxu0
    %849 = vmatprep.mubr.f32.mxu0 0.0
    %850 = vmatmul.mubr.f32.gmra.mrb[0].mxu0 %v310
    %v851 = vpop.f32.mrb[0].mxu0
    %v852 = vadd.f32 %v168, %v851
    %v853 = vpop.f32.mrb[0].mxu0
    %854 = vmatprep.mubr.f32.mxu0 0.0
    %855 = vmatmul.mubr.f32.gmra.mrb[0].mxu0 %v313
    %v856 = vpop.f32.mrb[0].mxu0
    %v857 = vadd.f32 %v168, %v856
    %v858 = vpop.f32.mrb[0].mxu0
    %859 = vmatprep.mubr.f32.mxu0 0.0
    %860 = vmatmul.mubr.f32.gmra.mrb[0].mxu0 %v316
    %v861 = vpop.f32.mrb[0].mxu0
    %v862 = vadd.f32 %v168, %v861
    %v863 = vpop.f32.mrb[0].mxu0
    %864 = vmatprep.mubr.f32.mxu0 0.0
    %865 = vmatmul.mubr.f32.gmra.mrb[0].mxu0 %v319
    %v866 = vpop.f32.mrb[0].mxu0
    %v867 = vadd.f32 %v168, %v866
    %v868 = vpop.f32.mrb[0].mxu0
    %869 = vmatprep.mubr.f32.mxu0 0.0
    %870 = vmatmul.mubr.f32.gmra.mrb[0].mxu0 %v322
    %v871 = vpop.f32.mrb[0].mxu0
    %v872 = vadd.f32 %v168, %v871
    %v873 = vpop.f32.mrb[0].mxu0
    %874 = vmatprep.mubr.f32.mxu0 0.0
    %875 = vmatmul.mubr.f32.gmra.mrb[0].mxu0 %v325
    %v876 = vpop.f32.mrb[0].mxu0
    %v877 = vadd.f32 %v168, %v876
    %v878 = vpop.f32.mrb[0].mxu0
    %879 = vmatprep.mubr.f32.mxu0 0.0
    %880 = vmatmul.mubr.f32.gmra.mrb[0].mxu0 %v328
    %v881 = vpop.f32.mrb[0].mxu0
    %v882 = vadd.f32 %v168, %v881
    %v883 = vpop.f32.mrb[0].mxu0
    %884 = vmatprep.mubr.f32.mxu0 0.0
    %885 = vmatmul.mubr.f32.gmra.mrb[0].mxu0 %v331
    %v886 = vpop.f32.mrb[0].mxu0
    %v887 = vadd.f32 %v168, %v886
    %v888 = vpop.f32.mrb[0].mxu0
    %889 = vmatprep.mubr.f32.mxu0 0.0
    %890 = vmatmul.mubr.f32.gmra.mrb[0].mxu0 %v334
    %v891 = vpop.f32.mrb[0].mxu0
    %v892 = vadd.f32 %v168, %v891
    %v893 = vpop.f32.mrb[0].mxu0
    %894 = vmatprep.mubr.f32.mxu0 0.0
    %895 = vmatmul.mubr.f32.gmra.mrb[0].mxu0 %v337
    %v896 = vpop.f32.mrb[0].mxu0
    %v897 = vadd.f32 %v168, %v896
    %v898 = vpop.f32.mrb[0].mxu0
    %899 = vmatprep.mubr.f32.mxu0 0.0
    %900 = vmatmul.mubr.f32.gmra.mrb[0].mxu0 %v340
    %v901 = vpop.f32.mrb[0].mxu0
    %v902 = vadd.f32 %v168, %v901
    %v903 = vpop.f32.mrb[0].mxu0
    %904 = vmatprep.mubr.f32.mxu0 0.0
    %905 = vmatmul.mubr.f32.gmra.mrb[0].mxu0 %v343
    %v906 = vpop.f32.mrb[0].mxu0
    %v907 = vadd.f32 %v168, %v906
    %v908 = vpop.f32.mrb[0].mxu0
    %909 = vmatprep.mubr.f32.mxu0 0.0
    %910 = vmatmul.mubr.f32.gmra.mrb[0].mxu0 %v346
    %v911 = vpop.f32.mrb[0].mxu0
    %v912 = vadd.f32 %v168, %v911
    %v913 = vpop.f32.mrb[0].mxu0
    %914 = vmatprep.mubr.f32.mxu0 0.0
    %915 = vmatmul.mubr.f32.gmra.mrb[0].mxu0 %v349
    %v916 = vpop.f32.mrb[0].mxu0
    %v917 = vadd.f32 %v168, %v916
    %v918 = vpop.f32.mrb[0].mxu0
    %919 = vmatprep.mubr.f32.mxu0 0.0
    %920 = vmatmul.mubr.f32.gmra.mrb[0].mxu0 %v352
    %v921 = vpop.f32.mrb[0].mxu0
    %v922 = vadd.f32 %v168, %v921
    %v923 = vpop.f32.mrb[0].mxu0
    %924 = vmatprep.mubr.f32.mxu0 0.0
    %925 = vmatmul.mubr.f32.gmra.mrb[0].mxu0 %v355
    %v926 = vpop.f32.mrb[0].mxu0
    %v927 = vadd.f32 %v168, %v926
    %v928 = vpop.f32.mrb[0].mxu0
    %929 = vmatprep.mubr.f32.mxu0 0.0
    %930 = vmatmul.mubr.f32.gmra.mrb[0].mxu0 %v358
    %v931 = vpop.f32.mrb[0].mxu0
    %v932 = vadd.f32 %v168, %v931
    %v933 = vpop.f32.mrb[0].mxu0
    %934 = vmatprep.mubr.f32.mxu0 0.0
    %935 = vmatmul.mubr.f32.gmra.mrb[0].mxu0 %v361
    %v936 = vpop.f32.mrb[0].mxu0
    %v937 = vadd.f32 %v168, %v936
    %v938 = vpop.f32.mrb[0].mxu0
    %939 = vmatprep.mubr.f32.mxu0 0.0
    %940 = vmatmul.mubr.f32.gmra.mrb[0].mxu0 %v364
    %v941 = vpop.f32.mrb[0].mxu0
    %v942 = vadd.f32 %v168, %v941
    %v943 = vpop.f32.mrb[0].mxu0
    %944 = vmatprep.mubr.f32.mxu0 0.0
    %945 = vmatmul.mubr.f32.gmra.mrb[0].mxu0 %v367
    %v946 = vpop.f32.mrb[0].mxu0
    %v947 = vadd.f32 %v168, %v946
    %v948 = vpop.f32.mrb[0].mxu0
    %949 = vmatprep.mubr.f32.mxu0 0.0
    %950 = vmatmul.mubr.f32.gmra.mrb[0].mxu0 %v370
    %v951 = vpop.f32.mrb[0].mxu0
    %v952 = vadd.f32 %v168, %v951
    %v953 = vpop.f32.mrb[0].mxu0
    %954 = vmatprep.mubr.f32.mxu0 0.0
    %955 = vmatmul.mubr.f32.gmra.mrb[0].mxu0 %v373
    %v956 = vpop.f32.mrb[0].mxu0
    %v957 = vadd.f32 %v168, %v956
    %v958 = vpop.f32.mrb[0].mxu0
    %959 = vmatprep.mubr.f32.mxu0 0.0
    %960 = vmatmul.mubr.f32.gmra.mrb[0].mxu0 %v376
    %v961 = vpop.f32.mrb[0].mxu0
    %v962 = vadd.f32 %v168, %v961
    %v963 = vpop.f32.mrb[0].mxu0
    %964 = vmatprep.mubr.f32.mxu0 0.0
    %965 = vmatmul.mubr.f32.gmra.mrb[0].mxu0 %v379
    %v966 = vpop.f32.mrb[0].mxu0
    %v967 = vadd.f32 %v168, %v966
    %v968 = vpop.f32.mrb[0].mxu0
    %969 = vmatprep.mubr.f32.mxu0 0.0
    %970 = vmatmul.mubr.f32.gmra.mrb[0].mxu0 %v382
    %v971 = vpop.f32.mrb[0].mxu0
    %v972 = vadd.f32 %v168, %v971
    %v973 = vpop.f32.mrb[0].mxu0
    %974 = vmatprep.mubr.f32.mxu0 0.0
    %975 = vmatmul.mubr.f32.gmra.mrb[0].mxu0 %v385
    %v976 = vpop.f32.mrb[0].mxu0
    %v977 = vadd.f32 %v168, %v976
    %v978 = vpop.f32.mrb[0].mxu0
    %979 = vmatprep.mubr.f32.mxu0 0.0
    %980 = vmatmul.mubr.f32.gmra.mrb[0].mxu0 %v388
    %v981 = vpop.f32.mrb[0].mxu0
    %v982 = vadd.f32 %v168, %v981
    %v983 = vpop.f32.mrb[0].mxu0
    %984 = vmatprep.mubr.f32.mxu0 0.0
    %985 = vmatmul.mubr.f32.gmra.mrb[0].mxu0 %v391
    %v986 = vpop.f32.mrb[0].mxu0
    %v987 = vadd.f32 %v168, %v986
    %v988 = vpop.f32.mrb[0].mxu0
    %989 = vmatprep.mubr.f32.mxu0 0.0
    %990 = vmatmul.mubr.f32.gmra.mrb[0].mxu0 %v394
    %v991 = vpop.f32.mrb[0].mxu0
    %v992 = vadd.f32 %v168, %v991
    %v993 = vpop.f32.mrb[0].mxu0
    %994 = vmatprep.mubr.f32.mxu0 0.0
    %995 = vmatmul.mubr.f32.gmra.mrb[0].mxu0 %v397
    %v996 = vpop.f32.mrb[0].mxu0
    %v997 = vadd.f32 %v168, %v996
    %v998 = vpop.f32.mrb[0].mxu0
    %999 = vmatprep.mubr.f32.mxu0 0.0
    %1000 = vmatmul.mubr.f32.gmra.mrb[0].mxu0 %v400
    %v1001 = vpop.f32.mrb[0].mxu0
    %v1002 = vadd.f32 %v168, %v1001
    %v1003 = vpop.f32.mrb[0].mxu0
    %1004 = vmatprep.mubr.f32.mxu0 0.0
    %1005 = vmatmul.mubr.f32.gmra.mrb[0].mxu0 %v403
    %v1006 = vpop.f32.mrb[0].mxu0
    %v1007 = vadd.f32 %v168, %v1006
    %v1008 = vpop.f32.mrb[0].mxu0
    %1009 = vmatprep.mubr.f32.mxu0 0.0
    %1010 = vmatmul.mubr.f32.gmra.mrb[0].mxu0 %v406
    %v1011 = vpop.f32.mrb[0].mxu0
    %v1012 = vadd.f32 %v168, %v1011
    %v1013 = vpop.f32.mrb[0].mxu0
    %1014 = vmatprep.mubr.f32.mxu0 0.0
    %1015 = vmatmul.mubr.f32.gmra.mrb[0].mxu0 %v409
    %v1016 = vpop.f32.mrb[0].mxu0
    %v1017 = vadd.f32 %v168, %v1016
    %v1018 = vpop.f32.mrb[0].mxu0
    %1019 = vmatprep.mubr.f32.mxu0 0.0
    %1020 = vmatmul.mubr.f32.gmra.mrb[0].mxu0 %v412
    %v1021 = vpop.f32.mrb[0].mxu0
    %v1022 = vadd.f32 %v168, %v1021
    %v1023 = vpop.f32.mrb[0].mxu0
    %1024 = vmatprep.mubr.f32.mxu0 0.0
    %1025 = vmatmul.mubr.f32.gmra.mrb[0].mxu0 %v415
    %v1026 = vpop.f32.mrb[0].mxu0
    %v1027 = vadd.f32 %v168, %v1026
    %v1028 = vpop.f32.mrb[0].mxu0
    %1029 = vmatprep.mubr.f32.mxu0 0.0
    %1030 = vmatmul.mubr.f32.gmra.mrb[0].mxu0 %v418
    %v1031 = vpop.f32.mrb[0].mxu0
    %v1032 = vadd.f32 %v168, %v1031
    %v1033 = vpop.f32.mrb[0].mxu0
    %1034 = vmatprep.mubr.f32.mxu0 0.0
    %1035 = vmatmul.mubr.f32.gmra.mrb[0].mxu0 %v421
    %v1036 = vpop.f32.mrb[0].mxu0
    %v1037 = vadd.f32 %v168, %v1036
    %v1038 = vpop.f32.mrb[0].mxu0
    %1039 = vmatprep.mubr.f32.mxu0 0.0
    %1040 = vmatmul.mubr.f32.gmra.mrb[0].mxu0 %v424
    %v1041 = vpop.f32.mrb[0].mxu0
    %v1042 = vadd.f32 %v168, %v1041
    %v1043 = vpop.f32.mrb[0].mxu0
    %1044 = vmatprep.mubr.f32.mxu0 0.0
    %1045 = vmatmul.mubr.f32.gmra.mrb[0].mxu0 %v427
    %v1046 = vpop.f32.mrb[0].mxu0
    %v1047 = vadd.f32 %v168, %v1046
    %v1048 = vpop.f32.mrb[0].mxu0
    %1049 = vmatprep.mubr.f32.mxu0 0.0
    %1050 = vmatmul.mubr.f32.gmra.mrb[0].mxu0 %v430
    %v1051 = vpop.f32.mrb[0].mxu0
    %v1052 = vadd.f32 %v168, %v1051
    %v1053 = vpop.f32.mrb[0].mxu0
    %1054 = vmatprep.mubr.f32.mxu0 0.0
    %1055 = vmatmul.mubr.f32.gmra.mrb[0].mxu0 %v433
    %v1056 = vpop.f32.mrb[0].mxu0
    %v1057 = vadd.f32 %v168, %v1056
    %v1058 = vpop.f32.mrb[0].mxu0
    %1059 = vmatprep.mubr.f32.mxu0 0.0
    %1060 = vmatmul.mubr.f32.gmra.mrb[0].mxu0 %v436
    %v1061 = vpop.f32.mrb[0].mxu0
    %v1062 = vadd.f32 %v168, %v1061
    %v1063 = vpop.f32.mrb[0].mxu0
    %1064 = vmatprep.mubr.f32.mxu0 0.0
    %1065 = vmatmul.mubr.f32.gmra.mrb[0].mxu0 %v439
    %v1066 = vpop.f32.mrb[0].mxu0
    %v1067 = vadd.f32 %v168, %v1066
    %v1068 = vpop.f32.mrb[0].mxu0
    %1069 = vmatprep.mubr.f32.mxu0 0.0
    %1070 = vmatmul.mubr.f32.gmra.mrb[0].mxu0 %v442
    %v1071 = vpop.f32.mrb[0].mxu0
    %v1072 = vadd.f32 %v168, %v1071
    %v1073 = vpop.f32.mrb[0].mxu0
    %1074 = vmatprep.mubr.f32.mxu0 0.0
    %1075 = vmatmul.mubr.f32.gmra.mrb[0].mxu0 %v445
    %v1076 = vpop.f32.mrb[0].mxu0
    %v1077 = vadd.f32 %v168, %v1076
    %v1078 = vpop.f32.mrb[0].mxu0
    %1079 = vmatprep.mubr.f32.mxu0 0.0
    %1080 = vmatmul.mubr.f32.gmra.mrb[0].mxu0 %v448
    %v1081 = vpop.f32.mrb[0].mxu0
    %v1082 = vadd.f32 %v168, %v1081
    %v1083 = vpop.f32.mrb[0].mxu0
    %1084 = vmatprep.mubr.f32.mxu0 0.0
    %1085 = vmatmul.mubr.f32.gmra.mrb[0].mxu0 %v451
    %v1086 = vpop.f32.mrb[0].mxu0
    %v1087 = vadd.f32 %v168, %v1086
    %v1088 = vpop.f32.mrb[0].mxu0
    %1089 = vmatprep.mubr.f32.mxu0 0.0
    %1090 = vmatmul.mubr.f32.gmra.mrb[0].mxu0 %v454
    %v1091 = vpop.f32.mrb[0].mxu0
    %v1092 = vadd.f32 %v168, %v1091
    %v1093 = vpop.f32.mrb[0].mxu0
    %1094 = vmatprep.mubr.f32.mxu0 0.0
    %1095 = vmatmul.mubr.f32.gmra.mrb[0].mxu0 %v457
    %v1096 = vpop.f32.mrb[0].mxu0
    %v1097 = vadd.f32 %v168, %v1096
    %v1098 = vpop.f32.mrb[0].mxu0
    %1099 = vmatprep.mubr.f32.mxu0 0.0
    %1100 = vmatmul.mubr.f32.gmra.mrb[0].mxu0 %v460
    %v1101 = vpop.f32.mrb[0].mxu0
    %v1102 = vadd.f32 %v168, %v1101
    %v1103 = vpop.f32.mrb[0].mxu0
    %1104 = vmatprep.mubr.f32.mxu0 0.0
    %1105 = vmatmul.mubr.f32.gmra.mrb[0].mxu0 %v463
    %v1106 = vpop.f32.mrb[0].mxu0
    %v1107 = vadd.f32 %v168, %v1106
    %v1108 = vpop.f32.mrb[0].mxu0
    %1109 = vmatprep.mubr.f32.mxu0 0.0
    %1110 = vmatmul.mubr.f32.gmra.mrb[0].mxu0 %v466
    %v1111 = vpop.f32.mrb[0].mxu0
    %v1112 = vadd.f32 %v168, %v1111
    %v1113 = vpop.f32.mrb[0].mxu0
    %1114 = vmatprep.mubr.f32.mxu0 0.0
    %1115 = vmatmul.mubr.f32.gmra.mrb[0].mxu0 %v469
    %v1116 = vpop.f32.mrb[0].mxu0
    %v1117 = vadd.f32 %v168, %v1116
    %v1118 = vpop.f32.mrb[0].mxu0
    %1119 = vmatprep.mubr.f32.mxu0 0.0
    %1120 = vmatmul.mubr.f32.gmra.mrb[0].mxu0 %v472
    %v1121 = vpop.f32.mrb[0].mxu0
    %v1122 = vadd.f32 %v168, %v1121
    %v1123 = vpop.f32.mrb[0].mxu0
    %1124 = vmatprep.mubr.f32.mxu0 0.0
    %1125 = vmatmul.mubr.f32.gmra.mrb[0].mxu0 %v475
    %v1126 = vpop.f32.mrb[0].mxu0
    %v1127 = vadd.f32 %v168, %v1126
    %v1128 = vpop.f32.mrb[0].mxu0
    %1129 = vmatprep.mubr.f32.mxu0 0.0
    %1130 = vmatmul.mubr.f32.gmra.mrb[0].mxu0 %v478
    %v1131 = vpop.f32.mrb[0].mxu0
    %v1132 = vadd.f32 %v168, %v1131
    %v1133 = vpop.f32.mrb[0].mxu0
    %1134 = vmatprep.mubr.f32.mxu0 0.0
    %1135 = vmatmul.mubr.f32.gmra.mrb[0].mxu0 %v481
    %v1136 = vpop.f32.mrb[0].mxu0
    %v1137 = vadd.f32 %v168, %v1136
    %v1138 = vpop.f32.mrb[0].mxu0
    %1139 = vmatprep.mubr.f32.mxu0 0.0
    %1140 = vmatmul.mubr.f32.gmra.mrb[0].mxu0 %v484
    %v1141 = vpop.f32.mrb[0].mxu0
    %v1142 = vadd.f32 %v168, %v1141
    %v1143 = vpop.f32.mrb[0].mxu0
    %1144 = vmatprep.mubr.f32.mxu0 0.0
    %1145 = vmatmul.mubr.f32.gmra.mrb[0].mxu0 %v487
    %v1146 = vpop.f32.mrb[0].mxu0
    %v1147 = vadd.f32 %v168, %v1146
    %v1148 = vpop.f32.mrb[0].mxu0
    %1149 = vmatprep.mubr.f32.mxu0 0.0
    %1150 = vmatmul.mubr.f32.gmra.mrb[0].mxu0 %v490
    %v1151 = vpop.f32.mrb[0].mxu0
    %v1152 = vadd.f32 %v168, %v1151
    %v1153 = vpop.f32.mrb[0].mxu0
    %1154 = vmatprep.mubr.f32.mxu0 0.0
    %1155 = vmatmul.mubr.f32.gmra.mrb[0].mxu0 %v493
    %v1156 = vpop.f32.mrb[0].mxu0
    %v1157 = vadd.f32 %v168, %v1156
    %v1158 = vpop.f32.mrb[0].mxu0
    %1159 = vmatprep.mubr.f32.mxu0 0.0
    %1160 = vmatmul.mubr.f32.gmra.mrb[0].mxu0 %v496
    %v1161 = vpop.f32.mrb[0].mxu0
    %v1162 = vadd.f32 %v168, %v1161
    %v1163 = vpop.f32.mrb[0].mxu0
    %1164 = vmatprep.mubr.f32.mxu0 0.0
    %1165 = vmatmul.mubr.f32.gmra.mrb[0].mxu0 %v499
    %v1166 = vpop.f32.mrb[0].mxu0
    %v1167 = vadd.f32 %v168, %v1166
    %v1168 = vpop.f32.mrb[0].mxu0
    %1169 = vmatprep.mubr.f32.mxu0 0.0
    %1170 = vmatmul.mubr.f32.gmra.mrb[0].mxu0 %v502
    %v1171 = vpop.f32.mrb[0].mxu0
    %v1172 = vadd.f32 %v168, %v1171
    %v1173 = vpop.f32.mrb[0].mxu0
    %1174 = vmatprep.mubr.f32.mxu0 0.0
    %1175 = vmatmul.mubr.f32.gmra.mrb[0].mxu0 %v505
    %v1176 = vpop.f32.mrb[0].mxu0
    %v1177 = vadd.f32 %v168, %v1176
    %v1178 = vpop.f32.mrb[0].mxu0
    %1179 = vmatprep.mubr.f32.mxu0 0.0
    %1180 = vmatmul.mubr.f32.gmra.mrb[0].mxu0 %v508
    %v1181 = vpop.f32.mrb[0].mxu0
    %v1182 = vadd.f32 %v168, %v1181
    %v1183 = vpop.f32.mrb[0].mxu0
    %1184 = vmatprep.mubr.f32.mxu0 0.0
    %1185 = vmatmul.mubr.f32.gmra.mrb[0].mxu0 %v511
    %v1186 = vpop.f32.mrb[0].mxu0
    %v1187 = vadd.f32 %v168, %v1186
    %v1188 = vpop.f32.mrb[0].mxu0
    %1189 = vmatprep.mubr.f32.mxu0 0.0
    %1190 = vmatmul.mubr.f32.gmra.mrb[0].mxu0 %v514
    %v1191 = vpop.f32.mrb[0].mxu0
    %v1192 = vadd.f32 %v168, %v1191
    %v1193 = vpop.f32.mrb[0].mxu0
    %1194 = vmatprep.mubr.f32.mxu0 0.0
    %1195 = vmatmul.mubr.f32.gmra.mrb[0].mxu0 %v517
    %v1196 = vpop.f32.mrb[0].mxu0
    %v1197 = vadd.f32 %v168, %v1196
    %v1198 = vpop.f32.mrb[0].mxu0
    %1199 = vmatprep.mubr.f32.mxu0 0.0
    %1200 = vmatmul.mubr.f32.gmra.mrb[0].mxu0 %v520
    %v1201 = vpop.f32.mrb[0].mxu0
    %v1202 = vadd.f32 %v168, %v1201
    %v1203 = vpop.f32.mrb[0].mxu0
    %1204 = vmatprep.mubr.f32.mxu0 0.0
    %1205 = vmatmul.mubr.f32.gmra.mrb[0].mxu0 %v523
    %v1206 = vpop.f32.mrb[0].mxu0
    %v1207 = vadd.f32 %v168, %v1206
    %v1208 = vpop.f32.mrb[0].mxu0
    %1209 = vmatprep.mubr.f32.mxu0 0.0
    %1210 = vmatmul.mubr.f32.gmra.mrb[0].mxu0 %v526
    %v1211 = vpop.f32.mrb[0].mxu0
    %v1212 = vadd.f32 %v168, %v1211
    %v1213 = vpop.f32.mrb[0].mxu0
    %1214 = vmatprep.mubr.f32.mxu0 0.0
    %1215 = vmatmul.mubr.f32.gmra.mrb[0].mxu0 %v529
    %v1216 = vpop.f32.mrb[0].mxu0
    %v1217 = vadd.f32 %v168, %v1216
    %v1218 = vpop.f32.mrb[0].mxu0
    %1219 = vmatprep.mubr.f32.mxu0 0.0
    %1220 = vmatmul.mubr.f32.gmra.mrb[0].mxu0 %v532
    %v1221 = vpop.f32.mrb[0].mxu0
    %v1222 = vadd.f32 %v168, %v1221
    %v1223 = vpop.f32.mrb[0].mxu0
    %1224 = vmatprep.mubr.f32.mxu0 0.0
    %1225 = vmatmul.mubr.f32.gmra.mrb[0].mxu0 %v535
    %v1226 = vpop.f32.mrb[0].mxu0
    %v1227 = vadd.f32 %v168, %v1226
    %v1228 = vpop.f32.mrb[0].mxu0
    %1229 = vmatprep.mubr.f32.mxu0 0.0
    %1230 = vmatmul.mubr.f32.gmra.mrb[0].mxu0 %v538
    %v1231 = vpop.f32.mrb[0].mxu0
    %v1232 = vadd.f32 %v168, %v1231
    %v1233 = vpop.f32.mrb[0].mxu0
    %1234 = vmatprep.mubr.f32.mxu0 0.0
    %1235 = vmatmul.mubr.f32.gmra.mrb[0].mxu0 %v541
    %v1236 = vpop.f32.mrb[0].mxu0
    %v1237 = vadd.f32 %v168, %v1236
    %v1238 = vpop.f32.mrb[0].mxu0
    %1239 = vmatprep.mubr.f32.mxu0 0.0
    %1240 = vmatmul.mubr.f32.gmra.mrb[0].mxu0 %v544
    %v1241 = vpop.f32.mrb[0].mxu0
    %v1242 = vadd.f32 %v168, %v1241
    %v1243 = vpop.f32.mrb[0].mxu0
    %1244 = vmatprep.mubr.f32.mxu0 0.0
    %1245 = vmatmul.mubr.f32.gmra.mrb[0].mxu0 %v547
    %v1246 = vpop.f32.mrb[0].mxu0
    %v1247 = vadd.f32 %v168, %v1246
    %v1248 = vpop.f32.mrb[0].mxu0
    %1249 = vmatprep.mubr.f32.mxu0 0.0
    %1250 = vmatmul.mubr.f32.gmra.mrb[0].mxu0 %v550
    %v1251 = vpop.f32.mrb[0].mxu0
    %v1252 = vadd.f32 %v168, %v1251
    %v1253 = vpop.f32.mrb[0].mxu0
    %1254 = vmatprep.mubr.f32.mxu0 0.0
    %1255 = vmatmul.mubr.f32.gmra.mrb[0].mxu0 %v553
    %v1256 = vpop.f32.mrb[0].mxu0
    %v1257 = vadd.f32 %v168, %v1256
    %v1258 = vpop.f32.mrb[0].mxu0
    %1259 = vdwg.mxu0
    %v1260 = vmax.f32 %v622, 0.0
    %v1261 = vmax.f32 %v627, 0.0
    %v1262 = vmax.f32 %v632, 0.0
    %v1263 = vmax.f32 %v637, 0.0
    %v1264 = vmax.f32 %v642, 0.0
    %v1265 = vmax.f32 %v647, 0.0
    %v1266 = vmax.f32 %v652, 0.0
    %v1267 = vmax.f32 %v657, 0.0
    %v1268 = vmax.f32 %v662, 0.0
    %v1269 = vmax.f32 %v667, 0.0
    %v1270 = vmax.f32 %v672, 0.0
    %v1271 = vmax.f32 %v677, 0.0
    %v1272 = vmax.f32 %v682, 0.0
    %v1273 = vmax.f32 %v687, 0.0
    %v1274 = vmax.f32 %v692, 0.0
    %v1275 = vmax.f32 %v697, 0.0
    %v1276 = vmax.f32 %v702, 0.0
    %v1277 = vmax.f32 %v707, 0.0
    %v1278 = vmax.f32 %v712, 0.0
    %v1279 = vmax.f32 %v717, 0.0
    %v1280 = vmax.f32 %v722, 0.0
    %v1281 = vmax.f32 %v727, 0.0
    %v1282 = vmax.f32 %v732, 0.0
    %v1283 = vmax.f32 %v737, 0.0
    %v1284 = vmax.f32 %v742, 0.0
    %v1285 = vmax.f32 %v747, 0.0
    %v1286 = vmax.f32 %v752, 0.0
    %v1287 = vmax.f32 %v757, 0.0
    %v1288 = vmax.f32 %v762, 0.0
    %v1289 = vmax.f32 %v767, 0.0
    %v1290 = vmax.f32 %v772, 0.0
    %v1291 = vmax.f32 %v777, 0.0
    %v1292 = vmax.f32 %v782, 0.0
    %v1293 = vmax.f32 %v787, 0.0
    %v1294 = vmax.f32 %v792, 0.0
    %v1295 = vmax.f32 %v797, 0.0
    %v1296 = vmax.f32 %v802, 0.0
    %v1297 = vmax.f32 %v807, 0.0
    %v1298 = vmax.f32 %v812, 0.0
    %v1299 = vmax.f32 %v817, 0.0
    %v1300 = vmax.f32 %v822, 0.0
    %v1301 = vmax.f32 %v827, 0.0
    %v1302 = vmax.f32 %v832, 0.0
    %v1303 = vmax.f32 %v837, 0.0
    %v1304 = vmax.f32 %v842, 0.0
    %v1305 = vmax.f32 %v847, 0.0
    %v1306 = vmax.f32 %v852, 0.0
    %v1307 = vmax.f32 %v857, 0.0
    %v1308 = vmax.f32 %v862, 0.0
    %v1309 = vmax.f32 %v867, 0.0
    %v1310 = vmax.f32 %v872, 0.0
    %v1311 = vmax.f32 %v877, 0.0
    %v1312 = vmax.f32 %v882, 0.0
    %v1313 = vmax.f32 %v887, 0.0
    %v1314 = vmax.f32 %v892, 0.0
    %v1315 = vmax.f32 %v897, 0.0
    %v1316 = vmax.f32 %v902, 0.0
    %v1317 = vmax.f32 %v907, 0.0
    %v1318 = vmax.f32 %v912, 0.0
    %v1319 = vmax.f32 %v917, 0.0
    %v1320 = vmax.f32 %v922, 0.0
    %v1321 = vmax.f32 %v927, 0.0
    %v1322 = vmax.f32 %v932, 0.0
    %v1323 = vmax.f32 %v937, 0.0
    %v1324 = vmax.f32 %v942, 0.0
    %v1325 = vmax.f32 %v947, 0.0
    %v1326 = vmax.f32 %v952, 0.0
    %v1327 = vmax.f32 %v957, 0.0
    %v1328 = vmax.f32 %v962, 0.0
    %v1329 = vmax.f32 %v967, 0.0
    %v1330 = vmax.f32 %v972, 0.0
    %v1331 = vmax.f32 %v977, 0.0
    %v1332 = vmax.f32 %v982, 0.0
    %v1333 = vmax.f32 %v987, 0.0
    %v1334 = vmax.f32 %v992, 0.0
    %v1335 = vmax.f32 %v997, 0.0
    %v1336 = vmax.f32 %v1002, 0.0
    %v1337 = vmax.f32 %v1007, 0.0
    %v1338 = vmax.f32 %v1012, 0.0
    %v1339 = vmax.f32 %v1017, 0.0
    %v1340 = vmax.f32 %v1022, 0.0
    %v1341 = vmax.f32 %v1027, 0.0
    %v1342 = vmax.f32 %v1032, 0.0
    %v1343 = vmax.f32 %v1037, 0.0
    %v1344 = vmax.f32 %v1042, 0.0
    %v1345 = vmax.f32 %v1047, 0.0
    %v1346 = vmax.f32 %v1052, 0.0
    %v1347 = vmax.f32 %v1057, 0.0
    %v1348 = vmax.f32 %v1062, 0.0
    %v1349 = vmax.f32 %v1067, 0.0
    %v1350 = vmax.f32 %v1072, 0.0
    %v1351 = vmax.f32 %v1077, 0.0
    %v1352 = vmax.f32 %v1082, 0.0
    %v1353 = vmax.f32 %v1087, 0.0
    %v1354 = vmax.f32 %v1092, 0.0
    %v1355 = vmax.f32 %v1097, 0.0
    %v1356 = vmax.f32 %v1102, 0.0
    %v1357 = vmax.f32 %v1107, 0.0
    %v1358 = vmax.f32 %v1112, 0.0
    %v1359 = vmax.f32 %v1117, 0.0
    %v1360 = vmax.f32 %v1122, 0.0
    %v1361 = vmax.f32 %v1127, 0.0
    %v1362 = vmax.f32 %v1132, 0.0
    %v1363 = vmax.f32 %v1137, 0.0
    %v1364 = vmax.f32 %v1142, 0.0
    %v1365 = vmax.f32 %v1147, 0.0
    %v1366 = vmax.f32 %v1152, 0.0
    %v1367 = vmax.f32 %v1157, 0.0
    %v1368 = vmax.f32 %v1162, 0.0
    %v1369 = vmax.f32 %v1167, 0.0
    %v1370 = vmax.f32 %v1172, 0.0
    %v1371 = vmax.f32 %v1177, 0.0
    %v1372 = vmax.f32 %v1182, 0.0
    %v1373 = vmax.f32 %v1187, 0.0
    %v1374 = vmax.f32 %v1192, 0.0
    %v1375 = vmax.f32 %v1197, 0.0
    %v1376 = vmax.f32 %v1202, 0.0
    %v1377 = vmax.f32 %v1207, 0.0
    %v1378 = vmax.f32 %v1212, 0.0
    %v1379 = vmax.f32 %v1217, 0.0
    %v1380 = vmax.f32 %v1222, 0.0
    %v1381 = vmax.f32 %v1227, 0.0
    %v1382 = vmax.f32 %v1232, 0.0
    %v1383 = vmax.f32 %v1237, 0.0
    %v1384 = vmax.f32 %v1242, 0.0
    %v1385 = vmax.f32 %v1247, 0.0
    %v1386 = vmax.f32 %v1252, 0.0
    %v1387 = vmax.f32 %v1257, 0.0
    %vm1388 = vcmask 64512
    %1389 = vst.msk [vmem:[#allocation2] sm:$0xff] %vm1388, 0.0
    %1390 = vst.msk [vmem:[#allocation2 + $0x8] sm:$0xff] %vm1388, 0.0
    %1391 = vst.msk [vmem:[#allocation2 + $0x10] sm:$0xff] %vm1388, 0.0
    %1392 = vst.msk [vmem:[#allocation2 + $0x18] sm:$0xff] %vm1388, 0.0
    %1393 = vst.msk [vmem:[#allocation2 + $0x20] sm:$0xff] %vm1388, 0.0
    %1394 = vst.msk [vmem:[#allocation2 + $0x28] sm:$0xff] %vm1388, 0.0
    %1395 = vst.msk [vmem:[#allocation2 + $0x30] sm:$0xff] %vm1388, 0.0
    %1396 = vst.msk [vmem:[#allocation2 + $0x38] sm:$0xff] %vm1388, 0.0
    %1397 = vst.msk [vmem:[#allocation2 + $0x40] sm:$0xff] %vm1388, 0.0
    %1398 = vst.msk [vmem:[#allocation2 + $0x48] sm:$0xff] %vm1388, 0.0
    %1399 = vst.msk [vmem:[#allocation2 + $0x50] sm:$0xff] %vm1388, 0.0
    %1400 = vst.msk [vmem:[#allocation2 + $0x58] sm:$0xff] %vm1388, 0.0
    %1401 = vst.msk [vmem:[#allocation2 + $0x60] sm:$0xff] %vm1388, 0.0
    %1402 = vst.msk [vmem:[#allocation2 + $0x68] sm:$0xff] %vm1388, 0.0
    %1403 = vst.msk [vmem:[#allocation2 + $0x70] sm:$0xff] %vm1388, 0.0
    %1404 = vst.msk [vmem:[#allocation2 + $0x78] sm:$0xff] %vm1388, 0.0
    %1405 = vst.msk [vmem:[#allocation2 + $0x80] sm:$0xff] %vm1388, 0.0
    %1406 = vst.msk [vmem:[#allocation2 + $0x88] sm:$0xff] %vm1388, 0.0
    %1407 = vst.msk [vmem:[#allocation2 + $0x90] sm:$0xff] %vm1388, 0.0
    %1408 = vst.msk [vmem:[#allocation2 + $0x98] sm:$0xff] %vm1388, 0.0
    %1409 = vst.msk [vmem:[#allocation2 + $0xa0] sm:$0xff] %vm1388, 0.0
    %1410 = vst.msk [vmem:[#allocation2 + $0xa8] sm:$0xff] %vm1388, 0.0
    %1411 = vst.msk [vmem:[#allocation2 + $0xb0] sm:$0xff] %vm1388, 0.0
    %1412 = vst.msk [vmem:[#allocation2 + $0xb8] sm:$0xff] %vm1388, 0.0
    %1413 = vst.msk [vmem:[#allocation2 + $0xc0] sm:$0xff] %vm1388, 0.0
    %1414 = vst.msk [vmem:[#allocation2 + $0xc8] sm:$0xff] %vm1388, 0.0
    %1415 = vst.msk [vmem:[#allocation2 + $0xd0] sm:$0xff] %vm1388, 0.0
    %1416 = vst.msk [vmem:[#allocation2 + $0xd8] sm:$0xff] %vm1388, 0.0
    %1417 = vst.msk [vmem:[#allocation2 + $0xe0] sm:$0xff] %vm1388, 0.0
    %1418 = vst.msk [vmem:[#allocation2 + $0xe8] sm:$0xff] %vm1388, 0.0
    %1419 = vst.msk [vmem:[#allocation2 + $0xf0] sm:$0xff] %vm1388, 0.0
    %1420 = vst.msk [vmem:[#allocation2 + $0xf8] sm:$0xff] %vm1388, 0.0
    %1421 = vst.msk [vmem:[#allocation2 + $0x100] sm:$0xff] %vm1388, 0.0
    %1422 = vst.msk [vmem:[#allocation2 + $0x108] sm:$0xff] %vm1388, 0.0
    %1423 = vst.msk [vmem:[#allocation2 + $0x110] sm:$0xff] %vm1388, 0.0
    %1424 = vst.msk [vmem:[#allocation2 + $0x118] sm:$0xff] %vm1388, 0.0
    %1425 = vst.msk [vmem:[#allocation2 + $0x120] sm:$0xff] %vm1388, 0.0
    %1426 = vst.msk [vmem:[#allocation2 + $0x128] sm:$0xff] %vm1388, 0.0
    %1427 = vst.msk [vmem:[#allocation2 + $0x130] sm:$0xff] %vm1388, 0.0
    %1428 = vst.msk [vmem:[#allocation2 + $0x138] sm:$0xff] %vm1388, 0.0
    %1429 = vst.msk [vmem:[#allocation2 + $0x140] sm:$0xff] %vm1388, 0.0
    %1430 = vst.msk [vmem:[#allocation2 + $0x148] sm:$0xff] %vm1388, 0.0
    %1431 = vst.msk [vmem:[#allocation2 + $0x150] sm:$0xff] %vm1388, 0.0
    %1432 = vst.msk [vmem:[#allocation2 + $0x158] sm:$0xff] %vm1388, 0.0
    %1433 = vst.msk [vmem:[#allocation2 + $0x160] sm:$0xff] %vm1388, 0.0
    %1434 = vst.msk [vmem:[#allocation2 + $0x168] sm:$0xff] %vm1388, 0.0
    %1435 = vst.msk [vmem:[#allocation2 + $0x170] sm:$0xff] %vm1388, 0.0
    %1436 = vst.msk [vmem:[#allocation2 + $0x178] sm:$0xff] %vm1388, 0.0
    %1437 = vst.msk [vmem:[#allocation2 + $0x180] sm:$0xff] %vm1388, 0.0
    %1438 = vst.msk [vmem:[#allocation2 + $0x188] sm:$0xff] %vm1388, 0.0
    %1439 = vst.msk [vmem:[#allocation2 + $0x190] sm:$0xff] %vm1388, 0.0
    %1440 = vst.msk [vmem:[#allocation2 + $0x198] sm:$0xff] %vm1388, 0.0
    %1441 = vst.msk [vmem:[#allocation2 + $0x1a0] sm:$0xff] %vm1388, 0.0
    %1442 = vst.msk [vmem:[#allocation2 + $0x1a8] sm:$0xff] %vm1388, 0.0
    %1443 = vst.msk [vmem:[#allocation2 + $0x1b0] sm:$0xff] %vm1388, 0.0
    %1444 = vst.msk [vmem:[#allocation2 + $0x1b8] sm:$0xff] %vm1388, 0.0
    %1445 = vst.msk [vmem:[#allocation2 + $0x1c0] sm:$0xff] %vm1388, 0.0
    %1446 = vst.msk [vmem:[#allocation2 + $0x1c8] sm:$0xff] %vm1388, 0.0
    %1447 = vst.msk [vmem:[#allocation2 + $0x1d0] sm:$0xff] %vm1388, 0.0
    %1448 = vst.msk [vmem:[#allocation2 + $0x1d8] sm:$0xff] %vm1388, 0.0
    %1449 = vst.msk [vmem:[#allocation2 + $0x1e0] sm:$0xff] %vm1388, 0.0
    %1450 = vst.msk [vmem:[#allocation2 + $0x1e8] sm:$0xff] %vm1388, 0.0
    %1451 = vst.msk [vmem:[#allocation2 + $0x1f0] sm:$0xff] %vm1388, 0.0
    %1452 = vst.msk [vmem:[#allocation2 + $0x1f8] sm:$0xff] %vm1388, 0.0
    %1453 = vst.msk [vmem:[#allocation2 + $0x200] sm:$0xff] %vm1388, 0.0
    %1454 = vst.msk [vmem:[#allocation2 + $0x208] sm:$0xff] %vm1388, 0.0
    %1455 = vst.msk [vmem:[#allocation2 + $0x210] sm:$0xff] %vm1388, 0.0
    %1456 = vst.msk [vmem:[#allocation2 + $0x218] sm:$0xff] %vm1388, 0.0
    %1457 = vst.msk [vmem:[#allocation2 + $0x220] sm:$0xff] %vm1388, 0.0
    %1458 = vst.msk [vmem:[#allocation2 + $0x228] sm:$0xff] %vm1388, 0.0
    %1459 = vst.msk [vmem:[#allocation2 + $0x230] sm:$0xff] %vm1388, 0.0
    %1460 = vst.msk [vmem:[#allocation2 + $0x238] sm:$0xff] %vm1388, 0.0
    %1461 = vst.msk [vmem:[#allocation2 + $0x240] sm:$0xff] %vm1388, 0.0
    %1462 = vst.msk [vmem:[#allocation2 + $0x248] sm:$0xff] %vm1388, 0.0
    %1463 = vst.msk [vmem:[#allocation2 + $0x250] sm:$0xff] %vm1388, 0.0
    %1464 = vst.msk [vmem:[#allocation2 + $0x258] sm:$0xff] %vm1388, 0.0
    %1465 = vst.msk [vmem:[#allocation2 + $0x260] sm:$0xff] %vm1388, 0.0
    %1466 = vst.msk [vmem:[#allocation2 + $0x268] sm:$0xff] %vm1388, 0.0
    %1467 = vst.msk [vmem:[#allocation2 + $0x270] sm:$0xff] %vm1388, 0.0
    %1468 = vst.msk [vmem:[#allocation2 + $0x278] sm:$0xff] %vm1388, 0.0
    %1469 = vst.msk [vmem:[#allocation2 + $0x280] sm:$0xff] %vm1388, 0.0
    %1470 = vst.msk [vmem:[#allocation2 + $0x288] sm:$0xff] %vm1388, 0.0
    %1471 = vst.msk [vmem:[#allocation2 + $0x290] sm:$0xff] %vm1388, 0.0
    %1472 = vst.msk [vmem:[#allocation2 + $0x298] sm:$0xff] %vm1388, 0.0
    %1473 = vst.msk [vmem:[#allocation2 + $0x2a0] sm:$0xff] %vm1388, 0.0
    %1474 = vst.msk [vmem:[#allocation2 + $0x2a8] sm:$0xff] %vm1388, 0.0
    %1475 = vst.msk [vmem:[#allocation2 + $0x2b0] sm:$0xff] %vm1388, 0.0
    %1476 = vst.msk [vmem:[#allocation2 + $0x2b8] sm:$0xff] %vm1388, 0.0
    %1477 = vst.msk [vmem:[#allocation2 + $0x2c0] sm:$0xff] %vm1388, 0.0
    %1478 = vst.msk [vmem:[#allocation2 + $0x2c8] sm:$0xff] %vm1388, 0.0
    %1479 = vst.msk [vmem:[#allocation2 + $0x2d0] sm:$0xff] %vm1388, 0.0
    %1480 = vst.msk [vmem:[#allocation2 + $0x2d8] sm:$0xff] %vm1388, 0.0
    %1481 = vst.msk [vmem:[#allocation2 + $0x2e0] sm:$0xff] %vm1388, 0.0
    %1482 = vst.msk [vmem:[#allocation2 + $0x2e8] sm:$0xff] %vm1388, 0.0
    %1483 = vst.msk [vmem:[#allocation2 + $0x2f0] sm:$0xff] %vm1388, 0.0
    %1484 = vst.msk [vmem:[#allocation2 + $0x2f8] sm:$0xff] %vm1388, 0.0
    %1485 = vst.msk [vmem:[#allocation2 + $0x300] sm:$0xff] %vm1388, 0.0
    %1486 = vst.msk [vmem:[#allocation2 + $0x308] sm:$0xff] %vm1388, 0.0
    %1487 = vst.msk [vmem:[#allocation2 + $0x310] sm:$0xff] %vm1388, 0.0
    %1488 = vst.msk [vmem:[#allocation2 + $0x318] sm:$0xff] %vm1388, 0.0
    %1489 = vst.msk [vmem:[#allocation2 + $0x320] sm:$0xff] %vm1388, 0.0
    %1490 = vst.msk [vmem:[#allocation2 + $0x328] sm:$0xff] %vm1388, 0.0
    %1491 = vst.msk [vmem:[#allocation2 + $0x330] sm:$0xff] %vm1388, 0.0
    %1492 = vst.msk [vmem:[#allocation2 + $0x338] sm:$0xff] %vm1388, 0.0
    %1493 = vst.msk [vmem:[#allocation2 + $0x340] sm:$0xff] %vm1388, 0.0
    %1494 = vst.msk [vmem:[#allocation2 + $0x348] sm:$0xff] %vm1388, 0.0
    %1495 = vst.msk [vmem:[#allocation2 + $0x350] sm:$0xff] %vm1388, 0.0
    %1496 = vst.msk [vmem:[#allocation2 + $0x358] sm:$0xff] %vm1388, 0.0
    %1497 = vst.msk [vmem:[#allocation2 + $0x360] sm:$0xff] %vm1388, 0.0
    %1498 = vst.msk [vmem:[#allocation2 + $0x368] sm:$0xff] %vm1388, 0.0
    %1499 = vst.msk [vmem:[#allocation2 + $0x370] sm:$0xff] %vm1388, 0.0
    %1500 = vst.msk [vmem:[#allocation2 + $0x378] sm:$0xff] %vm1388, 0.0
    %1501 = vst.msk [vmem:[#allocation2 + $0x380] sm:$0xff] %vm1388, 0.0
    %1502 = vst.msk [vmem:[#allocation2 + $0x388] sm:$0xff] %vm1388, 0.0
    %1503 = vst.msk [vmem:[#allocation2 + $0x390] sm:$0xff] %vm1388, 0.0
    %1504 = vst.msk [vmem:[#allocation2 + $0x398] sm:$0xff] %vm1388, 0.0
    %1505 = vst.msk [vmem:[#allocation2 + $0x3a0] sm:$0xff] %vm1388, 0.0
    %1506 = vst.msk [vmem:[#allocation2 + $0x3a8] sm:$0xff] %vm1388, 0.0
    %1507 = vst.msk [vmem:[#allocation2 + $0x3b0] sm:$0xff] %vm1388, 0.0
    %1508 = vst.msk [vmem:[#allocation2 + $0x3b8] sm:$0xff] %vm1388, 0.0
    %1509 = vst.msk [vmem:[#allocation2 + $0x3c0] sm:$0xff] %vm1388, 0.0
    %1510 = vst.msk [vmem:[#allocation2 + $0x3c8] sm:$0xff] %vm1388, 0.0
    %1511 = vst.msk [vmem:[#allocation2 + $0x3d0] sm:$0xff] %vm1388, 0.0
    %1512 = vst.msk [vmem:[#allocation2 + $0x3d8] sm:$0xff] %vm1388, 0.0
    %1513 = vst.msk [vmem:[#allocation2 + $0x3e0] sm:$0xff] %vm1388, 0.0
    %1514 = vst.msk [vmem:[#allocation2 + $0x3e8] sm:$0xff] %vm1388, 0.0
    %1515 = vst.msk [vmem:[#allocation2 + $0x3f0] sm:$0xff] %vm1388, 0.0
    %1516 = vst.msk [vmem:[#allocation2 + $0x3f8] sm:$0xff] %vm1388, 0.0
    %1517 = vst.msk [vmem:[#allocation2 + $0x400] sm:$0xff] %vm1388, 0.0
    %1518 = vst.msk [vmem:[#allocation2 + $0x408] sm:$0xff] %vm1388, 0.0
    %1519 = vst.msk [vmem:[#allocation2 + $0x410] sm:$0xff] %vm1388, 0.0
    %1520 = vst.msk [vmem:[#allocation2 + $0x418] sm:$0xff] %vm1388, 0.0
    %1521 = vst.msk [vmem:[#allocation2 + $0x420] sm:$0xff] %vm1388, 0.0
    %1522 = vst.msk [vmem:[#allocation2 + $0x428] sm:$0xff] %vm1388, 0.0
    %1523 = vst.msk [vmem:[#allocation2 + $0x430] sm:$0xff] %vm1388, 0.0
    %1524 = vst.msk [vmem:[#allocation2 + $0x438] sm:$0xff] %vm1388, 0.0
    %1525 = vst.msk [vmem:[#allocation2 + $0x440] sm:$0xff] %vm1388, 0.0
    %1526 = vst.msk [vmem:[#allocation2 + $0x448] sm:$0xff] %vm1388, 0.0
    %1527 = vst.msk [vmem:[#allocation2 + $0x450] sm:$0xff] %vm1388, 0.0
    %1528 = vst.msk [vmem:[#allocation2 + $0x458] sm:$0xff] %vm1388, 0.0
    %1529 = vst.msk [vmem:[#allocation2 + $0x460] sm:$0xff] %vm1388, 0.0
    %1530 = vst.msk [vmem:[#allocation2 + $0x468] sm:$0xff] %vm1388, 0.0
    %1531 = vst.msk [vmem:[#allocation2 + $0x470] sm:$0xff] %vm1388, 0.0
    %1532 = vst.msk [vmem:[#allocation2 + $0x478] sm:$0xff] %vm1388, 0.0
    %1533 = vst.msk [vmem:[#allocation2 + $0x480] sm:$0xff] %vm1388, 0.0
    %1534 = vst.msk [vmem:[#allocation2 + $0x488] sm:$0xff] %vm1388, 0.0
    %1535 = vst.msk [vmem:[#allocation2 + $0x490] sm:$0xff] %vm1388, 0.0
    %1536 = vst.msk [vmem:[#allocation2 + $0x498] sm:$0xff] %vm1388, 0.0
    %1537 = vst.msk [vmem:[#allocation2 + $0x4a0] sm:$0xff] %vm1388, 0.0
    %1538 = vst.msk [vmem:[#allocation2 + $0x4a8] sm:$0xff] %vm1388, 0.0
    %1539 = vst.msk [vmem:[#allocation2 + $0x4b0] sm:$0xff] %vm1388, 0.0
    %1540 = vst.msk [vmem:[#allocation2 + $0x4b8] sm:$0xff] %vm1388, 0.0
    %1541 = vst.msk [vmem:[#allocation2 + $0x4c0] sm:$0xff] %vm1388, 0.0
    %1542 = vst.msk [vmem:[#allocation2 + $0x4c8] sm:$0xff] %vm1388, 0.0
    %1543 = vst.msk [vmem:[#allocation2 + $0x4d0] sm:$0xff] %vm1388, 0.0
    %1544 = vst.msk [vmem:[#allocation2 + $0x4d8] sm:$0xff] %vm1388, 0.0
    %1545 = vst.msk [vmem:[#allocation2 + $0x4e0] sm:$0xff] %vm1388, 0.0
    %1546 = vst.msk [vmem:[#allocation2 + $0x4e8] sm:$0xff] %vm1388, 0.0
    %1547 = vst.msk [vmem:[#allocation2 + $0x4f0] sm:$0xff] %vm1388, 0.0
    %1548 = vst.msk [vmem:[#allocation2 + $0x4f8] sm:$0xff] %vm1388, 0.0
    %1549 = vst.msk [vmem:[#allocation2 + $0x500] sm:$0xff] %vm1388, 0.0
    %1550 = vst.msk [vmem:[#allocation2 + $0x508] sm:$0xff] %vm1388, 0.0
    %1551 = vst.msk [vmem:[#allocation2 + $0x510] sm:$0xff] %vm1388, 0.0
    %1552 = vst.msk [vmem:[#allocation2 + $0x518] sm:$0xff] %vm1388, 0.0
    %1553 = vst.msk [vmem:[#allocation2 + $0x520] sm:$0xff] %vm1388, 0.0
    %1554 = vst.msk [vmem:[#allocation2 + $0x528] sm:$0xff] %vm1388, 0.0
    %1555 = vst.msk [vmem:[#allocation2 + $0x530] sm:$0xff] %vm1388, 0.0
    %1556 = vst.msk [vmem:[#allocation2 + $0x538] sm:$0xff] %vm1388, 0.0
    %1557 = vst.msk [vmem:[#allocation2 + $0x540] sm:$0xff] %vm1388, 0.0
    %1558 = vst.msk [vmem:[#allocation2 + $0x548] sm:$0xff] %vm1388, 0.0
    %1559 = vst.msk [vmem:[#allocation2 + $0x550] sm:$0xff] %vm1388, 0.0
    %1560 = vst.msk [vmem:[#allocation2 + $0x558] sm:$0xff] %vm1388, 0.0
    %1561 = vst.msk [vmem:[#allocation2 + $0x560] sm:$0xff] %vm1388, 0.0
    %1562 = vst.msk [vmem:[#allocation2 + $0x568] sm:$0xff] %vm1388, 0.0
    %1563 = vst.msk [vmem:[#allocation2 + $0x570] sm:$0xff] %vm1388, 0.0
    %1564 = vst.msk [vmem:[#allocation2 + $0x578] sm:$0xff] %vm1388, 0.0
    %1565 = vst.msk [vmem:[#allocation2 + $0x580] sm:$0xff] %vm1388, 0.0
    %1566 = vst.msk [vmem:[#allocation2 + $0x588] sm:$0xff] %vm1388, 0.0
    %1567 = vst.msk [vmem:[#allocation2 + $0x590] sm:$0xff] %vm1388, 0.0
    %1568 = vst.msk [vmem:[#allocation2 + $0x598] sm:$0xff] %vm1388, 0.0
    %1569 = vst.msk [vmem:[#allocation2 + $0x5a0] sm:$0xff] %vm1388, 0.0
    %1570 = vst.msk [vmem:[#allocation2 + $0x5a8] sm:$0xff] %vm1388, 0.0
    %1571 = vst.msk [vmem:[#allocation2 + $0x5b0] sm:$0xff] %vm1388, 0.0
    %1572 = vst.msk [vmem:[#allocation2 + $0x5b8] sm:$0xff] %vm1388, 0.0
    %1573 = vst.msk [vmem:[#allocation2 + $0x5c0] sm:$0xff] %vm1388, 0.0
    %1574 = vst.msk [vmem:[#allocation2 + $0x5c8] sm:$0xff] %vm1388, 0.0
    %1575 = vst.msk [vmem:[#allocation2 + $0x5d0] sm:$0xff] %vm1388, 0.0
    %1576 = vst.msk [vmem:[#allocation2 + $0x5d8] sm:$0xff] %vm1388, 0.0
    %1577 = vst.msk [vmem:[#allocation2 + $0x5e0] sm:$0xff] %vm1388, 0.0
    %1578 = vst.msk [vmem:[#allocation2 + $0x5e8] sm:$0xff] %vm1388, 0.0
    %1579 = vst.msk [vmem:[#allocation2 + $0x5f0] sm:$0xff] %vm1388, 0.0
    %1580 = vst.msk [vmem:[#allocation2 + $0x5f8] sm:$0xff] %vm1388, 0.0
    %1581 = vst.msk [vmem:[#allocation2 + $0x600] sm:$0xff] %vm1388, 0.0
    %1582 = vst.msk [vmem:[#allocation2 + $0x608] sm:$0xff] %vm1388, 0.0
    %1583 = vst.msk [vmem:[#allocation2 + $0x610] sm:$0xff] %vm1388, 0.0
    %1584 = vst.msk [vmem:[#allocation2 + $0x618] sm:$0xff] %vm1388, 0.0
    %1585 = vst.msk [vmem:[#allocation2 + $0x620] sm:$0xff] %vm1388, 0.0
    %1586 = vst.msk [vmem:[#allocation2 + $0x628] sm:$0xff] %vm1388, 0.0
    %1587 = vst.msk [vmem:[#allocation2 + $0x630] sm:$0xff] %vm1388, 0.0
    %1588 = vst.msk [vmem:[#allocation2 + $0x638] sm:$0xff] %vm1388, 0.0
    %s1589 = scalar_lea.vmem [#allocation2], 96
    %1590 = vst.msk [vmem:[%s1589] sm:$0xff] %vm1388, %v1260
    %1591 = vst.msk [vmem:[%s1589 + $0x8] sm:$0xff] %vm1388, %v1261
    %1592 = vst.msk [vmem:[%s1589 + $0x10] sm:$0xff] %vm1388, %v1262
    %1593 = vst.msk [vmem:[%s1589 + $0x18] sm:$0xff] %vm1388, %v1263
    %1594 = vst.msk [vmem:[%s1589 + $0x20] sm:$0xff] %vm1388, %v1264
    %1595 = vst.msk [vmem:[%s1589 + $0x28] sm:$0xff] %vm1388, %v1265
    %1596 = vst.msk [vmem:[%s1589 + $0x30] sm:$0xff] %vm1388, %v1266
    %1597 = vst.msk [vmem:[%s1589 + $0x38] sm:$0xff] %vm1388, %v1267
    %1598 = vst.msk [vmem:[%s1589 + $0x50] sm:$0xff] %vm1388, %v1268
    %1599 = vst.msk [vmem:[%s1589 + $0x58] sm:$0xff] %vm1388, %v1269
    %1600 = vst.msk [vmem:[%s1589 + $0x60] sm:$0xff] %vm1388, %v1270
    %1601 = vst.msk [vmem:[%s1589 + $0x68] sm:$0xff] %vm1388, %v1271
    %1602 = vst.msk [vmem:[%s1589 + $0x70] sm:$0xff] %vm1388, %v1272
    %1603 = vst.msk [vmem:[%s1589 + $0x78] sm:$0xff] %vm1388, %v1273
    %1604 = vst.msk [vmem:[%s1589 + $0x80] sm:$0xff] %vm1388, %v1274
    %1605 = vst.msk [vmem:[%s1589 + $0x88] sm:$0xff] %vm1388, %v1275
    %1606 = vst.msk [vmem:[%s1589 + $0xa0] sm:$0xff] %vm1388, %v1276
    %1607 = vst.msk [vmem:[%s1589 + $0xa8] sm:$0xff] %vm1388, %v1277
    %1608 = vst.msk [vmem:[%s1589 + $0xb0] sm:$0xff] %vm1388, %v1278
    %1609 = vst.msk [vmem:[%s1589 + $0xb8] sm:$0xff] %vm1388, %v1279
    %1610 = vst.msk [vmem:[%s1589 + $0xc0] sm:$0xff] %vm1388, %v1280
    %1611 = vst.msk [vmem:[%s1589 + $0xc8] sm:$0xff] %vm1388, %v1281
    %1612 = vst.msk [vmem:[%s1589 + $0xd0] sm:$0xff] %vm1388, %v1282
    %1613 = vst.msk [vmem:[%s1589 + $0xd8] sm:$0xff] %vm1388, %v1283
    %1614 = vst.msk [vmem:[%s1589 + $0xf0] sm:$0xff] %vm1388, %v1284
    %1615 = vst.msk [vmem:[%s1589 + $0xf8] sm:$0xff] %vm1388, %v1285
    %1616 = vst.msk [vmem:[%s1589 + $0x100] sm:$0xff] %vm1388, %v1286
    %1617 = vst.msk [vmem:[%s1589 + $0x108] sm:$0xff] %vm1388, %v1287
    %1618 = vst.msk [vmem:[%s1589 + $0x110] sm:$0xff] %vm1388, %v1288
    %1619 = vst.msk [vmem:[%s1589 + $0x118] sm:$0xff] %vm1388, %v1289
    %1620 = vst.msk [vmem:[%s1589 + $0x120] sm:$0xff] %vm1388, %v1290
    %1621 = vst.msk [vmem:[%s1589 + $0x128] sm:$0xff] %vm1388, %v1291
    %1622 = vst.msk [vmem:[%s1589 + $0x190] sm:$0xff] %vm1388, %v1292
    %1623 = vst.msk [vmem:[%s1589 + $0x198] sm:$0xff] %vm1388, %v1293
    %1624 = vst.msk [vmem:[%s1589 + $0x1a0] sm:$0xff] %vm1388, %v1294
    %1625 = vst.msk [vmem:[%s1589 + $0x1a8] sm:$0xff] %vm1388, %v1295
    %1626 = vst.msk [vmem:[%s1589 + $0x1b0] sm:$0xff] %vm1388, %v1296
    %1627 = vst.msk [vmem:[%s1589 + $0x1b8] sm:$0xff] %vm1388, %v1297
    %1628 = vst.msk [vmem:[%s1589 + $0x1c0] sm:$0xff] %vm1388, %v1298
    %1629 = vst.msk [vmem:[%s1589 + $0x1c8] sm:$0xff] %vm1388, %v1299
    %1630 = vst.msk [vmem:[%s1589 + $0x1e0] sm:$0xff] %vm1388, %v1300
    %1631 = vst.msk [vmem:[%s1589 + $0x1e8] sm:$0xff] %vm1388, %v1301
    %1632 = vst.msk [vmem:[%s1589 + $0x1f0] sm:$0xff] %vm1388, %v1302
    %1633 = vst.msk [vmem:[%s1589 + $0x1f8] sm:$0xff] %vm1388, %v1303
    %1634 = vst.msk [vmem:[%s1589 + $0x200] sm:$0xff] %vm1388, %v1304
    %1635 = vst.msk [vmem:[%s1589 + $0x208] sm:$0xff] %vm1388, %v1305
    %1636 = vst.msk [vmem:[%s1589 + $0x210] sm:$0xff] %vm1388, %v1306
    %1637 = vst.msk [vmem:[%s1589 + $0x218] sm:$0xff] %vm1388, %v1307
    %1638 = vst.msk [vmem:[%s1589 + $0x230] sm:$0xff] %vm1388, %v1308
    %1639 = vst.msk [vmem:[%s1589 + $0x238] sm:$0xff] %vm1388, %v1309
    %1640 = vst.msk [vmem:[%s1589 + $0x240] sm:$0xff] %vm1388, %v1310
    %1641 = vst.msk [vmem:[%s1589 + $0x248] sm:$0xff] %vm1388, %v1311
    %1642 = vst.msk [vmem:[%s1589 + $0x250] sm:$0xff] %vm1388, %v1312
    %1643 = vst.msk [vmem:[%s1589 + $0x258] sm:$0xff] %vm1388, %v1313
    %1644 = vst.msk [vmem:[%s1589 + $0x260] sm:$0xff] %vm1388, %v1314
    %1645 = vst.msk [vmem:[%s1589 + $0x268] sm:$0xff] %vm1388, %v1315
    %1646 = vst.msk [vmem:[%s1589 + $0x280] sm:$0xff] %vm1388, %v1316
    %1647 = vst.msk [vmem:[%s1589 + $0x288] sm:$0xff] %vm1388, %v1317
    %1648 = vst.msk [vmem:[%s1589 + $0x290] sm:$0xff] %vm1388, %v1318
    %1649 = vst.msk [vmem:[%s1589 + $0x298] sm:$0xff] %vm1388, %v1319
    %1650 = vst.msk [vmem:[%s1589 + $0x2a0] sm:$0xff] %vm1388, %v1320
    %1651 = vst.msk [vmem:[%s1589 + $0x2a8] sm:$0xff] %vm1388, %v1321
    %1652 = vst.msk [vmem:[%s1589 + $0x2b0] sm:$0xff] %vm1388, %v1322
    %1653 = vst.msk [vmem:[%s1589 + $0x2b8] sm:$0xff] %vm1388, %v1323
    %1654 = vst.msk [vmem:[%s1589 + $0x320] sm:$0xff] %vm1388, %v1324
    %1655 = vst.msk [vmem:[%s1589 + $0x328] sm:$0xff] %vm1388, %v1325
    %1656 = vst.msk [vmem:[%s1589 + $0x330] sm:$0xff] %vm1388, %v1326
    %1657 = vst.msk [vmem:[%s1589 + $0x338] sm:$0xff] %vm1388, %v1327
    %1658 = vst.msk [vmem:[%s1589 + $0x340] sm:$0xff] %vm1388, %v1328
    %1659 = vst.msk [vmem:[%s1589 + $0x348] sm:$0xff] %vm1388, %v1329
    %1660 = vst.msk [vmem:[%s1589 + $0x350] sm:$0xff] %vm1388, %v1330
    %1661 = vst.msk [vmem:[%s1589 + $0x358] sm:$0xff] %vm1388, %v1331
    %1662 = vst.msk [vmem:[%s1589 + $0x370] sm:$0xff] %vm1388, %v1332
    %1663 = vst.msk [vmem:[%s1589 + $0x378] sm:$0xff] %vm1388, %v1333
    %1664 = vst.msk [vmem:[%s1589 + $0x380] sm:$0xff] %vm1388, %v1334
    %1665 = vst.msk [vmem:[%s1589 + $0x388] sm:$0xff] %vm1388, %v1335
    %1666 = vst.msk [vmem:[%s1589 + $0x390] sm:$0xff] %vm1388, %v1336
    %1667 = vst.msk [vmem:[%s1589 + $0x398] sm:$0xff] %vm1388, %v1337
    %1668 = vst.msk [vmem:[%s1589 + $0x3a0] sm:$0xff] %vm1388, %v1338
    %1669 = vst.msk [vmem:[%s1589 + $0x3a8] sm:$0xff] %vm1388, %v1339
    %1670 = vst.msk [vmem:[%s1589 + $0x3c0] sm:$0xff] %vm1388, %v1340
    %1671 = vst.msk [vmem:[%s1589 + $0x3c8] sm:$0xff] %vm1388, %v1341
    %1672 = vst.msk [vmem:[%s1589 + $0x3d0] sm:$0xff] %vm1388, %v1342
    %1673 = vst.msk [vmem:[%s1589 + $0x3d8] sm:$0xff] %vm1388, %v1343
    %1674 = vst.msk [vmem:[%s1589 + $0x3e0] sm:$0xff] %vm1388, %v1344
    %1675 = vst.msk [vmem:[%s1589 + $0x3e8] sm:$0xff] %vm1388, %v1345
    %1676 = vst.msk [vmem:[%s1589 + $0x3f0] sm:$0xff] %vm1388, %v1346
    %1677 = vst.msk [vmem:[%s1589 + $0x3f8] sm:$0xff] %vm1388, %v1347
    %1678 = vst.msk [vmem:[%s1589 + $0x410] sm:$0xff] %vm1388, %v1348
    %1679 = vst.msk [vmem:[%s1589 + $0x418] sm:$0xff] %vm1388, %v1349
    %1680 = vst.msk [vmem:[%s1589 + $0x420] sm:$0xff] %vm1388, %v1350
    %1681 = vst.msk [vmem:[%s1589 + $0x428] sm:$0xff] %vm1388, %v1351
    %1682 = vst.msk [vmem:[%s1589 + $0x430] sm:$0xff] %vm1388, %v1352
    %1683 = vst.msk [vmem:[%s1589 + $0x438] sm:$0xff] %vm1388, %v1353
    %1684 = vst.msk [vmem:[%s1589 + $0x440] sm:$0xff] %vm1388, %v1354
    %1685 = vst.msk [vmem:[%s1589 + $0x448] sm:$0xff] %vm1388, %v1355
    %1686 = vst.msk [vmem:[%s1589 + $0x4b0] sm:$0xff] %vm1388, %v1356
    %1687 = vst.msk [vmem:[%s1589 + $0x4b8] sm:$0xff] %vm1388, %v1357
    %1688 = vst.msk [vmem:[%s1589 + $0x4c0] sm:$0xff] %vm1388, %v1358
    %1689 = vst.msk [vmem:[%s1589 + $0x4c8] sm:$0xff] %vm1388, %v1359
    %1690 = vst.msk [vmem:[%s1589 + $0x4d0] sm:$0xff] %vm1388, %v1360
    %1691 = vst.msk [vmem:[%s1589 + $0x4d8] sm:$0xff] %vm1388, %v1361
    %1692 = vst.msk [vmem:[%s1589 + $0x4e0] sm:$0xff] %vm1388, %v1362
    %1693 = vst.msk [vmem:[%s1589 + $0x4e8] sm:$0xff] %vm1388, %v1363
    %1694 = vst.msk [vmem:[%s1589 + $0x500] sm:$0xff] %vm1388, %v1364
    %1695 = vst.msk [vmem:[%s1589 + $0x508] sm:$0xff] %vm1388, %v1365
    %1696 = vst.msk [vmem:[%s1589 + $0x510] sm:$0xff] %vm1388, %v1366
    %1697 = vst.msk [vmem:[%s1589 + $0x518] sm:$0xff] %vm1388, %v1367
    %1698 = vst.msk [vmem:[%s1589 + $0x520] sm:$0xff] %vm1388, %v1368
    %1699 = vst.msk [vmem:[%s1589 + $0x528] sm:$0xff] %vm1388, %v1369
    %1700 = vst.msk [vmem:[%s1589 + $0x530] sm:$0xff] %vm1388, %v1370
    %1701 = vst.msk [vmem:[%s1589 + $0x538] sm:$0xff] %vm1388, %v1371
    %1702 = vst.msk [vmem:[%s1589 + $0x550] sm:$0xff] %vm1388, %v1372
    %1703 = vst.msk [vmem:[%s1589 + $0x558] sm:$0xff] %vm1388, %v1373
    %1704 = vst.msk [vmem:[%s1589 + $0x560] sm:$0xff] %vm1388, %v1374
    %1705 = vst.msk [vmem:[%s1589 + $0x568] sm:$0xff] %vm1388, %v1375
    %1706 = vst.msk [vmem:[%s1589 + $0x570] sm:$0xff] %vm1388, %v1376
    %1707 = vst.msk [vmem:[%s1589 + $0x578] sm:$0xff] %vm1388, %v1377
    %1708 = vst.msk [vmem:[%s1589 + $0x580] sm:$0xff] %vm1388, %v1378
    %1709 = vst.msk [vmem:[%s1589 + $0x588] sm:$0xff] %vm1388, %v1379
    %1710 = vst.msk [vmem:[%s1589 + $0x5a0] sm:$0xff] %vm1388, %v1380
    %1711 = vst.msk [vmem:[%s1589 + $0x5a8] sm:$0xff] %vm1388, %v1381
    %1712 = vst.msk [vmem:[%s1589 + $0x5b0] sm:$0xff] %vm1388, %v1382
    %1713 = vst.msk [vmem:[%s1589 + $0x5b8] sm:$0xff] %vm1388, %v1383
    %1714 = vst.msk [vmem:[%s1589 + $0x5c0] sm:$0xff] %vm1388, %v1384
    %1715 = vst.msk [vmem:[%s1589 + $0x5c8] sm:$0xff] %vm1388, %v1385
    %1716 = vst.msk [vmem:[%s1589 + $0x5d0] sm:$0xff] %vm1388, %v1386
    %1717 = vst.msk [vmem:[%s1589 + $0x5d8] sm:$0xff] %vm1388, %v1387
    %s1718 = scalar_lea.vmem [#allocation2], 1200
    %v1719 = vld [vmem:[%s1718] sm:$0xff]
    %v1720 = vld [vmem:[%s1718 + $0x8] sm:$0xff]
    %v1721 = vld [vmem:[%s1718 + $0x10] sm:$0xff]
    %v1722 = vld [vmem:[%s1718 + $0x18] sm:$0xff]
    %v1723 = vld [vmem:[%s1718 + $0x20] sm:$0xff]
    %v1724 = vld [vmem:[%s1718 + $0x28] sm:$0xff]
    %v1725 = vld [vmem:[%s1718 + $0x30] sm:$0xff]
    %v1726 = vld [vmem:[%s1718 + $0x38] sm:$0xff]
    %v1727 = vld [vmem:[%s1718 + $0x50] sm:$0xff]
    %v1728 = vld [vmem:[%s1718 + $0x58] sm:$0xff]
    %v1729 = vld [vmem:[%s1718 + $0x60] sm:$0xff]
    %v1730 = vld [vmem:[%s1718 + $0x68] sm:$0xff]
    %v1731 = vld [vmem:[%s1718 + $0x70] sm:$0xff]
    %v1732 = vld [vmem:[%s1718 + $0x78] sm:$0xff]
    %v1733 = vld [vmem:[%s1718 + $0x80] sm:$0xff]
    %v1734 = vld [vmem:[%s1718 + $0x88] sm:$0xff]
    %v1735 = vld [vmem:[%s1718 + $0xa0] sm:$0xff]
    %v1736 = vld [vmem:[%s1718 + $0xa8] sm:$0xff]
    %v1737 = vld [vmem:[%s1718 + $0xb0] sm:$0xff]
    %v1738 = vld [vmem:[%s1718 + $0xb8] sm:$0xff]
    %v1739 = vld [vmem:[%s1718 + $0xc0] sm:$0xff]
    %v1740 = vld [vmem:[%s1718 + $0xc8] sm:$0xff]
    %v1741 = vld [vmem:[%s1718 + $0xd0] sm:$0xff]
    %v1742 = vld [vmem:[%s1718 + $0xd8] sm:$0xff]
    %v1743 = vld [vmem:[%s1718 + $0xf0] sm:$0xff]
    %v1744 = vld [vmem:[%s1718 + $0xf8] sm:$0xff]
    %v1745 = vld [vmem:[%s1718 + $0x100] sm:$0xff]
    %v1746 = vld [vmem:[%s1718 + $0x108] sm:$0xff]
    %v1747 = vld [vmem:[%s1718 + $0x110] sm:$0xff]
    %v1748 = vld [vmem:[%s1718 + $0x118] sm:$0xff]
    %v1749 = vld [vmem:[%s1718 + $0x120] sm:$0xff]
    %v1750 = vld [vmem:[%s1718 + $0x128] sm:$0xff]
    %v1751 = vld [vmem:[%s3] sm:$0xff]
    %s1752 = scalar_lea.vmem [#allocation2], 816
    %v1753 = vld [vmem:[%s1752] sm:$0xff]
    %v1754 = vld [vmem:[%s1752 + $0x8] sm:$0xff]
    %v1755 = vld [vmem:[%s1752 + $0x10] sm:$0xff]
    %v1756 = vld [vmem:[%s1752 + $0x18] sm:$0xff]
    %v1757 = vld [vmem:[%s1752 + $0x20] sm:$0xff]
    %v1758 = vld [vmem:[%s1752 + $0x28] sm:$0xff]
    %v1759 = vld [vmem:[%s1752 + $0x30] sm:$0xff]
    %v1760 = vld [vmem:[%s1752 + $0x38] sm:$0xff]
    %v1761 = vld [vmem:[%s1752 + $0x50] sm:$0xff]
    %v1762 = vld [vmem:[%s1752 + $0x58] sm:$0xff]
    %v1763 = vld [vmem:[%s1752 + $0x60] sm:$0xff]
    %v1764 = vld [vmem:[%s1752 + $0x68] sm:$0xff]
    %v1765 = vld [vmem:[%s1752 + $0x70] sm:$0xff]
    %v1766 = vld [vmem:[%s1752 + $0x78] sm:$0xff]
    %v1767 = vld [vmem:[%s1752 + $0x80] sm:$0xff]
    %v1768 = vld [vmem:[%s1752 + $0x88] sm:$0xff]
    %v1769 = vld [vmem:[%s1752 + $0xa0] sm:$0xff]
    %v1770 = vld [vmem:[%s1752 + $0xa8] sm:$0xff]
    %v1771 = vld [vmem:[%s1752 + $0xb0] sm:$0xff]
    %v1772 = vld [vmem:[%s1752 + $0xb8] sm:$0xff]
    %v1773 = vld [vmem:[%s1752 + $0xc0] sm:$0xff]
    %v1774 = vld [vmem:[%s1752 + $0xc8] sm:$0xff]
    %v1775 = vld [vmem:[%s1752 + $0xd0] sm:$0xff]
    %v1776 = vld [vmem:[%s1752 + $0xd8] sm:$0xff]
    %v1777 = vld [vmem:[%s1752 + $0xf0] sm:$0xff]
    %v1778 = vld [vmem:[%s1752 + $0xf8] sm:$0xff]
    %v1779 = vld [vmem:[%s1752 + $0x100] sm:$0xff]
    %v1780 = vld [vmem:[%s1752 + $0x108] sm:$0xff]
    %v1781 = vld [vmem:[%s1752 + $0x110] sm:$0xff]
    %v1782 = vld [vmem:[%s1752 + $0x118] sm:$0xff]
    %v1783 = vld [vmem:[%s1752 + $0x120] sm:$0xff]
    %v1784 = vld [vmem:[%s1752 + $0x128] sm:$0xff]
    %s1785 = scalar_lea.vmem %s3, 8
    %v1786 = vld [vmem:[%s1785] sm:$0xff]
    %v1788 = vsel %vm1388, %v1753, 0
    %v1791 = vsel %vm1388, %v1754, 0
    %v1794 = vsel %vm1388, %v1755, 0
    %v1797 = vsel %vm1388, %v1756, 0
    %v1800 = vsel %vm1388, %v1757, 0
    %v1803 = vsel %vm1388, %v1758, 0
    %v1806 = vsel %vm1388, %v1759, 0
    %v1809 = vsel %vm1388, %v1760, 0
    %v1812 = vsel %vm1388, %v1761, 0
    %v1815 = vsel %vm1388, %v1762, 0
    %v1818 = vsel %vm1388, %v1763, 0
    %v1821 = vsel %vm1388, %v1764, 0
    %v1824 = vsel %vm1388, %v1765, 0
    %v1827 = vsel %vm1388, %v1766, 0
    %v1830 = vsel %vm1388, %v1767, 0
    %v1833 = vsel %vm1388, %v1768, 0
    %v1836 = vsel %vm1388, %v1769, 0
    %v1839 = vsel %vm1388, %v1770, 0
    %v1842 = vsel %vm1388, %v1771, 0
    %v1845 = vsel %vm1388, %v1772, 0
    %v1848 = vsel %vm1388, %v1773, 0
    %v1851 = vsel %vm1388, %v1774, 0
    %v1854 = vsel %vm1388, %v1775, 0
    %v1857 = vsel %vm1388, %v1776, 0
    %v1860 = vsel %vm1388, %v1777, 0
    %v1863 = vsel %vm1388, %v1778, 0
    %v1866 = vsel %vm1388, %v1779, 0
    %v1869 = vsel %vm1388, %v1780, 0
    %v1872 = vsel %vm1388, %v1781, 0
    %v1875 = vsel %vm1388, %v1782, 0
    %v1878 = vsel %vm1388, %v1783, 0
    %v1881 = vsel %vm1388, %v1784, 0
    %1883 = vmatprep.subr.mxu0 0.0
    %1884 = vmatpush1.msra.mxu0 %v1786
    %1885 = vmatprep.subr.mxu0 0.0
    %1886 = vmatpush1.msra.mxu0 0.0
    %1887 = vmatprep.subr.mxu0 0.0
    %1888 = vmatpush1.msra.mxu0 0.0
    %1889 = vmatprep.subr.mxu0 0.0
    %1890 = vmatpush1.msra.mxu0 0.0
    %1891 = vmatprep.subr.mxu0 0.0
    %1892 = vmatpush1.msra.mxu0 0.0
    %1893 = vmatprep.subr.mxu0 0.0
    %1894 = vmatpush1.msra.mxu0 0.0
    %1895 = vmatprep.subr.mxu0 0.0
    %1896 = vmatpush1.msra.mxu0 0.0
    %1897 = vmatprep.subr.mxu0 0.0
    %1898 = vmatpush1.msra.mxu0 0.0
    %1899 = vmatprep.subr.mxu0 0.0
    %1900 = vmatpush1.msra.mxu0 0.0
    %1901 = vmatprep.subr.mxu0 0.0
    %1902 = vmatpush1.msra.mxu0 0.0
    %1903 = vmatprep.subr.mxu0 0.0
    %1904 = vmatpush1.msra.mxu0 0.0
    %1905 = vmatprep.subr.mxu0 0.0
    %1906 = vmatpush1.msra.mxu0 0.0
    %1907 = vmatprep.subr.mxu0 0.0
    %1908 = vmatpush1.msra.mxu0 0.0
    %1909 = vmatprep.subr.mxu0 0.0
    %1910 = vmatpush1.msra.mxu0 0.0
    %1911 = vmatprep.subr.mxu0 0.0
    %1912 = vmatpush1.msra.mxu0 0.0
    %1913 = vmatprep.subr.mxu0 0.0
    %1914 = vmatpush1.msra.mxu0 0.0
    %1915 = vmatprep.subr.mxu0 0.0
    %1916 = vmatpush1.msra.mxu0 0.0
    %1917 = vmatprep.subr.mxu0 0.0
    %1918 = vmatpush1.msra.mxu0 0.0
    %1919 = vmatprep.subr.mxu0 0.0
    %1920 = vmatpush1.msra.mxu0 0.0
    %1921 = vmatprep.subr.mxu0 0.0
    %1922 = vmatpush1.msra.mxu0 0.0
    %1923 = vmatprep.subr.mxu0 0.0
    %1924 = vmatpush1.msra.mxu0 0.0
    %1925 = vmatprep.subr.mxu0 0.0
    %1926 = vmatpush1.msra.mxu0 0.0
    %1927 = vmatprep.subr.mxu0 0.0
    %1928 = vmatpush1.msra.mxu0 0.0
    %1929 = vmatprep.subr.mxu0 0.0
    %1930 = vmatpush1.msra.mxu0 0.0
    %1931 = vmatprep.subr.mxu0 0.0
    %1932 = vmatpush1.msra.mxu0 0.0
    %1933 = vmatprep.subr.mxu0 0.0
    %1934 = vmatpush1.msra.mxu0 0.0
    %1935 = vmatprep.subr.mxu0 0.0
    %1936 = vmatpush1.msra.mxu0 0.0
    %1937 = vmatprep.subr.mxu0 0.0
    %1938 = vmatpush1.msra.mxu0 0.0
    %1939 = vmatprep.subr.mxu0 0.0
    %1940 = vmatpush1.msra.mxu0 0.0
    %1941 = vmatprep.subr.mxu0 0.0
    %1942 = vmatpush1.msra.mxu0 0.0
    %1943 = vmatprep.subr.mxu0 0.0
    %1944 = vmatpush1.msra.mxu0 0.0
    %1945 = vmatprep.subr.mxu0 0.0
    %1946 = vmatpush1.msra.mxu0 0.0
    %1947 = vmatprep.mubr.f32.mxu0 0.0
    %1948 = vmatmul.mubr.f32.gmra.mrb[0].mxu0 %v1788
    %v1949 = vpop.f32.mrb[0].mxu0
    %v1950 = vadd.f32 0.0, %v1949
    %v1951 = vpop.f32.mrb[0].mxu0
    %1952 = vmatprep.mubr.f32.mxu0 0.0
    %1953 = vmatmul.mubr.f32.gmra.mrb[0].mxu0 %v1791
    %v1954 = vpop.f32.mrb[0].mxu0
    %v1955 = vadd.f32 0.0, %v1954
    %v1956 = vpop.f32.mrb[0].mxu0
    %1957 = vmatprep.mubr.f32.mxu0 0.0
    %1958 = vmatmul.mubr.f32.gmra.mrb[0].mxu0 %v1794
    %v1959 = vpop.f32.mrb[0].mxu0
    %v1960 = vadd.f32 0.0, %v1959
    %v1961 = vpop.f32.mrb[0].mxu0
    %1962 = vmatprep.mubr.f32.mxu0 0.0
    %1963 = vmatmul.mubr.f32.gmra.mrb[0].mxu0 %v1797
    %v1964 = vpop.f32.mrb[0].mxu0
    %v1965 = vadd.f32 0.0, %v1964
    %v1966 = vpop.f32.mrb[0].mxu0
    %1967 = vmatprep.mubr.f32.mxu0 0.0
    %1968 = vmatmul.mubr.f32.gmra.mrb[0].mxu0 %v1800
    %v1969 = vpop.f32.mrb[0].mxu0
    %v1970 = vadd.f32 0.0, %v1969
    %v1971 = vpop.f32.mrb[0].mxu0
    %1972 = vmatprep.mubr.f32.mxu0 0.0
    %1973 = vmatmul.mubr.f32.gmra.mrb[0].mxu0 %v1803
    %v1974 = vpop.f32.mrb[0].mxu0
    %v1975 = vadd.f32 0.0, %v1974
    %v1976 = vpop.f32.mrb[0].mxu0
    %1977 = vmatprep.mubr.f32.mxu0 0.0
    %1978 = vmatmul.mubr.f32.gmra.mrb[0].mxu0 %v1806
    %v1979 = vpop.f32.mrb[0].mxu0
    %v1980 = vadd.f32 0.0, %v1979
    %v1981 = vpop.f32.mrb[0].mxu0
    %1982 = vmatprep.mubr.f32.mxu0 0.0
    %1983 = vmatmul.mubr.f32.gmra.mrb[0].mxu0 %v1809
    %v1984 = vpop.f32.mrb[0].mxu0
    %v1985 = vadd.f32 0.0, %v1984
    %v1986 = vpop.f32.mrb[0].mxu0
    %1987 = vmatprep.mubr.f32.mxu0 0.0
    %1988 = vmatmul.mubr.f32.gmra.mrb[0].mxu0 %v1812
    %v1989 = vpop.f32.mrb[0].mxu0
    %v1990 = vadd.f32 0.0, %v1989
    %v1991 = vpop.f32.mrb[0].mxu0
    %1992 = vmatprep.mubr.f32.mxu0 0.0
    %1993 = vmatmul.mubr.f32.gmra.mrb[0].mxu0 %v1815
    %v1994 = vpop.f32.mrb[0].mxu0
    %v1995 = vadd.f32 0.0, %v1994
    %v1996 = vpop.f32.mrb[0].mxu0
    %1997 = vmatprep.mubr.f32.mxu0 0.0
    %1998 = vmatmul.mubr.f32.gmra.mrb[0].mxu0 %v1818
    %v1999 = vpop.f32.mrb[0].mxu0
    %v2000 = vadd.f32 0.0, %v1999
    %v2001 = vpop.f32.mrb[0].mxu0
    %2002 = vmatprep.mubr.f32.mxu0 0.0
    %2003 = vmatmul.mubr.f32.gmra.mrb[0].mxu0 %v1821
    %v2004 = vpop.f32.mrb[0].mxu0
    %v2005 = vadd.f32 0.0, %v2004
    %v2006 = vpop.f32.mrb[0].mxu0
    %2007 = vmatprep.mubr.f32.mxu0 0.0
    %2008 = vmatmul.mubr.f32.gmra.mrb[0].mxu0 %v1824
    %v2009 = vpop.f32.mrb[0].mxu0
    %v2010 = vadd.f32 0.0, %v2009
    %v2011 = vpop.f32.mrb[0].mxu0
    %2012 = vmatprep.mubr.f32.mxu0 0.0
    %2013 = vmatmul.mubr.f32.gmra.mrb[0].mxu0 %v1827
    %v2014 = vpop.f32.mrb[0].mxu0
    %v2015 = vadd.f32 0.0, %v2014
    %v2016 = vpop.f32.mrb[0].mxu0
    %2017 = vmatprep.mubr.f32.mxu0 0.0
    %2018 = vmatmul.mubr.f32.gmra.mrb[0].mxu0 %v1830
    %v2019 = vpop.f32.mrb[0].mxu0
    %v2020 = vadd.f32 0.0, %v2019
    %v2021 = vpop.f32.mrb[0].mxu0
    %2022 = vmatprep.mubr.f32.mxu0 0.0
    %2023 = vmatmul.mubr.f32.gmra.mrb[0].mxu0 %v1833
    %v2024 = vpop.f32.mrb[0].mxu0
    %v2025 = vadd.f32 0.0, %v2024
    %v2026 = vpop.f32.mrb[0].mxu0
    %2027 = vmatprep.mubr.f32.mxu0 0.0
    %2028 = vmatmul.mubr.f32.gmra.mrb[0].mxu0 %v1836
    %v2029 = vpop.f32.mrb[0].mxu0
    %v2030 = vadd.f32 0.0, %v2029
    %v2031 = vpop.f32.mrb[0].mxu0
    %2032 = vmatprep.mubr.f32.mxu0 0.0
    %2033 = vmatmul.mubr.f32.gmra.mrb[0].mxu0 %v1839
    %v2034 = vpop.f32.mrb[0].mxu0
    %v2035 = vadd.f32 0.0, %v2034
    %v2036 = vpop.f32.mrb[0].mxu0
    %2037 = vmatprep.mubr.f32.mxu0 0.0
    %2038 = vmatmul.mubr.f32.gmra.mrb[0].mxu0 %v1842
    %v2039 = vpop.f32.mrb[0].mxu0
    %v2040 = vadd.f32 0.0, %v2039
    %v2041 = vpop.f32.mrb[0].mxu0
    %2042 = vmatprep.mubr.f32.mxu0 0.0
    %2043 = vmatmul.mubr.f32.gmra.mrb[0].mxu0 %v1845
    %v2044 = vpop.f32.mrb[0].mxu0
    %v2045 = vadd.f32 0.0, %v2044
    %v2046 = vpop.f32.mrb[0].mxu0
    %2047 = vmatprep.mubr.f32.mxu0 0.0
    %2048 = vmatmul.mubr.f32.gmra.mrb[0].mxu0 %v1848
    %v2049 = vpop.f32.mrb[0].mxu0
    %v2050 = vadd.f32 0.0, %v2049
    %v2051 = vpop.f32.mrb[0].mxu0
    %2052 = vmatprep.mubr.f32.mxu0 0.0
    %2053 = vmatmul.mubr.f32.gmra.mrb[0].mxu0 %v1851
    %v2054 = vpop.f32.mrb[0].mxu0
    %v2055 = vadd.f32 0.0, %v2054
    %v2056 = vpop.f32.mrb[0].mxu0
    %2057 = vmatprep.mubr.f32.mxu0 0.0
    %2058 = vmatmul.mubr.f32.gmra.mrb[0].mxu0 %v1854
    %v2059 = vpop.f32.mrb[0].mxu0
    %v2060 = vadd.f32 0.0, %v2059
    %v2061 = vpop.f32.mrb[0].mxu0
    %2062 = vmatprep.mubr.f32.mxu0 0.0
    %2063 = vmatmul.mubr.f32.gmra.mrb[0].mxu0 %v1857
    %v2064 = vpop.f32.mrb[0].mxu0
    %v2065 = vadd.f32 0.0, %v2064
    %v2066 = vpop.f32.mrb[0].mxu0
    %2067 = vmatprep.mubr.f32.mxu0 0.0
    %2068 = vmatmul.mubr.f32.gmra.mrb[0].mxu0 %v1860
    %v2069 = vpop.f32.mrb[0].mxu0
    %v2070 = vadd.f32 0.0, %v2069
    %v2071 = vpop.f32.mrb[0].mxu0
    %2072 = vmatprep.mubr.f32.mxu0 0.0
    %2073 = vmatmul.mubr.f32.gmra.mrb[0].mxu0 %v1863
    %v2074 = vpop.f32.mrb[0].mxu0
    %v2075 = vadd.f32 0.0, %v2074
    %v2076 = vpop.f32.mrb[0].mxu0
    %2077 = vmatprep.mubr.f32.mxu0 0.0
    %2078 = vmatmul.mubr.f32.gmra.mrb[0].mxu0 %v1866
    %v2079 = vpop.f32.mrb[0].mxu0
    %v2080 = vadd.f32 0.0, %v2079
    %v2081 = vpop.f32.mrb[0].mxu0
    %2082 = vmatprep.mubr.f32.mxu0 0.0
    %2083 = vmatmul.mubr.f32.gmra.mrb[0].mxu0 %v1869
    %v2084 = vpop.f32.mrb[0].mxu0
    %v2085 = vadd.f32 0.0, %v2084
    %v2086 = vpop.f32.mrb[0].mxu0
    %2087 = vmatprep.mubr.f32.mxu0 0.0
    %2088 = vmatmul.mubr.f32.gmra.mrb[0].mxu0 %v1872
    %v2089 = vpop.f32.mrb[0].mxu0
    %v2090 = vadd.f32 0.0, %v2089
    %v2091 = vpop.f32.mrb[0].mxu0
    %2092 = vmatprep.mubr.f32.mxu0 0.0
    %2093 = vmatmul.mubr.f32.gmra.mrb[0].mxu0 %v1875
    %v2094 = vpop.f32.mrb[0].mxu0
    %v2095 = vadd.f32 0.0, %v2094
    %v2096 = vpop.f32.mrb[0].mxu0
    %2097 = vmatprep.mubr.f32.mxu0 0.0
    %2098 = vmatmul.mubr.f32.gmra.mrb[0].mxu0 %v1878
    %v2099 = vpop.f32.mrb[0].mxu0
    %v2100 = vadd.f32 0.0, %v2099
    %v2101 = vpop.f32.mrb[0].mxu0
    %2102 = vmatprep.mubr.f32.mxu0 0.0
    %2103 = vmatmul.mubr.f32.gmra.mrb[0].mxu0 %v1881
    %v2104 = vpop.f32.mrb[0].mxu0
    %v2105 = vadd.f32 0.0, %v2104
    %v2106 = vpop.f32.mrb[0].mxu0
    %2107 = vdwg.mxu0
    %v2109 = vsel %vm1388, %v1719, 0
    %v2112 = vsel %vm1388, %v1720, 0
    %v2115 = vsel %vm1388, %v1721, 0
    %v2118 = vsel %vm1388, %v1722, 0
    %v2121 = vsel %vm1388, %v1723, 0
    %v2124 = vsel %vm1388, %v1724, 0
    %v2127 = vsel %vm1388, %v1725, 0
    %v2130 = vsel %vm1388, %v1726, 0
    %v2133 = vsel %vm1388, %v1727, 0
    %v2136 = vsel %vm1388, %v1728, 0
    %v2139 = vsel %vm1388, %v1729, 0
    %v2142 = vsel %vm1388, %v1730, 0
    %v2145 = vsel %vm1388, %v1731, 0
    %v2148 = vsel %vm1388, %v1732, 0
    %v2151 = vsel %vm1388, %v1733, 0
    %v2154 = vsel %vm1388, %v1734, 0
    %v2157 = vsel %vm1388, %v1735, 0
    %v2160 = vsel %vm1388, %v1736, 0
    %v2163 = vsel %vm1388, %v1737, 0
    %v2166 = vsel %vm1388, %v1738, 0
    %v2169 = vsel %vm1388, %v1739, 0
    %v2172 = vsel %vm1388, %v1740, 0
    %v2175 = vsel %vm1388, %v1741, 0
    %v2178 = vsel %vm1388, %v1742, 0
    %v2181 = vsel %vm1388, %v1743, 0
    %v2184 = vsel %vm1388, %v1744, 0
    %v2187 = vsel %vm1388, %v1745, 0
    %v2190 = vsel %vm1388, %v1746, 0
    %v2193 = vsel %vm1388, %v1747, 0
    %v2196 = vsel %vm1388, %v1748, 0
    %v2199 = vsel %vm1388, %v1749, 0
    %v2202 = vsel %vm1388, %v1750, 0
    %2204 = vmatprep.subr.mxu0 0.0
    %2205 = vmatpush1.msra.mxu0 %v1751
    %2206 = vmatprep.subr.mxu0 0.0
    %2207 = vmatpush1.msra.mxu0 0.0
    %2208 = vmatprep.subr.mxu0 0.0
    %2209 = vmatpush1.msra.mxu0 0.0
    %2210 = vmatprep.subr.mxu0 0.0
    %2211 = vmatpush1.msra.mxu0 0.0
    %2212 = vmatprep.subr.mxu0 0.0
    %2213 = vmatpush1.msra.mxu0 0.0
    %2214 = vmatprep.subr.mxu0 0.0
    %2215 = vmatpush1.msra.mxu0 0.0
    %2216 = vmatprep.subr.mxu0 0.0
    %2217 = vmatpush1.msra.mxu0 0.0
    %2218 = vmatprep.subr.mxu0 0.0
    %2219 = vmatpush1.msra.mxu0 0.0
    %2220 = vmatprep.subr.mxu0 0.0
    %2221 = vmatpush1.msra.mxu0 0.0
    %2222 = vmatprep.subr.mxu0 0.0
    %2223 = vmatpush1.msra.mxu0 0.0
    %2224 = vmatprep.subr.mxu0 0.0
    %2225 = vmatpush1.msra.mxu0 0.0
    %2226 = vmatprep.subr.mxu0 0.0
    %2227 = vmatpush1.msra.mxu0 0.0
    %2228 = vmatprep.subr.mxu0 0.0
    %2229 = vmatpush1.msra.mxu0 0.0
    %2230 = vmatprep.subr.mxu0 0.0
    %2231 = vmatpush1.msra.mxu0 0.0
    %2232 = vmatprep.subr.mxu0 0.0
    %2233 = vmatpush1.msra.mxu0 0.0
    %2234 = vmatprep.subr.mxu0 0.0
    %2235 = vmatpush1.msra.mxu0 0.0
    %2236 = vmatprep.subr.mxu0 0.0
    %2237 = vmatpush1.msra.mxu0 0.0
    %2238 = vmatprep.subr.mxu0 0.0
    %2239 = vmatpush1.msra.mxu0 0.0
    %2240 = vmatprep.subr.mxu0 0.0
    %2241 = vmatpush1.msra.mxu0 0.0
    %2242 = vmatprep.subr.mxu0 0.0
    %2243 = vmatpush1.msra.mxu0 0.0
    %2244 = vmatprep.subr.mxu0 0.0
    %2245 = vmatpush1.msra.mxu0 0.0
    %2246 = vmatprep.subr.mxu0 0.0
    %2247 = vmatpush1.msra.mxu0 0.0
    %2248 = vmatprep.subr.mxu0 0.0
    %2249 = vmatpush1.msra.mxu0 0.0
    %2250 = vmatprep.subr.mxu0 0.0
    %2251 = vmatpush1.msra.mxu0 0.0
    %2252 = vmatprep.subr.mxu0 0.0
    %2253 = vmatpush1.msra.mxu0 0.0
    %2254 = vmatprep.subr.mxu0 0.0
    %2255 = vmatpush1.msra.mxu0 0.0
    %2256 = vmatprep.subr.mxu0 0.0
    %2257 = vmatpush1.msra.mxu0 0.0
    %2258 = vmatprep.subr.mxu0 0.0
    %2259 = vmatpush1.msra.mxu0 0.0
    %2260 = vmatprep.subr.mxu0 0.0
    %2261 = vmatpush1.msra.mxu0 0.0
    %2262 = vmatprep.subr.mxu0 0.0
    %2263 = vmatpush1.msra.mxu0 0.0
    %2264 = vmatprep.subr.mxu0 0.0
    %2265 = vmatpush1.msra.mxu0 0.0
    %2266 = vmatprep.subr.mxu0 0.0
    %2267 = vmatpush1.msra.mxu0 0.0
    %2268 = vmatprep.mubr.f32.mxu0 0.0
    %2269 = vmatmul.mubr.f32.gmra.mrb[0].mxu0 %v2109
    %v2270 = vpop.f32.mrb[0].mxu0
    %v2271 = vadd.f32 %v1950, %v2270
    %v2272 = vpop.f32.mrb[0].mxu0
    %2273 = vmatprep.mubr.f32.mxu0 0.0
    %2274 = vmatmul.mubr.f32.gmra.mrb[0].mxu0 %v2112
    %v2275 = vpop.f32.mrb[0].mxu0
    %v2276 = vadd.f32 %v1955, %v2275
    %v2277 = vpop.f32.mrb[0].mxu0
    %2278 = vmatprep.mubr.f32.mxu0 0.0
    %2279 = vmatmul.mubr.f32.gmra.mrb[0].mxu0 %v2115
    %v2280 = vpop.f32.mrb[0].mxu0
    %v2281 = vadd.f32 %v1960, %v2280
    %v2282 = vpop.f32.mrb[0].mxu0
    %2283 = vmatprep.mubr.f32.mxu0 0.0
    %2284 = vmatmul.mubr.f32.gmra.mrb[0].mxu0 %v2118
    %v2285 = vpop.f32.mrb[0].mxu0
    %v2286 = vadd.f32 %v1965, %v2285
    %v2287 = vpop.f32.mrb[0].mxu0
    %2288 = vmatprep.mubr.f32.mxu0 0.0
    %2289 = vmatmul.mubr.f32.gmra.mrb[0].mxu0 %v2121
    %v2290 = vpop.f32.mrb[0].mxu0
    %v2291 = vadd.f32 %v1970, %v2290
    %v2292 = vpop.f32.mrb[0].mxu0
    %2293 = vmatprep.mubr.f32.mxu0 0.0
    %2294 = vmatmul.mubr.f32.gmra.mrb[0].mxu0 %v2124
    %v2295 = vpop.f32.mrb[0].mxu0
    %v2296 = vadd.f32 %v1975, %v2295
    %v2297 = vpop.f32.mrb[0].mxu0
    %2298 = vmatprep.mubr.f32.mxu0 0.0
    %2299 = vmatmul.mubr.f32.gmra.mrb[0].mxu0 %v2127
    %v2300 = vpop.f32.mrb[0].mxu0
    %v2301 = vadd.f32 %v1980, %v2300
    %v2302 = vpop.f32.mrb[0].mxu0
    %2303 = vmatprep.mubr.f32.mxu0 0.0
    %2304 = vmatmul.mubr.f32.gmra.mrb[0].mxu0 %v2130
    %v2305 = vpop.f32.mrb[0].mxu0
    %v2306 = vadd.f32 %v1985, %v2305
    %v2307 = vpop.f32.mrb[0].mxu0
    %2308 = vmatprep.mubr.f32.mxu0 0.0
    %2309 = vmatmul.mubr.f32.gmra.mrb[0].mxu0 %v2133
    %v2310 = vpop.f32.mrb[0].mxu0
    %v2311 = vadd.f32 %v1990, %v2310
    %v2312 = vpop.f32.mrb[0].mxu0
    %2313 = vmatprep.mubr.f32.mxu0 0.0
    %2314 = vmatmul.mubr.f32.gmra.mrb[0].mxu0 %v2136
    %v2315 = vpop.f32.mrb[0].mxu0
    %v2316 = vadd.f32 %v1995, %v2315
    %v2317 = vpop.f32.mrb[0].mxu0
    %2318 = vmatprep.mubr.f32.mxu0 0.0
    %2319 = vmatmul.mubr.f32.gmra.mrb[0].mxu0 %v2139
    %v2320 = vpop.f32.mrb[0].mxu0
    %v2321 = vadd.f32 %v2000, %v2320
    %v2322 = vpop.f32.mrb[0].mxu0
    %2323 = vmatprep.mubr.f32.mxu0 0.0
    %2324 = vmatmul.mubr.f32.gmra.mrb[0].mxu0 %v2142
    %v2325 = vpop.f32.mrb[0].mxu0
    %v2326 = vadd.f32 %v2005, %v2325
    %v2327 = vpop.f32.mrb[0].mxu0
    %2328 = vmatprep.mubr.f32.mxu0 0.0
    %2329 = vmatmul.mubr.f32.gmra.mrb[0].mxu0 %v2145
    %v2330 = vpop.f32.mrb[0].mxu0
    %v2331 = vadd.f32 %v2010, %v2330
    %v2332 = vpop.f32.mrb[0].mxu0
    %2333 = vmatprep.mubr.f32.mxu0 0.0
    %2334 = vmatmul.mubr.f32.gmra.mrb[0].mxu0 %v2148
    %v2335 = vpop.f32.mrb[0].mxu0
    %v2336 = vadd.f32 %v2015, %v2335
    %v2337 = vpop.f32.mrb[0].mxu0
    %2338 = vmatprep.mubr.f32.mxu0 0.0
    %2339 = vmatmul.mubr.f32.gmra.mrb[0].mxu0 %v2151
    %v2340 = vpop.f32.mrb[0].mxu0
    %v2341 = vadd.f32 %v2020, %v2340
    %v2342 = vpop.f32.mrb[0].mxu0
    %2343 = vmatprep.mubr.f32.mxu0 0.0
    %2344 = vmatmul.mubr.f32.gmra.mrb[0].mxu0 %v2154
    %v2345 = vpop.f32.mrb[0].mxu0
    %v2346 = vadd.f32 %v2025, %v2345
    %v2347 = vpop.f32.mrb[0].mxu0
    %2348 = vmatprep.mubr.f32.mxu0 0.0
    %2349 = vmatmul.mubr.f32.gmra.mrb[0].mxu0 %v2157
    %v2350 = vpop.f32.mrb[0].mxu0
    %v2351 = vadd.f32 %v2030, %v2350
    %v2352 = vpop.f32.mrb[0].mxu0
    %2353 = vmatprep.mubr.f32.mxu0 0.0
    %2354 = vmatmul.mubr.f32.gmra.mrb[0].mxu0 %v2160
    %v2355 = vpop.f32.mrb[0].mxu0
    %v2356 = vadd.f32 %v2035, %v2355
    %v2357 = vpop.f32.mrb[0].mxu0
    %2358 = vmatprep.mubr.f32.mxu0 0.0
    %2359 = vmatmul.mubr.f32.gmra.mrb[0].mxu0 %v2163
    %v2360 = vpop.f32.mrb[0].mxu0
    %v2361 = vadd.f32 %v2040, %v2360
    %v2362 = vpop.f32.mrb[0].mxu0
    %2363 = vmatprep.mubr.f32.mxu0 0.0
    %2364 = vmatmul.mubr.f32.gmra.mrb[0].mxu0 %v2166
    %v2365 = vpop.f32.mrb[0].mxu0
    %v2366 = vadd.f32 %v2045, %v2365
    %v2367 = vpop.f32.mrb[0].mxu0
    %2368 = vmatprep.mubr.f32.mxu0 0.0
    %2369 = vmatmul.mubr.f32.gmra.mrb[0].mxu0 %v2169
    %v2370 = vpop.f32.mrb[0].mxu0
    %v2371 = vadd.f32 %v2050, %v2370
    %v2372 = vpop.f32.mrb[0].mxu0
    %2373 = vmatprep.mubr.f32.mxu0 0.0
    %2374 = vmatmul.mubr.f32.gmra.mrb[0].mxu0 %v2172
    %v2375 = vpop.f32.mrb[0].mxu0
    %v2376 = vadd.f32 %v2055, %v2375
    %v2377 = vpop.f32.mrb[0].mxu0
    %2378 = vmatprep.mubr.f32.mxu0 0.0
    %2379 = vmatmul.mubr.f32.gmra.mrb[0].mxu0 %v2175
    %v2380 = vpop.f32.mrb[0].mxu0
    %v2381 = vadd.f32 %v2060, %v2380
    %v2382 = vpop.f32.mrb[0].mxu0
    %2383 = vmatprep.mubr.f32.mxu0 0.0
    %2384 = vmatmul.mubr.f32.gmra.mrb[0].mxu0 %v2178
    %v2385 = vpop.f32.mrb[0].mxu0
    %v2386 = vadd.f32 %v2065, %v2385
    %v2387 = vpop.f32.mrb[0].mxu0
    %2388 = vmatprep.mubr.f32.mxu0 0.0
    %2389 = vmatmul.mubr.f32.gmra.mrb[0].mxu0 %v2181
    %v2390 = vpop.f32.mrb[0].mxu0
    %v2391 = vadd.f32 %v2070, %v2390
    %v2392 = vpop.f32.mrb[0].mxu0
    %2393 = vmatprep.mubr.f32.mxu0 0.0
    %2394 = vmatmul.mubr.f32.gmra.mrb[0].mxu0 %v2184
    %v2395 = vpop.f32.mrb[0].mxu0
    %v2396 = vadd.f32 %v2075, %v2395
    %v2397 = vpop.f32.mrb[0].mxu0
    %2398 = vmatprep.mubr.f32.mxu0 0.0
    %2399 = vmatmul.mubr.f32.gmra.mrb[0].mxu0 %v2187
    %v2400 = vpop.f32.mrb[0].mxu0
    %v2401 = vadd.f32 %v2080, %v2400
    %v2402 = vpop.f32.mrb[0].mxu0
    %2403 = vmatprep.mubr.f32.mxu0 0.0
    %2404 = vmatmul.mubr.f32.gmra.mrb[0].mxu0 %v2190
    %v2405 = vpop.f32.mrb[0].mxu0
    %v2406 = vadd.f32 %v2085, %v2405
    %v2407 = vpop.f32.mrb[0].mxu0
    %2408 = vmatprep.mubr.f32.mxu0 0.0
    %2409 = vmatmul.mubr.f32.gmra.mrb[0].mxu0 %v2193
    %v2410 = vpop.f32.mrb[0].mxu0
    %v2411 = vadd.f32 %v2090, %v2410
    %v2412 = vpop.f32.mrb[0].mxu0
    %2413 = vmatprep.mubr.f32.mxu0 0.0
    %2414 = vmatmul.mubr.f32.gmra.mrb[0].mxu0 %v2196
    %v2415 = vpop.f32.mrb[0].mxu0
    %v2416 = vadd.f32 %v2095, %v2415
    %v2417 = vpop.f32.mrb[0].mxu0
    %2418 = vmatprep.mubr.f32.mxu0 0.0
    %2419 = vmatmul.mubr.f32.gmra.mrb[0].mxu0 %v2199
    %v2420 = vpop.f32.mrb[0].mxu0
    %v2421 = vadd.f32 %v2100, %v2420
    %v2422 = vpop.f32.mrb[0].mxu0
    %2423 = vmatprep.mubr.f32.mxu0 0.0
    %2424 = vmatmul.mubr.f32.gmra.mrb[0].mxu0 %v2202
    %v2425 = vpop.f32.mrb[0].mxu0
    %v2426 = vadd.f32 %v2105, %v2425
    %v2427 = vpop.f32.mrb[0].mxu0
    %2428 = vdwg.mxu0
    %s2429 = scalar_lea.vmem [#allocation2], 1216
    %v2430 = vld [vmem:[%s2429] sm:$0xff]
    %v2431 = vld [vmem:[%s2429 + $0x8] sm:$0xff]
    %v2432 = vld [vmem:[%s2429 + $0x10] sm:$0xff]
    %v2433 = vld [vmem:[%s2429 + $0x18] sm:$0xff]
    %v2434 = vld [vmem:[%s2429 + $0x20] sm:$0xff]
    %v2435 = vld [vmem:[%s2429 + $0x28] sm:$0xff]
    %v2436 = vld [vmem:[%s2429 + $0x30] sm:$0xff]
    %v2437 = vld [vmem:[%s2429 + $0x38] sm:$0xff]
    %v2438 = vld [vmem:[%s2429 + $0x50] sm:$0xff]
    %v2439 = vld [vmem:[%s2429 + $0x58] sm:$0xff]
    %v2440 = vld [vmem:[%s2429 + $0x60] sm:$0xff]
    %v2441 = vld [vmem:[%s2429 + $0x68] sm:$0xff]
    %v2442 = vld [vmem:[%s2429 + $0x70] sm:$0xff]
    %v2443 = vld [vmem:[%s2429 + $0x78] sm:$0xff]
    %v2444 = vld [vmem:[%s2429 + $0x80] sm:$0xff]
    %v2445 = vld [vmem:[%s2429 + $0x88] sm:$0xff]
    %v2446 = vld [vmem:[%s2429 + $0xa0] sm:$0xff]
    %v2447 = vld [vmem:[%s2429 + $0xa8] sm:$0xff]
    %v2448 = vld [vmem:[%s2429 + $0xb0] sm:$0xff]
    %v2449 = vld [vmem:[%s2429 + $0xb8] sm:$0xff]
    %v2450 = vld [vmem:[%s2429 + $0xc0] sm:$0xff]
    %v2451 = vld [vmem:[%s2429 + $0xc8] sm:$0xff]
    %v2452 = vld [vmem:[%s2429 + $0xd0] sm:$0xff]
    %v2453 = vld [vmem:[%s2429 + $0xd8] sm:$0xff]
    %v2454 = vld [vmem:[%s2429 + $0xf0] sm:$0xff]
    %v2455 = vld [vmem:[%s2429 + $0xf8] sm:$0xff]
    %v2456 = vld [vmem:[%s2429 + $0x100] sm:$0xff]
    %v2457 = vld [vmem:[%s2429 + $0x108] sm:$0xff]
    %v2458 = vld [vmem:[%s2429 + $0x110] sm:$0xff]
    %v2459 = vld [vmem:[%s2429 + $0x118] sm:$0xff]
    %v2460 = vld [vmem:[%s2429 + $0x120] sm:$0xff]
    %v2461 = vld [vmem:[%s2429 + $0x128] sm:$0xff]
    %s2462 = scalar_lea.vmem %s3, 16
    %v2463 = vld [vmem:[%s2462] sm:$0xff]
    %v2465 = vsel %vm1388, %v2430, 0
    %v2468 = vsel %vm1388, %v2431, 0
    %v2471 = vsel %vm1388, %v2432, 0
    %v2474 = vsel %vm1388, %v2433, 0
    %v2477 = vsel %vm1388, %v2434, 0
    %v2480 = vsel %vm1388, %v2435, 0
    %v2483 = vsel %vm1388, %v2436, 0
    %v2486 = vsel %vm1388, %v2437, 0
    %v2489 = vsel %vm1388, %v2438, 0
    %v2492 = vsel %vm1388, %v2439, 0
    %v2495 = vsel %vm1388, %v2440, 0
    %v2498 = vsel %vm1388, %v2441, 0
    %v2501 = vsel %vm1388, %v2442, 0
    %v2504 = vsel %vm1388, %v2443, 0
    %v2507 = vsel %vm1388, %v2444, 0
    %v2510 = vsel %vm1388, %v2445, 0
    %v2513 = vsel %vm1388, %v2446, 0
    %v2516 = vsel %vm1388, %v2447, 0
    %v2519 = vsel %vm1388, %v2448, 0
    %v2522 = vsel %vm1388, %v2449, 0
    %v2525 = vsel %vm1388, %v2450, 0
    %v2528 = vsel %vm1388, %v2451, 0
    %v2531 = vsel %vm1388, %v2452, 0
    %v2534 = vsel %vm1388, %v2453, 0
    %v2537 = vsel %vm1388, %v2454, 0
    %v2540 = vsel %vm1388, %v2455, 0
    %v2543 = vsel %vm1388, %v2456, 0
    %v2546 = vsel %vm1388, %v2457, 0
    %v2549 = vsel %vm1388, %v2458, 0
    %v2552 = vsel %vm1388, %v2459, 0
    %v2555 = vsel %vm1388, %v2460, 0
    %v2558 = vsel %vm1388, %v2461, 0
    %2560 = vmatprep.subr.mxu0 0.0
    %2561 = vmatpush1.msra.mxu0 %v2463
    %2562 = vmatprep.subr.mxu0 0.0
    %2563 = vmatpush1.msra.mxu0 0.0
    %2564 = vmatprep.subr.mxu0 0.0
    %2565 = vmatpush1.msra.mxu0 0.0
    %2566 = vmatprep.subr.mxu0 0.0
    %2567 = vmatpush1.msra.mxu0 0.0
    %2568 = vmatprep.subr.mxu0 0.0
    %2569 = vmatpush1.msra.mxu0 0.0
    %2570 = vmatprep.subr.mxu0 0.0
    %2571 = vmatpush1.msra.mxu0 0.0
    %2572 = vmatprep.subr.mxu0 0.0
    %2573 = vmatpush1.msra.mxu0 0.0
    %2574 = vmatprep.subr.mxu0 0.0
    %2575 = vmatpush1.msra.mxu0 0.0
    %2576 = vmatprep.subr.mxu0 0.0
    %2577 = vmatpush1.msra.mxu0 0.0
    %2578 = vmatprep.subr.mxu0 0.0
    %2579 = vmatpush1.msra.mxu0 0.0
    %2580 = vmatprep.subr.mxu0 0.0
    %2581 = vmatpush1.msra.mxu0 0.0
    %2582 = vmatprep.subr.mxu0 0.0
    %2583 = vmatpush1.msra.mxu0 0.0
    %2584 = vmatprep.subr.mxu0 0.0
    %2585 = vmatpush1.msra.mxu0 0.0
    %2586 = vmatprep.subr.mxu0 0.0
    %2587 = vmatpush1.msra.mxu0 0.0
    %2588 = vmatprep.subr.mxu0 0.0
    %2589 = vmatpush1.msra.mxu0 0.0
    %2590 = vmatprep.subr.mxu0 0.0
    %2591 = vmatpush1.msra.mxu0 0.0
    %2592 = vmatprep.subr.mxu0 0.0
    %2593 = vmatpush1.msra.mxu0 0.0
    %2594 = vmatprep.subr.mxu0 0.0
    %2595 = vmatpush1.msra.mxu0 0.0
    %2596 = vmatprep.subr.mxu0 0.0
    %2597 = vmatpush1.msra.mxu0 0.0
    %2598 = vmatprep.subr.mxu0 0.0
    %2599 = vmatpush1.msra.mxu0 0.0
    %2600 = vmatprep.subr.mxu0 0.0
    %2601 = vmatpush1.msra.mxu0 0.0
    %2602 = vmatprep.subr.mxu0 0.0
    %2603 = vmatpush1.msra.mxu0 0.0
    %2604 = vmatprep.subr.mxu0 0.0
    %2605 = vmatpush1.msra.mxu0 0.0
    %2606 = vmatprep.subr.mxu0 0.0
    %2607 = vmatpush1.msra.mxu0 0.0
    %2608 = vmatprep.subr.mxu0 0.0
    %2609 = vmatpush1.msra.mxu0 0.0
    %2610 = vmatprep.subr.mxu0 0.0
    %2611 = vmatpush1.msra.mxu0 0.0
    %2612 = vmatprep.subr.mxu0 0.0
    %2613 = vmatpush1.msra.mxu0 0.0
    %2614 = vmatprep.subr.mxu0 0.0
    %2615 = vmatpush1.msra.mxu0 0.0
    %2616 = vmatprep.subr.mxu0 0.0
    %2617 = vmatpush1.msra.mxu0 0.0
    %2618 = vmatprep.subr.mxu0 0.0
    %2619 = vmatpush1.msra.mxu0 0.0
    %2620 = vmatprep.subr.mxu0 0.0
    %2621 = vmatpush1.msra.mxu0 0.0
    %2622 = vmatprep.subr.mxu0 0.0
    %2623 = vmatpush1.msra.mxu0 0.0
    %2624 = vmatprep.mubr.f32.mxu0 0.0
    %2625 = vmatmul.mubr.f32.gmra.mrb[0].mxu0 %v2465
    %v2626 = vpop.f32.mrb[0].mxu0
    %v2627 = vadd.f32 0.0, %v2626
    %v2628 = vpop.f32.mrb[0].mxu0
    %2629 = vmatprep.mubr.f32.mxu0 0.0
    %2630 = vmatmul.mubr.f32.gmra.mrb[0].mxu0 %v2468
    %v2631 = vpop.f32.mrb[0].mxu0
    %v2632 = vadd.f32 0.0, %v2631
    %v2633 = vpop.f32.mrb[0].mxu0
    %2634 = vmatprep.mubr.f32.mxu0 0.0
    %2635 = vmatmul.mubr.f32.gmra.mrb[0].mxu0 %v2471
    %v2636 = vpop.f32.mrb[0].mxu0
    %v2637 = vadd.f32 0.0, %v2636
    %v2638 = vpop.f32.mrb[0].mxu0
    %2639 = vmatprep.mubr.f32.mxu0 0.0
    %2640 = vmatmul.mubr.f32.gmra.mrb[0].mxu0 %v2474
    %v2641 = vpop.f32.mrb[0].mxu0
    %v2642 = vadd.f32 0.0, %v2641
    %v2643 = vpop.f32.mrb[0].mxu0
    %2644 = vmatprep.mubr.f32.mxu0 0.0
    %2645 = vmatmul.mubr.f32.gmra.mrb[0].mxu0 %v2477
    %v2646 = vpop.f32.mrb[0].mxu0
    %v2647 = vadd.f32 0.0, %v2646
    %v2648 = vpop.f32.mrb[0].mxu0
    %2649 = vmatprep.mubr.f32.mxu0 0.0
    %2650 = vmatmul.mubr.f32.gmra.mrb[0].mxu0 %v2480
    %v2651 = vpop.f32.mrb[0].mxu0
    %v2652 = vadd.f32 0.0, %v2651
    %v2653 = vpop.f32.mrb[0].mxu0
    %2654 = vmatprep.mubr.f32.mxu0 0.0
    %2655 = vmatmul.mubr.f32.gmra.mrb[0].mxu0 %v2483
    %v2656 = vpop.f32.mrb[0].mxu0
    %v2657 = vadd.f32 0.0, %v2656
    %v2658 = vpop.f32.mrb[0].mxu0
    %2659 = vmatprep.mubr.f32.mxu0 0.0
    %2660 = vmatmul.mubr.f32.gmra.mrb[0].mxu0 %v2486
    %v2661 = vpop.f32.mrb[0].mxu0
    %v2662 = vadd.f32 0.0, %v2661
    %v2663 = vpop.f32.mrb[0].mxu0
    %2664 = vmatprep.mubr.f32.mxu0 0.0
    %2665 = vmatmul.mubr.f32.gmra.mrb[0].mxu0 %v2489
    %v2666 = vpop.f32.mrb[0].mxu0
    %v2667 = vadd.f32 0.0, %v2666
    %v2668 = vpop.f32.mrb[0].mxu0
    %2669 = vmatprep.mubr.f32.mxu0 0.0
    %2670 = vmatmul.mubr.f32.gmra.mrb[0].mxu0 %v2492
    %v2671 = vpop.f32.mrb[0].mxu0
    %v2672 = vadd.f32 0.0, %v2671
    %v2673 = vpop.f32.mrb[0].mxu0
    %2674 = vmatprep.mubr.f32.mxu0 0.0
    %2675 = vmatmul.mubr.f32.gmra.mrb[0].mxu0 %v2495
    %v2676 = vpop.f32.mrb[0].mxu0
    %v2677 = vadd.f32 0.0, %v2676
    %v2678 = vpop.f32.mrb[0].mxu0
    %2679 = vmatprep.mubr.f32.mxu0 0.0
    %2680 = vmatmul.mubr.f32.gmra.mrb[0].mxu0 %v2498
    %v2681 = vpop.f32.mrb[0].mxu0
    %v2682 = vadd.f32 0.0, %v2681
    %v2683 = vpop.f32.mrb[0].mxu0
    %2684 = vmatprep.mubr.f32.mxu0 0.0
    %2685 = vmatmul.mubr.f32.gmra.mrb[0].mxu0 %v2501
    %v2686 = vpop.f32.mrb[0].mxu0
    %v2687 = vadd.f32 0.0, %v2686
    %v2688 = vpop.f32.mrb[0].mxu0
    %2689 = vmatprep.mubr.f32.mxu0 0.0
    %2690 = vmatmul.mubr.f32.gmra.mrb[0].mxu0 %v2504
    %v2691 = vpop.f32.mrb[0].mxu0
    %v2692 = vadd.f32 0.0, %v2691
    %v2693 = vpop.f32.mrb[0].mxu0
    %2694 = vmatprep.mubr.f32.mxu0 0.0
    %2695 = vmatmul.mubr.f32.gmra.mrb[0].mxu0 %v2507
    %v2696 = vpop.f32.mrb[0].mxu0
    %v2697 = vadd.f32 0.0, %v2696
    %v2698 = vpop.f32.mrb[0].mxu0
    %2699 = vmatprep.mubr.f32.mxu0 0.0
    %2700 = vmatmul.mubr.f32.gmra.mrb[0].mxu0 %v2510
    %v2701 = vpop.f32.mrb[0].mxu0
    %v2702 = vadd.f32 0.0, %v2701
    %v2703 = vpop.f32.mrb[0].mxu0
    %2704 = vmatprep.mubr.f32.mxu0 0.0
    %2705 = vmatmul.mubr.f32.gmra.mrb[0].mxu0 %v2513
    %v2706 = vpop.f32.mrb[0].mxu0
    %v2707 = vadd.f32 0.0, %v2706
    %v2708 = vpop.f32.mrb[0].mxu0
    %2709 = vmatprep.mubr.f32.mxu0 0.0
    %2710 = vmatmul.mubr.f32.gmra.mrb[0].mxu0 %v2516
    %v2711 = vpop.f32.mrb[0].mxu0
    %v2712 = vadd.f32 0.0, %v2711
    %v2713 = vpop.f32.mrb[0].mxu0
    %2714 = vmatprep.mubr.f32.mxu0 0.0
    %2715 = vmatmul.mubr.f32.gmra.mrb[0].mxu0 %v2519
    %v2716 = vpop.f32.mrb[0].mxu0
    %v2717 = vadd.f32 0.0, %v2716
    %v2718 = vpop.f32.mrb[0].mxu0
    %2719 = vmatprep.mubr.f32.mxu0 0.0
    %2720 = vmatmul.mubr.f32.gmra.mrb[0].mxu0 %v2522
    %v2721 = vpop.f32.mrb[0].mxu0
    %v2722 = vadd.f32 0.0, %v2721
    %v2723 = vpop.f32.mrb[0].mxu0
    %2724 = vmatprep.mubr.f32.mxu0 0.0
    %2725 = vmatmul.mubr.f32.gmra.mrb[0].mxu0 %v2525
    %v2726 = vpop.f32.mrb[0].mxu0
    %v2727 = vadd.f32 0.0, %v2726
    %v2728 = vpop.f32.mrb[0].mxu0
    %2729 = vmatprep.mubr.f32.mxu0 0.0
    %2730 = vmatmul.mubr.f32.gmra.mrb[0].mxu0 %v2528
    %v2731 = vpop.f32.mrb[0].mxu0
    %v2732 = vadd.f32 0.0, %v2731
    %v2733 = vpop.f32.mrb[0].mxu0
    %2734 = vmatprep.mubr.f32.mxu0 0.0
    %2735 = vmatmul.mubr.f32.gmra.mrb[0].mxu0 %v2531
    %v2736 = vpop.f32.mrb[0].mxu0
    %v2737 = vadd.f32 0.0, %v2736
    %v2738 = vpop.f32.mrb[0].mxu0
    %2739 = vmatprep.mubr.f32.mxu0 0.0
    %2740 = vmatmul.mubr.f32.gmra.mrb[0].mxu0 %v2534
    %v2741 = vpop.f32.mrb[0].mxu0
    %v2742 = vadd.f32 0.0, %v2741
    %v2743 = vpop.f32.mrb[0].mxu0
    %2744 = vmatprep.mubr.f32.mxu0 0.0
    %2745 = vmatmul.mubr.f32.gmra.mrb[0].mxu0 %v2537
    %v2746 = vpop.f32.mrb[0].mxu0
    %v2747 = vadd.f32 0.0, %v2746
    %v2748 = vpop.f32.mrb[0].mxu0
    %2749 = vmatprep.mubr.f32.mxu0 0.0
    %2750 = vmatmul.mubr.f32.gmra.mrb[0].mxu0 %v2540
    %v2751 = vpop.f32.mrb[0].mxu0
    %v2752 = vadd.f32 0.0, %v2751
    %v2753 = vpop.f32.mrb[0].mxu0
    %2754 = vmatprep.mubr.f32.mxu0 0.0
    %2755 = vmatmul.mubr.f32.gmra.mrb[0].mxu0 %v2543
    %v2756 = vpop.f32.mrb[0].mxu0
    %v2757 = vadd.f32 0.0, %v2756
    %v2758 = vpop.f32.mrb[0].mxu0
    %2759 = vmatprep.mubr.f32.mxu0 0.0
    %2760 = vmatmul.mubr.f32.gmra.mrb[0].mxu0 %v2546
    %v2761 = vpop.f32.mrb[0].mxu0
    %v2762 = vadd.f32 0.0, %v2761
    %v2763 = vpop.f32.mrb[0].mxu0
    %2764 = vmatprep.mubr.f32.mxu0 0.0
    %2765 = vmatmul.mubr.f32.gmra.mrb[0].mxu0 %v2549
    %v2766 = vpop.f32.mrb[0].mxu0
    %v2767 = vadd.f32 0.0, %v2766
    %v2768 = vpop.f32.mrb[0].mxu0
    %2769 = vmatprep.mubr.f32.mxu0 0.0
    %2770 = vmatmul.mubr.f32.gmra.mrb[0].mxu0 %v2552
    %v2771 = vpop.f32.mrb[0].mxu0
    %v2772 = vadd.f32 0.0, %v2771
    %v2773 = vpop.f32.mrb[0].mxu0
    %2774 = vmatprep.mubr.f32.mxu0 0.0
    %2775 = vmatmul.mubr.f32.gmra.mrb[0].mxu0 %v2555
    %v2776 = vpop.f32.mrb[0].mxu0
    %v2777 = vadd.f32 0.0, %v2776
    %v2778 = vpop.f32.mrb[0].mxu0
    %2779 = vmatprep.mubr.f32.mxu0 0.0
    %2780 = vmatmul.mubr.f32.gmra.mrb[0].mxu0 %v2558
    %v2781 = vpop.f32.mrb[0].mxu0
    %v2782 = vadd.f32 0.0, %v2781
    %v2783 = vpop.f32.mrb[0].mxu0
    %2784 = vdwg.mxu0
    %v2785 = vadd.f32 %v2271, %v2627
    %v2786 = vadd.f32 %v2276, %v2632
    %v2787 = vadd.f32 %v2281, %v2637
    %v2788 = vadd.f32 %v2286, %v2642
    %v2789 = vadd.f32 %v2291, %v2647
    %v2790 = vadd.f32 %v2296, %v2652
    %v2791 = vadd.f32 %v2301, %v2657
    %v2792 = vadd.f32 %v2306, %v2662
    %v2793 = vadd.f32 %v2311, %v2667
    %v2794 = vadd.f32 %v2316, %v2672
    %v2795 = vadd.f32 %v2321, %v2677
    %v2796 = vadd.f32 %v2326, %v2682
    %v2797 = vadd.f32 %v2331, %v2687
    %v2798 = vadd.f32 %v2336, %v2692
    %v2799 = vadd.f32 %v2341, %v2697
    %v2800 = vadd.f32 %v2346, %v2702
    %v2801 = vadd.f32 %v2351, %v2707
    %v2802 = vadd.f32 %v2356, %v2712
    %v2803 = vadd.f32 %v2361, %v2717
    %v2804 = vadd.f32 %v2366, %v2722
    %v2805 = vadd.f32 %v2371, %v2727
    %v2806 = vadd.f32 %v2376, %v2732
    %v2807 = vadd.f32 %v2381, %v2737
    %v2808 = vadd.f32 %v2386, %v2742
    %v2809 = vadd.f32 %v2391, %v2747
    %v2810 = vadd.f32 %v2396, %v2752
    %v2811 = vadd.f32 %v2401, %v2757
    %v2812 = vadd.f32 %v2406, %v2762
    %v2813 = vadd.f32 %v2411, %v2767
    %v2814 = vadd.f32 %v2416, %v2772
    %v2815 = vadd.f32 %v2421, %v2777
    %v2816 = vadd.f32 %v2426, %v2782
    %s2817 = scalar_lea.vmem [#allocation2], 480
    %v2818 = vld [vmem:[%s2817] sm:$0xff]
    %v2819 = vld [vmem:[%s2817 + $0x8] sm:$0xff]
    %v2820 = vld [vmem:[%s2817 + $0x10] sm:$0xff]
    %v2821 = vld [vmem:[%s2817 + $0x18] sm:$0xff]
    %v2822 = vld [vmem:[%s2817 + $0x20] sm:$0xff]
    %v2823 = vld [vmem:[%s2817 + $0x28] sm:$0xff]
    %v2824 = vld [vmem:[%s2817 + $0x30] sm:$0xff]
    %v2825 = vld [vmem:[%s2817 + $0x38] sm:$0xff]
    %v2826 = vld [vmem:[%s2817 + $0x50] sm:$0xff]
    %v2827 = vld [vmem:[%s2817 + $0x58] sm:$0xff]
    %v2828 = vld [vmem:[%s2817 + $0x60] sm:$0xff]
    %v2829 = vld [vmem:[%s2817 + $0x68] sm:$0xff]
    %v2830 = vld [vmem:[%s2817 + $0x70] sm:$0xff]
    %v2831 = vld [vmem:[%s2817 + $0x78] sm:$0xff]
    %v2832 = vld [vmem:[%s2817 + $0x80] sm:$0xff]
    %v2833 = vld [vmem:[%s2817 + $0x88] sm:$0xff]
    %v2834 = vld [vmem:[%s2817 + $0xa0] sm:$0xff]
    %v2835 = vld [vmem:[%s2817 + $0xa8] sm:$0xff]
    %v2836 = vld [vmem:[%s2817 + $0xb0] sm:$0xff]
    %v2837 = vld [vmem:[%s2817 + $0xb8] sm:$0xff]
    %v2838 = vld [vmem:[%s2817 + $0xc0] sm:$0xff]
    %v2839 = vld [vmem:[%s2817 + $0xc8] sm:$0xff]
    %v2840 = vld [vmem:[%s2817 + $0xd0] sm:$0xff]
    %v2841 = vld [vmem:[%s2817 + $0xd8] sm:$0xff]
    %v2842 = vld [vmem:[%s2817 + $0xf0] sm:$0xff]
    %v2843 = vld [vmem:[%s2817 + $0xf8] sm:$0xff]
    %v2844 = vld [vmem:[%s2817 + $0x100] sm:$0xff]
    %v2845 = vld [vmem:[%s2817 + $0x108] sm:$0xff]
    %v2846 = vld [vmem:[%s2817 + $0x110] sm:$0xff]
    %v2847 = vld [vmem:[%s2817 + $0x118] sm:$0xff]
    %v2848 = vld [vmem:[%s2817 + $0x120] sm:$0xff]
    %v2849 = vld [vmem:[%s2817 + $0x128] sm:$0xff]
    %s2850 = scalar_lea.vmem %s3, 24
    %v2851 = vld [vmem:[%s2850] sm:$0xff]
    %v2853 = vsel %vm1388, %v2818, 0
    %v2856 = vsel %vm1388, %v2819, 0
    %v2859 = vsel %vm1388, %v2820, 0
    %v2862 = vsel %vm1388, %v2821, 0
    %v2865 = vsel %vm1388, %v2822, 0
    %v2868 = vsel %vm1388, %v2823, 0
    %v2871 = vsel %vm1388, %v2824, 0
    %v2874 = vsel %vm1388, %v2825, 0
    %v2877 = vsel %vm1388, %v2826, 0
    %v2880 = vsel %vm1388, %v2827, 0
    %v2883 = vsel %vm1388, %v2828, 0
    %v2886 = vsel %vm1388, %v2829, 0
    %v2889 = vsel %vm1388, %v2830, 0
    %v2892 = vsel %vm1388, %v2831, 0
    %v2895 = vsel %vm1388, %v2832, 0
    %v2898 = vsel %vm1388, %v2833, 0
    %v2901 = vsel %vm1388, %v2834, 0
    %v2904 = vsel %vm1388, %v2835, 0
    %v2907 = vsel %vm1388, %v2836, 0
    %v2910 = vsel %vm1388, %v2837, 0
    %v2913 = vsel %vm1388, %v2838, 0
    %v2916 = vsel %vm1388, %v2839, 0
    %v2919 = vsel %vm1388, %v2840, 0
    %v2922 = vsel %vm1388, %v2841, 0
    %v2925 = vsel %vm1388, %v2842, 0
    %v2928 = vsel %vm1388, %v2843, 0
    %v2931 = vsel %vm1388, %v2844, 0
    %v2934 = vsel %vm1388, %v2845, 0
    %v2937 = vsel %vm1388, %v2846, 0
    %v2940 = vsel %vm1388, %v2847, 0
    %v2943 = vsel %vm1388, %v2848, 0
    %v2946 = vsel %vm1388, %v2849, 0
    %2948 = vmatprep.subr.mxu0 0.0
    %2949 = vmatpush1.msra.mxu0 %v2851
    %2950 = vmatprep.subr.mxu0 0.0
    %2951 = vmatpush1.msra.mxu0 0.0
    %2952 = vmatprep.subr.mxu0 0.0
    %2953 = vmatpush1.msra.mxu0 0.0
    %2954 = vmatprep.subr.mxu0 0.0
    %2955 = vmatpush1.msra.mxu0 0.0
    %2956 = vmatprep.subr.mxu0 0.0
    %2957 = vmatpush1.msra.mxu0 0.0
    %2958 = vmatprep.subr.mxu0 0.0
    %2959 = vmatpush1.msra.mxu0 0.0
    %2960 = vmatprep.subr.mxu0 0.0
    %2961 = vmatpush1.msra.mxu0 0.0
    %2962 = vmatprep.subr.mxu0 0.0
    %2963 = vmatpush1.msra.mxu0 0.0
    %2964 = vmatprep.subr.mxu0 0.0
    %2965 = vmatpush1.msra.mxu0 0.0
    %2966 = vmatprep.subr.mxu0 0.0
    %2967 = vmatpush1.msra.mxu0 0.0
    %2968 = vmatprep.subr.mxu0 0.0
    %2969 = vmatpush1.msra.mxu0 0.0
    %2970 = vmatprep.subr.mxu0 0.0
    %2971 = vmatpush1.msra.mxu0 0.0
    %2972 = vmatprep.subr.mxu0 0.0
    %2973 = vmatpush1.msra.mxu0 0.0
    %2974 = vmatprep.subr.mxu0 0.0
    %2975 = vmatpush1.msra.mxu0 0.0
    %2976 = vmatprep.subr.mxu0 0.0
    %2977 = vmatpush1.msra.mxu0 0.0
    %2978 = vmatprep.subr.mxu0 0.0
    %2979 = vmatpush1.msra.mxu0 0.0
    %2980 = vmatprep.subr.mxu0 0.0
    %2981 = vmatpush1.msra.mxu0 0.0
    %2982 = vmatprep.subr.mxu0 0.0
    %2983 = vmatpush1.msra.mxu0 0.0
    %2984 = vmatprep.subr.mxu0 0.0
    %2985 = vmatpush1.msra.mxu0 0.0
    %2986 = vmatprep.subr.mxu0 0.0
    %2987 = vmatpush1.msra.mxu0 0.0
    %2988 = vmatprep.subr.mxu0 0.0
    %2989 = vmatpush1.msra.mxu0 0.0
    %2990 = vmatprep.subr.mxu0 0.0
    %2991 = vmatpush1.msra.mxu0 0.0
    %2992 = vmatprep.subr.mxu0 0.0
    %2993 = vmatpush1.msra.mxu0 0.0
    %2994 = vmatprep.subr.mxu0 0.0
    %2995 = vmatpush1.msra.mxu0 0.0
    %2996 = vmatprep.subr.mxu0 0.0
    %2997 = vmatpush1.msra.mxu0 0.0
    %2998 = vmatprep.subr.mxu0 0.0
    %2999 = vmatpush1.msra.mxu0 0.0
    %3000 = vmatprep.subr.mxu0 0.0
    %3001 = vmatpush1.msra.mxu0 0.0
    %3002 = vmatprep.subr.mxu0 0.0
    %3003 = vmatpush1.msra.mxu0 0.0
    %3004 = vmatprep.subr.mxu0 0.0
    %3005 = vmatpush1.msra.mxu0 0.0
    %3006 = vmatprep.subr.mxu0 0.0
    %3007 = vmatpush1.msra.mxu0 0.0
    %3008 = vmatprep.subr.mxu0 0.0
    %3009 = vmatpush1.msra.mxu0 0.0
    %3010 = vmatprep.subr.mxu0 0.0
    %3011 = vmatpush1.msra.mxu0 0.0
    %3012 = vmatprep.mubr.f32.mxu0 0.0
    %3013 = vmatmul.mubr.f32.gmra.mrb[0].mxu0 %v2853
    %v3014 = vpop.f32.mrb[0].mxu0
    %v3015 = vadd.f32 0.0, %v3014
    %v3016 = vpop.f32.mrb[0].mxu0
    %3017 = vmatprep.mubr.f32.mxu0 0.0
    %3018 = vmatmul.mubr.f32.gmra.mrb[0].mxu0 %v2856
    %v3019 = vpop.f32.mrb[0].mxu0
    %v3020 = vadd.f32 0.0, %v3019
    %v3021 = vpop.f32.mrb[0].mxu0
    %3022 = vmatprep.mubr.f32.mxu0 0.0
    %3023 = vmatmul.mubr.f32.gmra.mrb[0].mxu0 %v2859
    %v3024 = vpop.f32.mrb[0].mxu0
    %v3025 = vadd.f32 0.0, %v3024
    %v3026 = vpop.f32.mrb[0].mxu0
    %3027 = vmatprep.mubr.f32.mxu0 0.0
    %3028 = vmatmul.mubr.f32.gmra.mrb[0].mxu0 %v2862
    %v3029 = vpop.f32.mrb[0].mxu0
    %v3030 = vadd.f32 0.0, %v3029
    %v3031 = vpop.f32.mrb[0].mxu0
    %3032 = vmatprep.mubr.f32.mxu0 0.0
    %3033 = vmatmul.mubr.f32.gmra.mrb[0].mxu0 %v2865
    %v3034 = vpop.f32.mrb[0].mxu0
    %v3035 = vadd.f32 0.0, %v3034
    %v3036 = vpop.f32.mrb[0].mxu0
    %3037 = vmatprep.mubr.f32.mxu0 0.0
    %3038 = vmatmul.mubr.f32.gmra.mrb[0].mxu0 %v2868
    %v3039 = vpop.f32.mrb[0].mxu0
    %v3040 = vadd.f32 0.0, %v3039
    %v3041 = vpop.f32.mrb[0].mxu0
    %3042 = vmatprep.mubr.f32.mxu0 0.0
    %3043 = vmatmul.mubr.f32.gmra.mrb[0].mxu0 %v2871
    %v3044 = vpop.f32.mrb[0].mxu0
    %v3045 = vadd.f32 0.0, %v3044
    %v3046 = vpop.f32.mrb[0].mxu0
    %3047 = vmatprep.mubr.f32.mxu0 0.0
    %3048 = vmatmul.mubr.f32.gmra.mrb[0].mxu0 %v2874
    %v3049 = vpop.f32.mrb[0].mxu0
    %v3050 = vadd.f32 0.0, %v3049
    %v3051 = vpop.f32.mrb[0].mxu0
    %3052 = vmatprep.mubr.f32.mxu0 0.0
    %3053 = vmatmul.mubr.f32.gmra.mrb[0].mxu0 %v2877
    %v3054 = vpop.f32.mrb[0].mxu0
    %v3055 = vadd.f32 0.0, %v3054
    %v3056 = vpop.f32.mrb[0].mxu0
    %3057 = vmatprep.mubr.f32.mxu0 0.0
    %3058 = vmatmul.mubr.f32.gmra.mrb[0].mxu0 %v2880
    %v3059 = vpop.f32.mrb[0].mxu0
    %v3060 = vadd.f32 0.0, %v3059
    %v3061 = vpop.f32.mrb[0].mxu0
    %3062 = vmatprep.mubr.f32.mxu0 0.0
    %3063 = vmatmul.mubr.f32.gmra.mrb[0].mxu0 %v2883
    %v3064 = vpop.f32.mrb[0].mxu0
    %v3065 = vadd.f32 0.0, %v3064
    %v3066 = vpop.f32.mrb[0].mxu0
    %3067 = vmatprep.mubr.f32.mxu0 0.0
    %3068 = vmatmul.mubr.f32.gmra.mrb[0].mxu0 %v2886
    %v3069 = vpop.f32.mrb[0].mxu0
    %v3070 = vadd.f32 0.0, %v3069
    %v3071 = vpop.f32.mrb[0].mxu0
    %3072 = vmatprep.mubr.f32.mxu0 0.0
    %3073 = vmatmul.mubr.f32.gmra.mrb[0].mxu0 %v2889
    %v3074 = vpop.f32.mrb[0].mxu0
    %v3075 = vadd.f32 0.0, %v3074
    %v3076 = vpop.f32.mrb[0].mxu0
    %3077 = vmatprep.mubr.f32.mxu0 0.0
    %3078 = vmatmul.mubr.f32.gmra.mrb[0].mxu0 %v2892
    %v3079 = vpop.f32.mrb[0].mxu0
    %v3080 = vadd.f32 0.0, %v3079
    %v3081 = vpop.f32.mrb[0].mxu0
    %3082 = vmatprep.mubr.f32.mxu0 0.0
    %3083 = vmatmul.mubr.f32.gmra.mrb[0].mxu0 %v2895
    %v3084 = vpop.f32.mrb[0].mxu0
    %v3085 = vadd.f32 0.0, %v3084
    %v3086 = vpop.f32.mrb[0].mxu0
    %3087 = vmatprep.mubr.f32.mxu0 0.0
    %3088 = vmatmul.mubr.f32.gmra.mrb[0].mxu0 %v2898
    %v3089 = vpop.f32.mrb[0].mxu0
    %v3090 = vadd.f32 0.0, %v3089
    %v3091 = vpop.f32.mrb[0].mxu0
    %3092 = vmatprep.mubr.f32.mxu0 0.0
    %3093 = vmatmul.mubr.f32.gmra.mrb[0].mxu0 %v2901
    %v3094 = vpop.f32.mrb[0].mxu0
    %v3095 = vadd.f32 0.0, %v3094
    %v3096 = vpop.f32.mrb[0].mxu0
    %3097 = vmatprep.mubr.f32.mxu0 0.0
    %3098 = vmatmul.mubr.f32.gmra.mrb[0].mxu0 %v2904
    %v3099 = vpop.f32.mrb[0].mxu0
    %v3100 = vadd.f32 0.0, %v3099
    %v3101 = vpop.f32.mrb[0].mxu0
    %3102 = vmatprep.mubr.f32.mxu0 0.0
    %3103 = vmatmul.mubr.f32.gmra.mrb[0].mxu0 %v2907
    %v3104 = vpop.f32.mrb[0].mxu0
    %v3105 = vadd.f32 0.0, %v3104
    %v3106 = vpop.f32.mrb[0].mxu0
    %3107 = vmatprep.mubr.f32.mxu0 0.0
    %3108 = vmatmul.mubr.f32.gmra.mrb[0].mxu0 %v2910
    %v3109 = vpop.f32.mrb[0].mxu0
    %v3110 = vadd.f32 0.0, %v3109
    %v3111 = vpop.f32.mrb[0].mxu0
    %3112 = vmatprep.mubr.f32.mxu0 0.0
    %3113 = vmatmul.mubr.f32.gmra.mrb[0].mxu0 %v2913
    %v3114 = vpop.f32.mrb[0].mxu0
    %v3115 = vadd.f32 0.0, %v3114
    %v3116 = vpop.f32.mrb[0].mxu0
    %3117 = vmatprep.mubr.f32.mxu0 0.0
    %3118 = vmatmul.mubr.f32.gmra.mrb[0].mxu0 %v2916
    %v3119 = vpop.f32.mrb[0].mxu0
    %v3120 = vadd.f32 0.0, %v3119
    %v3121 = vpop.f32.mrb[0].mxu0
    %3122 = vmatprep.mubr.f32.mxu0 0.0
    %3123 = vmatmul.mubr.f32.gmra.mrb[0].mxu0 %v2919
    %v3124 = vpop.f32.mrb[0].mxu0
    %v3125 = vadd.f32 0.0, %v3124
    %v3126 = vpop.f32.mrb[0].mxu0
    %3127 = vmatprep.mubr.f32.mxu0 0.0
    %3128 = vmatmul.mubr.f32.gmra.mrb[0].mxu0 %v2922
    %v3129 = vpop.f32.mrb[0].mxu0
    %v3130 = vadd.f32 0.0, %v3129
    %v3131 = vpop.f32.mrb[0].mxu0
    %3132 = vmatprep.mubr.f32.mxu0 0.0
    %3133 = vmatmul.mubr.f32.gmra.mrb[0].mxu0 %v2925
    %v3134 = vpop.f32.mrb[0].mxu0
    %v3135 = vadd.f32 0.0, %v3134
    %v3136 = vpop.f32.mrb[0].mxu0
    %3137 = vmatprep.mubr.f32.mxu0 0.0
    %3138 = vmatmul.mubr.f32.gmra.mrb[0].mxu0 %v2928
    %v3139 = vpop.f32.mrb[0].mxu0
    %v3140 = vadd.f32 0.0, %v3139
    %v3141 = vpop.f32.mrb[0].mxu0
    %3142 = vmatprep.mubr.f32.mxu0 0.0
    %3143 = vmatmul.mubr.f32.gmra.mrb[0].mxu0 %v2931
    %v3144 = vpop.f32.mrb[0].mxu0
    %v3145 = vadd.f32 0.0, %v3144
    %v3146 = vpop.f32.mrb[0].mxu0
    %3147 = vmatprep.mubr.f32.mxu0 0.0
    %3148 = vmatmul.mubr.f32.gmra.mrb[0].mxu0 %v2934
    %v3149 = vpop.f32.mrb[0].mxu0
    %v3150 = vadd.f32 0.0, %v3149
    %v3151 = vpop.f32.mrb[0].mxu0
    %3152 = vmatprep.mubr.f32.mxu0 0.0
    %3153 = vmatmul.mubr.f32.gmra.mrb[0].mxu0 %v2937
    %v3154 = vpop.f32.mrb[0].mxu0
    %v3155 = vadd.f32 0.0, %v3154
    %v3156 = vpop.f32.mrb[0].mxu0
    %3157 = vmatprep.mubr.f32.mxu0 0.0
    %3158 = vmatmul.mubr.f32.gmra.mrb[0].mxu0 %v2940
    %v3159 = vpop.f32.mrb[0].mxu0
    %v3160 = vadd.f32 0.0, %v3159
    %v3161 = vpop.f32.mrb[0].mxu0
    %3162 = vmatprep.mubr.f32.mxu0 0.0
    %3163 = vmatmul.mubr.f32.gmra.mrb[0].mxu0 %v2943
    %v3164 = vpop.f32.mrb[0].mxu0
    %v3165 = vadd.f32 0.0, %v3164
    %v3166 = vpop.f32.mrb[0].mxu0
    %3167 = vmatprep.mubr.f32.mxu0 0.0
    %3168 = vmatmul.mubr.f32.gmra.mrb[0].mxu0 %v2946
    %v3169 = vpop.f32.mrb[0].mxu0
    %v3170 = vadd.f32 0.0, %v3169
    %v3171 = vpop.f32.mrb[0].mxu0
    %3172 = vdwg.mxu0
    %v3173 = vadd.f32 %v2785, %v3015
    %v3174 = vadd.f32 %v2786, %v3020
    %v3175 = vadd.f32 %v2787, %v3025
    %v3176 = vadd.f32 %v2788, %v3030
    %v3177 = vadd.f32 %v2789, %v3035
    %v3178 = vadd.f32 %v2790, %v3040
    %v3179 = vadd.f32 %v2791, %v3045
    %v3180 = vadd.f32 %v2792, %v3050
    %v3181 = vadd.f32 %v2793, %v3055
    %v3182 = vadd.f32 %v2794, %v3060
    %v3183 = vadd.f32 %v2795, %v3065
    %v3184 = vadd.f32 %v2796, %v3070
    %v3185 = vadd.f32 %v2797, %v3075
    %v3186 = vadd.f32 %v2798, %v3080
    %v3187 = vadd.f32 %v2799, %v3085
    %v3188 = vadd.f32 %v2800, %v3090
    %v3189 = vadd.f32 %v2801, %v3095
    %v3190 = vadd.f32 %v2802, %v3100
    %v3191 = vadd.f32 %v2803, %v3105
    %v3192 = vadd.f32 %v2804, %v3110
    %v3193 = vadd.f32 %v2805, %v3115
    %v3194 = vadd.f32 %v2806, %v3120
    %v3195 = vadd.f32 %v2807, %v3125
    %v3196 = vadd.f32 %v2808, %v3130
    %v3197 = vadd.f32 %v2809, %v3135
    %v3198 = vadd.f32 %v2810, %v3140
    %v3199 = vadd.f32 %v2811, %v3145
    %v3200 = vadd.f32 %v2812, %v3150
    %v3201 = vadd.f32 %v2813, %v3155
    %v3202 = vadd.f32 %v2814, %v3160
    %v3203 = vadd.f32 %v2815, %v3165
    %v3204 = vadd.f32 %v2816, %v3170
    %v3205 = vld [vmem:[%s1589] sm:$0xff]
    %v3206 = vld [vmem:[%s1589 + $0x8] sm:$0xff]
    %v3207 = vld [vmem:[%s1589 + $0x10] sm:$0xff]
    %v3208 = vld [vmem:[%s1589 + $0x18] sm:$0xff]
    %v3209 = vld [vmem:[%s1589 + $0x20] sm:$0xff]
    %v3210 = vld [vmem:[%s1589 + $0x28] sm:$0xff]
    %v3211 = vld [vmem:[%s1589 + $0x30] sm:$0xff]
    %v3212 = vld [vmem:[%s1589 + $0x38] sm:$0xff]
    %v3213 = vld [vmem:[%s1589 + $0x50] sm:$0xff]
    %v3214 = vld [vmem:[%s1589 + $0x58] sm:$0xff]
    %v3215 = vld [vmem:[%s1589 + $0x60] sm:$0xff]
    %v3216 = vld [vmem:[%s1589 + $0x68] sm:$0xff]
    %v3217 = vld [vmem:[%s1589 + $0x70] sm:$0xff]
    %v3218 = vld [vmem:[%s1589 + $0x78] sm:$0xff]
    %v3219 = vld [vmem:[%s1589 + $0x80] sm:$0xff]
    %v3220 = vld [vmem:[%s1589 + $0x88] sm:$0xff]
    %v3221 = vld [vmem:[%s1589 + $0xa0] sm:$0xff]
    %v3222 = vld [vmem:[%s1589 + $0xa8] sm:$0xff]
    %v3223 = vld [vmem:[%s1589 + $0xb0] sm:$0xff]
    %v3224 = vld [vmem:[%s1589 + $0xb8] sm:$0xff]
    %v3225 = vld [vmem:[%s1589 + $0xc0] sm:$0xff]
    %v3226 = vld [vmem:[%s1589 + $0xc8] sm:$0xff]
    %v3227 = vld [vmem:[%s1589 + $0xd0] sm:$0xff]
    %v3228 = vld [vmem:[%s1589 + $0xd8] sm:$0xff]
    %v3229 = vld [vmem:[%s1589 + $0xf0] sm:$0xff]
    %v3230 = vld [vmem:[%s1589 + $0xf8] sm:$0xff]
    %v3231 = vld [vmem:[%s1589 + $0x100] sm:$0xff]
    %v3232 = vld [vmem:[%s1589 + $0x108] sm:$0xff]
    %v3233 = vld [vmem:[%s1589 + $0x110] sm:$0xff]
    %v3234 = vld [vmem:[%s1589 + $0x118] sm:$0xff]
    %v3235 = vld [vmem:[%s1589 + $0x120] sm:$0xff]
    %v3236 = vld [vmem:[%s1589 + $0x128] sm:$0xff]
    %s3237 = scalar_lea.vmem %s3, 32
    %v3238 = vld [vmem:[%s3237] sm:$0xff]
    %v3240 = vsel %vm1388, %v3205, 0
    %v3243 = vsel %vm1388, %v3206, 0
    %v3246 = vsel %vm1388, %v3207, 0
    %v3249 = vsel %vm1388, %v3208, 0
    %v3252 = vsel %vm1388, %v3209, 0
    %v3255 = vsel %vm1388, %v3210, 0
    %v3258 = vsel %vm1388, %v3211, 0
    %v3261 = vsel %vm1388, %v3212, 0
    %v3264 = vsel %vm1388, %v3213, 0
    %v3267 = vsel %vm1388, %v3214, 0
    %v3270 = vsel %vm1388, %v3215, 0
    %v3273 = vsel %vm1388, %v3216, 0
    %v3276 = vsel %vm1388, %v3217, 0
    %v3279 = vsel %vm1388, %v3218, 0
    %v3282 = vsel %vm1388, %v3219, 0
    %v3285 = vsel %vm1388, %v3220, 0
    %v3288 = vsel %vm1388, %v3221, 0
    %v3291 = vsel %vm1388, %v3222, 0
    %v3294 = vsel %vm1388, %v3223, 0
    %v3297 = vsel %vm1388, %v3224, 0
    %v3300 = vsel %vm1388, %v3225, 0
    %v3303 = vsel %vm1388, %v3226, 0
    %v3306 = vsel %vm1388, %v3227, 0
    %v3309 = vsel %vm1388, %v3228, 0
    %v3312 = vsel %vm1388, %v3229, 0
    %v3315 = vsel %vm1388, %v3230, 0
    %v3318 = vsel %vm1388, %v3231, 0
    %v3321 = vsel %vm1388, %v3232, 0
    %v3324 = vsel %vm1388, %v3233, 0
    %v3327 = vsel %vm1388, %v3234, 0
    %v3330 = vsel %vm1388, %v3235, 0
    %v3333 = vsel %vm1388, %v3236, 0
    %3335 = vmatprep.subr.mxu0 0.0
    %3336 = vmatpush1.msra.mxu0 %v3238
    %3337 = vmatprep.subr.mxu0 0.0
    %3338 = vmatpush1.msra.mxu0 0.0
    %3339 = vmatprep.subr.mxu0 0.0
    %3340 = vmatpush1.msra.mxu0 0.0
    %3341 = vmatprep.subr.mxu0 0.0
    %3342 = vmatpush1.msra.mxu0 0.0
    %3343 = vmatprep.subr.mxu0 0.0
    %3344 = vmatpush1.msra.mxu0 0.0
    %3345 = vmatprep.subr.mxu0 0.0
    %3346 = vmatpush1.msra.mxu0 0.0
    %3347 = vmatprep.subr.mxu0 0.0
    %3348 = vmatpush1.msra.mxu0 0.0
    %3349 = vmatprep.subr.mxu0 0.0
    %3350 = vmatpush1.msra.mxu0 0.0
    %3351 = vmatprep.subr.mxu0 0.0
    %3352 = vmatpush1.msra.mxu0 0.0
    %3353 = vmatprep.subr.mxu0 0.0
    %3354 = vmatpush1.msra.mxu0 0.0
    %3355 = vmatprep.subr.mxu0 0.0
    %3356 = vmatpush1.msra.mxu0 0.0
    %3357 = vmatprep.subr.mxu0 0.0
    %3358 = vmatpush1.msra.mxu0 0.0
    %3359 = vmatprep.subr.mxu0 0.0
    %3360 = vmatpush1.msra.mxu0 0.0
    %3361 = vmatprep.subr.mxu0 0.0
    %3362 = vmatpush1.msra.mxu0 0.0
    %3363 = vmatprep.subr.mxu0 0.0
    %3364 = vmatpush1.msra.mxu0 0.0
    %3365 = vmatprep.subr.mxu0 0.0
    %3366 = vmatpush1.msra.mxu0 0.0
    %3367 = vmatprep.subr.mxu0 0.0
    %3368 = vmatpush1.msra.mxu0 0.0
    %3369 = vmatprep.subr.mxu0 0.0
    %3370 = vmatpush1.msra.mxu0 0.0
    %3371 = vmatprep.subr.mxu0 0.0
    %3372 = vmatpush1.msra.mxu0 0.0
    %3373 = vmatprep.subr.mxu0 0.0
    %3374 = vmatpush1.msra.mxu0 0.0
    %3375 = vmatprep.subr.mxu0 0.0
    %3376 = vmatpush1.msra.mxu0 0.0
    %3377 = vmatprep.subr.mxu0 0.0
    %3378 = vmatpush1.msra.mxu0 0.0
    %3379 = vmatprep.subr.mxu0 0.0
    %3380 = vmatpush1.msra.mxu0 0.0
    %3381 = vmatprep.subr.mxu0 0.0
    %3382 = vmatpush1.msra.mxu0 0.0
    %3383 = vmatprep.subr.mxu0 0.0
    %3384 = vmatpush1.msra.mxu0 0.0
    %3385 = vmatprep.subr.mxu0 0.0
    %3386 = vmatpush1.msra.mxu0 0.0
    %3387 = vmatprep.subr.mxu0 0.0
    %3388 = vmatpush1.msra.mxu0 0.0
    %3389 = vmatprep.subr.mxu0 0.0
    %3390 = vmatpush1.msra.mxu0 0.0
    %3391 = vmatprep.subr.mxu0 0.0
    %3392 = vmatpush1.msra.mxu0 0.0
    %3393 = vmatprep.subr.mxu0 0.0
    %3394 = vmatpush1.msra.mxu0 0.0
    %3395 = vmatprep.subr.mxu0 0.0
    %3396 = vmatpush1.msra.mxu0 0.0
    %3397 = vmatprep.subr.mxu0 0.0
    %3398 = vmatpush1.msra.mxu0 0.0
    %3399 = vmatprep.mubr.f32.mxu0 0.0
    %3400 = vmatmul.mubr.f32.gmra.mrb[0].mxu0 %v3240
    %v3401 = vpop.f32.mrb[0].mxu0
    %v3402 = vadd.f32 0.0, %v3401
    %v3403 = vpop.f32.mrb[0].mxu0
    %3404 = vmatprep.mubr.f32.mxu0 0.0
    %3405 = vmatmul.mubr.f32.gmra.mrb[0].mxu0 %v3243
    %v3406 = vpop.f32.mrb[0].mxu0
    %v3407 = vadd.f32 0.0, %v3406
    %v3408 = vpop.f32.mrb[0].mxu0
    %3409 = vmatprep.mubr.f32.mxu0 0.0
    %3410 = vmatmul.mubr.f32.gmra.mrb[0].mxu0 %v3246
    %v3411 = vpop.f32.mrb[0].mxu0
    %v3412 = vadd.f32 0.0, %v3411
    %v3413 = vpop.f32.mrb[0].mxu0
    %3414 = vmatprep.mubr.f32.mxu0 0.0
    %3415 = vmatmul.mubr.f32.gmra.mrb[0].mxu0 %v3249
    %v3416 = vpop.f32.mrb[0].mxu0
    %v3417 = vadd.f32 0.0, %v3416
    %v3418 = vpop.f32.mrb[0].mxu0
    %3419 = vmatprep.mubr.f32.mxu0 0.0
    %3420 = vmatmul.mubr.f32.gmra.mrb[0].mxu0 %v3252
    %v3421 = vpop.f32.mrb[0].mxu0
    %v3422 = vadd.f32 0.0, %v3421
    %v3423 = vpop.f32.mrb[0].mxu0
    %3424 = vmatprep.mubr.f32.mxu0 0.0
    %3425 = vmatmul.mubr.f32.gmra.mrb[0].mxu0 %v3255
    %v3426 = vpop.f32.mrb[0].mxu0
    %v3427 = vadd.f32 0.0, %v3426
    %v3428 = vpop.f32.mrb[0].mxu0
    %3429 = vmatprep.mubr.f32.mxu0 0.0
    %3430 = vmatmul.mubr.f32.gmra.mrb[0].mxu0 %v3258
    %v3431 = vpop.f32.mrb[0].mxu0
    %v3432 = vadd.f32 0.0, %v3431
    %v3433 = vpop.f32.mrb[0].mxu0
    %3434 = vmatprep.mubr.f32.mxu0 0.0
    %3435 = vmatmul.mubr.f32.gmra.mrb[0].mxu0 %v3261
    %v3436 = vpop.f32.mrb[0].mxu0
    %v3437 = vadd.f32 0.0, %v3436
    %v3438 = vpop.f32.mrb[0].mxu0
    %3439 = vmatprep.mubr.f32.mxu0 0.0
    %3440 = vmatmul.mubr.f32.gmra.mrb[0].mxu0 %v3264
    %v3441 = vpop.f32.mrb[0].mxu0
    %v3442 = vadd.f32 0.0, %v3441
    %v3443 = vpop.f32.mrb[0].mxu0
    %3444 = vmatprep.mubr.f32.mxu0 0.0
    %3445 = vmatmul.mubr.f32.gmra.mrb[0].mxu0 %v3267
    %v3446 = vpop.f32.mrb[0].mxu0
    %v3447 = vadd.f32 0.0, %v3446
    %v3448 = vpop.f32.mrb[0].mxu0
    %3449 = vmatprep.mubr.f32.mxu0 0.0
    %3450 = vmatmul.mubr.f32.gmra.mrb[0].mxu0 %v3270
    %v3451 = vpop.f32.mrb[0].mxu0
    %v3452 = vadd.f32 0.0, %v3451
    %v3453 = vpop.f32.mrb[0].mxu0
    %3454 = vmatprep.mubr.f32.mxu0 0.0
    %3455 = vmatmul.mubr.f32.gmra.mrb[0].mxu0 %v3273
    %v3456 = vpop.f32.mrb[0].mxu0
    %v3457 = vadd.f32 0.0, %v3456
    %v3458 = vpop.f32.mrb[0].mxu0
    %3459 = vmatprep.mubr.f32.mxu0 0.0
    %3460 = vmatmul.mubr.f32.gmra.mrb[0].mxu0 %v3276
    %v3461 = vpop.f32.mrb[0].mxu0
    %v3462 = vadd.f32 0.0, %v3461
    %v3463 = vpop.f32.mrb[0].mxu0
    %3464 = vmatprep.mubr.f32.mxu0 0.0
    %3465 = vmatmul.mubr.f32.gmra.mrb[0].mxu0 %v3279
    %v3466 = vpop.f32.mrb[0].mxu0
    %v3467 = vadd.f32 0.0, %v3466
    %v3468 = vpop.f32.mrb[0].mxu0
    %3469 = vmatprep.mubr.f32.mxu0 0.0
    %3470 = vmatmul.mubr.f32.gmra.mrb[0].mxu0 %v3282
    %v3471 = vpop.f32.mrb[0].mxu0
    %v3472 = vadd.f32 0.0, %v3471
    %v3473 = vpop.f32.mrb[0].mxu0
    %3474 = vmatprep.mubr.f32.mxu0 0.0
    %3475 = vmatmul.mubr.f32.gmra.mrb[0].mxu0 %v3285
    %v3476 = vpop.f32.mrb[0].mxu0
    %v3477 = vadd.f32 0.0, %v3476
    %v3478 = vpop.f32.mrb[0].mxu0
    %3479 = vmatprep.mubr.f32.mxu0 0.0
    %3480 = vmatmul.mubr.f32.gmra.mrb[0].mxu0 %v3288
    %v3481 = vpop.f32.mrb[0].mxu0
    %v3482 = vadd.f32 0.0, %v3481
    %v3483 = vpop.f32.mrb[0].mxu0
    %3484 = vmatprep.mubr.f32.mxu0 0.0
    %3485 = vmatmul.mubr.f32.gmra.mrb[0].mxu0 %v3291
    %v3486 = vpop.f32.mrb[0].mxu0
    %v3487 = vadd.f32 0.0, %v3486
    %v3488 = vpop.f32.mrb[0].mxu0
    %3489 = vmatprep.mubr.f32.mxu0 0.0
    %3490 = vmatmul.mubr.f32.gmra.mrb[0].mxu0 %v3294
    %v3491 = vpop.f32.mrb[0].mxu0
    %v3492 = vadd.f32 0.0, %v3491
    %v3493 = vpop.f32.mrb[0].mxu0
    %3494 = vmatprep.mubr.f32.mxu0 0.0
    %3495 = vmatmul.mubr.f32.gmra.mrb[0].mxu0 %v3297
    %v3496 = vpop.f32.mrb[0].mxu0
    %v3497 = vadd.f32 0.0, %v3496
    %v3498 = vpop.f32.mrb[0].mxu0
    %3499 = vmatprep.mubr.f32.mxu0 0.0
    %3500 = vmatmul.mubr.f32.gmra.mrb[0].mxu0 %v3300
    %v3501 = vpop.f32.mrb[0].mxu0
    %v3502 = vadd.f32 0.0, %v3501
    %v3503 = vpop.f32.mrb[0].mxu0
    %3504 = vmatprep.mubr.f32.mxu0 0.0
    %3505 = vmatmul.mubr.f32.gmra.mrb[0].mxu0 %v3303
    %v3506 = vpop.f32.mrb[0].mxu0
    %v3507 = vadd.f32 0.0, %v3506
    %v3508 = vpop.f32.mrb[0].mxu0
    %3509 = vmatprep.mubr.f32.mxu0 0.0
    %3510 = vmatmul.mubr.f32.gmra.mrb[0].mxu0 %v3306
    %v3511 = vpop.f32.mrb[0].mxu0
    %v3512 = vadd.f32 0.0, %v3511
    %v3513 = vpop.f32.mrb[0].mxu0
    %3514 = vmatprep.mubr.f32.mxu0 0.0
    %3515 = vmatmul.mubr.f32.gmra.mrb[0].mxu0 %v3309
    %v3516 = vpop.f32.mrb[0].mxu0
    %v3517 = vadd.f32 0.0, %v3516
    %v3518 = vpop.f32.mrb[0].mxu0
    %3519 = vmatprep.mubr.f32.mxu0 0.0
    %3520 = vmatmul.mubr.f32.gmra.mrb[0].mxu0 %v3312
    %v3521 = vpop.f32.mrb[0].mxu0
    %v3522 = vadd.f32 0.0, %v3521
    %v3523 = vpop.f32.mrb[0].mxu0
    %3524 = vmatprep.mubr.f32.mxu0 0.0
    %3525 = vmatmul.mubr.f32.gmra.mrb[0].mxu0 %v3315
    %v3526 = vpop.f32.mrb[0].mxu0
    %v3527 = vadd.f32 0.0, %v3526
    %v3528 = vpop.f32.mrb[0].mxu0
    %3529 = vmatprep.mubr.f32.mxu0 0.0
    %3530 = vmatmul.mubr.f32.gmra.mrb[0].mxu0 %v3318
    %v3531 = vpop.f32.mrb[0].mxu0
    %v3532 = vadd.f32 0.0, %v3531
    %v3533 = vpop.f32.mrb[0].mxu0
    %3534 = vmatprep.mubr.f32.mxu0 0.0
    %3535 = vmatmul.mubr.f32.gmra.mrb[0].mxu0 %v3321
    %v3536 = vpop.f32.mrb[0].mxu0
    %v3537 = vadd.f32 0.0, %v3536
    %v3538 = vpop.f32.mrb[0].mxu0
    %3539 = vmatprep.mubr.f32.mxu0 0.0
    %3540 = vmatmul.mubr.f32.gmra.mrb[0].mxu0 %v3324
    %v3541 = vpop.f32.mrb[0].mxu0
    %v3542 = vadd.f32 0.0, %v3541
    %v3543 = vpop.f32.mrb[0].mxu0
    %3544 = vmatprep.mubr.f32.mxu0 0.0
    %3545 = vmatmul.mubr.f32.gmra.mrb[0].mxu0 %v3327
    %v3546 = vpop.f32.mrb[0].mxu0
    %v3547 = vadd.f32 0.0, %v3546
    %v3548 = vpop.f32.mrb[0].mxu0
    %3549 = vmatprep.mubr.f32.mxu0 0.0
    %3550 = vmatmul.mubr.f32.gmra.mrb[0].mxu0 %v3330
    %v3551 = vpop.f32.mrb[0].mxu0
    %v3552 = vadd.f32 0.0, %v3551
    %v3553 = vpop.f32.mrb[0].mxu0
    %3554 = vmatprep.mubr.f32.mxu0 0.0
    %3555 = vmatmul.mubr.f32.gmra.mrb[0].mxu0 %v3333
    %v3556 = vpop.f32.mrb[0].mxu0
    %v3557 = vadd.f32 0.0, %v3556
    %v3558 = vpop.f32.mrb[0].mxu0
    %3559 = vdwg.mxu0
    %v3560 = vadd.f32 %v3173, %v3402
    %v3561 = vadd.f32 %v3174, %v3407
    %v3562 = vadd.f32 %v3175, %v3412
    %v3563 = vadd.f32 %v3176, %v3417
    %v3564 = vadd.f32 %v3177, %v3422
    %v3565 = vadd.f32 %v3178, %v3427
    %v3566 = vadd.f32 %v3179, %v3432
    %v3567 = vadd.f32 %v3180, %v3437
    %v3568 = vadd.f32 %v3181, %v3442
    %v3569 = vadd.f32 %v3182, %v3447
    %v3570 = vadd.f32 %v3183, %v3452
    %v3571 = vadd.f32 %v3184, %v3457
    %v3572 = vadd.f32 %v3185, %v3462
    %v3573 = vadd.f32 %v3186, %v3467
    %v3574 = vadd.f32 %v3187, %v3472
    %v3575 = vadd.f32 %v3188, %v3477
    %v3576 = vadd.f32 %v3189, %v3482
    %v3577 = vadd.f32 %v3190, %v3487
    %v3578 = vadd.f32 %v3191, %v3492
    %v3579 = vadd.f32 %v3192, %v3497
    %v3580 = vadd.f32 %v3193, %v3502
    %v3581 = vadd.f32 %v3194, %v3507
    %v3582 = vadd.f32 %v3195, %v3512
    %v3583 = vadd.f32 %v3196, %v3517
    %v3584 = vadd.f32 %v3197, %v3522
    %v3585 = vadd.f32 %v3198, %v3527
    %v3586 = vadd.f32 %v3199, %v3532
    %v3587 = vadd.f32 %v3200, %v3537
    %v3588 = vadd.f32 %v3201, %v3542
    %v3589 = vadd.f32 %v3202, %v3547
    %v3590 = vadd.f32 %v3203, %v3552
    %v3591 = vadd.f32 %v3204, %v3557
    %s3592 = scalar_lea.vmem [#allocation2], 496
    %v3593 = vld [vmem:[%s3592] sm:$0xff]
    %v3594 = vld [vmem:[%s3592 + $0x8] sm:$0xff]
    %v3595 = vld [vmem:[%s3592 + $0x10] sm:$0xff]
    %v3596 = vld [vmem:[%s3592 + $0x18] sm:$0xff]
    %v3597 = vld [vmem:[%s3592 + $0x20] sm:$0xff]
    %v3598 = vld [vmem:[%s3592 + $0x28] sm:$0xff]
    %v3599 = vld [vmem:[%s3592 + $0x30] sm:$0xff]
    %v3600 = vld [vmem:[%s3592 + $0x38] sm:$0xff]
    %v3601 = vld [vmem:[%s3592 + $0x50] sm:$0xff]
    %v3602 = vld [vmem:[%s3592 + $0x58] sm:$0xff]
    %v3603 = vld [vmem:[%s3592 + $0x60] sm:$0xff]
    %v3604 = vld [vmem:[%s3592 + $0x68] sm:$0xff]
    %v3605 = vld [vmem:[%s3592 + $0x70] sm:$0xff]
    %v3606 = vld [vmem:[%s3592 + $0x78] sm:$0xff]
    %v3607 = vld [vmem:[%s3592 + $0x80] sm:$0xff]
    %v3608 = vld [vmem:[%s3592 + $0x88] sm:$0xff]
    %v3609 = vld [vmem:[%s3592 + $0xa0] sm:$0xff]
    %v3610 = vld [vmem:[%s3592 + $0xa8] sm:$0xff]
    %v3611 = vld [vmem:[%s3592 + $0xb0] sm:$0xff]
    %v3612 = vld [vmem:[%s3592 + $0xb8] sm:$0xff]
    %v3613 = vld [vmem:[%s3592 + $0xc0] sm:$0xff]
    %v3614 = vld [vmem:[%s3592 + $0xc8] sm:$0xff]
    %v3615 = vld [vmem:[%s3592 + $0xd0] sm:$0xff]
    %v3616 = vld [vmem:[%s3592 + $0xd8] sm:$0xff]
    %v3617 = vld [vmem:[%s3592 + $0xf0] sm:$0xff]
    %v3618 = vld [vmem:[%s3592 + $0xf8] sm:$0xff]
    %v3619 = vld [vmem:[%s3592 + $0x100] sm:$0xff]
    %v3620 = vld [vmem:[%s3592 + $0x108] sm:$0xff]
    %v3621 = vld [vmem:[%s3592 + $0x110] sm:$0xff]
    %v3622 = vld [vmem:[%s3592 + $0x118] sm:$0xff]
    %v3623 = vld [vmem:[%s3592 + $0x120] sm:$0xff]
    %v3624 = vld [vmem:[%s3592 + $0x128] sm:$0xff]
    %s3625 = scalar_lea.vmem %s3, 40
    %v3626 = vld [vmem:[%s3625] sm:$0xff]
    %v3628 = vsel %vm1388, %v3593, 0
    %v3631 = vsel %vm1388, %v3594, 0
    %v3634 = vsel %vm1388, %v3595, 0
    %v3637 = vsel %vm1388, %v3596, 0
    %v3640 = vsel %vm1388, %v3597, 0
    %v3643 = vsel %vm1388, %v3598, 0
    %v3646 = vsel %vm1388, %v3599, 0
    %v3649 = vsel %vm1388, %v3600, 0
    %v3652 = vsel %vm1388, %v3601, 0
    %v3655 = vsel %vm1388, %v3602, 0
    %v3658 = vsel %vm1388, %v3603, 0
    %v3661 = vsel %vm1388, %v3604, 0
    %v3664 = vsel %vm1388, %v3605, 0
    %v3667 = vsel %vm1388, %v3606, 0
    %v3670 = vsel %vm1388, %v3607, 0
    %v3673 = vsel %vm1388, %v3608, 0
    %v3676 = vsel %vm1388, %v3609, 0
    %v3679 = vsel %vm1388, %v3610, 0
    %v3682 = vsel %vm1388, %v3611, 0
    %v3685 = vsel %vm1388, %v3612, 0
    %v3688 = vsel %vm1388, %v3613, 0
    %v3691 = vsel %vm1388, %v3614, 0
    %v3694 = vsel %vm1388, %v3615, 0
    %v3697 = vsel %vm1388, %v3616, 0
    %v3700 = vsel %vm1388, %v3617, 0
    %v3703 = vsel %vm1388, %v3618, 0
    %v3706 = vsel %vm1388, %v3619, 0
    %v3709 = vsel %vm1388, %v3620, 0
    %v3712 = vsel %vm1388, %v3621, 0
    %v3715 = vsel %vm1388, %v3622, 0
    %v3718 = vsel %vm1388, %v3623, 0
    %v3721 = vsel %vm1388, %v3624, 0
    %3723 = vmatprep.subr.mxu0 0.0
    %3724 = vmatpush1.msra.mxu0 %v3626
    %3725 = vmatprep.subr.mxu0 0.0
    %3726 = vmatpush1.msra.mxu0 0.0
    %3727 = vmatprep.subr.mxu0 0.0
    %3728 = vmatpush1.msra.mxu0 0.0
    %3729 = vmatprep.subr.mxu0 0.0
    %3730 = vmatpush1.msra.mxu0 0.0
    %3731 = vmatprep.subr.mxu0 0.0
    %3732 = vmatpush1.msra.mxu0 0.0
    %3733 = vmatprep.subr.mxu0 0.0
    %3734 = vmatpush1.msra.mxu0 0.0
    %3735 = vmatprep.subr.mxu0 0.0
    %3736 = vmatpush1.msra.mxu0 0.0
    %3737 = vmatprep.subr.mxu0 0.0
    %3738 = vmatpush1.msra.mxu0 0.0
    %3739 = vmatprep.subr.mxu0 0.0
    %3740 = vmatpush1.msra.mxu0 0.0
    %3741 = vmatprep.subr.mxu0 0.0
    %3742 = vmatpush1.msra.mxu0 0.0
    %3743 = vmatprep.subr.mxu0 0.0
    %3744 = vmatpush1.msra.mxu0 0.0
    %3745 = vmatprep.subr.mxu0 0.0
    %3746 = vmatpush1.msra.mxu0 0.0
    %3747 = vmatprep.subr.mxu0 0.0
    %3748 = vmatpush1.msra.mxu0 0.0
    %3749 = vmatprep.subr.mxu0 0.0
    %3750 = vmatpush1.msra.mxu0 0.0
    %3751 = vmatprep.subr.mxu0 0.0
    %3752 = vmatpush1.msra.mxu0 0.0
    %3753 = vmatprep.subr.mxu0 0.0
    %3754 = vmatpush1.msra.mxu0 0.0
    %3755 = vmatprep.subr.mxu0 0.0
    %3756 = vmatpush1.msra.mxu0 0.0
    %3757 = vmatprep.subr.mxu0 0.0
    %3758 = vmatpush1.msra.mxu0 0.0
    %3759 = vmatprep.subr.mxu0 0.0
    %3760 = vmatpush1.msra.mxu0 0.0
    %3761 = vmatprep.subr.mxu0 0.0
    %3762 = vmatpush1.msra.mxu0 0.0
    %3763 = vmatprep.subr.mxu0 0.0
    %3764 = vmatpush1.msra.mxu0 0.0
    %3765 = vmatprep.subr.mxu0 0.0
    %3766 = vmatpush1.msra.mxu0 0.0
    %3767 = vmatprep.subr.mxu0 0.0
    %3768 = vmatpush1.msra.mxu0 0.0
    %3769 = vmatprep.subr.mxu0 0.0
    %3770 = vmatpush1.msra.mxu0 0.0
    %3771 = vmatprep.subr.mxu0 0.0
    %3772 = vmatpush1.msra.mxu0 0.0
    %3773 = vmatprep.subr.mxu0 0.0
    %3774 = vmatpush1.msra.mxu0 0.0
    %3775 = vmatprep.subr.mxu0 0.0
    %3776 = vmatpush1.msra.mxu0 0.0
    %3777 = vmatprep.subr.mxu0 0.0
    %3778 = vmatpush1.msra.mxu0 0.0
    %3779 = vmatprep.subr.mxu0 0.0
    %3780 = vmatpush1.msra.mxu0 0.0
    %3781 = vmatprep.subr.mxu0 0.0
    %3782 = vmatpush1.msra.mxu0 0.0
    %3783 = vmatprep.subr.mxu0 0.0
    %3784 = vmatpush1.msra.mxu0 0.0
    %3785 = vmatprep.subr.mxu0 0.0
    %3786 = vmatpush1.msra.mxu0 0.0
    %3787 = vmatprep.mubr.f32.mxu0 0.0
    %3788 = vmatmul.mubr.f32.gmra.mrb[0].mxu0 %v3628
    %v3789 = vpop.f32.mrb[0].mxu0
    %v3790 = vadd.f32 0.0, %v3789
    %v3791 = vpop.f32.mrb[0].mxu0
    %3792 = vmatprep.mubr.f32.mxu0 0.0
    %3793 = vmatmul.mubr.f32.gmra.mrb[0].mxu0 %v3631
    %v3794 = vpop.f32.mrb[0].mxu0
    %v3795 = vadd.f32 0.0, %v3794
    %v3796 = vpop.f32.mrb[0].mxu0
    %3797 = vmatprep.mubr.f32.mxu0 0.0
    %3798 = vmatmul.mubr.f32.gmra.mrb[0].mxu0 %v3634
    %v3799 = vpop.f32.mrb[0].mxu0
    %v3800 = vadd.f32 0.0, %v3799
    %v3801 = vpop.f32.mrb[0].mxu0
    %3802 = vmatprep.mubr.f32.mxu0 0.0
    %3803 = vmatmul.mubr.f32.gmra.mrb[0].mxu0 %v3637
    %v3804 = vpop.f32.mrb[0].mxu0
    %v3805 = vadd.f32 0.0, %v3804
    %v3806 = vpop.f32.mrb[0].mxu0
    %3807 = vmatprep.mubr.f32.mxu0 0.0
    %3808 = vmatmul.mubr.f32.gmra.mrb[0].mxu0 %v3640
    %v3809 = vpop.f32.mrb[0].mxu0
    %v3810 = vadd.f32 0.0, %v3809
    %v3811 = vpop.f32.mrb[0].mxu0
    %3812 = vmatprep.mubr.f32.mxu0 0.0
    %3813 = vmatmul.mubr.f32.gmra.mrb[0].mxu0 %v3643
    %v3814 = vpop.f32.mrb[0].mxu0
    %v3815 = vadd.f32 0.0, %v3814
    %v3816 = vpop.f32.mrb[0].mxu0
    %3817 = vmatprep.mubr.f32.mxu0 0.0
    %3818 = vmatmul.mubr.f32.gmra.mrb[0].mxu0 %v3646
    %v3819 = vpop.f32.mrb[0].mxu0
    %v3820 = vadd.f32 0.0, %v3819
    %v3821 = vpop.f32.mrb[0].mxu0
    %3822 = vmatprep.mubr.f32.mxu0 0.0
    %3823 = vmatmul.mubr.f32.gmra.mrb[0].mxu0 %v3649
    %v3824 = vpop.f32.mrb[0].mxu0
    %v3825 = vadd.f32 0.0, %v3824
    %v3826 = vpop.f32.mrb[0].mxu0
    %3827 = vmatprep.mubr.f32.mxu0 0.0
    %3828 = vmatmul.mubr.f32.gmra.mrb[0].mxu0 %v3652
    %v3829 = vpop.f32.mrb[0].mxu0
    %v3830 = vadd.f32 0.0, %v3829
    %v3831 = vpop.f32.mrb[0].mxu0
    %3832 = vmatprep.mubr.f32.mxu0 0.0
    %3833 = vmatmul.mubr.f32.gmra.mrb[0].mxu0 %v3655
    %v3834 = vpop.f32.mrb[0].mxu0
    %v3835 = vadd.f32 0.0, %v3834
    %v3836 = vpop.f32.mrb[0].mxu0
    %3837 = vmatprep.mubr.f32.mxu0 0.0
    %3838 = vmatmul.mubr.f32.gmra.mrb[0].mxu0 %v3658
    %v3839 = vpop.f32.mrb[0].mxu0
    %v3840 = vadd.f32 0.0, %v3839
    %v3841 = vpop.f32.mrb[0].mxu0
    %3842 = vmatprep.mubr.f32.mxu0 0.0
    %3843 = vmatmul.mubr.f32.gmra.mrb[0].mxu0 %v3661
    %v3844 = vpop.f32.mrb[0].mxu0
    %v3845 = vadd.f32 0.0, %v3844
    %v3846 = vpop.f32.mrb[0].mxu0
    %3847 = vmatprep.mubr.f32.mxu0 0.0
    %3848 = vmatmul.mubr.f32.gmra.mrb[0].mxu0 %v3664
    %v3849 = vpop.f32.mrb[0].mxu0
    %v3850 = vadd.f32 0.0, %v3849
    %v3851 = vpop.f32.mrb[0].mxu0
    %3852 = vmatprep.mubr.f32.mxu0 0.0
    %3853 = vmatmul.mubr.f32.gmra.mrb[0].mxu0 %v3667
    %v3854 = vpop.f32.mrb[0].mxu0
    %v3855 = vadd.f32 0.0, %v3854
    %v3856 = vpop.f32.mrb[0].mxu0
    %3857 = vmatprep.mubr.f32.mxu0 0.0
    %3858 = vmatmul.mubr.f32.gmra.mrb[0].mxu0 %v3670
    %v3859 = vpop.f32.mrb[0].mxu0
    %v3860 = vadd.f32 0.0, %v3859
    %v3861 = vpop.f32.mrb[0].mxu0
    %3862 = vmatprep.mubr.f32.mxu0 0.0
    %3863 = vmatmul.mubr.f32.gmra.mrb[0].mxu0 %v3673
    %v3864 = vpop.f32.mrb[0].mxu0
    %v3865 = vadd.f32 0.0, %v3864
    %v3866 = vpop.f32.mrb[0].mxu0
    %3867 = vmatprep.mubr.f32.mxu0 0.0
    %3868 = vmatmul.mubr.f32.gmra.mrb[0].mxu0 %v3676
    %v3869 = vpop.f32.mrb[0].mxu0
    %v3870 = vadd.f32 0.0, %v3869
    %v3871 = vpop.f32.mrb[0].mxu0
    %3872 = vmatprep.mubr.f32.mxu0 0.0
    %3873 = vmatmul.mubr.f32.gmra.mrb[0].mxu0 %v3679
    %v3874 = vpop.f32.mrb[0].mxu0
    %v3875 = vadd.f32 0.0, %v3874
    %v3876 = vpop.f32.mrb[0].mxu0
    %3877 = vmatprep.mubr.f32.mxu0 0.0
    %3878 = vmatmul.mubr.f32.gmra.mrb[0].mxu0 %v3682
    %v3879 = vpop.f32.mrb[0].mxu0
    %v3880 = vadd.f32 0.0, %v3879
    %v3881 = vpop.f32.mrb[0].mxu0
    %3882 = vmatprep.mubr.f32.mxu0 0.0
    %3883 = vmatmul.mubr.f32.gmra.mrb[0].mxu0 %v3685
    %v3884 = vpop.f32.mrb[0].mxu0
    %v3885 = vadd.f32 0.0, %v3884
    %v3886 = vpop.f32.mrb[0].mxu0
    %3887 = vmatprep.mubr.f32.mxu0 0.0
    %3888 = vmatmul.mubr.f32.gmra.mrb[0].mxu0 %v3688
    %v3889 = vpop.f32.mrb[0].mxu0
    %v3890 = vadd.f32 0.0, %v3889
    %v3891 = vpop.f32.mrb[0].mxu0
    %3892 = vmatprep.mubr.f32.mxu0 0.0
    %3893 = vmatmul.mubr.f32.gmra.mrb[0].mxu0 %v3691
    %v3894 = vpop.f32.mrb[0].mxu0
    %v3895 = vadd.f32 0.0, %v3894
    %v3896 = vpop.f32.mrb[0].mxu0
    %3897 = vmatprep.mubr.f32.mxu0 0.0
    %3898 = vmatmul.mubr.f32.gmra.mrb[0].mxu0 %v3694
    %v3899 = vpop.f32.mrb[0].mxu0
    %v3900 = vadd.f32 0.0, %v3899
    %v3901 = vpop.f32.mrb[0].mxu0
    %3902 = vmatprep.mubr.f32.mxu0 0.0
    %3903 = vmatmul.mubr.f32.gmra.mrb[0].mxu0 %v3697
    %v3904 = vpop.f32.mrb[0].mxu0
    %v3905 = vadd.f32 0.0, %v3904
    %v3906 = vpop.f32.mrb[0].mxu0
    %3907 = vmatprep.mubr.f32.mxu0 0.0
    %3908 = vmatmul.mubr.f32.gmra.mrb[0].mxu0 %v3700
    %v3909 = vpop.f32.mrb[0].mxu0
    %v3910 = vadd.f32 0.0, %v3909
    %v3911 = vpop.f32.mrb[0].mxu0
    %3912 = vmatprep.mubr.f32.mxu0 0.0
    %3913 = vmatmul.mubr.f32.gmra.mrb[0].mxu0 %v3703
    %v3914 = vpop.f32.mrb[0].mxu0
    %v3915 = vadd.f32 0.0, %v3914
    %v3916 = vpop.f32.mrb[0].mxu0
    %3917 = vmatprep.mubr.f32.mxu0 0.0
    %3918 = vmatmul.mubr.f32.gmra.mrb[0].mxu0 %v3706
    %v3919 = vpop.f32.mrb[0].mxu0
    %v3920 = vadd.f32 0.0, %v3919
    %v3921 = vpop.f32.mrb[0].mxu0
    %3922 = vmatprep.mubr.f32.mxu0 0.0
    %3923 = vmatmul.mubr.f32.gmra.mrb[0].mxu0 %v3709
    %v3924 = vpop.f32.mrb[0].mxu0
    %v3925 = vadd.f32 0.0, %v3924
    %v3926 = vpop.f32.mrb[0].mxu0
    %3927 = vmatprep.mubr.f32.mxu0 0.0
    %3928 = vmatmul.mubr.f32.gmra.mrb[0].mxu0 %v3712
    %v3929 = vpop.f32.mrb[0].mxu0
    %v3930 = vadd.f32 0.0, %v3929
    %v3931 = vpop.f32.mrb[0].mxu0
    %3932 = vmatprep.mubr.f32.mxu0 0.0
    %3933 = vmatmul.mubr.f32.gmra.mrb[0].mxu0 %v3715
    %v3934 = vpop.f32.mrb[0].mxu0
    %v3935 = vadd.f32 0.0, %v3934
    %v3936 = vpop.f32.mrb[0].mxu0
    %3937 = vmatprep.mubr.f32.mxu0 0.0
    %3938 = vmatmul.mubr.f32.gmra.mrb[0].mxu0 %v3718
    %v3939 = vpop.f32.mrb[0].mxu0
    %v3940 = vadd.f32 0.0, %v3939
    %v3941 = vpop.f32.mrb[0].mxu0
    %3942 = vmatprep.mubr.f32.mxu0 0.0
    %3943 = vmatmul.mubr.f32.gmra.mrb[0].mxu0 %v3721
    %v3944 = vpop.f32.mrb[0].mxu0
    %v3945 = vadd.f32 0.0, %v3944
    %v3946 = vpop.f32.mrb[0].mxu0
    %3947 = vdwg.mxu0
    %v3948 = vadd.f32 %v3560, %v3790
    %v3949 = vadd.f32 %v3561, %v3795
    %v3950 = vadd.f32 %v3562, %v3800
    %v3951 = vadd.f32 %v3563, %v3805
    %v3952 = vadd.f32 %v3564, %v3810
    %v3953 = vadd.f32 %v3565, %v3815
    %v3954 = vadd.f32 %v3566, %v3820
    %v3955 = vadd.f32 %v3567, %v3825
    %v3956 = vadd.f32 %v3568, %v3830
    %v3957 = vadd.f32 %v3569, %v3835
    %v3958 = vadd.f32 %v3570, %v3840
    %v3959 = vadd.f32 %v3571, %v3845
    %v3960 = vadd.f32 %v3572, %v3850
    %v3961 = vadd.f32 %v3573, %v3855
    %v3962 = vadd.f32 %v3574, %v3860
    %v3963 = vadd.f32 %v3575, %v3865
    %v3964 = vadd.f32 %v3576, %v3870
    %v3965 = vadd.f32 %v3577, %v3875
    %v3966 = vadd.f32 %v3578, %v3880
    %v3967 = vadd.f32 %v3579, %v3885
    %v3968 = vadd.f32 %v3580, %v3890
    %v3969 = vadd.f32 %v3581, %v3895
    %v3970 = vadd.f32 %v3582, %v3900
    %v3971 = vadd.f32 %v3583, %v3905
    %v3972 = vadd.f32 %v3584, %v3910
    %v3973 = vadd.f32 %v3585, %v3915
    %v3974 = vadd.f32 %v3586, %v3920
    %v3975 = vadd.f32 %v3587, %v3925
    %v3976 = vadd.f32 %v3588, %v3930
    %v3977 = vadd.f32 %v3589, %v3935
    %v3978 = vadd.f32 %v3590, %v3940
    %v3979 = vadd.f32 %v3591, %v3945
    %s3980 = scalar_lea.vmem [#allocation2], 1280
    %v3981 = vld [vmem:[%s3980] sm:$0xff]
    %v3982 = vld [vmem:[%s3980 + $0x8] sm:$0xff]
    %v3983 = vld [vmem:[%s3980 + $0x10] sm:$0xff]
    %v3984 = vld [vmem:[%s3980 + $0x18] sm:$0xff]
    %v3985 = vld [vmem:[%s3980 + $0x20] sm:$0xff]
    %v3986 = vld [vmem:[%s3980 + $0x28] sm:$0xff]
    %v3987 = vld [vmem:[%s3980 + $0x30] sm:$0xff]
    %v3988 = vld [vmem:[%s3980 + $0x38] sm:$0xff]
    %v3989 = vld [vmem:[%s3980 + $0x50] sm:$0xff]
    %v3990 = vld [vmem:[%s3980 + $0x58] sm:$0xff]
    %v3991 = vld [vmem:[%s3980 + $0x60] sm:$0xff]
    %v3992 = vld [vmem:[%s3980 + $0x68] sm:$0xff]
    %v3993 = vld [vmem:[%s3980 + $0x70] sm:$0xff]
    %v3994 = vld [vmem:[%s3980 + $0x78] sm:$0xff]
    %v3995 = vld [vmem:[%s3980 + $0x80] sm:$0xff]
    %v3996 = vld [vmem:[%s3980 + $0x88] sm:$0xff]
    %v3997 = vld [vmem:[%s3980 + $0xa0] sm:$0xff]
    %v3998 = vld [vmem:[%s3980 + $0xa8] sm:$0xff]
    %v3999 = vld [vmem:[%s3980 + $0xb0] sm:$0xff]
    %v4000 = vld [vmem:[%s3980 + $0xb8] sm:$0xff]
    %v4001 = vld [vmem:[%s3980 + $0xc0] sm:$0xff]
    %v4002 = vld [vmem:[%s3980 + $0xc8] sm:$0xff]
    %v4003 = vld [vmem:[%s3980 + $0xd0] sm:$0xff]
    %v4004 = vld [vmem:[%s3980 + $0xd8] sm:$0xff]
    %v4005 = vld [vmem:[%s3980 + $0xf0] sm:$0xff]
    %v4006 = vld [vmem:[%s3980 + $0xf8] sm:$0xff]
    %v4007 = vld [vmem:[%s3980 + $0x100] sm:$0xff]
    %v4008 = vld [vmem:[%s3980 + $0x108] sm:$0xff]
    %v4009 = vld [vmem:[%s3980 + $0x110] sm:$0xff]
    %v4010 = vld [vmem:[%s3980 + $0x118] sm:$0xff]
    %v4011 = vld [vmem:[%s3980 + $0x120] sm:$0xff]
    %v4012 = vld [vmem:[%s3980 + $0x128] sm:$0xff]
    %s4013 = scalar_lea.vmem %s3, 48
    %v4014 = vld [vmem:[%s4013] sm:$0xff]
    %v4016 = vsel %vm1388, %v3981, 0
    %v4019 = vsel %vm1388, %v3982, 0
    %v4022 = vsel %vm1388, %v3983, 0
    %v4025 = vsel %vm1388, %v3984, 0
    %v4028 = vsel %vm1388, %v3985, 0
    %v4031 = vsel %vm1388, %v3986, 0
    %v4034 = vsel %vm1388, %v3987, 0
    %v4037 = vsel %vm1388, %v3988, 0
    %v4040 = vsel %vm1388, %v3989, 0
    %v4043 = vsel %vm1388, %v3990, 0
    %v4046 = vsel %vm1388, %v3991, 0
    %v4049 = vsel %vm1388, %v3992, 0
    %v4052 = vsel %vm1388, %v3993, 0
    %v4055 = vsel %vm1388, %v3994, 0
    %v4058 = vsel %vm1388, %v3995, 0
    %v4061 = vsel %vm1388, %v3996, 0
    %v4064 = vsel %vm1388, %v3997, 0
    %v4067 = vsel %vm1388, %v3998, 0
    %v4070 = vsel %vm1388, %v3999, 0
    %v4073 = vsel %vm1388, %v4000, 0
    %v4076 = vsel %vm1388, %v4001, 0
    %v4079 = vsel %vm1388, %v4002, 0
    %v4082 = vsel %vm1388, %v4003, 0
    %v4085 = vsel %vm1388, %v4004, 0
    %v4088 = vsel %vm1388, %v4005, 0
    %v4091 = vsel %vm1388, %v4006, 0
    %v4094 = vsel %vm1388, %v4007, 0
    %v4097 = vsel %vm1388, %v4008, 0
    %v4100 = vsel %vm1388, %v4009, 0
    %v4103 = vsel %vm1388, %v4010, 0
    %v4106 = vsel %vm1388, %v4011, 0
    %v4109 = vsel %vm1388, %v4012, 0
    %4111 = vmatprep.subr.mxu0 0.0
    %4112 = vmatpush1.msra.mxu0 %v4014
    %4113 = vmatprep.subr.mxu0 0.0
    %4114 = vmatpush1.msra.mxu0 0.0
    %4115 = vmatprep.subr.mxu0 0.0
    %4116 = vmatpush1.msra.mxu0 0.0
    %4117 = vmatprep.subr.mxu0 0.0
    %4118 = vmatpush1.msra.mxu0 0.0
    %4119 = vmatprep.subr.mxu0 0.0
    %4120 = vmatpush1.msra.mxu0 0.0
    %4121 = vmatprep.subr.mxu0 0.0
    %4122 = vmatpush1.msra.mxu0 0.0
    %4123 = vmatprep.subr.mxu0 0.0
    %4124 = vmatpush1.msra.mxu0 0.0
    %4125 = vmatprep.subr.mxu0 0.0
    %4126 = vmatpush1.msra.mxu0 0.0
    %4127 = vmatprep.subr.mxu0 0.0
    %4128 = vmatpush1.msra.mxu0 0.0
    %4129 = vmatprep.subr.mxu0 0.0
    %4130 = vmatpush1.msra.mxu0 0.0
    %4131 = vmatprep.subr.mxu0 0.0
    %4132 = vmatpush1.msra.mxu0 0.0
    %4133 = vmatprep.subr.mxu0 0.0
    %4134 = vmatpush1.msra.mxu0 0.0
    %4135 = vmatprep.subr.mxu0 0.0
    %4136 = vmatpush1.msra.mxu0 0.0
    %4137 = vmatprep.subr.mxu0 0.0
    %4138 = vmatpush1.msra.mxu0 0.0
    %4139 = vmatprep.subr.mxu0 0.0
    %4140 = vmatpush1.msra.mxu0 0.0
    %4141 = vmatprep.subr.mxu0 0.0
    %4142 = vmatpush1.msra.mxu0 0.0
    %4143 = vmatprep.subr.mxu0 0.0
    %4144 = vmatpush1.msra.mxu0 0.0
    %4145 = vmatprep.subr.mxu0 0.0
    %4146 = vmatpush1.msra.mxu0 0.0
    %4147 = vmatprep.subr.mxu0 0.0
    %4148 = vmatpush1.msra.mxu0 0.0
    %4149 = vmatprep.subr.mxu0 0.0
    %4150 = vmatpush1.msra.mxu0 0.0
    %4151 = vmatprep.subr.mxu0 0.0
    %4152 = vmatpush1.msra.mxu0 0.0
    %4153 = vmatprep.subr.mxu0 0.0
    %4154 = vmatpush1.msra.mxu0 0.0
    %4155 = vmatprep.subr.mxu0 0.0
    %4156 = vmatpush1.msra.mxu0 0.0
    %4157 = vmatprep.subr.mxu0 0.0
    %4158 = vmatpush1.msra.mxu0 0.0
    %4159 = vmatprep.subr.mxu0 0.0
    %4160 = vmatpush1.msra.mxu0 0.0
    %4161 = vmatprep.subr.mxu0 0.0
    %4162 = vmatpush1.msra.mxu0 0.0
    %4163 = vmatprep.subr.mxu0 0.0
    %4164 = vmatpush1.msra.mxu0 0.0
    %4165 = vmatprep.subr.mxu0 0.0
    %4166 = vmatpush1.msra.mxu0 0.0
    %4167 = vmatprep.subr.mxu0 0.0
    %4168 = vmatpush1.msra.mxu0 0.0
    %4169 = vmatprep.subr.mxu0 0.0
    %4170 = vmatpush1.msra.mxu0 0.0
    %4171 = vmatprep.subr.mxu0 0.0
    %4172 = vmatpush1.msra.mxu0 0.0
    %4173 = vmatprep.subr.mxu0 0.0
    %4174 = vmatpush1.msra.mxu0 0.0
    %4175 = vmatprep.mubr.f32.mxu0 0.0
    %4176 = vmatmul.mubr.f32.gmra.mrb[0].mxu0 %v4016
    %v4177 = vpop.f32.mrb[0].mxu0
    %v4178 = vadd.f32 0.0, %v4177
    %v4179 = vpop.f32.mrb[0].mxu0
    %4180 = vmatprep.mubr.f32.mxu0 0.0
    %4181 = vmatmul.mubr.f32.gmra.mrb[0].mxu0 %v4019
    %v4182 = vpop.f32.mrb[0].mxu0
    %v4183 = vadd.f32 0.0, %v4182
    %v4184 = vpop.f32.mrb[0].mxu0
    %4185 = vmatprep.mubr.f32.mxu0 0.0
    %4186 = vmatmul.mubr.f32.gmra.mrb[0].mxu0 %v4022
    %v4187 = vpop.f32.mrb[0].mxu0
    %v4188 = vadd.f32 0.0, %v4187
    %v4189 = vpop.f32.mrb[0].mxu0
    %4190 = vmatprep.mubr.f32.mxu0 0.0
    %4191 = vmatmul.mubr.f32.gmra.mrb[0].mxu0 %v4025
    %v4192 = vpop.f32.mrb[0].mxu0
    %v4193 = vadd.f32 0.0, %v4192
    %v4194 = vpop.f32.mrb[0].mxu0
    %4195 = vmatprep.mubr.f32.mxu0 0.0
    %4196 = vmatmul.mubr.f32.gmra.mrb[0].mxu0 %v4028
    %v4197 = vpop.f32.mrb[0].mxu0
    %v4198 = vadd.f32 0.0, %v4197
    %v4199 = vpop.f32.mrb[0].mxu0
    %4200 = vmatprep.mubr.f32.mxu0 0.0
    %4201 = vmatmul.mubr.f32.gmra.mrb[0].mxu0 %v4031
    %v4202 = vpop.f32.mrb[0].mxu0
    %v4203 = vadd.f32 0.0, %v4202
    %v4204 = vpop.f32.mrb[0].mxu0
    %4205 = vmatprep.mubr.f32.mxu0 0.0
    %4206 = vmatmul.mubr.f32.gmra.mrb[0].mxu0 %v4034
    %v4207 = vpop.f32.mrb[0].mxu0
    %v4208 = vadd.f32 0.0, %v4207
    %v4209 = vpop.f32.mrb[0].mxu0
    %4210 = vmatprep.mubr.f32.mxu0 0.0
    %4211 = vmatmul.mubr.f32.gmra.mrb[0].mxu0 %v4037
    %v4212 = vpop.f32.mrb[0].mxu0
    %v4213 = vadd.f32 0.0, %v4212
    %v4214 = vpop.f32.mrb[0].mxu0
    %4215 = vmatprep.mubr.f32.mxu0 0.0
    %4216 = vmatmul.mubr.f32.gmra.mrb[0].mxu0 %v4040
    %v4217 = vpop.f32.mrb[0].mxu0
    %v4218 = vadd.f32 0.0, %v4217
    %v4219 = vpop.f32.mrb[0].mxu0
    %4220 = vmatprep.mubr.f32.mxu0 0.0
    %4221 = vmatmul.mubr.f32.gmra.mrb[0].mxu0 %v4043
    %v4222 = vpop.f32.mrb[0].mxu0
    %v4223 = vadd.f32 0.0, %v4222
    %v4224 = vpop.f32.mrb[0].mxu0
    %4225 = vmatprep.mubr.f32.mxu0 0.0
    %4226 = vmatmul.mubr.f32.gmra.mrb[0].mxu0 %v4046
    %v4227 = vpop.f32.mrb[0].mxu0
    %v4228 = vadd.f32 0.0, %v4227
    %v4229 = vpop.f32.mrb[0].mxu0
    %4230 = vmatprep.mubr.f32.mxu0 0.0
    %4231 = vmatmul.mubr.f32.gmra.mrb[0].mxu0 %v4049
    %v4232 = vpop.f32.mrb[0].mxu0
    %v4233 = vadd.f32 0.0, %v4232
    %v4234 = vpop.f32.mrb[0].mxu0
    %4235 = vmatprep.mubr.f32.mxu0 0.0
    %4236 = vmatmul.mubr.f32.gmra.mrb[0].mxu0 %v4052
    %v4237 = vpop.f32.mrb[0].mxu0
    %v4238 = vadd.f32 0.0, %v4237
    %v4239 = vpop.f32.mrb[0].mxu0
    %4240 = vmatprep.mubr.f32.mxu0 0.0
    %4241 = vmatmul.mubr.f32.gmra.mrb[0].mxu0 %v4055
    %v4242 = vpop.f32.mrb[0].mxu0
    %v4243 = vadd.f32 0.0, %v4242
    %v4244 = vpop.f32.mrb[0].mxu0
    %4245 = vmatprep.mubr.f32.mxu0 0.0
    %4246 = vmatmul.mubr.f32.gmra.mrb[0].mxu0 %v4058
    %v4247 = vpop.f32.mrb[0].mxu0
    %v4248 = vadd.f32 0.0, %v4247
    %v4249 = vpop.f32.mrb[0].mxu0
    %4250 = vmatprep.mubr.f32.mxu0 0.0
    %4251 = vmatmul.mubr.f32.gmra.mrb[0].mxu0 %v4061
    %v4252 = vpop.f32.mrb[0].mxu0
    %v4253 = vadd.f32 0.0, %v4252
    %v4254 = vpop.f32.mrb[0].mxu0
    %4255 = vmatprep.mubr.f32.mxu0 0.0
    %4256 = vmatmul.mubr.f32.gmra.mrb[0].mxu0 %v4064
    %v4257 = vpop.f32.mrb[0].mxu0
    %v4258 = vadd.f32 0.0, %v4257
    %v4259 = vpop.f32.mrb[0].mxu0
    %4260 = vmatprep.mubr.f32.mxu0 0.0
    %4261 = vmatmul.mubr.f32.gmra.mrb[0].mxu0 %v4067
    %v4262 = vpop.f32.mrb[0].mxu0
    %v4263 = vadd.f32 0.0, %v4262
    %v4264 = vpop.f32.mrb[0].mxu0
    %4265 = vmatprep.mubr.f32.mxu0 0.0
    %4266 = vmatmul.mubr.f32.gmra.mrb[0].mxu0 %v4070
    %v4267 = vpop.f32.mrb[0].mxu0
    %v4268 = vadd.f32 0.0, %v4267
    %v4269 = vpop.f32.mrb[0].mxu0
    %4270 = vmatprep.mubr.f32.mxu0 0.0
    %4271 = vmatmul.mubr.f32.gmra.mrb[0].mxu0 %v4073
    %v4272 = vpop.f32.mrb[0].mxu0
    %v4273 = vadd.f32 0.0, %v4272
    %v4274 = vpop.f32.mrb[0].mxu0
    %4275 = vmatprep.mubr.f32.mxu0 0.0
    %4276 = vmatmul.mubr.f32.gmra.mrb[0].mxu0 %v4076
    %v4277 = vpop.f32.mrb[0].mxu0
    %v4278 = vadd.f32 0.0, %v4277
    %v4279 = vpop.f32.mrb[0].mxu0
    %4280 = vmatprep.mubr.f32.mxu0 0.0
    %4281 = vmatmul.mubr.f32.gmra.mrb[0].mxu0 %v4079
    %v4282 = vpop.f32.mrb[0].mxu0
    %v4283 = vadd.f32 0.0, %v4282
    %v4284 = vpop.f32.mrb[0].mxu0
    %4285 = vmatprep.mubr.f32.mxu0 0.0
    %4286 = vmatmul.mubr.f32.gmra.mrb[0].mxu0 %v4082
    %v4287 = vpop.f32.mrb[0].mxu0
    %v4288 = vadd.f32 0.0, %v4287
    %v4289 = vpop.f32.mrb[0].mxu0
    %4290 = vmatprep.mubr.f32.mxu0 0.0
    %4291 = vmatmul.mubr.f32.gmra.mrb[0].mxu0 %v4085
    %v4292 = vpop.f32.mrb[0].mxu0
    %v4293 = vadd.f32 0.0, %v4292
    %v4294 = vpop.f32.mrb[0].mxu0
    %4295 = vmatprep.mubr.f32.mxu0 0.0
    %4296 = vmatmul.mubr.f32.gmra.mrb[0].mxu0 %v4088
    %v4297 = vpop.f32.mrb[0].mxu0
    %v4298 = vadd.f32 0.0, %v4297
    %v4299 = vpop.f32.mrb[0].mxu0
    %4300 = vmatprep.mubr.f32.mxu0 0.0
    %4301 = vmatmul.mubr.f32.gmra.mrb[0].mxu0 %v4091
    %v4302 = vpop.f32.mrb[0].mxu0
    %v4303 = vadd.f32 0.0, %v4302
    %v4304 = vpop.f32.mrb[0].mxu0
    %4305 = vmatprep.mubr.f32.mxu0 0.0
    %4306 = vmatmul.mubr.f32.gmra.mrb[0].mxu0 %v4094
    %v4307 = vpop.f32.mrb[0].mxu0
    %v4308 = vadd.f32 0.0, %v4307
    %v4309 = vpop.f32.mrb[0].mxu0
    %4310 = vmatprep.mubr.f32.mxu0 0.0
    %4311 = vmatmul.mubr.f32.gmra.mrb[0].mxu0 %v4097
    %v4312 = vpop.f32.mrb[0].mxu0
    %v4313 = vadd.f32 0.0, %v4312
    %v4314 = vpop.f32.mrb[0].mxu0
    %4315 = vmatprep.mubr.f32.mxu0 0.0
    %4316 = vmatmul.mubr.f32.gmra.mrb[0].mxu0 %v4100
    %v4317 = vpop.f32.mrb[0].mxu0
    %v4318 = vadd.f32 0.0, %v4317
    %v4319 = vpop.f32.mrb[0].mxu0
    %4320 = vmatprep.mubr.f32.mxu0 0.0
    %4321 = vmatmul.mubr.f32.gmra.mrb[0].mxu0 %v4103
    %v4322 = vpop.f32.mrb[0].mxu0
    %v4323 = vadd.f32 0.0, %v4322
    %v4324 = vpop.f32.mrb[0].mxu0
    %4325 = vmatprep.mubr.f32.mxu0 0.0
    %4326 = vmatmul.mubr.f32.gmra.mrb[0].mxu0 %v4106
    %v4327 = vpop.f32.mrb[0].mxu0
    %v4328 = vadd.f32 0.0, %v4327
    %v4329 = vpop.f32.mrb[0].mxu0
    %4330 = vmatprep.mubr.f32.mxu0 0.0
    %4331 = vmatmul.mubr.f32.gmra.mrb[0].mxu0 %v4109
    %v4332 = vpop.f32.mrb[0].mxu0
    %v4333 = vadd.f32 0.0, %v4332
    %v4334 = vpop.f32.mrb[0].mxu0
    %4335 = vdwg.mxu0
    %v4336 = vadd.f32 %v3948, %v4178
    %v4337 = vadd.f32 %v3949, %v4183
    %v4338 = vadd.f32 %v3950, %v4188
    %v4339 = vadd.f32 %v3951, %v4193
    %v4340 = vadd.f32 %v3952, %v4198
    %v4341 = vadd.f32 %v3953, %v4203
    %v4342 = vadd.f32 %v3954, %v4208
    %v4343 = vadd.f32 %v3955, %v4213
    %v4344 = vadd.f32 %v3956, %v4218
    %v4345 = vadd.f32 %v3957, %v4223
    %v4346 = vadd.f32 %v3958, %v4228
    %v4347 = vadd.f32 %v3959, %v4233
    %v4348 = vadd.f32 %v3960, %v4238
    %v4349 = vadd.f32 %v3961, %v4243
    %v4350 = vadd.f32 %v3962, %v4248
    %v4351 = vadd.f32 %v3963, %v4253
    %v4352 = vadd.f32 %v3964, %v4258
    %v4353 = vadd.f32 %v3965, %v4263
    %v4354 = vadd.f32 %v3966, %v4268
    %v4355 = vadd.f32 %v3967, %v4273
    %v4356 = vadd.f32 %v3968, %v4278
    %v4357 = vadd.f32 %v3969, %v4283
    %v4358 = vadd.f32 %v3970, %v4288
    %v4359 = vadd.f32 %v3971, %v4293
    %v4360 = vadd.f32 %v3972, %v4298
    %v4361 = vadd.f32 %v3973, %v4303
    %v4362 = vadd.f32 %v3974, %v4308
    %v4363 = vadd.f32 %v3975, %v4313
    %v4364 = vadd.f32 %v3976, %v4318
    %v4365 = vadd.f32 %v3977, %v4323
    %v4366 = vadd.f32 %v3978, %v4328
    %v4367 = vadd.f32 %v3979, %v4333
    %s4368 = scalar_lea.vmem [#allocation2], 896
    %v4369 = vld [vmem:[%s4368] sm:$0xff]
    %v4370 = vld [vmem:[%s4368 + $0x8] sm:$0xff]
    %v4371 = vld [vmem:[%s4368 + $0x10] sm:$0xff]
    %v4372 = vld [vmem:[%s4368 + $0x18] sm:$0xff]
    %v4373 = vld [vmem:[%s4368 + $0x20] sm:$0xff]
    %v4374 = vld [vmem:[%s4368 + $0x28] sm:$0xff]
    %v4375 = vld [vmem:[%s4368 + $0x30] sm:$0xff]
    %v4376 = vld [vmem:[%s4368 + $0x38] sm:$0xff]
    %v4377 = vld [vmem:[%s4368 + $0x50] sm:$0xff]
    %v4378 = vld [vmem:[%s4368 + $0x58] sm:$0xff]
    %v4379 = vld [vmem:[%s4368 + $0x60] sm:$0xff]
    %v4380 = vld [vmem:[%s4368 + $0x68] sm:$0xff]
    %v4381 = vld [vmem:[%s4368 + $0x70] sm:$0xff]
    %v4382 = vld [vmem:[%s4368 + $0x78] sm:$0xff]
    %v4383 = vld [vmem:[%s4368 + $0x80] sm:$0xff]
    %v4384 = vld [vmem:[%s4368 + $0x88] sm:$0xff]
    %v4385 = vld [vmem:[%s4368 + $0xa0] sm:$0xff]
    %v4386 = vld [vmem:[%s4368 + $0xa8] sm:$0xff]
    %v4387 = vld [vmem:[%s4368 + $0xb0] sm:$0xff]
    %v4388 = vld [vmem:[%s4368 + $0xb8] sm:$0xff]
    %v4389 = vld [vmem:[%s4368 + $0xc0] sm:$0xff]
    %v4390 = vld [vmem:[%s4368 + $0xc8] sm:$0xff]
    %v4391 = vld [vmem:[%s4368 + $0xd0] sm:$0xff]
    %v4392 = vld [vmem:[%s4368 + $0xd8] sm:$0xff]
    %v4393 = vld [vmem:[%s4368 + $0xf0] sm:$0xff]
    %v4394 = vld [vmem:[%s4368 + $0xf8] sm:$0xff]
    %v4395 = vld [vmem:[%s4368 + $0x100] sm:$0xff]
    %v4396 = vld [vmem:[%s4368 + $0x108] sm:$0xff]
    %v4397 = vld [vmem:[%s4368 + $0x110] sm:$0xff]
    %v4398 = vld [vmem:[%s4368 + $0x118] sm:$0xff]
    %v4399 = vld [vmem:[%s4368 + $0x120] sm:$0xff]
    %v4400 = vld [vmem:[%s4368 + $0x128] sm:$0xff]
    %s4401 = scalar_lea.vmem %s3, 56
    %v4402 = vld [vmem:[%s4401] sm:$0xff]
    %v4404 = vsel %vm1388, %v4369, 0
    %v4407 = vsel %vm1388, %v4370, 0
    %v4410 = vsel %vm1388, %v4371, 0
    %v4413 = vsel %vm1388, %v4372, 0
    %v4416 = vsel %vm1388, %v4373, 0
    %v4419 = vsel %vm1388, %v4374, 0
    %v4422 = vsel %vm1388, %v4375, 0
    %v4425 = vsel %vm1388, %v4376, 0
    %v4428 = vsel %vm1388, %v4377, 0
    %v4431 = vsel %vm1388, %v4378, 0
    %v4434 = vsel %vm1388, %v4379, 0
    %v4437 = vsel %vm1388, %v4380, 0
    %v4440 = vsel %vm1388, %v4381, 0
    %v4443 = vsel %vm1388, %v4382, 0
    %v4446 = vsel %vm1388, %v4383, 0
    %v4449 = vsel %vm1388, %v4384, 0
    %v4452 = vsel %vm1388, %v4385, 0
    %v4455 = vsel %vm1388, %v4386, 0
    %v4458 = vsel %vm1388, %v4387, 0
    %v4461 = vsel %vm1388, %v4388, 0
    %v4464 = vsel %vm1388, %v4389, 0
    %v4467 = vsel %vm1388, %v4390, 0
    %v4470 = vsel %vm1388, %v4391, 0
    %v4473 = vsel %vm1388, %v4392, 0
    %v4476 = vsel %vm1388, %v4393, 0
    %v4479 = vsel %vm1388, %v4394, 0
    %v4482 = vsel %vm1388, %v4395, 0
    %v4485 = vsel %vm1388, %v4396, 0
    %v4488 = vsel %vm1388, %v4397, 0
    %v4491 = vsel %vm1388, %v4398, 0
    %v4494 = vsel %vm1388, %v4399, 0
    %v4497 = vsel %vm1388, %v4400, 0
    %4499 = vmatprep.subr.mxu0 0.0
    %4500 = vmatpush1.msra.mxu0 %v4402
    %4501 = vmatprep.subr.mxu0 0.0
    %4502 = vmatpush1.msra.mxu0 0.0
    %4503 = vmatprep.subr.mxu0 0.0
    %4504 = vmatpush1.msra.mxu0 0.0
    %4505 = vmatprep.subr.mxu0 0.0
    %4506 = vmatpush1.msra.mxu0 0.0
    %4507 = vmatprep.subr.mxu0 0.0
    %4508 = vmatpush1.msra.mxu0 0.0
    %4509 = vmatprep.subr.mxu0 0.0
    %4510 = vmatpush1.msra.mxu0 0.0
    %4511 = vmatprep.subr.mxu0 0.0
    %4512 = vmatpush1.msra.mxu0 0.0
    %4513 = vmatprep.subr.mxu0 0.0
    %4514 = vmatpush1.msra.mxu0 0.0
    %4515 = vmatprep.subr.mxu0 0.0
    %4516 = vmatpush1.msra.mxu0 0.0
    %4517 = vmatprep.subr.mxu0 0.0
    %4518 = vmatpush1.msra.mxu0 0.0
    %4519 = vmatprep.subr.mxu0 0.0
    %4520 = vmatpush1.msra.mxu0 0.0
    %4521 = vmatprep.subr.mxu0 0.0
    %4522 = vmatpush1.msra.mxu0 0.0
    %4523 = vmatprep.subr.mxu0 0.0
    %4524 = vmatpush1.msra.mxu0 0.0
    %4525 = vmatprep.subr.mxu0 0.0
    %4526 = vmatpush1.msra.mxu0 0.0
    %4527 = vmatprep.subr.mxu0 0.0
    %4528 = vmatpush1.msra.mxu0 0.0
    %4529 = vmatprep.subr.mxu0 0.0
    %4530 = vmatpush1.msra.mxu0 0.0
    %4531 = vmatprep.subr.mxu0 0.0
    %4532 = vmatpush1.msra.mxu0 0.0
    %4533 = vmatprep.subr.mxu0 0.0
    %4534 = vmatpush1.msra.mxu0 0.0
    %4535 = vmatprep.subr.mxu0 0.0
    %4536 = vmatpush1.msra.mxu0 0.0
    %4537 = vmatprep.subr.mxu0 0.0
    %4538 = vmatpush1.msra.mxu0 0.0
    %4539 = vmatprep.subr.mxu0 0.0
    %4540 = vmatpush1.msra.mxu0 0.0
    %4541 = vmatprep.subr.mxu0 0.0
    %4542 = vmatpush1.msra.mxu0 0.0
    %4543 = vmatprep.subr.mxu0 0.0
    %4544 = vmatpush1.msra.mxu0 0.0
    %4545 = vmatprep.subr.mxu0 0.0
    %4546 = vmatpush1.msra.mxu0 0.0
    %4547 = vmatprep.subr.mxu0 0.0
    %4548 = vmatpush1.msra.mxu0 0.0
    %4549 = vmatprep.subr.mxu0 0.0
    %4550 = vmatpush1.msra.mxu0 0.0
    %4551 = vmatprep.subr.mxu0 0.0
    %4552 = vmatpush1.msra.mxu0 0.0
    %4553 = vmatprep.subr.mxu0 0.0
    %4554 = vmatpush1.msra.mxu0 0.0
    %4555 = vmatprep.subr.mxu0 0.0
    %4556 = vmatpush1.msra.mxu0 0.0
    %4557 = vmatprep.subr.mxu0 0.0
    %4558 = vmatpush1.msra.mxu0 0.0
    %4559 = vmatprep.subr.mxu0 0.0
    %4560 = vmatpush1.msra.mxu0 0.0
    %4561 = vmatprep.subr.mxu0 0.0
    %4562 = vmatpush1.msra.mxu0 0.0
    %4563 = vmatprep.mubr.f32.mxu0 0.0
    %4564 = vmatmul.mubr.f32.gmra.mrb[0].mxu0 %v4404
    %v4565 = vpop.f32.mrb[0].mxu0
    %v4566 = vadd.f32 0.0, %v4565
    %v4567 = vpop.f32.mrb[0].mxu0
    %4568 = vmatprep.mubr.f32.mxu0 0.0
    %4569 = vmatmul.mubr.f32.gmra.mrb[0].mxu0 %v4407
    %v4570 = vpop.f32.mrb[0].mxu0
    %v4571 = vadd.f32 0.0, %v4570
    %v4572 = vpop.f32.mrb[0].mxu0
    %4573 = vmatprep.mubr.f32.mxu0 0.0
    %4574 = vmatmul.mubr.f32.gmra.mrb[0].mxu0 %v4410
    %v4575 = vpop.f32.mrb[0].mxu0
    %v4576 = vadd.f32 0.0, %v4575
    %v4577 = vpop.f32.mrb[0].mxu0
    %4578 = vmatprep.mubr.f32.mxu0 0.0
    %4579 = vmatmul.mubr.f32.gmra.mrb[0].mxu0 %v4413
    %v4580 = vpop.f32.mrb[0].mxu0
    %v4581 = vadd.f32 0.0, %v4580
    %v4582 = vpop.f32.mrb[0].mxu0
    %4583 = vmatprep.mubr.f32.mxu0 0.0
    %4584 = vmatmul.mubr.f32.gmra.mrb[0].mxu0 %v4416
    %v4585 = vpop.f32.mrb[0].mxu0
    %v4586 = vadd.f32 0.0, %v4585
    %v4587 = vpop.f32.mrb[0].mxu0
    %4588 = vmatprep.mubr.f32.mxu0 0.0
    %4589 = vmatmul.mubr.f32.gmra.mrb[0].mxu0 %v4419
    %v4590 = vpop.f32.mrb[0].mxu0
    %v4591 = vadd.f32 0.0, %v4590
    %v4592 = vpop.f32.mrb[0].mxu0
    %4593 = vmatprep.mubr.f32.mxu0 0.0
    %4594 = vmatmul.mubr.f32.gmra.mrb[0].mxu0 %v4422
    %v4595 = vpop.f32.mrb[0].mxu0
    %v4596 = vadd.f32 0.0, %v4595
    %v4597 = vpop.f32.mrb[0].mxu0
    %4598 = vmatprep.mubr.f32.mxu0 0.0
    %4599 = vmatmul.mubr.f32.gmra.mrb[0].mxu0 %v4425
    %v4600 = vpop.f32.mrb[0].mxu0
    %v4601 = vadd.f32 0.0, %v4600
    %v4602 = vpop.f32.mrb[0].mxu0
    %4603 = vmatprep.mubr.f32.mxu0 0.0
    %4604 = vmatmul.mubr.f32.gmra.mrb[0].mxu0 %v4428
    %v4605 = vpop.f32.mrb[0].mxu0
    %v4606 = vadd.f32 0.0, %v4605
    %v4607 = vpop.f32.mrb[0].mxu0
    %4608 = vmatprep.mubr.f32.mxu0 0.0
    %4609 = vmatmul.mubr.f32.gmra.mrb[0].mxu0 %v4431
    %v4610 = vpop.f32.mrb[0].mxu0
    %v4611 = vadd.f32 0.0, %v4610
    %v4612 = vpop.f32.mrb[0].mxu0
    %4613 = vmatprep.mubr.f32.mxu0 0.0
    %4614 = vmatmul.mubr.f32.gmra.mrb[0].mxu0 %v4434
    %v4615 = vpop.f32.mrb[0].mxu0
    %v4616 = vadd.f32 0.0, %v4615
    %v4617 = vpop.f32.mrb[0].mxu0
    %4618 = vmatprep.mubr.f32.mxu0 0.0
    %4619 = vmatmul.mubr.f32.gmra.mrb[0].mxu0 %v4437
    %v4620 = vpop.f32.mrb[0].mxu0
    %v4621 = vadd.f32 0.0, %v4620
    %v4622 = vpop.f32.mrb[0].mxu0
    %4623 = vmatprep.mubr.f32.mxu0 0.0
    %4624 = vmatmul.mubr.f32.gmra.mrb[0].mxu0 %v4440
    %v4625 = vpop.f32.mrb[0].mxu0
    %v4626 = vadd.f32 0.0, %v4625
    %v4627 = vpop.f32.mrb[0].mxu0
    %4628 = vmatprep.mubr.f32.mxu0 0.0
    %4629 = vmatmul.mubr.f32.gmra.mrb[0].mxu0 %v4443
    %v4630 = vpop.f32.mrb[0].mxu0
    %v4631 = vadd.f32 0.0, %v4630
    %v4632 = vpop.f32.mrb[0].mxu0
    %4633 = vmatprep.mubr.f32.mxu0 0.0
    %4634 = vmatmul.mubr.f32.gmra.mrb[0].mxu0 %v4446
    %v4635 = vpop.f32.mrb[0].mxu0
    %v4636 = vadd.f32 0.0, %v4635
    %v4637 = vpop.f32.mrb[0].mxu0
    %4638 = vmatprep.mubr.f32.mxu0 0.0
    %4639 = vmatmul.mubr.f32.gmra.mrb[0].mxu0 %v4449
    %v4640 = vpop.f32.mrb[0].mxu0
    %v4641 = vadd.f32 0.0, %v4640
    %v4642 = vpop.f32.mrb[0].mxu0
    %4643 = vmatprep.mubr.f32.mxu0 0.0
    %4644 = vmatmul.mubr.f32.gmra.mrb[0].mxu0 %v4452
    %v4645 = vpop.f32.mrb[0].mxu0
    %v4646 = vadd.f32 0.0, %v4645
    %v4647 = vpop.f32.mrb[0].mxu0
    %4648 = vmatprep.mubr.f32.mxu0 0.0
    %4649 = vmatmul.mubr.f32.gmra.mrb[0].mxu0 %v4455
    %v4650 = vpop.f32.mrb[0].mxu0
    %v4651 = vadd.f32 0.0, %v4650
    %v4652 = vpop.f32.mrb[0].mxu0
    %4653 = vmatprep.mubr.f32.mxu0 0.0
    %4654 = vmatmul.mubr.f32.gmra.mrb[0].mxu0 %v4458
    %v4655 = vpop.f32.mrb[0].mxu0
    %v4656 = vadd.f32 0.0, %v4655
    %v4657 = vpop.f32.mrb[0].mxu0
    %4658 = vmatprep.mubr.f32.mxu0 0.0
    %4659 = vmatmul.mubr.f32.gmra.mrb[0].mxu0 %v4461
    %v4660 = vpop.f32.mrb[0].mxu0
    %v4661 = vadd.f32 0.0, %v4660
    %v4662 = vpop.f32.mrb[0].mxu0
    %4663 = vmatprep.mubr.f32.mxu0 0.0
    %4664 = vmatmul.mubr.f32.gmra.mrb[0].mxu0 %v4464
    %v4665 = vpop.f32.mrb[0].mxu0
    %v4666 = vadd.f32 0.0, %v4665
    %v4667 = vpop.f32.mrb[0].mxu0
    %4668 = vmatprep.mubr.f32.mxu0 0.0
    %4669 = vmatmul.mubr.f32.gmra.mrb[0].mxu0 %v4467
    %v4670 = vpop.f32.mrb[0].mxu0
    %v4671 = vadd.f32 0.0, %v4670
    %v4672 = vpop.f32.mrb[0].mxu0
    %4673 = vmatprep.mubr.f32.mxu0 0.0
    %4674 = vmatmul.mubr.f32.gmra.mrb[0].mxu0 %v4470
    %v4675 = vpop.f32.mrb[0].mxu0
    %v4676 = vadd.f32 0.0, %v4675
    %v4677 = vpop.f32.mrb[0].mxu0
    %4678 = vmatprep.mubr.f32.mxu0 0.0
    %4679 = vmatmul.mubr.f32.gmra.mrb[0].mxu0 %v4473
    %v4680 = vpop.f32.mrb[0].mxu0
    %v4681 = vadd.f32 0.0, %v4680
    %v4682 = vpop.f32.mrb[0].mxu0
    %4683 = vmatprep.mubr.f32.mxu0 0.0
    %4684 = vmatmul.mubr.f32.gmra.mrb[0].mxu0 %v4476
    %v4685 = vpop.f32.mrb[0].mxu0
    %v4686 = vadd.f32 0.0, %v4685
    %v4687 = vpop.f32.mrb[0].mxu0
    %4688 = vmatprep.mubr.f32.mxu0 0.0
    %4689 = vmatmul.mubr.f32.gmra.mrb[0].mxu0 %v4479
    %v4690 = vpop.f32.mrb[0].mxu0
    %v4691 = vadd.f32 0.0, %v4690
    %v4692 = vpop.f32.mrb[0].mxu0
    %4693 = vmatprep.mubr.f32.mxu0 0.0
    %4694 = vmatmul.mubr.f32.gmra.mrb[0].mxu0 %v4482
    %v4695 = vpop.f32.mrb[0].mxu0
    %v4696 = vadd.f32 0.0, %v4695
    %v4697 = vpop.f32.mrb[0].mxu0
    %4698 = vmatprep.mubr.f32.mxu0 0.0
    %4699 = vmatmul.mubr.f32.gmra.mrb[0].mxu0 %v4485
    %v4700 = vpop.f32.mrb[0].mxu0
    %v4701 = vadd.f32 0.0, %v4700
    %v4702 = vpop.f32.mrb[0].mxu0
    %4703 = vmatprep.mubr.f32.mxu0 0.0
    %4704 = vmatmul.mubr.f32.gmra.mrb[0].mxu0 %v4488
    %v4705 = vpop.f32.mrb[0].mxu0
    %v4706 = vadd.f32 0.0, %v4705
    %v4707 = vpop.f32.mrb[0].mxu0
    %4708 = vmatprep.mubr.f32.mxu0 0.0
    %4709 = vmatmul.mubr.f32.gmra.mrb[0].mxu0 %v4491
    %v4710 = vpop.f32.mrb[0].mxu0
    %v4711 = vadd.f32 0.0, %v4710
    %v4712 = vpop.f32.mrb[0].mxu0
    %4713 = vmatprep.mubr.f32.mxu0 0.0
    %4714 = vmatmul.mubr.f32.gmra.mrb[0].mxu0 %v4494
    %v4715 = vpop.f32.mrb[0].mxu0
    %v4716 = vadd.f32 0.0, %v4715
    %v4717 = vpop.f32.mrb[0].mxu0
    %4718 = vmatprep.mubr.f32.mxu0 0.0
    %4719 = vmatmul.mubr.f32.gmra.mrb[0].mxu0 %v4497
    %v4720 = vpop.f32.mrb[0].mxu0
    %v4721 = vadd.f32 0.0, %v4720
    %v4722 = vpop.f32.mrb[0].mxu0
    %4723 = vdwg.mxu0
    %v4724 = vadd.f32 %v4336, %v4566
    %v4725 = vadd.f32 %v4337, %v4571
    %v4726 = vadd.f32 %v4338, %v4576
    %v4727 = vadd.f32 %v4339, %v4581
    %v4728 = vadd.f32 %v4340, %v4586
    %v4729 = vadd.f32 %v4341, %v4591
    %v4730 = vadd.f32 %v4342, %v4596
    %v4731 = vadd.f32 %v4343, %v4601
    %v4732 = vadd.f32 %v4344, %v4606
    %v4733 = vadd.f32 %v4345, %v4611
    %v4734 = vadd.f32 %v4346, %v4616
    %v4735 = vadd.f32 %v4347, %v4621
    %v4736 = vadd.f32 %v4348, %v4626
    %v4737 = vadd.f32 %v4349, %v4631
    %v4738 = vadd.f32 %v4350, %v4636
    %v4739 = vadd.f32 %v4351, %v4641
    %v4740 = vadd.f32 %v4352, %v4646
    %v4741 = vadd.f32 %v4353, %v4651
    %v4742 = vadd.f32 %v4354, %v4656
    %v4743 = vadd.f32 %v4355, %v4661
    %v4744 = vadd.f32 %v4356, %v4666
    %v4745 = vadd.f32 %v4357, %v4671
    %v4746 = vadd.f32 %v4358, %v4676
    %v4747 = vadd.f32 %v4359, %v4681
    %v4748 = vadd.f32 %v4360, %v4686
    %v4749 = vadd.f32 %v4361, %v4691
    %v4750 = vadd.f32 %v4362, %v4696
    %v4751 = vadd.f32 %v4363, %v4701
    %v4752 = vadd.f32 %v4364, %v4706
    %v4753 = vadd.f32 %v4365, %v4711
    %v4754 = vadd.f32 %v4366, %v4716
    %v4755 = vadd.f32 %v4367, %v4721
    %s4756 = scalar_lea.vmem [#allocation2], 1296
    %v4757 = vld [vmem:[%s4756] sm:$0xff]
    %v4758 = vld [vmem:[%s4756 + $0x8] sm:$0xff]
    %v4759 = vld [vmem:[%s4756 + $0x10] sm:$0xff]
    %v4760 = vld [vmem:[%s4756 + $0x18] sm:$0xff]
    %v4761 = vld [vmem:[%s4756 + $0x20] sm:$0xff]
    %v4762 = vld [vmem:[%s4756 + $0x28] sm:$0xff]
    %v4763 = vld [vmem:[%s4756 + $0x30] sm:$0xff]
    %v4764 = vld [vmem:[%s4756 + $0x38] sm:$0xff]
    %v4765 = vld [vmem:[%s4756 + $0x50] sm:$0xff]
    %v4766 = vld [vmem:[%s4756 + $0x58] sm:$0xff]
    %v4767 = vld [vmem:[%s4756 + $0x60] sm:$0xff]
    %v4768 = vld [vmem:[%s4756 + $0x68] sm:$0xff]
    %v4769 = vld [vmem:[%s4756 + $0x70] sm:$0xff]
    %v4770 = vld [vmem:[%s4756 + $0x78] sm:$0xff]
    %v4771 = vld [vmem:[%s4756 + $0x80] sm:$0xff]
    %v4772 = vld [vmem:[%s4756 + $0x88] sm:$0xff]
    %v4773 = vld [vmem:[%s4756 + $0xa0] sm:$0xff]
    %v4774 = vld [vmem:[%s4756 + $0xa8] sm:$0xff]
    %v4775 = vld [vmem:[%s4756 + $0xb0] sm:$0xff]
    %v4776 = vld [vmem:[%s4756 + $0xb8] sm:$0xff]
    %v4777 = vld [vmem:[%s4756 + $0xc0] sm:$0xff]
    %v4778 = vld [vmem:[%s4756 + $0xc8] sm:$0xff]
    %v4779 = vld [vmem:[%s4756 + $0xd0] sm:$0xff]
    %v4780 = vld [vmem:[%s4756 + $0xd8] sm:$0xff]
    %v4781 = vld [vmem:[%s4756 + $0xf0] sm:$0xff]
    %v4782 = vld [vmem:[%s4756 + $0xf8] sm:$0xff]
    %v4783 = vld [vmem:[%s4756 + $0x100] sm:$0xff]
    %v4784 = vld [vmem:[%s4756 + $0x108] sm:$0xff]
    %v4785 = vld [vmem:[%s4756 + $0x110] sm:$0xff]
    %v4786 = vld [vmem:[%s4756 + $0x118] sm:$0xff]
    %v4787 = vld [vmem:[%s4756 + $0x120] sm:$0xff]
    %v4788 = vld [vmem:[%s4756 + $0x128] sm:$0xff]
    %s4789 = scalar_lea.vmem %s3, 64
    %v4790 = vld [vmem:[%s4789] sm:$0xff]
    %v4792 = vsel %vm1388, %v4757, 0
    %v4795 = vsel %vm1388, %v4758, 0
    %v4798 = vsel %vm1388, %v4759, 0
    %v4801 = vsel %vm1388, %v4760, 0
    %v4804 = vsel %vm1388, %v4761, 0
    %v4807 = vsel %vm1388, %v4762, 0
    %v4810 = vsel %vm1388, %v4763, 0
    %v4813 = vsel %vm1388, %v4764, 0
    %v4816 = vsel %vm1388, %v4765, 0
    %v4819 = vsel %vm1388, %v4766, 0
    %v4822 = vsel %vm1388, %v4767, 0
    %v4825 = vsel %vm1388, %v4768, 0
    %v4828 = vsel %vm1388, %v4769, 0
    %v4831 = vsel %vm1388, %v4770, 0
    %v4834 = vsel %vm1388, %v4771, 0
    %v4837 = vsel %vm1388, %v4772, 0
    %v4840 = vsel %vm1388, %v4773, 0
    %v4843 = vsel %vm1388, %v4774, 0
    %v4846 = vsel %vm1388, %v4775, 0
    %v4849 = vsel %vm1388, %v4776, 0
    %v4852 = vsel %vm1388, %v4777, 0
    %v4855 = vsel %vm1388, %v4778, 0
    %v4858 = vsel %vm1388, %v4779, 0
    %v4861 = vsel %vm1388, %v4780, 0
    %v4864 = vsel %vm1388, %v4781, 0
    %v4867 = vsel %vm1388, %v4782, 0
    %v4870 = vsel %vm1388, %v4783, 0
    %v4873 = vsel %vm1388, %v4784, 0
    %v4876 = vsel %vm1388, %v4785, 0
    %v4879 = vsel %vm1388, %v4786, 0
    %v4882 = vsel %vm1388, %v4787, 0
    %v4885 = vsel %vm1388, %v4788, 0
    %4887 = vmatprep.subr.mxu0 0.0
    %4888 = vmatpush1.msra.mxu0 %v4790
    %4889 = vmatprep.subr.mxu0 0.0
    %4890 = vmatpush1.msra.mxu0 0.0
    %4891 = vmatprep.subr.mxu0 0.0
    %4892 = vmatpush1.msra.mxu0 0.0
    %4893 = vmatprep.subr.mxu0 0.0
    %4894 = vmatpush1.msra.mxu0 0.0
    %4895 = vmatprep.subr.mxu0 0.0
    %4896 = vmatpush1.msra.mxu0 0.0
    %4897 = vmatprep.subr.mxu0 0.0
    %4898 = vmatpush1.msra.mxu0 0.0
    %4899 = vmatprep.subr.mxu0 0.0
    %4900 = vmatpush1.msra.mxu0 0.0
    %4901 = vmatprep.subr.mxu0 0.0
    %4902 = vmatpush1.msra.mxu0 0.0
    %4903 = vmatprep.subr.mxu0 0.0
    %4904 = vmatpush1.msra.mxu0 0.0
    %4905 = vmatprep.subr.mxu0 0.0
    %4906 = vmatpush1.msra.mxu0 0.0
    %4907 = vmatprep.subr.mxu0 0.0
    %4908 = vmatpush1.msra.mxu0 0.0
    %4909 = vmatprep.subr.mxu0 0.0
    %4910 = vmatpush1.msra.mxu0 0.0
    %4911 = vmatprep.subr.mxu0 0.0
    %4912 = vmatpush1.msra.mxu0 0.0
    %4913 = vmatprep.subr.mxu0 0.0
    %4914 = vmatpush1.msra.mxu0 0.0
    %4915 = vmatprep.subr.mxu0 0.0
    %4916 = vmatpush1.msra.mxu0 0.0
    %4917 = vmatprep.subr.mxu0 0.0
    %4918 = vmatpush1.msra.mxu0 0.0
    %4919 = vmatprep.subr.mxu0 0.0
    %4920 = vmatpush1.msra.mxu0 0.0
    %4921 = vmatprep.subr.mxu0 0.0
    %4922 = vmatpush1.msra.mxu0 0.0
    %4923 = vmatprep.subr.mxu0 0.0
    %4924 = vmatpush1.msra.mxu0 0.0
    %4925 = vmatprep.subr.mxu0 0.0
    %4926 = vmatpush1.msra.mxu0 0.0
    %4927 = vmatprep.subr.mxu0 0.0
    %4928 = vmatpush1.msra.mxu0 0.0
    %4929 = vmatprep.subr.mxu0 0.0
    %4930 = vmatpush1.msra.mxu0 0.0
    %4931 = vmatprep.subr.mxu0 0.0
    %4932 = vmatpush1.msra.mxu0 0.0
    %4933 = vmatprep.subr.mxu0 0.0
    %4934 = vmatpush1.msra.mxu0 0.0
    %4935 = vmatprep.subr.mxu0 0.0
    %4936 = vmatpush1.msra.mxu0 0.0
    %4937 = vmatprep.subr.mxu0 0.0
    %4938 = vmatpush1.msra.mxu0 0.0
    %4939 = vmatprep.subr.mxu0 0.0
    %4940 = vmatpush1.msra.mxu0 0.0
    %4941 = vmatprep.subr.mxu0 0.0
    %4942 = vmatpush1.msra.mxu0 0.0
    %4943 = vmatprep.subr.mxu0 0.0
    %4944 = vmatpush1.msra.mxu0 0.0
    %4945 = vmatprep.subr.mxu0 0.0
    %4946 = vmatpush1.msra.mxu0 0.0
    %4947 = vmatprep.subr.mxu0 0.0
    %4948 = vmatpush1.msra.mxu0 0.0
    %4949 = vmatprep.subr.mxu0 0.0
    %4950 = vmatpush1.msra.mxu0 0.0
    %4951 = vmatprep.mubr.f32.mxu0 0.0
    %4952 = vmatmul.mubr.f32.gmra.mrb[0].mxu0 %v4792
    %v4953 = vpop.f32.mrb[0].mxu0
    %v4954 = vadd.f32 0.0, %v4953
    %v4955 = vpop.f32.mrb[0].mxu0
    %4956 = vmatprep.mubr.f32.mxu0 0.0
    %4957 = vmatmul.mubr.f32.gmra.mrb[0].mxu0 %v4795
    %v4958 = vpop.f32.mrb[0].mxu0
    %v4959 = vadd.f32 0.0, %v4958
    %v4960 = vpop.f32.mrb[0].mxu0
    %4961 = vmatprep.mubr.f32.mxu0 0.0
    %4962 = vmatmul.mubr.f32.gmra.mrb[0].mxu0 %v4798
    %v4963 = vpop.f32.mrb[0].mxu0
    %v4964 = vadd.f32 0.0, %v4963
    %v4965 = vpop.f32.mrb[0].mxu0
    %4966 = vmatprep.mubr.f32.mxu0 0.0
    %4967 = vmatmul.mubr.f32.gmra.mrb[0].mxu0 %v4801
    %v4968 = vpop.f32.mrb[0].mxu0
    %v4969 = vadd.f32 0.0, %v4968
    %v4970 = vpop.f32.mrb[0].mxu0
    %4971 = vmatprep.mubr.f32.mxu0 0.0
    %4972 = vmatmul.mubr.f32.gmra.mrb[0].mxu0 %v4804
    %v4973 = vpop.f32.mrb[0].mxu0
    %v4974 = vadd.f32 0.0, %v4973
    %v4975 = vpop.f32.mrb[0].mxu0
    %4976 = vmatprep.mubr.f32.mxu0 0.0
    %4977 = vmatmul.mubr.f32.gmra.mrb[0].mxu0 %v4807
    %v4978 = vpop.f32.mrb[0].mxu0
    %v4979 = vadd.f32 0.0, %v4978
    %v4980 = vpop.f32.mrb[0].mxu0
    %4981 = vmatprep.mubr.f32.mxu0 0.0
    %4982 = vmatmul.mubr.f32.gmra.mrb[0].mxu0 %v4810
    %v4983 = vpop.f32.mrb[0].mxu0
    %v4984 = vadd.f32 0.0, %v4983
    %v4985 = vpop.f32.mrb[0].mxu0
    %4986 = vmatprep.mubr.f32.mxu0 0.0
    %4987 = vmatmul.mubr.f32.gmra.mrb[0].mxu0 %v4813
    %v4988 = vpop.f32.mrb[0].mxu0
    %v4989 = vadd.f32 0.0, %v4988
    %v4990 = vpop.f32.mrb[0].mxu0
    %4991 = vmatprep.mubr.f32.mxu0 0.0
    %4992 = vmatmul.mubr.f32.gmra.mrb[0].mxu0 %v4816
    %v4993 = vpop.f32.mrb[0].mxu0
    %v4994 = vadd.f32 0.0, %v4993
    %v4995 = vpop.f32.mrb[0].mxu0
    %4996 = vmatprep.mubr.f32.mxu0 0.0
    %4997 = vmatmul.mubr.f32.gmra.mrb[0].mxu0 %v4819
    %v4998 = vpop.f32.mrb[0].mxu0
    %v4999 = vadd.f32 0.0, %v4998
    %v5000 = vpop.f32.mrb[0].mxu0
    %5001 = vmatprep.mubr.f32.mxu0 0.0
    %5002 = vmatmul.mubr.f32.gmra.mrb[0].mxu0 %v4822
    %v5003 = vpop.f32.mrb[0].mxu0
    %v5004 = vadd.f32 0.0, %v5003
    %v5005 = vpop.f32.mrb[0].mxu0
    %5006 = vmatprep.mubr.f32.mxu0 0.0
    %5007 = vmatmul.mubr.f32.gmra.mrb[0].mxu0 %v4825
    %v5008 = vpop.f32.mrb[0].mxu0
    %v5009 = vadd.f32 0.0, %v5008
    %v5010 = vpop.f32.mrb[0].mxu0
    %5011 = vmatprep.mubr.f32.mxu0 0.0
    %5012 = vmatmul.mubr.f32.gmra.mrb[0].mxu0 %v4828
    %v5013 = vpop.f32.mrb[0].mxu0
    %v5014 = vadd.f32 0.0, %v5013
    %v5015 = vpop.f32.mrb[0].mxu0
    %5016 = vmatprep.mubr.f32.mxu0 0.0
    %5017 = vmatmul.mubr.f32.gmra.mrb[0].mxu0 %v4831
    %v5018 = vpop.f32.mrb[0].mxu0
    %v5019 = vadd.f32 0.0, %v5018
    %v5020 = vpop.f32.mrb[0].mxu0
    %5021 = vmatprep.mubr.f32.mxu0 0.0
    %5022 = vmatmul.mubr.f32.gmra.mrb[0].mxu0 %v4834
    %v5023 = vpop.f32.mrb[0].mxu0
    %v5024 = vadd.f32 0.0, %v5023
    %v5025 = vpop.f32.mrb[0].mxu0
    %5026 = vmatprep.mubr.f32.mxu0 0.0
    %5027 = vmatmul.mubr.f32.gmra.mrb[0].mxu0 %v4837
    %v5028 = vpop.f32.mrb[0].mxu0
    %v5029 = vadd.f32 0.0, %v5028
    %v5030 = vpop.f32.mrb[0].mxu0
    %5031 = vmatprep.mubr.f32.mxu0 0.0
    %5032 = vmatmul.mubr.f32.gmra.mrb[0].mxu0 %v4840
    %v5033 = vpop.f32.mrb[0].mxu0
    %v5034 = vadd.f32 0.0, %v5033
    %v5035 = vpop.f32.mrb[0].mxu0
    %5036 = vmatprep.mubr.f32.mxu0 0.0
    %5037 = vmatmul.mubr.f32.gmra.mrb[0].mxu0 %v4843
    %v5038 = vpop.f32.mrb[0].mxu0
    %v5039 = vadd.f32 0.0, %v5038
    %v5040 = vpop.f32.mrb[0].mxu0
    %5041 = vmatprep.mubr.f32.mxu0 0.0
    %5042 = vmatmul.mubr.f32.gmra.mrb[0].mxu0 %v4846
    %v5043 = vpop.f32.mrb[0].mxu0
    %v5044 = vadd.f32 0.0, %v5043
    %v5045 = vpop.f32.mrb[0].mxu0
    %5046 = vmatprep.mubr.f32.mxu0 0.0
    %5047 = vmatmul.mubr.f32.gmra.mrb[0].mxu0 %v4849
    %v5048 = vpop.f32.mrb[0].mxu0
    %v5049 = vadd.f32 0.0, %v5048
    %v5050 = vpop.f32.mrb[0].mxu0
    %5051 = vmatprep.mubr.f32.mxu0 0.0
    %5052 = vmatmul.mubr.f32.gmra.mrb[0].mxu0 %v4852
    %v5053 = vpop.f32.mrb[0].mxu0
    %v5054 = vadd.f32 0.0, %v5053
    %v5055 = vpop.f32.mrb[0].mxu0
    %5056 = vmatprep.mubr.f32.mxu0 0.0
    %5057 = vmatmul.mubr.f32.gmra.mrb[0].mxu0 %v4855
    %v5058 = vpop.f32.mrb[0].mxu0
    %v5059 = vadd.f32 0.0, %v5058
    %v5060 = vpop.f32.mrb[0].mxu0
    %5061 = vmatprep.mubr.f32.mxu0 0.0
    %5062 = vmatmul.mubr.f32.gmra.mrb[0].mxu0 %v4858
    %v5063 = vpop.f32.mrb[0].mxu0
    %v5064 = vadd.f32 0.0, %v5063
    %v5065 = vpop.f32.mrb[0].mxu0
    %5066 = vmatprep.mubr.f32.mxu0 0.0
    %5067 = vmatmul.mubr.f32.gmra.mrb[0].mxu0 %v4861
    %v5068 = vpop.f32.mrb[0].mxu0
    %v5069 = vadd.f32 0.0, %v5068
    %v5070 = vpop.f32.mrb[0].mxu0
    %5071 = vmatprep.mubr.f32.mxu0 0.0
    %5072 = vmatmul.mubr.f32.gmra.mrb[0].mxu0 %v4864
    %v5073 = vpop.f32.mrb[0].mxu0
    %v5074 = vadd.f32 0.0, %v5073
    %v5075 = vpop.f32.mrb[0].mxu0
    %5076 = vmatprep.mubr.f32.mxu0 0.0
    %5077 = vmatmul.mubr.f32.gmra.mrb[0].mxu0 %v4867
    %v5078 = vpop.f32.mrb[0].mxu0
    %v5079 = vadd.f32 0.0, %v5078
    %v5080 = vpop.f32.mrb[0].mxu0
    %5081 = vmatprep.mubr.f32.mxu0 0.0
    %5082 = vmatmul.mubr.f32.gmra.mrb[0].mxu0 %v4870
    %v5083 = vpop.f32.mrb[0].mxu0
    %v5084 = vadd.f32 0.0, %v5083
    %v5085 = vpop.f32.mrb[0].mxu0
    %5086 = vmatprep.mubr.f32.mxu0 0.0
    %5087 = vmatmul.mubr.f32.gmra.mrb[0].mxu0 %v4873
    %v5088 = vpop.f32.mrb[0].mxu0
    %v5089 = vadd.f32 0.0, %v5088
    %v5090 = vpop.f32.mrb[0].mxu0
    %5091 = vmatprep.mubr.f32.mxu0 0.0
    %5092 = vmatmul.mubr.f32.gmra.mrb[0].mxu0 %v4876
    %v5093 = vpop.f32.mrb[0].mxu0
    %v5094 = vadd.f32 0.0, %v5093
    %v5095 = vpop.f32.mrb[0].mxu0
    %5096 = vmatprep.mubr.f32.mxu0 0.0
    %5097 = vmatmul.mubr.f32.gmra.mrb[0].mxu0 %v4879
    %v5098 = vpop.f32.mrb[0].mxu0
    %v5099 = vadd.f32 0.0, %v5098
    %v5100 = vpop.f32.mrb[0].mxu0
    %5101 = vmatprep.mubr.f32.mxu0 0.0
    %5102 = vmatmul.mubr.f32.gmra.mrb[0].mxu0 %v4882
    %v5103 = vpop.f32.mrb[0].mxu0
    %v5104 = vadd.f32 0.0, %v5103
    %v5105 = vpop.f32.mrb[0].mxu0
    %5106 = vmatprep.mubr.f32.mxu0 0.0
    %5107 = vmatmul.mubr.f32.gmra.mrb[0].mxu0 %v4885
    %v5108 = vpop.f32.mrb[0].mxu0
    %v5109 = vadd.f32 0.0, %v5108
    %v5110 = vpop.f32.mrb[0].mxu0
    %5111 = vdwg.mxu0
    %v5112 = vadd.f32 %v4724, %v4954
    %v5113 = vadd.f32 %v4725, %v4959
    %v5114 = vadd.f32 %v4726, %v4964
    %v5115 = vadd.f32 %v4727, %v4969
    %v5116 = vadd.f32 %v4728, %v4974
    %v5117 = vadd.f32 %v4729, %v4979
    %v5118 = vadd.f32 %v4730, %v4984
    %v5119 = vadd.f32 %v4731, %v4989
    %v5120 = vadd.f32 %v4732, %v4994
    %v5121 = vadd.f32 %v4733, %v4999
    %v5122 = vadd.f32 %v4734, %v5004
    %v5123 = vadd.f32 %v4735, %v5009
    %v5124 = vadd.f32 %v4736, %v5014
    %v5125 = vadd.f32 %v4737, %v5019
    %v5126 = vadd.f32 %v4738, %v5024
    %v5127 = vadd.f32 %v4739, %v5029
    %v5128 = vadd.f32 %v4740, %v5034
    %v5129 = vadd.f32 %v4741, %v5039
    %v5130 = vadd.f32 %v4742, %v5044
    %v5131 = vadd.f32 %v4743, %v5049
    %v5132 = vadd.f32 %v4744, %v5054
    %v5133 = vadd.f32 %v4745, %v5059
    %v5134 = vadd.f32 %v4746, %v5064
    %v5135 = vadd.f32 %v4747, %v5069
    %v5136 = vadd.f32 %v4748, %v5074
    %v5137 = vadd.f32 %v4749, %v5079
    %v5138 = vadd.f32 %v4750, %v5084
    %v5139 = vadd.f32 %v4751, %v5089
    %v5140 = vadd.f32 %v4752, %v5094
    %v5141 = vadd.f32 %v4753, %v5099
    %v5142 = vadd.f32 %v4754, %v5104
    %v5143 = vadd.f32 %v4755, %v5109
    %v5144 = vld [vmem:[%s4] sm:$0x1]
    %v5146 = vlaneseq
    %v5147 = vshrl.u32 %v5146, 7
    %v5148 = vsub.s32 0, %v5147
    %v5149 = vrot.slane %v5144, %v5148
    %v5151 = vadd.f32 %v5112, %v5149
    %v5152 = vadd.f32 %v5113, %v5149
    %v5153 = vadd.f32 %v5114, %v5149
    %v5154 = vadd.f32 %v5115, %v5149
    %v5155 = vadd.f32 %v5116, %v5149
    %v5156 = vadd.f32 %v5117, %v5149
    %v5157 = vadd.f32 %v5118, %v5149
    %v5158 = vadd.f32 %v5119, %v5149
    %v5159 = vadd.f32 %v5120, %v5149
    %v5160 = vadd.f32 %v5121, %v5149
    %v5161 = vadd.f32 %v5122, %v5149
    %v5162 = vadd.f32 %v5123, %v5149
    %v5163 = vadd.f32 %v5124, %v5149
    %v5164 = vadd.f32 %v5125, %v5149
    %v5165 = vadd.f32 %v5126, %v5149
    %v5166 = vadd.f32 %v5127, %v5149
    %v5167 = vadd.f32 %v5128, %v5149
    %v5168 = vadd.f32 %v5129, %v5149
    %v5169 = vadd.f32 %v5130, %v5149
    %v5170 = vadd.f32 %v5131, %v5149
    %v5171 = vadd.f32 %v5132, %v5149
    %v5172 = vadd.f32 %v5133, %v5149
    %v5173 = vadd.f32 %v5134, %v5149
    %v5174 = vadd.f32 %v5135, %v5149
    %v5175 = vadd.f32 %v5136, %v5149
    %v5176 = vadd.f32 %v5137, %v5149
    %v5177 = vadd.f32 %v5138, %v5149
    %v5178 = vadd.f32 %v5139, %v5149
    %v5179 = vadd.f32 %v5140, %v5149
    %v5180 = vadd.f32 %v5141, %v5149
    %v5181 = vadd.f32 %v5142, %v5149
    %v5182 = vadd.f32 %v5143, %v5149
    %v5183 = vmax.f32 %v5151, 0.0
    %v5184 = vmax.f32 %v5152, 0.0
    %v5185 = vmax.f32 %v5153, 0.0
    %v5186 = vmax.f32 %v5154, 0.0
    %v5187 = vmax.f32 %v5155, 0.0
    %v5188 = vmax.f32 %v5156, 0.0
    %v5189 = vmax.f32 %v5157, 0.0
    %v5190 = vmax.f32 %v5158, 0.0
    %v5191 = vmax.f32 %v5159, 0.0
    %v5192 = vmax.f32 %v5160, 0.0
    %v5193 = vmax.f32 %v5161, 0.0
    %v5194 = vmax.f32 %v5162, 0.0
    %v5195 = vmax.f32 %v5163, 0.0
    %v5196 = vmax.f32 %v5164, 0.0
    %v5197 = vmax.f32 %v5165, 0.0
    %v5198 = vmax.f32 %v5166, 0.0
    %v5199 = vmax.f32 %v5167, 0.0
    %v5200 = vmax.f32 %v5168, 0.0
    %v5201 = vmax.f32 %v5169, 0.0
    %v5202 = vmax.f32 %v5170, 0.0
    %v5203 = vmax.f32 %v5171, 0.0
    %v5204 = vmax.f32 %v5172, 0.0
    %v5205 = vmax.f32 %v5173, 0.0
    %v5206 = vmax.f32 %v5174, 0.0
    %v5207 = vmax.f32 %v5175, 0.0
    %v5208 = vmax.f32 %v5176, 0.0
    %v5209 = vmax.f32 %v5177, 0.0
    %v5210 = vmax.f32 %v5178, 0.0
    %v5211 = vmax.f32 %v5179, 0.0
    %v5212 = vmax.f32 %v5180, 0.0
    %v5213 = vmax.f32 %v5181, 0.0
    %v5214 = vmax.f32 %v5182, 0.0
    %v5215 = vld [vmem:[%s5] sm:$0xff]
    %v5216 = vld [vmem:[%s5 + $0x8] sm:$0xff]
    %s5217 = scalar_lea.vmem %s5, 16
    %v5218 = vld [vmem:[%s5217] sm:$0xff]
    %v5219 = vld [vmem:[%s5217 + $0x8] sm:$0xff]
    %vm5220 = vcmask 130048
    %v5222 = vsel %vm5220, %v5185, 0
    %v5225 = vsel %vm5220, %v5186, 0
    %5227 = vmatprep.subr.mxu0 0.0
    %5228 = vmatpush1.msra.mxu0 %v5218
    %5229 = vmatprep.subr.mxu0 0.0
    %5230 = vmatpush1.msra.mxu0 %v5219
    %5231 = vmatprep.subr.mxu0 0.0
    %5232 = vmatpush1.msra.mxu0 0.0
    %5233 = vmatprep.subr.mxu0 0.0
    %5234 = vmatpush1.msra.mxu0 0.0
    %5235 = vmatprep.subr.mxu0 0.0
    %5236 = vmatpush1.msra.mxu0 0.0
    %5237 = vmatprep.subr.mxu0 0.0
    %5238 = vmatpush1.msra.mxu0 0.0
    %5239 = vmatprep.subr.mxu0 0.0
    %5240 = vmatpush1.msra.mxu0 0.0
    %5241 = vmatprep.subr.mxu0 0.0
    %5242 = vmatpush1.msra.mxu0 0.0
    %5243 = vmatprep.subr.mxu0 0.0
    %5244 = vmatpush1.msra.mxu0 0.0
    %5245 = vmatprep.subr.mxu0 0.0
    %5246 = vmatpush1.msra.mxu0 0.0
    %5247 = vmatprep.subr.mxu0 0.0
    %5248 = vmatpush1.msra.mxu0 0.0
    %5249 = vmatprep.subr.mxu0 0.0
    %5250 = vmatpush1.msra.mxu0 0.0
    %5251 = vmatprep.subr.mxu0 0.0
    %5252 = vmatpush1.msra.mxu0 0.0
    %5253 = vmatprep.subr.mxu0 0.0
    %5254 = vmatpush1.msra.mxu0 0.0
    %5255 = vmatprep.subr.mxu0 0.0
    %5256 = vmatpush1.msra.mxu0 0.0
    %5257 = vmatprep.subr.mxu0 0.0
    %5258 = vmatpush1.msra.mxu0 0.0
    %5259 = vmatprep.subr.mxu0 0.0
    %5260 = vmatpush1.msra.mxu0 0.0
    %5261 = vmatprep.subr.mxu0 0.0
    %5262 = vmatpush1.msra.mxu0 0.0
    %5263 = vmatprep.subr.mxu0 0.0
    %5264 = vmatpush1.msra.mxu0 0.0
    %5265 = vmatprep.subr.mxu0 0.0
    %5266 = vmatpush1.msra.mxu0 0.0
    %5267 = vmatprep.subr.mxu0 0.0
    %5268 = vmatpush1.msra.mxu0 0.0
    %5269 = vmatprep.subr.mxu0 0.0
    %5270 = vmatpush1.msra.mxu0 0.0
    %5271 = vmatprep.subr.mxu0 0.0
    %5272 = vmatpush1.msra.mxu0 0.0
    %5273 = vmatprep.subr.mxu0 0.0
    %5274 = vmatpush1.msra.mxu0 0.0
    %5275 = vmatprep.subr.mxu0 0.0
    %5276 = vmatpush1.msra.mxu0 0.0
    %5277 = vmatprep.subr.mxu0 0.0
    %5278 = vmatpush1.msra.mxu0 0.0
    %5279 = vmatprep.subr.mxu0 0.0
    %5280 = vmatpush1.msra.mxu0 0.0
    %5281 = vmatprep.subr.mxu0 0.0
    %5282 = vmatpush1.msra.mxu0 0.0
    %5283 = vmatprep.subr.mxu0 0.0
    %5284 = vmatpush1.msra.mxu0 0.0
    %5285 = vmatprep.subr.mxu0 0.0
    %5286 = vmatpush1.msra.mxu0 0.0
    %5287 = vmatprep.subr.mxu0 0.0
    %5288 = vmatpush1.msra.mxu0 0.0
    %5289 = vmatprep.subr.mxu0 0.0
    %5290 = vmatpush1.msra.mxu0 0.0
    %5291 = vmatprep.mubr.f32.mxu0 0.0
    %5292 = vmatmul.mubr.f32.gmra.mrb[0].mxu0 %v5222
    %v5293 = vpop.f32.mrb[0].mxu0
    %v5294 = vadd.f32 0.0, %v5293
    %v5295 = vpop.f32.mrb[0].mxu0
    %5296 = vmatprep.mubr.f32.mxu0 0.0
    %5297 = vmatmul.mubr.f32.gmra.mrb[0].mxu0 %v5225
    %v5298 = vpop.f32.mrb[0].mxu0
    %v5299 = vadd.f32 0.0, %v5298
    %v5300 = vpop.f32.mrb[0].mxu0
    %5301 = vdwg.mxu0
    %v5303 = vsel %vm5220, %v5183, 0
    %v5306 = vsel %vm5220, %v5184, 0
    %5308 = vmatprep.subr.mxu0 0.0
    %5309 = vmatpush1.msra.mxu0 %v5215
    %5310 = vmatprep.subr.mxu0 0.0
    %5311 = vmatpush1.msra.mxu0 %v5216
    %5312 = vmatprep.subr.mxu0 0.0
    %5313 = vmatpush1.msra.mxu0 0.0
    %5314 = vmatprep.subr.mxu0 0.0
    %5315 = vmatpush1.msra.mxu0 0.0
    %5316 = vmatprep.subr.mxu0 0.0
    %5317 = vmatpush1.msra.mxu0 0.0
    %5318 = vmatprep.subr.mxu0 0.0
    %5319 = vmatpush1.msra.mxu0 0.0
    %5320 = vmatprep.subr.mxu0 0.0
    %5321 = vmatpush1.msra.mxu0 0.0
    %5322 = vmatprep.subr.mxu0 0.0
    %5323 = vmatpush1.msra.mxu0 0.0
    %5324 = vmatprep.subr.mxu0 0.0
    %5325 = vmatpush1.msra.mxu0 0.0
    %5326 = vmatprep.subr.mxu0 0.0
    %5327 = vmatpush1.msra.mxu0 0.0
    %5328 = vmatprep.subr.mxu0 0.0
    %5329 = vmatpush1.msra.mxu0 0.0
    %5330 = vmatprep.subr.mxu0 0.0
    %5331 = vmatpush1.msra.mxu0 0.0
    %5332 = vmatprep.subr.mxu0 0.0
    %5333 = vmatpush1.msra.mxu0 0.0
    %5334 = vmatprep.subr.mxu0 0.0
    %5335 = vmatpush1.msra.mxu0 0.0
    %5336 = vmatprep.subr.mxu0 0.0
    %5337 = vmatpush1.msra.mxu0 0.0
    %5338 = vmatprep.subr.mxu0 0.0
    %5339 = vmatpush1.msra.mxu0 0.0
    %5340 = vmatprep.subr.mxu0 0.0
    %5341 = vmatpush1.msra.mxu0 0.0
    %5342 = vmatprep.subr.mxu0 0.0
    %5343 = vmatpush1.msra.mxu0 0.0
    %5344 = vmatprep.subr.mxu0 0.0
    %5345 = vmatpush1.msra.mxu0 0.0
    %5346 = vmatprep.subr.mxu0 0.0
    %5347 = vmatpush1.msra.mxu0 0.0
    %5348 = vmatprep.subr.mxu0 0.0
    %5349 = vmatpush1.msra.mxu0 0.0
    %5350 = vmatprep.subr.mxu0 0.0
    %5351 = vmatpush1.msra.mxu0 0.0
    %5352 = vmatprep.subr.mxu0 0.0
    %5353 = vmatpush1.msra.mxu0 0.0
    %5354 = vmatprep.subr.mxu0 0.0
    %5355 = vmatpush1.msra.mxu0 0.0
    %5356 = vmatprep.subr.mxu0 0.0
    %5357 = vmatpush1.msra.mxu0 0.0
    %5358 = vmatprep.subr.mxu0 0.0
    %5359 = vmatpush1.msra.mxu0 0.0
    %5360 = vmatprep.subr.mxu0 0.0
    %5361 = vmatpush1.msra.mxu0 0.0
    %5362 = vmatprep.subr.mxu0 0.0
    %5363 = vmatpush1.msra.mxu0 0.0
    %5364 = vmatprep.subr.mxu0 0.0
    %5365 = vmatpush1.msra.mxu0 0.0
    %5366 = vmatprep.subr.mxu0 0.0
    %5367 = vmatpush1.msra.mxu0 0.0
    %5368 = vmatprep.subr.mxu0 0.0
    %5369 = vmatpush1.msra.mxu0 0.0
    %5370 = vmatprep.subr.mxu0 0.0
    %5371 = vmatpush1.msra.mxu0 0.0
    %5372 = vmatprep.mubr.f32.mxu0 0.0
    %5373 = vmatmul.mubr.f32.gmra.mrb[0].mxu0 %v5303
    %v5374 = vpop.f32.mrb[0].mxu0
    %v5375 = vadd.f32 %v5294, %v5374
    %v5376 = vpop.f32.mrb[0].mxu0
    %5377 = vmatprep.mubr.f32.mxu0 0.0
    %5378 = vmatmul.mubr.f32.gmra.mrb[0].mxu0 %v5306
    %v5379 = vpop.f32.mrb[0].mxu0
    %v5380 = vadd.f32 %v5299, %v5379
    %v5381 = vpop.f32.mrb[0].mxu0
    %5382 = vdwg.mxu0
    %s5383 = scalar_lea.vmem %s5, 32
    %v5384 = vld [vmem:[%s5383] sm:$0xff]
    %v5385 = vld [vmem:[%s5383 + $0x8] sm:$0xff]
    %v5387 = vsel %vm5220, %v5187, 0
    %v5390 = vsel %vm5220, %v5188, 0
    %5392 = vmatprep.subr.mxu0 0.0
    %5393 = vmatpush1.msra.mxu0 %v5384
    %5394 = vmatprep.subr.mxu0 0.0
    %5395 = vmatpush1.msra.mxu0 %v5385
    %5396 = vmatprep.subr.mxu0 0.0
    %5397 = vmatpush1.msra.mxu0 0.0
    %5398 = vmatprep.subr.mxu0 0.0
    %5399 = vmatpush1.msra.mxu0 0.0
    %5400 = vmatprep.subr.mxu0 0.0
    %5401 = vmatpush1.msra.mxu0 0.0
    %5402 = vmatprep.subr.mxu0 0.0
    %5403 = vmatpush1.msra.mxu0 0.0
    %5404 = vmatprep.subr.mxu0 0.0
    %5405 = vmatpush1.msra.mxu0 0.0
    %5406 = vmatprep.subr.mxu0 0.0
    %5407 = vmatpush1.msra.mxu0 0.0
    %5408 = vmatprep.subr.mxu0 0.0
    %5409 = vmatpush1.msra.mxu0 0.0
    %5410 = vmatprep.subr.mxu0 0.0
    %5411 = vmatpush1.msra.mxu0 0.0
    %5412 = vmatprep.subr.mxu0 0.0
    %5413 = vmatpush1.msra.mxu0 0.0
    %5414 = vmatprep.subr.mxu0 0.0
    %5415 = vmatpush1.msra.mxu0 0.0
    %5416 = vmatprep.subr.mxu0 0.0
    %5417 = vmatpush1.msra.mxu0 0.0
    %5418 = vmatprep.subr.mxu0 0.0
    %5419 = vmatpush1.msra.mxu0 0.0
    %5420 = vmatprep.subr.mxu0 0.0
    %5421 = vmatpush1.msra.mxu0 0.0
    %5422 = vmatprep.subr.mxu0 0.0
    %5423 = vmatpush1.msra.mxu0 0.0
    %5424 = vmatprep.subr.mxu0 0.0
    %5425 = vmatpush1.msra.mxu0 0.0
    %5426 = vmatprep.subr.mxu0 0.0
    %5427 = vmatpush1.msra.mxu0 0.0
    %5428 = vmatprep.subr.mxu0 0.0
    %5429 = vmatpush1.msra.mxu0 0.0
    %5430 = vmatprep.subr.mxu0 0.0
    %5431 = vmatpush1.msra.mxu0 0.0
    %5432 = vmatprep.subr.mxu0 0.0
    %5433 = vmatpush1.msra.mxu0 0.0
    %5434 = vmatprep.subr.mxu0 0.0
    %5435 = vmatpush1.msra.mxu0 0.0
    %5436 = vmatprep.subr.mxu0 0.0
    %5437 = vmatpush1.msra.mxu0 0.0
    %5438 = vmatprep.subr.mxu0 0.0
    %5439 = vmatpush1.msra.mxu0 0.0
    %5440 = vmatprep.subr.mxu0 0.0
    %5441 = vmatpush1.msra.mxu0 0.0
    %5442 = vmatprep.subr.mxu0 0.0
    %5443 = vmatpush1.msra.mxu0 0.0
    %5444 = vmatprep.subr.mxu0 0.0
    %5445 = vmatpush1.msra.mxu0 0.0
    %5446 = vmatprep.subr.mxu0 0.0
    %5447 = vmatpush1.msra.mxu0 0.0
    %5448 = vmatprep.subr.mxu0 0.0
    %5449 = vmatpush1.msra.mxu0 0.0
    %5450 = vmatprep.subr.mxu0 0.0
    %5451 = vmatpush1.msra.mxu0 0.0
    %5452 = vmatprep.subr.mxu0 0.0
    %5453 = vmatpush1.msra.mxu0 0.0
    %5454 = vmatprep.subr.mxu0 0.0
    %5455 = vmatpush1.msra.mxu0 0.0
    %5456 = vmatprep.mubr.f32.mxu0 0.0
    %5457 = vmatmul.mubr.f32.gmra.mrb[0].mxu0 %v5387
    %v5458 = vpop.f32.mrb[0].mxu0
    %v5459 = vadd.f32 0.0, %v5458
    %v5460 = vpop.f32.mrb[0].mxu0
    %5461 = vmatprep.mubr.f32.mxu0 0.0
    %5462 = vmatmul.mubr.f32.gmra.mrb[0].mxu0 %v5390
    %v5463 = vpop.f32.mrb[0].mxu0
    %v5464 = vadd.f32 0.0, %v5463
    %v5465 = vpop.f32.mrb[0].mxu0
    %5466 = vdwg.mxu0
    %v5467 = vadd.f32 %v5375, %v5459
    %v5468 = vadd.f32 %v5380, %v5464
    %s5469 = scalar_lea.vmem %s5, 48
    %v5470 = vld [vmem:[%s5469] sm:$0xff]
    %v5471 = vld [vmem:[%s5469 + $0x8] sm:$0xff]
    %v5473 = vsel %vm5220, %v5189, 0
    %v5476 = vsel %vm5220, %v5190, 0
    %5478 = vmatprep.subr.mxu0 0.0
    %5479 = vmatpush1.msra.mxu0 %v5470
    %5480 = vmatprep.subr.mxu0 0.0
    %5481 = vmatpush1.msra.mxu0 %v5471
    %5482 = vmatprep.subr.mxu0 0.0
    %5483 = vmatpush1.msra.mxu0 0.0
    %5484 = vmatprep.subr.mxu0 0.0
    %5485 = vmatpush1.msra.mxu0 0.0
    %5486 = vmatprep.subr.mxu0 0.0
    %5487 = vmatpush1.msra.mxu0 0.0
    %5488 = vmatprep.subr.mxu0 0.0
    %5489 = vmatpush1.msra.mxu0 0.0
    %5490 = vmatprep.subr.mxu0 0.0
    %5491 = vmatpush1.msra.mxu0 0.0
    %5492 = vmatprep.subr.mxu0 0.0
    %5493 = vmatpush1.msra.mxu0 0.0
    %5494 = vmatprep.subr.mxu0 0.0
    %5495 = vmatpush1.msra.mxu0 0.0
    %5496 = vmatprep.subr.mxu0 0.0
    %5497 = vmatpush1.msra.mxu0 0.0
    %5498 = vmatprep.subr.mxu0 0.0
    %5499 = vmatpush1.msra.mxu0 0.0
    %5500 = vmatprep.subr.mxu0 0.0
    %5501 = vmatpush1.msra.mxu0 0.0
    %5502 = vmatprep.subr.mxu0 0.0
    %5503 = vmatpush1.msra.mxu0 0.0
    %5504 = vmatprep.subr.mxu0 0.0
    %5505 = vmatpush1.msra.mxu0 0.0
    %5506 = vmatprep.subr.mxu0 0.0
    %5507 = vmatpush1.msra.mxu0 0.0
    %5508 = vmatprep.subr.mxu0 0.0
    %5509 = vmatpush1.msra.mxu0 0.0
    %5510 = vmatprep.subr.mxu0 0.0
    %5511 = vmatpush1.msra.mxu0 0.0
    %5512 = vmatprep.subr.mxu0 0.0
    %5513 = vmatpush1.msra.mxu0 0.0
    %5514 = vmatprep.subr.mxu0 0.0
    %5515 = vmatpush1.msra.mxu0 0.0
    %5516 = vmatprep.subr.mxu0 0.0
    %5517 = vmatpush1.msra.mxu0 0.0
    %5518 = vmatprep.subr.mxu0 0.0
    %5519 = vmatpush1.msra.mxu0 0.0
    %5520 = vmatprep.subr.mxu0 0.0
    %5521 = vmatpush1.msra.mxu0 0.0
    %5522 = vmatprep.subr.mxu0 0.0
    %5523 = vmatpush1.msra.mxu0 0.0
    %5524 = vmatprep.subr.mxu0 0.0
    %5525 = vmatpush1.msra.mxu0 0.0
    %5526 = vmatprep.subr.mxu0 0.0
    %5527 = vmatpush1.msra.mxu0 0.0
    %5528 = vmatprep.subr.mxu0 0.0
    %5529 = vmatpush1.msra.mxu0 0.0
    %5530 = vmatprep.subr.mxu0 0.0
    %5531 = vmatpush1.msra.mxu0 0.0
    %5532 = vmatprep.subr.mxu0 0.0
    %5533 = vmatpush1.msra.mxu0 0.0
    %5534 = vmatprep.subr.mxu0 0.0
    %5535 = vmatpush1.msra.mxu0 0.0
    %5536 = vmatprep.subr.mxu0 0.0
    %5537 = vmatpush1.msra.mxu0 0.0
    %5538 = vmatprep.subr.mxu0 0.0
    %5539 = vmatpush1.msra.mxu0 0.0
    %5540 = vmatprep.subr.mxu0 0.0
    %5541 = vmatpush1.msra.mxu0 0.0
    %5542 = vmatprep.mubr.f32.mxu0 0.0
    %5543 = vmatmul.mubr.f32.gmra.mrb[0].mxu0 %v5473
    %v5544 = vpop.f32.mrb[0].mxu0
    %v5545 = vadd.f32 0.0, %v5544
    %v5546 = vpop.f32.mrb[0].mxu0
    %5547 = vmatprep.mubr.f32.mxu0 0.0
    %5548 = vmatmul.mubr.f32.gmra.mrb[0].mxu0 %v5476
    %v5549 = vpop.f32.mrb[0].mxu0
    %v5550 = vadd.f32 0.0, %v5549
    %v5551 = vpop.f32.mrb[0].mxu0
    %5552 = vdwg.mxu0
    %v5553 = vadd.f32 %v5467, %v5545
    %v5554 = vadd.f32 %v5468, %v5550
    %s5555 = scalar_lea.vmem %s5, 64
    %v5556 = vld [vmem:[%s5555] sm:$0xff]
    %v5557 = vld [vmem:[%s5555 + $0x8] sm:$0xff]
    %v5559 = vsel %vm5220, %v5191, 0
    %v5562 = vsel %vm5220, %v5192, 0
    %5564 = vmatprep.subr.mxu0 0.0
    %5565 = vmatpush1.msra.mxu0 %v5556
    %5566 = vmatprep.subr.mxu0 0.0
    %5567 = vmatpush1.msra.mxu0 %v5557
    %5568 = vmatprep.subr.mxu0 0.0
    %5569 = vmatpush1.msra.mxu0 0.0
    %5570 = vmatprep.subr.mxu0 0.0
    %5571 = vmatpush1.msra.mxu0 0.0
    %5572 = vmatprep.subr.mxu0 0.0
    %5573 = vmatpush1.msra.mxu0 0.0
    %5574 = vmatprep.subr.mxu0 0.0
    %5575 = vmatpush1.msra.mxu0 0.0
    %5576 = vmatprep.subr.mxu0 0.0
    %5577 = vmatpush1.msra.mxu0 0.0
    %5578 = vmatprep.subr.mxu0 0.0
    %5579 = vmatpush1.msra.mxu0 0.0
    %5580 = vmatprep.subr.mxu0 0.0
    %5581 = vmatpush1.msra.mxu0 0.0
    %5582 = vmatprep.subr.mxu0 0.0
    %5583 = vmatpush1.msra.mxu0 0.0
    %5584 = vmatprep.subr.mxu0 0.0
    %5585 = vmatpush1.msra.mxu0 0.0
    %5586 = vmatprep.subr.mxu0 0.0
    %5587 = vmatpush1.msra.mxu0 0.0
    %5588 = vmatprep.subr.mxu0 0.0
    %5589 = vmatpush1.msra.mxu0 0.0
    %5590 = vmatprep.subr.mxu0 0.0
    %5591 = vmatpush1.msra.mxu0 0.0
    %5592 = vmatprep.subr.mxu0 0.0
    %5593 = vmatpush1.msra.mxu0 0.0
    %5594 = vmatprep.subr.mxu0 0.0
    %5595 = vmatpush1.msra.mxu0 0.0
    %5596 = vmatprep.subr.mxu0 0.0
    %5597 = vmatpush1.msra.mxu0 0.0
    %5598 = vmatprep.subr.mxu0 0.0
    %5599 = vmatpush1.msra.mxu0 0.0
    %5600 = vmatprep.subr.mxu0 0.0
    %5601 = vmatpush1.msra.mxu0 0.0
    %5602 = vmatprep.subr.mxu0 0.0
    %5603 = vmatpush1.msra.mxu0 0.0
    %5604 = vmatprep.subr.mxu0 0.0
    %5605 = vmatpush1.msra.mxu0 0.0
    %5606 = vmatprep.subr.mxu0 0.0
    %5607 = vmatpush1.msra.mxu0 0.0
    %5608 = vmatprep.subr.mxu0 0.0
    %5609 = vmatpush1.msra.mxu0 0.0
    %5610 = vmatprep.subr.mxu0 0.0
    %5611 = vmatpush1.msra.mxu0 0.0
    %5612 = vmatprep.subr.mxu0 0.0
    %5613 = vmatpush1.msra.mxu0 0.0
    %5614 = vmatprep.subr.mxu0 0.0
    %5615 = vmatpush1.msra.mxu0 0.0
    %5616 = vmatprep.subr.mxu0 0.0
    %5617 = vmatpush1.msra.mxu0 0.0
    %5618 = vmatprep.subr.mxu0 0.0
    %5619 = vmatpush1.msra.mxu0 0.0
    %5620 = vmatprep.subr.mxu0 0.0
    %5621 = vmatpush1.msra.mxu0 0.0
    %5622 = vmatprep.subr.mxu0 0.0
    %5623 = vmatpush1.msra.mxu0 0.0
    %5624 = vmatprep.subr.mxu0 0.0
    %5625 = vmatpush1.msra.mxu0 0.0
    %5626 = vmatprep.subr.mxu0 0.0
    %5627 = vmatpush1.msra.mxu0 0.0
    %5628 = vmatprep.mubr.f32.mxu0 0.0
    %5629 = vmatmul.mubr.f32.gmra.mrb[0].mxu0 %v5559
    %v5630 = vpop.f32.mrb[0].mxu0
    %v5631 = vadd.f32 0.0, %v5630
    %v5632 = vpop.f32.mrb[0].mxu0
    %5633 = vmatprep.mubr.f32.mxu0 0.0
    %5634 = vmatmul.mubr.f32.gmra.mrb[0].mxu0 %v5562
    %v5635 = vpop.f32.mrb[0].mxu0
    %v5636 = vadd.f32 0.0, %v5635
    %v5637 = vpop.f32.mrb[0].mxu0
    %5638 = vdwg.mxu0
    %v5639 = vadd.f32 %v5553, %v5631
    %v5640 = vadd.f32 %v5554, %v5636
    %s5641 = scalar_lea.vmem %s5, 80
    %v5642 = vld [vmem:[%s5641] sm:$0xff]
    %v5643 = vld [vmem:[%s5641 + $0x8] sm:$0xff]
    %v5645 = vsel %vm5220, %v5193, 0
    %v5648 = vsel %vm5220, %v5194, 0
    %5650 = vmatprep.subr.mxu0 0.0
    %5651 = vmatpush1.msra.mxu0 %v5642
    %5652 = vmatprep.subr.mxu0 0.0
    %5653 = vmatpush1.msra.mxu0 %v5643
    %5654 = vmatprep.subr.mxu0 0.0
    %5655 = vmatpush1.msra.mxu0 0.0
    %5656 = vmatprep.subr.mxu0 0.0
    %5657 = vmatpush1.msra.mxu0 0.0
    %5658 = vmatprep.subr.mxu0 0.0
    %5659 = vmatpush1.msra.mxu0 0.0
    %5660 = vmatprep.subr.mxu0 0.0
    %5661 = vmatpush1.msra.mxu0 0.0
    %5662 = vmatprep.subr.mxu0 0.0
    %5663 = vmatpush1.msra.mxu0 0.0
    %5664 = vmatprep.subr.mxu0 0.0
    %5665 = vmatpush1.msra.mxu0 0.0
    %5666 = vmatprep.subr.mxu0 0.0
    %5667 = vmatpush1.msra.mxu0 0.0
    %5668 = vmatprep.subr.mxu0 0.0
    %5669 = vmatpush1.msra.mxu0 0.0
    %5670 = vmatprep.subr.mxu0 0.0
    %5671 = vmatpush1.msra.mxu0 0.0
    %5672 = vmatprep.subr.mxu0 0.0
    %5673 = vmatpush1.msra.mxu0 0.0
    %5674 = vmatprep.subr.mxu0 0.0
    %5675 = vmatpush1.msra.mxu0 0.0
    %5676 = vmatprep.subr.mxu0 0.0
    %5677 = vmatpush1.msra.mxu0 0.0
    %5678 = vmatprep.subr.mxu0 0.0
    %5679 = vmatpush1.msra.mxu0 0.0
    %5680 = vmatprep.subr.mxu0 0.0
    %5681 = vmatpush1.msra.mxu0 0.0
    %5682 = vmatprep.subr.mxu0 0.0
    %5683 = vmatpush1.msra.mxu0 0.0
    %5684 = vmatprep.subr.mxu0 0.0
    %5685 = vmatpush1.msra.mxu0 0.0
    %5686 = vmatprep.subr.mxu0 0.0
    %5687 = vmatpush1.msra.mxu0 0.0
    %5688 = vmatprep.subr.mxu0 0.0
    %5689 = vmatpush1.msra.mxu0 0.0
    %5690 = vmatprep.subr.mxu0 0.0
    %5691 = vmatpush1.msra.mxu0 0.0
    %5692 = vmatprep.subr.mxu0 0.0
    %5693 = vmatpush1.msra.mxu0 0.0
    %5694 = vmatprep.subr.mxu0 0.0
    %5695 = vmatpush1.msra.mxu0 0.0
    %5696 = vmatprep.subr.mxu0 0.0
    %5697 = vmatpush1.msra.mxu0 0.0
    %5698 = vmatprep.subr.mxu0 0.0
    %5699 = vmatpush1.msra.mxu0 0.0
    %5700 = vmatprep.subr.mxu0 0.0
    %5701 = vmatpush1.msra.mxu0 0.0
    %5702 = vmatprep.subr.mxu0 0.0
    %5703 = vmatpush1.msra.mxu0 0.0
    %5704 = vmatprep.subr.mxu0 0.0
    %5705 = vmatpush1.msra.mxu0 0.0
    %5706 = vmatprep.subr.mxu0 0.0
    %5707 = vmatpush1.msra.mxu0 0.0
    %5708 = vmatprep.subr.mxu0 0.0
    %5709 = vmatpush1.msra.mxu0 0.0
    %5710 = vmatprep.subr.mxu0 0.0
    %5711 = vmatpush1.msra.mxu0 0.0
    %5712 = vmatprep.subr.mxu0 0.0
    %5713 = vmatpush1.msra.mxu0 0.0
    %5714 = vmatprep.mubr.f32.mxu0 0.0
    %5715 = vmatmul.mubr.f32.gmra.mrb[0].mxu0 %v5645
    %v5716 = vpop.f32.mrb[0].mxu0
    %v5717 = vadd.f32 0.0, %v5716
    %v5718 = vpop.f32.mrb[0].mxu0
    %5719 = vmatprep.mubr.f32.mxu0 0.0
    %5720 = vmatmul.mubr.f32.gmra.mrb[0].mxu0 %v5648
    %v5721 = vpop.f32.mrb[0].mxu0
    %v5722 = vadd.f32 0.0, %v5721
    %v5723 = vpop.f32.mrb[0].mxu0
    %5724 = vdwg.mxu0
    %v5725 = vadd.f32 %v5639, %v5717
    %v5726 = vadd.f32 %v5640, %v5722
    %s5727 = scalar_lea.vmem %s5, 96
    %v5728 = vld [vmem:[%s5727] sm:$0xff]
    %v5729 = vld [vmem:[%s5727 + $0x8] sm:$0xff]
    %v5731 = vsel %vm5220, %v5195, 0
    %v5734 = vsel %vm5220, %v5196, 0
    %5736 = vmatprep.subr.mxu0 0.0
    %5737 = vmatpush1.msra.mxu0 %v5728
    %5738 = vmatprep.subr.mxu0 0.0
    %5739 = vmatpush1.msra.mxu0 %v5729
    %5740 = vmatprep.subr.mxu0 0.0
    %5741 = vmatpush1.msra.mxu0 0.0
    %5742 = vmatprep.subr.mxu0 0.0
    %5743 = vmatpush1.msra.mxu0 0.0
    %5744 = vmatprep.subr.mxu0 0.0
    %5745 = vmatpush1.msra.mxu0 0.0
    %5746 = vmatprep.subr.mxu0 0.0
    %5747 = vmatpush1.msra.mxu0 0.0
    %5748 = vmatprep.subr.mxu0 0.0
    %5749 = vmatpush1.msra.mxu0 0.0
    %5750 = vmatprep.subr.mxu0 0.0
    %5751 = vmatpush1.msra.mxu0 0.0
    %5752 = vmatprep.subr.mxu0 0.0
    %5753 = vmatpush1.msra.mxu0 0.0
    %5754 = vmatprep.subr.mxu0 0.0
    %5755 = vmatpush1.msra.mxu0 0.0
    %5756 = vmatprep.subr.mxu0 0.0
    %5757 = vmatpush1.msra.mxu0 0.0
    %5758 = vmatprep.subr.mxu0 0.0
    %5759 = vmatpush1.msra.mxu0 0.0
    %5760 = vmatprep.subr.mxu0 0.0
    %5761 = vmatpush1.msra.mxu0 0.0
    %5762 = vmatprep.subr.mxu0 0.0
    %5763 = vmatpush1.msra.mxu0 0.0
    %5764 = vmatprep.subr.mxu0 0.0
    %5765 = vmatpush1.msra.mxu0 0.0
    %5766 = vmatprep.subr.mxu0 0.0
    %5767 = vmatpush1.msra.mxu0 0.0
    %5768 = vmatprep.subr.mxu0 0.0
    %5769 = vmatpush1.msra.mxu0 0.0
    %5770 = vmatprep.subr.mxu0 0.0
    %5771 = vmatpush1.msra.mxu0 0.0
    %5772 = vmatprep.subr.mxu0 0.0
    %5773 = vmatpush1.msra.mxu0 0.0
    %5774 = vmatprep.subr.mxu0 0.0
    %5775 = vmatpush1.msra.mxu0 0.0
    %5776 = vmatprep.subr.mxu0 0.0
    %5777 = vmatpush1.msra.mxu0 0.0
    %5778 = vmatprep.subr.mxu0 0.0
    %5779 = vmatpush1.msra.mxu0 0.0
    %5780 = vmatprep.subr.mxu0 0.0
    %5781 = vmatpush1.msra.mxu0 0.0
    %5782 = vmatprep.subr.mxu0 0.0
    %5783 = vmatpush1.msra.mxu0 0.0
    %5784 = vmatprep.subr.mxu0 0.0
    %5785 = vmatpush1.msra.mxu0 0.0
    %5786 = vmatprep.subr.mxu0 0.0
    %5787 = vmatpush1.msra.mxu0 0.0
    %5788 = vmatprep.subr.mxu0 0.0
    %5789 = vmatpush1.msra.mxu0 0.0
    %5790 = vmatprep.subr.mxu0 0.0
    %5791 = vmatpush1.msra.mxu0 0.0
    %5792 = vmatprep.subr.mxu0 0.0
    %5793 = vmatpush1.msra.mxu0 0.0
    %5794 = vmatprep.subr.mxu0 0.0
    %5795 = vmatpush1.msra.mxu0 0.0
    %5796 = vmatprep.subr.mxu0 0.0
    %5797 = vmatpush1.msra.mxu0 0.0
    %5798 = vmatprep.subr.mxu0 0.0
    %5799 = vmatpush1.msra.mxu0 0.0
    %5800 = vmatprep.mubr.f32.mxu0 0.0
    %5801 = vmatmul.mubr.f32.gmra.mrb[0].mxu0 %v5731
    %v5802 = vpop.f32.mrb[0].mxu0
    %v5803 = vadd.f32 0.0, %v5802
    %v5804 = vpop.f32.mrb[0].mxu0
    %5805 = vmatprep.mubr.f32.mxu0 0.0
    %5806 = vmatmul.mubr.f32.gmra.mrb[0].mxu0 %v5734
    %v5807 = vpop.f32.mrb[0].mxu0
    %v5808 = vadd.f32 0.0, %v5807
    %v5809 = vpop.f32.mrb[0].mxu0
    %5810 = vdwg.mxu0
    %v5811 = vadd.f32 %v5725, %v5803
    %v5812 = vadd.f32 %v5726, %v5808
    %s5813 = scalar_lea.vmem %s5, 112
    %v5814 = vld [vmem:[%s5813] sm:$0xff]
    %v5815 = vld [vmem:[%s5813 + $0x8] sm:$0xff]
    %v5817 = vsel %vm5220, %v5197, 0
    %v5820 = vsel %vm5220, %v5198, 0
    %5822 = vmatprep.subr.mxu0 0.0
    %5823 = vmatpush1.msra.mxu0 %v5814
    %5824 = vmatprep.subr.mxu0 0.0
    %5825 = vmatpush1.msra.mxu0 %v5815
    %5826 = vmatprep.subr.mxu0 0.0
    %5827 = vmatpush1.msra.mxu0 0.0
    %5828 = vmatprep.subr.mxu0 0.0
    %5829 = vmatpush1.msra.mxu0 0.0
    %5830 = vmatprep.subr.mxu0 0.0
    %5831 = vmatpush1.msra.mxu0 0.0
    %5832 = vmatprep.subr.mxu0 0.0
    %5833 = vmatpush1.msra.mxu0 0.0
    %5834 = vmatprep.subr.mxu0 0.0
    %5835 = vmatpush1.msra.mxu0 0.0
    %5836 = vmatprep.subr.mxu0 0.0
    %5837 = vmatpush1.msra.mxu0 0.0
    %5838 = vmatprep.subr.mxu0 0.0
    %5839 = vmatpush1.msra.mxu0 0.0
    %5840 = vmatprep.subr.mxu0 0.0
    %5841 = vmatpush1.msra.mxu0 0.0
    %5842 = vmatprep.subr.mxu0 0.0
    %5843 = vmatpush1.msra.mxu0 0.0
    %5844 = vmatprep.subr.mxu0 0.0
    %5845 = vmatpush1.msra.mxu0 0.0
    %5846 = vmatprep.subr.mxu0 0.0
    %5847 = vmatpush1.msra.mxu0 0.0
    %5848 = vmatprep.subr.mxu0 0.0
    %5849 = vmatpush1.msra.mxu0 0.0
    %5850 = vmatprep.subr.mxu0 0.0
    %5851 = vmatpush1.msra.mxu0 0.0
    %5852 = vmatprep.subr.mxu0 0.0
    %5853 = vmatpush1.msra.mxu0 0.0
    %5854 = vmatprep.subr.mxu0 0.0
    %5855 = vmatpush1.msra.mxu0 0.0
    %5856 = vmatprep.subr.mxu0 0.0
    %5857 = vmatpush1.msra.mxu0 0.0
    %5858 = vmatprep.subr.mxu0 0.0
    %5859 = vmatpush1.msra.mxu0 0.0
    %5860 = vmatprep.subr.mxu0 0.0
    %5861 = vmatpush1.msra.mxu0 0.0
    %5862 = vmatprep.subr.mxu0 0.0
    %5863 = vmatpush1.msra.mxu0 0.0
    %5864 = vmatprep.subr.mxu0 0.0
    %5865 = vmatpush1.msra.mxu0 0.0
    %5866 = vmatprep.subr.mxu0 0.0
    %5867 = vmatpush1.msra.mxu0 0.0
    %5868 = vmatprep.subr.mxu0 0.0
    %5869 = vmatpush1.msra.mxu0 0.0
    %5870 = vmatprep.subr.mxu0 0.0
    %5871 = vmatpush1.msra.mxu0 0.0
    %5872 = vmatprep.subr.mxu0 0.0
    %5873 = vmatpush1.msra.mxu0 0.0
    %5874 = vmatprep.subr.mxu0 0.0
    %5875 = vmatpush1.msra.mxu0 0.0
    %5876 = vmatprep.subr.mxu0 0.0
    %5877 = vmatpush1.msra.mxu0 0.0
    %5878 = vmatprep.subr.mxu0 0.0
    %5879 = vmatpush1.msra.mxu0 0.0
    %5880 = vmatprep.subr.mxu0 0.0
    %5881 = vmatpush1.msra.mxu0 0.0
    %5882 = vmatprep.subr.mxu0 0.0
    %5883 = vmatpush1.msra.mxu0 0.0
    %5884 = vmatprep.subr.mxu0 0.0
    %5885 = vmatpush1.msra.mxu0 0.0
    %5886 = vmatprep.mubr.f32.mxu0 0.0
    %5887 = vmatmul.mubr.f32.gmra.mrb[0].mxu0 %v5817
    %v5888 = vpop.f32.mrb[0].mxu0
    %v5889 = vadd.f32 0.0, %v5888
    %v5890 = vpop.f32.mrb[0].mxu0
    %5891 = vmatprep.mubr.f32.mxu0 0.0
    %5892 = vmatmul.mubr.f32.gmra.mrb[0].mxu0 %v5820
    %v5893 = vpop.f32.mrb[0].mxu0
    %v5894 = vadd.f32 0.0, %v5893
    %v5895 = vpop.f32.mrb[0].mxu0
    %5896 = vdwg.mxu0
    %v5897 = vadd.f32 %v5811, %v5889
    %v5898 = vadd.f32 %v5812, %v5894
    %s5899 = scalar_lea.vmem %s5, 128
    %v5900 = vld [vmem:[%s5899] sm:$0xff]
    %v5901 = vld [vmem:[%s5899 + $0x8] sm:$0xff]
    %v5903 = vsel %vm5220, %v5199, 0
    %v5906 = vsel %vm5220, %v5200, 0
    %5908 = vmatprep.subr.mxu0 0.0
    %5909 = vmatpush1.msra.mxu0 %v5900
    %5910 = vmatprep.subr.mxu0 0.0
    %5911 = vmatpush1.msra.mxu0 %v5901
    %5912 = vmatprep.subr.mxu0 0.0
    %5913 = vmatpush1.msra.mxu0 0.0
    %5914 = vmatprep.subr.mxu0 0.0
    %5915 = vmatpush1.msra.mxu0 0.0
    %5916 = vmatprep.subr.mxu0 0.0
    %5917 = vmatpush1.msra.mxu0 0.0
    %5918 = vmatprep.subr.mxu0 0.0
    %5919 = vmatpush1.msra.mxu0 0.0
    %5920 = vmatprep.subr.mxu0 0.0
    %5921 = vmatpush1.msra.mxu0 0.0
    %5922 = vmatprep.subr.mxu0 0.0
    %5923 = vmatpush1.msra.mxu0 0.0
    %5924 = vmatprep.subr.mxu0 0.0
    %5925 = vmatpush1.msra.mxu0 0.0
    %5926 = vmatprep.subr.mxu0 0.0
    %5927 = vmatpush1.msra.mxu0 0.0
    %5928 = vmatprep.subr.mxu0 0.0
    %5929 = vmatpush1.msra.mxu0 0.0
    %5930 = vmatprep.subr.mxu0 0.0
    %5931 = vmatpush1.msra.mxu0 0.0
    %5932 = vmatprep.subr.mxu0 0.0
    %5933 = vmatpush1.msra.mxu0 0.0
    %5934 = vmatprep.subr.mxu0 0.0
    %5935 = vmatpush1.msra.mxu0 0.0
    %5936 = vmatprep.subr.mxu0 0.0
    %5937 = vmatpush1.msra.mxu0 0.0
    %5938 = vmatprep.subr.mxu0 0.0
    %5939 = vmatpush1.msra.mxu0 0.0
    %5940 = vmatprep.subr.mxu0 0.0
    %5941 = vmatpush1.msra.mxu0 0.0
    %5942 = vmatprep.subr.mxu0 0.0
    %5943 = vmatpush1.msra.mxu0 0.0
    %5944 = vmatprep.subr.mxu0 0.0
    %5945 = vmatpush1.msra.mxu0 0.0
    %5946 = vmatprep.subr.mxu0 0.0
    %5947 = vmatpush1.msra.mxu0 0.0
    %5948 = vmatprep.subr.mxu0 0.0
    %5949 = vmatpush1.msra.mxu0 0.0
    %5950 = vmatprep.subr.mxu0 0.0
    %5951 = vmatpush1.msra.mxu0 0.0
    %5952 = vmatprep.subr.mxu0 0.0
    %5953 = vmatpush1.msra.mxu0 0.0
    %5954 = vmatprep.subr.mxu0 0.0
    %5955 = vmatpush1.msra.mxu0 0.0
    %5956 = vmatprep.subr.mxu0 0.0
    %5957 = vmatpush1.msra.mxu0 0.0
    %5958 = vmatprep.subr.mxu0 0.0
    %5959 = vmatpush1.msra.mxu0 0.0
    %5960 = vmatprep.subr.mxu0 0.0
    %5961 = vmatpush1.msra.mxu0 0.0
    %5962 = vmatprep.subr.mxu0 0.0
    %5963 = vmatpush1.msra.mxu0 0.0
    %5964 = vmatprep.subr.mxu0 0.0
    %5965 = vmatpush1.msra.mxu0 0.0
    %5966 = vmatprep.subr.mxu0 0.0
    %5967 = vmatpush1.msra.mxu0 0.0
    %5968 = vmatprep.subr.mxu0 0.0
    %5969 = vmatpush1.msra.mxu0 0.0
    %5970 = vmatprep.subr.mxu0 0.0
    %5971 = vmatpush1.msra.mxu0 0.0
    %5972 = vmatprep.mubr.f32.mxu0 0.0
    %5973 = vmatmul.mubr.f32.gmra.mrb[0].mxu0 %v5903
    %v5974 = vpop.f32.mrb[0].mxu0
    %v5975 = vadd.f32 0.0, %v5974
    %v5976 = vpop.f32.mrb[0].mxu0
    %5977 = vmatprep.mubr.f32.mxu0 0.0
    %5978 = vmatmul.mubr.f32.gmra.mrb[0].mxu0 %v5906
    %v5979 = vpop.f32.mrb[0].mxu0
    %v5980 = vadd.f32 0.0, %v5979
    %v5981 = vpop.f32.mrb[0].mxu0
    %5982 = vdwg.mxu0
    %v5983 = vadd.f32 %v5897, %v5975
    %v5984 = vadd.f32 %v5898, %v5980
    %s5985 = scalar_lea.vmem %s5, 144
    %v5986 = vld [vmem:[%s5985] sm:$0xff]
    %v5987 = vld [vmem:[%s5985 + $0x8] sm:$0xff]
    %v5989 = vsel %vm5220, %v5201, 0
    %v5992 = vsel %vm5220, %v5202, 0
    %5994 = vmatprep.subr.mxu0 0.0
    %5995 = vmatpush1.msra.mxu0 %v5986
    %5996 = vmatprep.subr.mxu0 0.0
    %5997 = vmatpush1.msra.mxu0 %v5987
    %5998 = vmatprep.subr.mxu0 0.0
    %5999 = vmatpush1.msra.mxu0 0.0
    %6000 = vmatprep.subr.mxu0 0.0
    %6001 = vmatpush1.msra.mxu0 0.0
    %6002 = vmatprep.subr.mxu0 0.0
    %6003 = vmatpush1.msra.mxu0 0.0
    %6004 = vmatprep.subr.mxu0 0.0
    %6005 = vmatpush1.msra.mxu0 0.0
    %6006 = vmatprep.subr.mxu0 0.0
    %6007 = vmatpush1.msra.mxu0 0.0
    %6008 = vmatprep.subr.mxu0 0.0
    %6009 = vmatpush1.msra.mxu0 0.0
    %6010 = vmatprep.subr.mxu0 0.0
    %6011 = vmatpush1.msra.mxu0 0.0
    %6012 = vmatprep.subr.mxu0 0.0
    %6013 = vmatpush1.msra.mxu0 0.0
    %6014 = vmatprep.subr.mxu0 0.0
    %6015 = vmatpush1.msra.mxu0 0.0
    %6016 = vmatprep.subr.mxu0 0.0
    %6017 = vmatpush1.msra.mxu0 0.0
    %6018 = vmatprep.subr.mxu0 0.0
    %6019 = vmatpush1.msra.mxu0 0.0
    %6020 = vmatprep.subr.mxu0 0.0
    %6021 = vmatpush1.msra.mxu0 0.0
    %6022 = vmatprep.subr.mxu0 0.0
    %6023 = vmatpush1.msra.mxu0 0.0
    %6024 = vmatprep.subr.mxu0 0.0
    %6025 = vmatpush1.msra.mxu0 0.0
    %6026 = vmatprep.subr.mxu0 0.0
    %6027 = vmatpush1.msra.mxu0 0.0
    %6028 = vmatprep.subr.mxu0 0.0
    %6029 = vmatpush1.msra.mxu0 0.0
    %6030 = vmatprep.subr.mxu0 0.0
    %6031 = vmatpush1.msra.mxu0 0.0
    %6032 = vmatprep.subr.mxu0 0.0
    %6033 = vmatpush1.msra.mxu0 0.0
    %6034 = vmatprep.subr.mxu0 0.0
    %6035 = vmatpush1.msra.mxu0 0.0
    %6036 = vmatprep.subr.mxu0 0.0
    %6037 = vmatpush1.msra.mxu0 0.0
    %6038 = vmatprep.subr.mxu0 0.0
    %6039 = vmatpush1.msra.mxu0 0.0
    %6040 = vmatprep.subr.mxu0 0.0
    %6041 = vmatpush1.msra.mxu0 0.0
    %6042 = vmatprep.subr.mxu0 0.0
    %6043 = vmatpush1.msra.mxu0 0.0
    %6044 = vmatprep.subr.mxu0 0.0
    %6045 = vmatpush1.msra.mxu0 0.0
    %6046 = vmatprep.subr.mxu0 0.0
    %6047 = vmatpush1.msra.mxu0 0.0
    %6048 = vmatprep.subr.mxu0 0.0
    %6049 = vmatpush1.msra.mxu0 0.0
    %6050 = vmatprep.subr.mxu0 0.0
    %6051 = vmatpush1.msra.mxu0 0.0
    %6052 = vmatprep.subr.mxu0 0.0
    %6053 = vmatpush1.msra.mxu0 0.0
    %6054 = vmatprep.subr.mxu0 0.0
    %6055 = vmatpush1.msra.mxu0 0.0
    %6056 = vmatprep.subr.mxu0 0.0
    %6057 = vmatpush1.msra.mxu0 0.0
    %6058 = vmatprep.mubr.f32.mxu0 0.0
    %6059 = vmatmul.mubr.f32.gmra.mrb[0].mxu0 %v5989
    %v6060 = vpop.f32.mrb[0].mxu0
    %v6061 = vadd.f32 0.0, %v6060
    %v6062 = vpop.f32.mrb[0].mxu0
    %6063 = vmatprep.mubr.f32.mxu0 0.0
    %6064 = vmatmul.mubr.f32.gmra.mrb[0].mxu0 %v5992
    %v6065 = vpop.f32.mrb[0].mxu0
    %v6066 = vadd.f32 0.0, %v6065
    %v6067 = vpop.f32.mrb[0].mxu0
    %6068 = vdwg.mxu0
    %v6069 = vadd.f32 %v5983, %v6061
    %v6070 = vadd.f32 %v5984, %v6066
    %s6071 = scalar_lea.vmem %s5, 160
    %v6072 = vld [vmem:[%s6071] sm:$0xff]
    %v6073 = vld [vmem:[%s6071 + $0x8] sm:$0xff]
    %v6075 = vsel %vm5220, %v5203, 0
    %v6078 = vsel %vm5220, %v5204, 0
    %6080 = vmatprep.subr.mxu0 0.0
    %6081 = vmatpush1.msra.mxu0 %v6072
    %6082 = vmatprep.subr.mxu0 0.0
    %6083 = vmatpush1.msra.mxu0 %v6073
    %6084 = vmatprep.subr.mxu0 0.0
    %6085 = vmatpush1.msra.mxu0 0.0
    %6086 = vmatprep.subr.mxu0 0.0
    %6087 = vmatpush1.msra.mxu0 0.0
    %6088 = vmatprep.subr.mxu0 0.0
    %6089 = vmatpush1.msra.mxu0 0.0
    %6090 = vmatprep.subr.mxu0 0.0
    %6091 = vmatpush1.msra.mxu0 0.0
    %6092 = vmatprep.subr.mxu0 0.0
    %6093 = vmatpush1.msra.mxu0 0.0
    %6094 = vmatprep.subr.mxu0 0.0
    %6095 = vmatpush1.msra.mxu0 0.0
    %6096 = vmatprep.subr.mxu0 0.0
    %6097 = vmatpush1.msra.mxu0 0.0
    %6098 = vmatprep.subr.mxu0 0.0
    %6099 = vmatpush1.msra.mxu0 0.0
    %6100 = vmatprep.subr.mxu0 0.0
    %6101 = vmatpush1.msra.mxu0 0.0
    %6102 = vmatprep.subr.mxu0 0.0
    %6103 = vmatpush1.msra.mxu0 0.0
    %6104 = vmatprep.subr.mxu0 0.0
    %6105 = vmatpush1.msra.mxu0 0.0
    %6106 = vmatprep.subr.mxu0 0.0
    %6107 = vmatpush1.msra.mxu0 0.0
    %6108 = vmatprep.subr.mxu0 0.0
    %6109 = vmatpush1.msra.mxu0 0.0
    %6110 = vmatprep.subr.mxu0 0.0
    %6111 = vmatpush1.msra.mxu0 0.0
    %6112 = vmatprep.subr.mxu0 0.0
    %6113 = vmatpush1.msra.mxu0 0.0
    %6114 = vmatprep.subr.mxu0 0.0
    %6115 = vmatpush1.msra.mxu0 0.0
    %6116 = vmatprep.subr.mxu0 0.0
    %6117 = vmatpush1.msra.mxu0 0.0
    %6118 = vmatprep.subr.mxu0 0.0
    %6119 = vmatpush1.msra.mxu0 0.0
    %6120 = vmatprep.subr.mxu0 0.0
    %6121 = vmatpush1.msra.mxu0 0.0
    %6122 = vmatprep.subr.mxu0 0.0
    %6123 = vmatpush1.msra.mxu0 0.0
    %6124 = vmatprep.subr.mxu0 0.0
    %6125 = vmatpush1.msra.mxu0 0.0
    %6126 = vmatprep.subr.mxu0 0.0
    %6127 = vmatpush1.msra.mxu0 0.0
    %6128 = vmatprep.subr.mxu0 0.0
    %6129 = vmatpush1.msra.mxu0 0.0
    %6130 = vmatprep.subr.mxu0 0.0
    %6131 = vmatpush1.msra.mxu0 0.0
    %6132 = vmatprep.subr.mxu0 0.0
    %6133 = vmatpush1.msra.mxu0 0.0
    %6134 = vmatprep.subr.mxu0 0.0
    %6135 = vmatpush1.msra.mxu0 0.0
    %6136 = vmatprep.subr.mxu0 0.0
    %6137 = vmatpush1.msra.mxu0 0.0
    %6138 = vmatprep.subr.mxu0 0.0
    %6139 = vmatpush1.msra.mxu0 0.0
    %6140 = vmatprep.subr.mxu0 0.0
    %6141 = vmatpush1.msra.mxu0 0.0
    %6142 = vmatprep.subr.mxu0 0.0
    %6143 = vmatpush1.msra.mxu0 0.0
    %6144 = vmatprep.mubr.f32.mxu0 0.0
    %6145 = vmatmul.mubr.f32.gmra.mrb[0].mxu0 %v6075
    %v6146 = vpop.f32.mrb[0].mxu0
    %v6147 = vadd.f32 0.0, %v6146
    %v6148 = vpop.f32.mrb[0].mxu0
    %6149 = vmatprep.mubr.f32.mxu0 0.0
    %6150 = vmatmul.mubr.f32.gmra.mrb[0].mxu0 %v6078
    %v6151 = vpop.f32.mrb[0].mxu0
    %v6152 = vadd.f32 0.0, %v6151
    %v6153 = vpop.f32.mrb[0].mxu0
    %6154 = vdwg.mxu0
    %v6155 = vadd.f32 %v6069, %v6147
    %v6156 = vadd.f32 %v6070, %v6152
    %s6157 = scalar_lea.vmem %s5, 176
    %v6158 = vld [vmem:[%s6157] sm:$0xff]
    %v6159 = vld [vmem:[%s6157 + $0x8] sm:$0xff]
    %v6161 = vsel %vm5220, %v5205, 0
    %v6164 = vsel %vm5220, %v5206, 0
    %6166 = vmatprep.subr.mxu0 0.0
    %6167 = vmatpush1.msra.mxu0 %v6158
    %6168 = vmatprep.subr.mxu0 0.0
    %6169 = vmatpush1.msra.mxu0 %v6159
    %6170 = vmatprep.subr.mxu0 0.0
    %6171 = vmatpush1.msra.mxu0 0.0
    %6172 = vmatprep.subr.mxu0 0.0
    %6173 = vmatpush1.msra.mxu0 0.0
    %6174 = vmatprep.subr.mxu0 0.0
    %6175 = vmatpush1.msra.mxu0 0.0
    %6176 = vmatprep.subr.mxu0 0.0
    %6177 = vmatpush1.msra.mxu0 0.0
    %6178 = vmatprep.subr.mxu0 0.0
    %6179 = vmatpush1.msra.mxu0 0.0
    %6180 = vmatprep.subr.mxu0 0.0
    %6181 = vmatpush1.msra.mxu0 0.0
    %6182 = vmatprep.subr.mxu0 0.0
    %6183 = vmatpush1.msra.mxu0 0.0
    %6184 = vmatprep.subr.mxu0 0.0
    %6185 = vmatpush1.msra.mxu0 0.0
    %6186 = vmatprep.subr.mxu0 0.0
    %6187 = vmatpush1.msra.mxu0 0.0
    %6188 = vmatprep.subr.mxu0 0.0
    %6189 = vmatpush1.msra.mxu0 0.0
    %6190 = vmatprep.subr.mxu0 0.0
    %6191 = vmatpush1.msra.mxu0 0.0
    %6192 = vmatprep.subr.mxu0 0.0
    %6193 = vmatpush1.msra.mxu0 0.0
    %6194 = vmatprep.subr.mxu0 0.0
    %6195 = vmatpush1.msra.mxu0 0.0
    %6196 = vmatprep.subr.mxu0 0.0
    %6197 = vmatpush1.msra.mxu0 0.0
    %6198 = vmatprep.subr.mxu0 0.0
    %6199 = vmatpush1.msra.mxu0 0.0
    %6200 = vmatprep.subr.mxu0 0.0
    %6201 = vmatpush1.msra.mxu0 0.0
    %6202 = vmatprep.subr.mxu0 0.0
    %6203 = vmatpush1.msra.mxu0 0.0
    %6204 = vmatprep.subr.mxu0 0.0
    %6205 = vmatpush1.msra.mxu0 0.0
    %6206 = vmatprep.subr.mxu0 0.0
    %6207 = vmatpush1.msra.mxu0 0.0
    %6208 = vmatprep.subr.mxu0 0.0
    %6209 = vmatpush1.msra.mxu0 0.0
    %6210 = vmatprep.subr.mxu0 0.0
    %6211 = vmatpush1.msra.mxu0 0.0
    %6212 = vmatprep.subr.mxu0 0.0
    %6213 = vmatpush1.msra.mxu0 0.0
    %6214 = vmatprep.subr.mxu0 0.0
    %6215 = vmatpush1.msra.mxu0 0.0
    %6216 = vmatprep.subr.mxu0 0.0
    %6217 = vmatpush1.msra.mxu0 0.0
    %6218 = vmatprep.subr.mxu0 0.0
    %6219 = vmatpush1.msra.mxu0 0.0
    %6220 = vmatprep.subr.mxu0 0.0
    %6221 = vmatpush1.msra.mxu0 0.0
    %6222 = vmatprep.subr.mxu0 0.0
    %6223 = vmatpush1.msra.mxu0 0.0
    %6224 = vmatprep.subr.mxu0 0.0
    %6225 = vmatpush1.msra.mxu0 0.0
    %6226 = vmatprep.subr.mxu0 0.0
    %6227 = vmatpush1.msra.mxu0 0.0
    %6228 = vmatprep.subr.mxu0 0.0
    %6229 = vmatpush1.msra.mxu0 0.0
    %6230 = vmatprep.mubr.f32.mxu0 0.0
    %6231 = vmatmul.mubr.f32.gmra.mrb[0].mxu0 %v6161
    %v6232 = vpop.f32.mrb[0].mxu0
    %v6233 = vadd.f32 0.0, %v6232
    %v6234 = vpop.f32.mrb[0].mxu0
    %6235 = vmatprep.mubr.f32.mxu0 0.0
    %6236 = vmatmul.mubr.f32.gmra.mrb[0].mxu0 %v6164
    %v6237 = vpop.f32.mrb[0].mxu0
    %v6238 = vadd.f32 0.0, %v6237
    %v6239 = vpop.f32.mrb[0].mxu0
    %6240 = vdwg.mxu0
    %v6241 = vadd.f32 %v6155, %v6233
    %v6242 = vadd.f32 %v6156, %v6238
    %s6243 = scalar_lea.vmem %s5, 192
    %v6244 = vld [vmem:[%s6243] sm:$0xff]
    %v6245 = vld [vmem:[%s6243 + $0x8] sm:$0xff]
    %v6247 = vsel %vm5220, %v5207, 0
    %v6250 = vsel %vm5220, %v5208, 0
    %6252 = vmatprep.subr.mxu0 0.0
    %6253 = vmatpush1.msra.mxu0 %v6244
    %6254 = vmatprep.subr.mxu0 0.0
    %6255 = vmatpush1.msra.mxu0 %v6245
    %6256 = vmatprep.subr.mxu0 0.0
    %6257 = vmatpush1.msra.mxu0 0.0
    %6258 = vmatprep.subr.mxu0 0.0
    %6259 = vmatpush1.msra.mxu0 0.0
    %6260 = vmatprep.subr.mxu0 0.0
    %6261 = vmatpush1.msra.mxu0 0.0
    %6262 = vmatprep.subr.mxu0 0.0
    %6263 = vmatpush1.msra.mxu0 0.0
    %6264 = vmatprep.subr.mxu0 0.0
    %6265 = vmatpush1.msra.mxu0 0.0
    %6266 = vmatprep.subr.mxu0 0.0
    %6267 = vmatpush1.msra.mxu0 0.0
    %6268 = vmatprep.subr.mxu0 0.0
    %6269 = vmatpush1.msra.mxu0 0.0
    %6270 = vmatprep.subr.mxu0 0.0
    %6271 = vmatpush1.msra.mxu0 0.0
    %6272 = vmatprep.subr.mxu0 0.0
    %6273 = vmatpush1.msra.mxu0 0.0
    %6274 = vmatprep.subr.mxu0 0.0
    %6275 = vmatpush1.msra.mxu0 0.0
    %6276 = vmatprep.subr.mxu0 0.0
    %6277 = vmatpush1.msra.mxu0 0.0
    %6278 = vmatprep.subr.mxu0 0.0
    %6279 = vmatpush1.msra.mxu0 0.0
    %6280 = vmatprep.subr.mxu0 0.0
    %6281 = vmatpush1.msra.mxu0 0.0
    %6282 = vmatprep.subr.mxu0 0.0
    %6283 = vmatpush1.msra.mxu0 0.0
    %6284 = vmatprep.subr.mxu0 0.0
    %6285 = vmatpush1.msra.mxu0 0.0
    %6286 = vmatprep.subr.mxu0 0.0
    %6287 = vmatpush1.msra.mxu0 0.0
    %6288 = vmatprep.subr.mxu0 0.0
    %6289 = vmatpush1.msra.mxu0 0.0
    %6290 = vmatprep.subr.mxu0 0.0
    %6291 = vmatpush1.msra.mxu0 0.0
    %6292 = vmatprep.subr.mxu0 0.0
    %6293 = vmatpush1.msra.mxu0 0.0
    %6294 = vmatprep.subr.mxu0 0.0
    %6295 = vmatpush1.msra.mxu0 0.0
    %6296 = vmatprep.subr.mxu0 0.0
    %6297 = vmatpush1.msra.mxu0 0.0
    %6298 = vmatprep.subr.mxu0 0.0
    %6299 = vmatpush1.msra.mxu0 0.0
    %6300 = vmatprep.subr.mxu0 0.0
    %6301 = vmatpush1.msra.mxu0 0.0
    %6302 = vmatprep.subr.mxu0 0.0
    %6303 = vmatpush1.msra.mxu0 0.0
    %6304 = vmatprep.subr.mxu0 0.0
    %6305 = vmatpush1.msra.mxu0 0.0
    %6306 = vmatprep.subr.mxu0 0.0
    %6307 = vmatpush1.msra.mxu0 0.0
    %6308 = vmatprep.subr.mxu0 0.0
    %6309 = vmatpush1.msra.mxu0 0.0
    %6310 = vmatprep.subr.mxu0 0.0
    %6311 = vmatpush1.msra.mxu0 0.0
    %6312 = vmatprep.subr.mxu0 0.0
    %6313 = vmatpush1.msra.mxu0 0.0
    %6314 = vmatprep.subr.mxu0 0.0
    %6315 = vmatpush1.msra.mxu0 0.0
    %6316 = vmatprep.mubr.f32.mxu0 0.0
    %6317 = vmatmul.mubr.f32.gmra.mrb[0].mxu0 %v6247
    %v6318 = vpop.f32.mrb[0].mxu0
    %v6319 = vadd.f32 0.0, %v6318
    %v6320 = vpop.f32.mrb[0].mxu0
    %6321 = vmatprep.mubr.f32.mxu0 0.0
    %6322 = vmatmul.mubr.f32.gmra.mrb[0].mxu0 %v6250
    %v6323 = vpop.f32.mrb[0].mxu0
    %v6324 = vadd.f32 0.0, %v6323
    %v6325 = vpop.f32.mrb[0].mxu0
    %6326 = vdwg.mxu0
    %v6327 = vadd.f32 %v6241, %v6319
    %v6328 = vadd.f32 %v6242, %v6324
    %s6329 = scalar_lea.vmem %s5, 208
    %v6330 = vld [vmem:[%s6329] sm:$0xff]
    %v6331 = vld [vmem:[%s6329 + $0x8] sm:$0xff]
    %v6333 = vsel %vm5220, %v5209, 0
    %v6336 = vsel %vm5220, %v5210, 0
    %6338 = vmatprep.subr.mxu0 0.0
    %6339 = vmatpush1.msra.mxu0 %v6330
    %6340 = vmatprep.subr.mxu0 0.0
    %6341 = vmatpush1.msra.mxu0 %v6331
    %6342 = vmatprep.subr.mxu0 0.0
    %6343 = vmatpush1.msra.mxu0 0.0
    %6344 = vmatprep.subr.mxu0 0.0
    %6345 = vmatpush1.msra.mxu0 0.0
    %6346 = vmatprep.subr.mxu0 0.0
    %6347 = vmatpush1.msra.mxu0 0.0
    %6348 = vmatprep.subr.mxu0 0.0
    %6349 = vmatpush1.msra.mxu0 0.0
    %6350 = vmatprep.subr.mxu0 0.0
    %6351 = vmatpush1.msra.mxu0 0.0
    %6352 = vmatprep.subr.mxu0 0.0
    %6353 = vmatpush1.msra.mxu0 0.0
    %6354 = vmatprep.subr.mxu0 0.0
    %6355 = vmatpush1.msra.mxu0 0.0
    %6356 = vmatprep.subr.mxu0 0.0
    %6357 = vmatpush1.msra.mxu0 0.0
    %6358 = vmatprep.subr.mxu0 0.0
    %6359 = vmatpush1.msra.mxu0 0.0
    %6360 = vmatprep.subr.mxu0 0.0
    %6361 = vmatpush1.msra.mxu0 0.0
    %6362 = vmatprep.subr.mxu0 0.0
    %6363 = vmatpush1.msra.mxu0 0.0
    %6364 = vmatprep.subr.mxu0 0.0
    %6365 = vmatpush1.msra.mxu0 0.0
    %6366 = vmatprep.subr.mxu0 0.0
    %6367 = vmatpush1.msra.mxu0 0.0
    %6368 = vmatprep.subr.mxu0 0.0
    %6369 = vmatpush1.msra.mxu0 0.0
    %6370 = vmatprep.subr.mxu0 0.0
    %6371 = vmatpush1.msra.mxu0 0.0
    %6372 = vmatprep.subr.mxu0 0.0
    %6373 = vmatpush1.msra.mxu0 0.0
    %6374 = vmatprep.subr.mxu0 0.0
    %6375 = vmatpush1.msra.mxu0 0.0
    %6376 = vmatprep.subr.mxu0 0.0
    %6377 = vmatpush1.msra.mxu0 0.0
    %6378 = vmatprep.subr.mxu0 0.0
    %6379 = vmatpush1.msra.mxu0 0.0
    %6380 = vmatprep.subr.mxu0 0.0
    %6381 = vmatpush1.msra.mxu0 0.0
    %6382 = vmatprep.subr.mxu0 0.0
    %6383 = vmatpush1.msra.mxu0 0.0
    %6384 = vmatprep.subr.mxu0 0.0
    %6385 = vmatpush1.msra.mxu0 0.0
    %6386 = vmatprep.subr.mxu0 0.0
    %6387 = vmatpush1.msra.mxu0 0.0
    %6388 = vmatprep.subr.mxu0 0.0
    %6389 = vmatpush1.msra.mxu0 0.0
    %6390 = vmatprep.subr.mxu0 0.0
    %6391 = vmatpush1.msra.mxu0 0.0
    %6392 = vmatprep.subr.mxu0 0.0
    %6393 = vmatpush1.msra.mxu0 0.0
    %6394 = vmatprep.subr.mxu0 0.0
    %6395 = vmatpush1.msra.mxu0 0.0
    %6396 = vmatprep.subr.mxu0 0.0
    %6397 = vmatpush1.msra.mxu0 0.0
    %6398 = vmatprep.subr.mxu0 0.0
    %6399 = vmatpush1.msra.mxu0 0.0
    %6400 = vmatprep.subr.mxu0 0.0
    %6401 = vmatpush1.msra.mxu0 0.0
    %6402 = vmatprep.mubr.f32.mxu0 0.0
    %6403 = vmatmul.mubr.f32.gmra.mrb[0].mxu0 %v6333
    %v6404 = vpop.f32.mrb[0].mxu0
    %v6405 = vadd.f32 0.0, %v6404
    %v6406 = vpop.f32.mrb[0].mxu0
    %6407 = vmatprep.mubr.f32.mxu0 0.0
    %6408 = vmatmul.mubr.f32.gmra.mrb[0].mxu0 %v6336
    %v6409 = vpop.f32.mrb[0].mxu0
    %v6410 = vadd.f32 0.0, %v6409
    %v6411 = vpop.f32.mrb[0].mxu0
    %6412 = vdwg.mxu0
    %v6413 = vadd.f32 %v6327, %v6405
    %v6414 = vadd.f32 %v6328, %v6410
    %s6415 = scalar_lea.vmem %s5, 224
    %v6416 = vld [vmem:[%s6415] sm:$0xff]
    %v6417 = vld [vmem:[%s6415 + $0x8] sm:$0xff]
    %v6419 = vsel %vm5220, %v5211, 0
    %v6422 = vsel %vm5220, %v5212, 0
    %6424 = vmatprep.subr.mxu0 0.0
    %6425 = vmatpush1.msra.mxu0 %v6416
    %6426 = vmatprep.subr.mxu0 0.0
    %6427 = vmatpush1.msra.mxu0 %v6417
    %6428 = vmatprep.subr.mxu0 0.0
    %6429 = vmatpush1.msra.mxu0 0.0
    %6430 = vmatprep.subr.mxu0 0.0
    %6431 = vmatpush1.msra.mxu0 0.0
    %6432 = vmatprep.subr.mxu0 0.0
    %6433 = vmatpush1.msra.mxu0 0.0
    %6434 = vmatprep.subr.mxu0 0.0
    %6435 = vmatpush1.msra.mxu0 0.0
    %6436 = vmatprep.subr.mxu0 0.0
    %6437 = vmatpush1.msra.mxu0 0.0
    %6438 = vmatprep.subr.mxu0 0.0
    %6439 = vmatpush1.msra.mxu0 0.0
    %6440 = vmatprep.subr.mxu0 0.0
    %6441 = vmatpush1.msra.mxu0 0.0
    %6442 = vmatprep.subr.mxu0 0.0
    %6443 = vmatpush1.msra.mxu0 0.0
    %6444 = vmatprep.subr.mxu0 0.0
    %6445 = vmatpush1.msra.mxu0 0.0
    %6446 = vmatprep.subr.mxu0 0.0
    %6447 = vmatpush1.msra.mxu0 0.0
    %6448 = vmatprep.subr.mxu0 0.0
    %6449 = vmatpush1.msra.mxu0 0.0
    %6450 = vmatprep.subr.mxu0 0.0
    %6451 = vmatpush1.msra.mxu0 0.0
    %6452 = vmatprep.subr.mxu0 0.0
    %6453 = vmatpush1.msra.mxu0 0.0
    %6454 = vmatprep.subr.mxu0 0.0
    %6455 = vmatpush1.msra.mxu0 0.0
    %6456 = vmatprep.subr.mxu0 0.0
    %6457 = vmatpush1.msra.mxu0 0.0
    %6458 = vmatprep.subr.mxu0 0.0
    %6459 = vmatpush1.msra.mxu0 0.0
    %6460 = vmatprep.subr.mxu0 0.0
    %6461 = vmatpush1.msra.mxu0 0.0
    %6462 = vmatprep.subr.mxu0 0.0
    %6463 = vmatpush1.msra.mxu0 0.0
    %6464 = vmatprep.subr.mxu0 0.0
    %6465 = vmatpush1.msra.mxu0 0.0
    %6466 = vmatprep.subr.mxu0 0.0
    %6467 = vmatpush1.msra.mxu0 0.0
    %6468 = vmatprep.subr.mxu0 0.0
    %6469 = vmatpush1.msra.mxu0 0.0
    %6470 = vmatprep.subr.mxu0 0.0
    %6471 = vmatpush1.msra.mxu0 0.0
    %6472 = vmatprep.subr.mxu0 0.0
    %6473 = vmatpush1.msra.mxu0 0.0
    %6474 = vmatprep.subr.mxu0 0.0
    %6475 = vmatpush1.msra.mxu0 0.0
    %6476 = vmatprep.subr.mxu0 0.0
    %6477 = vmatpush1.msra.mxu0 0.0
    %6478 = vmatprep.subr.mxu0 0.0
    %6479 = vmatpush1.msra.mxu0 0.0
    %6480 = vmatprep.subr.mxu0 0.0
    %6481 = vmatpush1.msra.mxu0 0.0
    %6482 = vmatprep.subr.mxu0 0.0
    %6483 = vmatpush1.msra.mxu0 0.0
    %6484 = vmatprep.subr.mxu0 0.0
    %6485 = vmatpush1.msra.mxu0 0.0
    %6486 = vmatprep.subr.mxu0 0.0
    %6487 = vmatpush1.msra.mxu0 0.0
    %6488 = vmatprep.mubr.f32.mxu0 0.0
    %6489 = vmatmul.mubr.f32.gmra.mrb[0].mxu0 %v6419
    %v6490 = vpop.f32.mrb[0].mxu0
    %v6491 = vadd.f32 0.0, %v6490
    %v6492 = vpop.f32.mrb[0].mxu0
    %6493 = vmatprep.mubr.f32.mxu0 0.0
    %6494 = vmatmul.mubr.f32.gmra.mrb[0].mxu0 %v6422
    %v6495 = vpop.f32.mrb[0].mxu0
    %v6496 = vadd.f32 0.0, %v6495
    %v6497 = vpop.f32.mrb[0].mxu0
    %6498 = vdwg.mxu0
    %v6499 = vadd.f32 %v6413, %v6491
    %v6500 = vadd.f32 %v6414, %v6496
    %s6501 = scalar_lea.vmem %s5, 240
    %v6502 = vld [vmem:[%s6501] sm:$0xff]
    %v6503 = vld [vmem:[%s6501 + $0x8] sm:$0xff]
    %v6505 = vsel %vm5220, %v5213, 0
    %v6508 = vsel %vm5220, %v5214, 0
    %6510 = vmatprep.subr.mxu0 0.0
    %6511 = vmatpush1.msra.mxu0 %v6502
    %6512 = vmatprep.subr.mxu0 0.0
    %6513 = vmatpush1.msra.mxu0 %v6503
    %6514 = vmatprep.subr.mxu0 0.0
    %6515 = vmatpush1.msra.mxu0 0.0
    %6516 = vmatprep.subr.mxu0 0.0
    %6517 = vmatpush1.msra.mxu0 0.0
    %6518 = vmatprep.subr.mxu0 0.0
    %6519 = vmatpush1.msra.mxu0 0.0
    %6520 = vmatprep.subr.mxu0 0.0
    %6521 = vmatpush1.msra.mxu0 0.0
    %6522 = vmatprep.subr.mxu0 0.0
    %6523 = vmatpush1.msra.mxu0 0.0
    %6524 = vmatprep.subr.mxu0 0.0
    %6525 = vmatpush1.msra.mxu0 0.0
    %6526 = vmatprep.subr.mxu0 0.0
    %6527 = vmatpush1.msra.mxu0 0.0
    %6528 = vmatprep.subr.mxu0 0.0
    %6529 = vmatpush1.msra.mxu0 0.0
    %6530 = vmatprep.subr.mxu0 0.0
    %6531 = vmatpush1.msra.mxu0 0.0
    %6532 = vmatprep.subr.mxu0 0.0
    %6533 = vmatpush1.msra.mxu0 0.0
    %6534 = vmatprep.subr.mxu0 0.0
    %6535 = vmatpush1.msra.mxu0 0.0
    %6536 = vmatprep.subr.mxu0 0.0
    %6537 = vmatpush1.msra.mxu0 0.0
    %6538 = vmatprep.subr.mxu0 0.0
    %6539 = vmatpush1.msra.mxu0 0.0
    %6540 = vmatprep.subr.mxu0 0.0
    %6541 = vmatpush1.msra.mxu0 0.0
    %6542 = vmatprep.subr.mxu0 0.0
    %6543 = vmatpush1.msra.mxu0 0.0
    %6544 = vmatprep.subr.mxu0 0.0
    %6545 = vmatpush1.msra.mxu0 0.0
    %6546 = vmatprep.subr.mxu0 0.0
    %6547 = vmatpush1.msra.mxu0 0.0
    %6548 = vmatprep.subr.mxu0 0.0
    %6549 = vmatpush1.msra.mxu0 0.0
    %6550 = vmatprep.subr.mxu0 0.0
    %6551 = vmatpush1.msra.mxu0 0.0
    %6552 = vmatprep.subr.mxu0 0.0
    %6553 = vmatpush1.msra.mxu0 0.0
    %6554 = vmatprep.subr.mxu0 0.0
    %6555 = vmatpush1.msra.mxu0 0.0
    %6556 = vmatprep.subr.mxu0 0.0
    %6557 = vmatpush1.msra.mxu0 0.0
    %6558 = vmatprep.subr.mxu0 0.0
    %6559 = vmatpush1.msra.mxu0 0.0
    %6560 = vmatprep.subr.mxu0 0.0
    %6561 = vmatpush1.msra.mxu0 0.0
    %6562 = vmatprep.subr.mxu0 0.0
    %6563 = vmatpush1.msra.mxu0 0.0
    %6564 = vmatprep.subr.mxu0 0.0
    %6565 = vmatpush1.msra.mxu0 0.0
    %6566 = vmatprep.subr.mxu0 0.0
    %6567 = vmatpush1.msra.mxu0 0.0
    %6568 = vmatprep.subr.mxu0 0.0
    %6569 = vmatpush1.msra.mxu0 0.0
    %6570 = vmatprep.subr.mxu0 0.0
    %6571 = vmatpush1.msra.mxu0 0.0
    %6572 = vmatprep.subr.mxu0 0.0
    %6573 = vmatpush1.msra.mxu0 0.0
    %6574 = vmatprep.mubr.f32.mxu0 0.0
    %6575 = vmatmul.mubr.f32.gmra.mrb[0].mxu0 %v6505
    %v6576 = vpop.f32.mrb[0].mxu0
    %v6577 = vadd.f32 0.0, %v6576
    %v6578 = vpop.f32.mrb[0].mxu0
    %6579 = vmatprep.mubr.f32.mxu0 0.0
    %6580 = vmatmul.mubr.f32.gmra.mrb[0].mxu0 %v6508
    %v6581 = vpop.f32.mrb[0].mxu0
    %v6582 = vadd.f32 0.0, %v6581
    %v6583 = vpop.f32.mrb[0].mxu0
    %6584 = vdwg.mxu0
    %v6585 = vadd.f32 %v6499, %v6577
    %v6586 = vadd.f32 %v6500, %v6582
    %v6587 = vld [vmem:[%s6] sm:$0x1]
    %v6589 = vlaneseq
    %v6590 = vshrl.u32 %v6589, 7
    %v6591 = vsub.s32 0, %v6590
    %v6592 = vrot.slane %v6587, %v6591
    %v6594 = vadd.f32 %v6585, %v6592
    %v6595 = vadd.f32 %v6586, %v6592
    %v6596 = vld [vmem:[%s7] sm:$0xff]
    %v6597 = vld [vmem:[%s7 + $0x8] sm:$0xff]
    %v6598 = vld [vmem:[%s7 + $0x10] sm:$0xff]
    %v6599 = vld [vmem:[%s7 + $0x18] sm:$0xff]
    %vm6600 = vcmask 261120
    %v6602 = vsel %vm6600, 0.0, 0
    %6604 = vmatprep.subr.mxu0 0.0
    %6605 = vmatpush1.msra.mxu0 %v6596
    %6606 = vmatprep.subr.mxu0 0.0
    %6607 = vmatpush1.msra.mxu0 %v6597
    %6608 = vmatprep.subr.mxu0 0.0
    %6609 = vmatpush1.msra.mxu0 %v6598
    %6610 = vmatprep.subr.mxu0 0.0
    %6611 = vmatpush1.msra.mxu0 %v6599
    %6612 = vmatprep.subr.mxu0 0.0
    %6613 = vmatpush1.msra.mxu0 0.0
    %6614 = vmatprep.subr.mxu0 0.0
    %6615 = vmatpush1.msra.mxu0 0.0
    %6616 = vmatprep.subr.mxu0 0.0
    %6617 = vmatpush1.msra.mxu0 0.0
    %6618 = vmatprep.subr.mxu0 0.0
    %6619 = vmatpush1.msra.mxu0 0.0
    %6620 = vmatprep.subr.mxu0 0.0
    %6621 = vmatpush1.msra.mxu0 0.0
    %6622 = vmatprep.subr.mxu0 0.0
    %6623 = vmatpush1.msra.mxu0 0.0
    %6624 = vmatprep.subr.mxu0 0.0
    %6625 = vmatpush1.msra.mxu0 0.0
    %6626 = vmatprep.subr.mxu0 0.0
    %6627 = vmatpush1.msra.mxu0 0.0
    %6628 = vmatprep.subr.mxu0 0.0
    %6629 = vmatpush1.msra.mxu0 0.0
    %6630 = vmatprep.subr.mxu0 0.0
    %6631 = vmatpush1.msra.mxu0 0.0
    %6632 = vmatprep.subr.mxu0 0.0
    %6633 = vmatpush1.msra.mxu0 0.0
    %6634 = vmatprep.subr.mxu0 0.0
    %6635 = vmatpush1.msra.mxu0 0.0
    %6636 = vmatprep.subr.mxu0 0.0
    %6637 = vmatpush1.msra.mxu0 0.0
    %6638 = vmatprep.subr.mxu0 0.0
    %6639 = vmatpush1.msra.mxu0 0.0
    %6640 = vmatprep.subr.mxu0 0.0
    %6641 = vmatpush1.msra.mxu0 0.0
    %6642 = vmatprep.subr.mxu0 0.0
    %6643 = vmatpush1.msra.mxu0 0.0
    %6644 = vmatprep.subr.mxu0 0.0
    %6645 = vmatpush1.msra.mxu0 0.0
    %6646 = vmatprep.subr.mxu0 0.0
    %6647 = vmatpush1.msra.mxu0 0.0
    %6648 = vmatprep.subr.mxu0 0.0
    %6649 = vmatpush1.msra.mxu0 0.0
    %6650 = vmatprep.subr.mxu0 0.0
    %6651 = vmatpush1.msra.mxu0 0.0
    %6652 = vmatprep.subr.mxu0 0.0
    %6653 = vmatpush1.msra.mxu0 0.0
    %6654 = vmatprep.subr.mxu0 0.0
    %6655 = vmatpush1.msra.mxu0 0.0
    %6656 = vmatprep.subr.mxu0 0.0
    %6657 = vmatpush1.msra.mxu0 0.0
    %6658 = vmatprep.subr.mxu0 0.0
    %6659 = vmatpush1.msra.mxu0 0.0
    %6660 = vmatprep.subr.mxu0 0.0
    %6661 = vmatpush1.msra.mxu0 0.0
    %6662 = vmatprep.subr.mxu0 0.0
    %6663 = vmatpush1.msra.mxu0 0.0
    %6664 = vmatprep.subr.mxu0 0.0
    %6665 = vmatpush1.msra.mxu0 0.0
    %6666 = vmatprep.subr.mxu0 0.0
    %6667 = vmatpush1.msra.mxu0 0.0
    %6668 = vmatprep.mubr.f32.mxu0 0.0
    %6669 = vmatmul.mubr.f32.gmra.mrb[0].mxu0 %v6602
    %v6670 = vpop.f32.mrb[0].mxu0
    %v6671 = vadd.f32 0.0, %v6670
    %v6672 = vpop.f32.mrb[0].mxu0
    %6673 = vdwg.mxu0
    %v6674 = vadd.f32 %v6594, %v6671
    %v6675 = vxor.u32 %v6674, 2147483648
    %v6676 = vmul.f32 %v6675, 1.442695
    %v6677 = vpow.pop %v6676
    %v6678 = vadd.f32 %v6677, 1.0
    %v6679 = vrcp.pop %v6678
    %v6680 = vmul.f32 1.0, %v6679
    %v6681 = vtanh.pop %v6674
    %v6682 = vmul.f32 %v6680, 0.0
    %6684 = vrot.lane.b32.xlu0 %v6681, 64
    %v6685 = vpop.permute.xlu0 %6684
    %v6687 = vmul.f32 %v6680, %v6685
    %6689 = vrot.lane.b32.xlu0 %v6687, 32
    %v6690 = vpop.permute.xlu0 %6689
    %v6692 = vadd.f32 %v6682, %v6690
    %v6693 = vtanh.pop %v6692
    %6695 = vrot.lane.b32.xlu0 %v6693, 64
    %v6696 = vpop.permute.xlu0 %6695
    %v6698 = vmul.f32 %v6680, %v6696
    %v6701 = vunpack.c.l.s4 1966171168
    %v6702 = vunpack.c.0.s8 %v6701
    %v6703 = vlaneseq
    %v6704 = vshrl.u32 %v6703, 7
    %v6705 = vsub.s32 %v6702, %v6704
    %v6706 = vrot.slane %v6698, %v6705
    %v6707 = vcombine.high %v6706, %v6706
    %v6709 = vunpack.c.l.s4 1966171168
    %v6710 = vunpack.c.0.s8 %v6709
    %v6711 = vlaneseq
    %v6712 = vshrl.u32 %v6711, 7
    %v6713 = vsub.s32 %v6710, %v6712
    %v6714 = vrot.slane %v6706, %v6713
    %v6716 = vunpack.c.l.s4 1966171168
    %v6717 = vunpack.c.0.s8 %v6716
    %v6718 = vlaneseq
    %v6719 = vshrl.u32 %v6718, 7
    %v6720 = vsub.s32 %v6717, %v6719
    %v6721 = vrot.slane %v6707, %v6720
    %v6722 = vlaneseq
    %v6723 = vshrl.u32 %v6722, 7
    %v6724 = vsub.s32 0, %v6723
    %v6725 = vrot.slane %v6714, %v6724
    %v6726 = vlaneseq
    %v6727 = vshrl.u32 %v6726, 7
    %v6728 = vsub.s32 0, %v6727
    %v6729 = vrot.slane %v6721, %v6728
    %6730 = vrot.lane.b32.xlu0 %v6725, 32
    %v6731 = vpop.permute.xlu0 %6730
    %6732 = vrot.lane.b32.xlu0 %v6729, 32
    %v6733 = vpop.permute.xlu0 %6732
    %vm6736 = vcmask 253952
    %6737 = vst.msk [vmem:[#allocation3] sm:$0x1] %vm6736, %v6731
    %6738 = vst.msk [vmem:[#allocation3 + $0x8] sm:$0x1] %vm6736, %v6733
    %6739 = vrot.lane.b32.xlu0 %v6698, 32
    %v6740 = vpop.permute.xlu0 %6739
    %v6741 = vsel %vm6600, %v6740, 0
    %6743 = vmatprep.subr.mxu0 0.0
    %6744 = vmatpush1.msra.mxu0 %v6596
    %6745 = vmatprep.subr.mxu0 0.0
    %6746 = vmatpush1.msra.mxu0 %v6597
    %6747 = vmatprep.subr.mxu0 0.0
    %6748 = vmatpush1.msra.mxu0 %v6598
    %6749 = vmatprep.subr.mxu0 0.0
    %6750 = vmatpush1.msra.mxu0 %v6599
    %6751 = vmatprep.subr.mxu0 0.0
    %6752 = vmatpush1.msra.mxu0 0.0
    %6753 = vmatprep.subr.mxu0 0.0
    %6754 = vmatpush1.msra.mxu0 0.0
    %6755 = vmatprep.subr.mxu0 0.0
    %6756 = vmatpush1.msra.mxu0 0.0
    %6757 = vmatprep.subr.mxu0 0.0
    %6758 = vmatpush1.msra.mxu0 0.0
    %6759 = vmatprep.subr.mxu0 0.0
    %6760 = vmatpush1.msra.mxu0 0.0
    %6761 = vmatprep.subr.mxu0 0.0
    %6762 = vmatpush1.msra.mxu0 0.0
    %6763 = vmatprep.subr.mxu0 0.0
    %6764 = vmatpush1.msra.mxu0 0.0
    %6765 = vmatprep.subr.mxu0 0.0
    %6766 = vmatpush1.msra.mxu0 0.0
    %6767 = vmatprep.subr.mxu0 0.0
    %6768 = vmatpush1.msra.mxu0 0.0
    %6769 = vmatprep.subr.mxu0 0.0
    %6770 = vmatpush1.msra.mxu0 0.0
    %6771 = vmatprep.subr.mxu0 0.0
    %6772 = vmatpush1.msra.mxu0 0.0
    %6773 = vmatprep.subr.mxu0 0.0
    %6774 = vmatpush1.msra.mxu0 0.0
    %6775 = vmatprep.subr.mxu0 0.0
    %6776 = vmatpush1.msra.mxu0 0.0
    %6777 = vmatprep.subr.mxu0 0.0
    %6778 = vmatpush1.msra.mxu0 0.0
    %6779 = vmatprep.subr.mxu0 0.0
    %6780 = vmatpush1.msra.mxu0 0.0
    %6781 = vmatprep.subr.mxu0 0.0
    %6782 = vmatpush1.msra.mxu0 0.0
    %6783 = vmatprep.subr.mxu0 0.0
    %6784 = vmatpush1.msra.mxu0 0.0
    %6785 = vmatprep.subr.mxu0 0.0
    %6786 = vmatpush1.msra.mxu0 0.0
    %6787 = vmatprep.subr.mxu0 0.0
    %6788 = vmatpush1.msra.mxu0 0.0
    %6789 = vmatprep.subr.mxu0 0.0
    %6790 = vmatpush1.msra.mxu0 0.0
    %6791 = vmatprep.subr.mxu0 0.0
    %6792 = vmatpush1.msra.mxu0 0.0
    %6793 = vmatprep.subr.mxu0 0.0
    %6794 = vmatpush1.msra.mxu0 0.0
    %6795 = vmatprep.subr.mxu0 0.0
    %6796 = vmatpush1.msra.mxu0 0.0
    %6797 = vmatprep.subr.mxu0 0.0
    %6798 = vmatpush1.msra.mxu0 0.0
    %6799 = vmatprep.subr.mxu0 0.0
    %6800 = vmatpush1.msra.mxu0 0.0
    %6801 = vmatprep.subr.mxu0 0.0
    %6802 = vmatpush1.msra.mxu0 0.0
    %6803 = vmatprep.subr.mxu0 0.0
    %6804 = vmatpush1.msra.mxu0 0.0
    %6805 = vmatprep.subr.mxu0 0.0
    %6806 = vmatpush1.msra.mxu0 0.0
    %6807 = vmatprep.mubr.f32.mxu0 0.0
    %6808 = vmatmul.mubr.f32.gmra.mrb[0].mxu0 %v6741
    %v6809 = vpop.f32.mrb[0].mxu0
    %v6810 = vadd.f32 0.0, %v6809
    %v6811 = vpop.f32.mrb[0].mxu0
    %6812 = vdwg.mxu0
    %v6814 = vrot.slane %v6810, 6
    %v6816 = vadd.f32 %v6594, %v6814
    %v6817 = vxor.u32 %v6816, 2147483648
    %v6818 = vmul.f32 %v6817, 1.442695
    %v6819 = vpow.pop %v6818
    %v6820 = vadd.f32 %v6819, 1.0
    %v6821 = vrcp.pop %v6820
    %v6822 = vmul.f32 1.0, %v6821
    %v6823 = vtanh.pop %v6816
    %v6825 = vrot.slane %v6692, 6
    %v6827 = vmul.f32 %v6822, %v6825
    %6829 = vrot.lane.b32.xlu0 %v6823, 64
    %v6830 = vpop.permute.xlu0 %6829
    %v6832 = vmul.f32 %v6822, %v6830
    %6834 = vrot.lane.b32.xlu0 %v6832, 32
    %v6835 = vpop.permute.xlu0 %6834
    %v6837 = vadd.f32 %v6827, %v6835
    %v6838 = vtanh.pop %v6837
    %6840 = vrot.lane.b32.xlu0 %v6838, 64
    %v6841 = vpop.permute.xlu0 %6840
    %v6843 = vmul.f32 %v6822, %v6841
    %v6846 = vunpack.c.l.s4 1966171168
    %v6847 = vunpack.c.0.s8 %v6846
    %v6848 = vlaneseq
    %v6849 = vshrl.u32 %v6848, 7
    %v6850 = vsub.s32 %v6847, %v6849
    %v6851 = vrot.slane %v6843, %v6850
    %v6852 = vcombine.high %v6851, %v6851
    %v6854 = vunpack.c.l.s4 1966171168
    %v6855 = vunpack.c.0.s8 %v6854
    %v6856 = vlaneseq
    %v6857 = vshrl.u32 %v6856, 7
    %v6858 = vsub.s32 %v6855, %v6857
    %v6859 = vrot.slane %v6851, %v6858
    %v6861 = vunpack.c.l.s4 1966171168
    %v6862 = vunpack.c.0.s8 %v6861
    %v6863 = vlaneseq
    %v6864 = vshrl.u32 %v6863, 7
    %v6865 = vsub.s32 %v6862, %v6864
    %v6866 = vrot.slane %v6852, %v6865
    %v6867 = vcombine.high %v6859, %v6859
    %v6868 = vcombine.high %v6866, %v6866
    %v6869 = vlaneseq
    %v6870 = vshrl.u32 %v6869, 7
    %v6871 = vsub.s32 0, %v6870
    %v6872 = vrot.slane %v6867, %v6871
    %v6873 = vlaneseq
    %v6874 = vshrl.u32 %v6873, 7
    %v6875 = vsub.s32 0, %v6874
    %v6876 = vrot.slane %v6868, %v6875
    %6877 = vrot.lane.b32.xlu0 %v6872, 32
    %v6878 = vpop.permute.xlu0 %6877
    %6879 = vrot.lane.b32.xlu0 %v6876, 32
    %v6880 = vpop.permute.xlu0 %6879
    %6883 = vst.msk [vmem:[#allocation3 + $0x1] sm:$0x1] %vm6736, %v6878
    %6884 = vst.msk [vmem:[#allocation3 + $0x9] sm:$0x1] %vm6736, %v6880
    %v6885 = vrot.slane %v6843, 2
    %6886 = vrot.lane.b32.xlu0 %v6885, 32
    %v6887 = vpop.permute.xlu0 %6886
    %v6888 = vsel %vm6600, %v6887, 0
    %6890 = vmatprep.subr.mxu0 0.0
    %6891 = vmatpush1.msra.mxu0 %v6596
    %6892 = vmatprep.subr.mxu0 0.0
    %6893 = vmatpush1.msra.mxu0 %v6597
    %6894 = vmatprep.subr.mxu0 0.0
    %6895 = vmatpush1.msra.mxu0 %v6598
    %6896 = vmatprep.subr.mxu0 0.0
    %6897 = vmatpush1.msra.mxu0 %v6599
    %6898 = vmatprep.subr.mxu0 0.0
    %6899 = vmatpush1.msra.mxu0 0.0
    %6900 = vmatprep.subr.mxu0 0.0
    %6901 = vmatpush1.msra.mxu0 0.0
    %6902 = vmatprep.subr.mxu0 0.0
    %6903 = vmatpush1.msra.mxu0 0.0
    %6904 = vmatprep.subr.mxu0 0.0
    %6905 = vmatpush1.msra.mxu0 0.0
    %6906 = vmatprep.subr.mxu0 0.0
    %6907 = vmatpush1.msra.mxu0 0.0
    %6908 = vmatprep.subr.mxu0 0.0
    %6909 = vmatpush1.msra.mxu0 0.0
    %6910 = vmatprep.subr.mxu0 0.0
    %6911 = vmatpush1.msra.mxu0 0.0
    %6912 = vmatprep.subr.mxu0 0.0
    %6913 = vmatpush1.msra.mxu0 0.0
    %6914 = vmatprep.subr.mxu0 0.0
    %6915 = vmatpush1.msra.mxu0 0.0
    %6916 = vmatprep.subr.mxu0 0.0
    %6917 = vmatpush1.msra.mxu0 0.0
    %6918 = vmatprep.subr.mxu0 0.0
    %6919 = vmatpush1.msra.mxu0 0.0
    %6920 = vmatprep.subr.mxu0 0.0
    %6921 = vmatpush1.msra.mxu0 0.0
    %6922 = vmatprep.subr.mxu0 0.0
    %6923 = vmatpush1.msra.mxu0 0.0
    %6924 = vmatprep.subr.mxu0 0.0
    %6925 = vmatpush1.msra.mxu0 0.0
    %6926 = vmatprep.subr.mxu0 0.0
    %6927 = vmatpush1.msra.mxu0 0.0
    %6928 = vmatprep.subr.mxu0 0.0
    %6929 = vmatpush1.msra.mxu0 0.0
    %6930 = vmatprep.subr.mxu0 0.0
    %6931 = vmatpush1.msra.mxu0 0.0
    %6932 = vmatprep.subr.mxu0 0.0
    %6933 = vmatpush1.msra.mxu0 0.0
    %6934 = vmatprep.subr.mxu0 0.0
    %6935 = vmatpush1.msra.mxu0 0.0
    %6936 = vmatprep.subr.mxu0 0.0
    %6937 = vmatpush1.msra.mxu0 0.0
    %6938 = vmatprep.subr.mxu0 0.0
    %6939 = vmatpush1.msra.mxu0 0.0
    %6940 = vmatprep.subr.mxu0 0.0
    %6941 = vmatpush1.msra.mxu0 0.0
    %6942 = vmatprep.subr.mxu0 0.0
    %6943 = vmatpush1.msra.mxu0 0.0
    %6944 = vmatprep.subr.mxu0 0.0
    %6945 = vmatpush1.msra.mxu0 0.0
    %6946 = vmatprep.subr.mxu0 0.0
    %6947 = vmatpush1.msra.mxu0 0.0
    %6948 = vmatprep.subr.mxu0 0.0
    %6949 = vmatpush1.msra.mxu0 0.0
    %6950 = vmatprep.subr.mxu0 0.0
    %6951 = vmatpush1.msra.mxu0 0.0
    %6952 = vmatprep.subr.mxu0 0.0
    %6953 = vmatpush1.msra.mxu0 0.0
    %6954 = vmatprep.mubr.f32.mxu0 0.0
    %6955 = vmatmul.mubr.f32.gmra.mrb[0].mxu0 %v6888
    %v6956 = vpop.f32.mrb[0].mxu0
    %v6957 = vadd.f32 0.0, %v6956
    %v6958 = vpop.f32.mrb[0].mxu0
    %6959 = vdwg.mxu0
    %v6961 = vrot.slane %v6957, 4
    %v6963 = vadd.f32 %v6594, %v6961
    %v6964 = vxor.u32 %v6963, 2147483648
    %v6965 = vmul.f32 %v6964, 1.442695
    %v6966 = vpow.pop %v6965
    %v6967 = vadd.f32 %v6966, 1.0
    %v6968 = vrcp.pop %v6967
    %v6969 = vmul.f32 1.0, %v6968
    %v6970 = vtanh.pop %v6963
    %v6972 = vrot.slane %v6837, 6
    %v6974 = vmul.f32 %v6969, %v6972
    %6976 = vrot.lane.b32.xlu0 %v6970, 64
    %v6977 = vpop.permute.xlu0 %6976
    %v6979 = vmul.f32 %v6969, %v6977
    %6981 = vrot.lane.b32.xlu0 %v6979, 32
    %v6982 = vpop.permute.xlu0 %6981
    %v6984 = vadd.f32 %v6974, %v6982
    %v6985 = vtanh.pop %v6984
    %6987 = vrot.lane.b32.xlu0 %v6985, 64
    %v6988 = vpop.permute.xlu0 %6987
    %v6990 = vmul.f32 %v6969, %v6988
    %v6992 = vcombine.high %v6990, %v6990
    %v6994 = vunpack.c.l.s4 1966171168
    %v6995 = vunpack.c.0.s8 %v6994
    %v6996 = vlaneseq
    %v6997 = vshrl.u32 %v6996, 7
    %v6998 = vsub.s32 %v6995, %v6997
    %v6999 = vrot.slane %v6992, %v6998
    %v7000 = vcombine.high %v6999, %v6999
    %v7002 = vunpack.c.l.s4 1966171168
    %v7003 = vunpack.c.0.s8 %v7002
    %v7004 = vlaneseq
    %v7005 = vshrl.u32 %v7004, 7
    %v7006 = vsub.s32 %v7003, %v7005
    %v7007 = vrot.slane %v6999, %v7006
    %v7009 = vunpack.c.l.s4 1966171168
    %v7010 = vunpack.c.0.s8 %v7009
    %v7011 = vlaneseq
    %v7012 = vshrl.u32 %v7011, 7
    %v7013 = vsub.s32 %v7010, %v7012
    %v7014 = vrot.slane %v7000, %v7013
    %v7015 = vlaneseq
    %v7016 = vshrl.u32 %v7015, 7
    %v7017 = vsub.s32 0, %v7016
    %v7018 = vrot.slane %v7007, %v7017
    %v7019 = vlaneseq
    %v7020 = vshrl.u32 %v7019, 7
    %v7021 = vsub.s32 0, %v7020
    %v7022 = vrot.slane %v7014, %v7021
    %7023 = vrot.lane.b32.xlu0 %v7018, 32
    %v7024 = vpop.permute.xlu0 %7023
    %7025 = vrot.lane.b32.xlu0 %v7022, 32
    %v7026 = vpop.permute.xlu0 %7025
    %7029 = vst.msk [vmem:[#allocation3 + $0x2] sm:$0x1] %vm6736, %v7024
    %7030 = vst.msk [vmem:[#allocation3 + $0xa] sm:$0x1] %vm6736, %v7026
    %v7031 = vrot.slane %v6990, 4
    %7032 = vrot.lane.b32.xlu0 %v7031, 32
    %v7033 = vpop.permute.xlu0 %7032
    %v7034 = vsel %vm6600, %v7033, 0
    %7036 = vmatprep.subr.mxu0 0.0
    %7037 = vmatpush1.msra.mxu0 %v6596
    %7038 = vmatprep.subr.mxu0 0.0
    %7039 = vmatpush1.msra.mxu0 %v6597
    %7040 = vmatprep.subr.mxu0 0.0
    %7041 = vmatpush1.msra.mxu0 %v6598
    %7042 = vmatprep.subr.mxu0 0.0
    %7043 = vmatpush1.msra.mxu0 %v6599
    %7044 = vmatprep.subr.mxu0 0.0
    %7045 = vmatpush1.msra.mxu0 0.0
    %7046 = vmatprep.subr.mxu0 0.0
    %7047 = vmatpush1.msra.mxu0 0.0
    %7048 = vmatprep.subr.mxu0 0.0
    %7049 = vmatpush1.msra.mxu0 0.0
    %7050 = vmatprep.subr.mxu0 0.0
    %7051 = vmatpush1.msra.mxu0 0.0
    %7052 = vmatprep.subr.mxu0 0.0
    %7053 = vmatpush1.msra.mxu0 0.0
    %7054 = vmatprep.subr.mxu0 0.0
    %7055 = vmatpush1.msra.mxu0 0.0
    %7056 = vmatprep.subr.mxu0 0.0
    %7057 = vmatpush1.msra.mxu0 0.0
    %7058 = vmatprep.subr.mxu0 0.0
    %7059 = vmatpush1.msra.mxu0 0.0
    %7060 = vmatprep.subr.mxu0 0.0
    %7061 = vmatpush1.msra.mxu0 0.0
    %7062 = vmatprep.subr.mxu0 0.0
    %7063 = vmatpush1.msra.mxu0 0.0
    %7064 = vmatprep.subr.mxu0 0.0
    %7065 = vmatpush1.msra.mxu0 0.0
    %7066 = vmatprep.subr.mxu0 0.0
    %7067 = vmatpush1.msra.mxu0 0.0
    %7068 = vmatprep.subr.mxu0 0.0
    %7069 = vmatpush1.msra.mxu0 0.0
    %7070 = vmatprep.subr.mxu0 0.0
    %7071 = vmatpush1.msra.mxu0 0.0
    %7072 = vmatprep.subr.mxu0 0.0
    %7073 = vmatpush1.msra.mxu0 0.0
    %7074 = vmatprep.subr.mxu0 0.0
    %7075 = vmatpush1.msra.mxu0 0.0
    %7076 = vmatprep.subr.mxu0 0.0
    %7077 = vmatpush1.msra.mxu0 0.0
    %7078 = vmatprep.subr.mxu0 0.0
    %7079 = vmatpush1.msra.mxu0 0.0
    %7080 = vmatprep.subr.mxu0 0.0
    %7081 = vmatpush1.msra.mxu0 0.0
    %7082 = vmatprep.subr.mxu0 0.0
    %7083 = vmatpush1.msra.mxu0 0.0
    %7084 = vmatprep.subr.mxu0 0.0
    %7085 = vmatpush1.msra.mxu0 0.0
    %7086 = vmatprep.subr.mxu0 0.0
    %7087 = vmatpush1.msra.mxu0 0.0
    %7088 = vmatprep.subr.mxu0 0.0
    %7089 = vmatpush1.msra.mxu0 0.0
    %7090 = vmatprep.subr.mxu0 0.0
    %7091 = vmatpush1.msra.mxu0 0.0
    %7092 = vmatprep.subr.mxu0 0.0
    %7093 = vmatpush1.msra.mxu0 0.0
    %7094 = vmatprep.subr.mxu0 0.0
    %7095 = vmatpush1.msra.mxu0 0.0
    %7096 = vmatprep.subr.mxu0 0.0
    %7097 = vmatpush1.msra.mxu0 0.0
    %7098 = vmatprep.subr.mxu0 0.0
    %7099 = vmatpush1.msra.mxu0 0.0
    %7100 = vmatprep.mubr.f32.mxu0 0.0
    %7101 = vmatmul.mubr.f32.gmra.mrb[0].mxu0 %v7034
    %v7102 = vpop.f32.mrb[0].mxu0
    %v7103 = vadd.f32 0.0, %v7102
    %v7104 = vpop.f32.mrb[0].mxu0
    %7105 = vdwg.mxu0
    %v7107 = vrot.slane %v7103, 2
    %v7109 = vadd.f32 %v6594, %v7107
    %v7110 = vxor.u32 %v7109, 2147483648
    %v7111 = vmul.f32 %v7110, 1.442695
    %v7112 = vpow.pop %v7111
    %v7113 = vadd.f32 %v7112, 1.0
    %v7114 = vrcp.pop %v7113
    %v7115 = vmul.f32 1.0, %v7114
    %v7116 = vtanh.pop %v7109
    %v7118 = vrot.slane %v6984, 6
    %v7120 = vmul.f32 %v7115, %v7118
    %7122 = vrot.lane.b32.xlu0 %v7116, 64
    %v7123 = vpop.permute.xlu0 %7122
    %v7125 = vmul.f32 %v7115, %v7123
    %7127 = vrot.lane.b32.xlu0 %v7125, 32
    %v7128 = vpop.permute.xlu0 %7127
    %v7130 = vadd.f32 %v7120, %v7128
    %v7131 = vtanh.pop %v7130
    %7133 = vrot.lane.b32.xlu0 %v7131, 64
    %v7134 = vpop.permute.xlu0 %7133
    %v7136 = vmul.f32 %v7115, %v7134
    %v7138 = vcombine.high %v7136, %v7136
    %v7140 = vunpack.c.l.s4 1966171168
    %v7141 = vunpack.c.0.s8 %v7140
    %v7142 = vlaneseq
    %v7143 = vshrl.u32 %v7142, 7
    %v7144 = vsub.s32 %v7141, %v7143
    %v7145 = vrot.slane %v7138, %v7144
    %v7146 = vcombine.high %v7145, %v7145
    %v7148 = vunpack.c.l.s4 1966171168
    %v7149 = vunpack.c.0.s8 %v7148
    %v7150 = vlaneseq
    %v7151 = vshrl.u32 %v7150, 7
    %v7152 = vsub.s32 %v7149, %v7151
    %v7153 = vrot.slane %v7145, %v7152
    %v7155 = vunpack.c.l.s4 1966171168
    %v7156 = vunpack.c.0.s8 %v7155
    %v7157 = vlaneseq
    %v7158 = vshrl.u32 %v7157, 7
    %v7159 = vsub.s32 %v7156, %v7158
    %v7160 = vrot.slane %v7146, %v7159
    %v7161 = vcombine.high %v7153, %v7153
    %v7162 = vcombine.high %v7160, %v7160
    %v7163 = vlaneseq
    %v7164 = vshrl.u32 %v7163, 7
    %v7165 = vsub.s32 0, %v7164
    %v7166 = vrot.slane %v7161, %v7165
    %v7167 = vlaneseq
    %v7168 = vshrl.u32 %v7167, 7
    %v7169 = vsub.s32 0, %v7168
    %v7170 = vrot.slane %v7162, %v7169
    %7171 = vrot.lane.b32.xlu0 %v7166, 32
    %v7172 = vpop.permute.xlu0 %7171
    %7173 = vrot.lane.b32.xlu0 %v7170, 32
    %v7174 = vpop.permute.xlu0 %7173
    %7177 = vst.msk [vmem:[#allocation3 + $0x3] sm:$0x1] %vm6736, %v7172
    %7178 = vst.msk [vmem:[#allocation3 + $0xb] sm:$0x1] %vm6736, %v7174
    %v7179 = vrot.slane %v7136, 6
    %7180 = vrot.lane.b32.xlu0 %v7179, 32
    %v7181 = vpop.permute.xlu0 %7180
    %v7182 = vsel %vm6600, %v7181, 0
    %7184 = vmatprep.subr.mxu0 0.0
    %7185 = vmatpush1.msra.mxu0 %v6596
    %7186 = vmatprep.subr.mxu0 0.0
    %7187 = vmatpush1.msra.mxu0 %v6597
    %7188 = vmatprep.subr.mxu0 0.0
    %7189 = vmatpush1.msra.mxu0 %v6598
    %7190 = vmatprep.subr.mxu0 0.0
    %7191 = vmatpush1.msra.mxu0 %v6599
    %7192 = vmatprep.subr.mxu0 0.0
    %7193 = vmatpush1.msra.mxu0 0.0
    %7194 = vmatprep.subr.mxu0 0.0
    %7195 = vmatpush1.msra.mxu0 0.0
    %7196 = vmatprep.subr.mxu0 0.0
    %7197 = vmatpush1.msra.mxu0 0.0
    %7198 = vmatprep.subr.mxu0 0.0
    %7199 = vmatpush1.msra.mxu0 0.0
    %7200 = vmatprep.subr.mxu0 0.0
    %7201 = vmatpush1.msra.mxu0 0.0
    %7202 = vmatprep.subr.mxu0 0.0
    %7203 = vmatpush1.msra.mxu0 0.0
    %7204 = vmatprep.subr.mxu0 0.0
    %7205 = vmatpush1.msra.mxu0 0.0
    %7206 = vmatprep.subr.mxu0 0.0
    %7207 = vmatpush1.msra.mxu0 0.0
    %7208 = vmatprep.subr.mxu0 0.0
    %7209 = vmatpush1.msra.mxu0 0.0
    %7210 = vmatprep.subr.mxu0 0.0
    %7211 = vmatpush1.msra.mxu0 0.0
    %7212 = vmatprep.subr.mxu0 0.0
    %7213 = vmatpush1.msra.mxu0 0.0
    %7214 = vmatprep.subr.mxu0 0.0
    %7215 = vmatpush1.msra.mxu0 0.0
    %7216 = vmatprep.subr.mxu0 0.0
    %7217 = vmatpush1.msra.mxu0 0.0
    %7218 = vmatprep.subr.mxu0 0.0
    %7219 = vmatpush1.msra.mxu0 0.0
    %7220 = vmatprep.subr.mxu0 0.0
    %7221 = vmatpush1.msra.mxu0 0.0
    %7222 = vmatprep.subr.mxu0 0.0
    %7223 = vmatpush1.msra.mxu0 0.0
    %7224 = vmatprep.subr.mxu0 0.0
    %7225 = vmatpush1.msra.mxu0 0.0
    %7226 = vmatprep.subr.mxu0 0.0
    %7227 = vmatpush1.msra.mxu0 0.0
    %7228 = vmatprep.subr.mxu0 0.0
    %7229 = vmatpush1.msra.mxu0 0.0
    %7230 = vmatprep.subr.mxu0 0.0
    %7231 = vmatpush1.msra.mxu0 0.0
    %7232 = vmatprep.subr.mxu0 0.0
    %7233 = vmatpush1.msra.mxu0 0.0
    %7234 = vmatprep.subr.mxu0 0.0
    %7235 = vmatpush1.msra.mxu0 0.0
    %7236 = vmatprep.subr.mxu0 0.0
    %7237 = vmatpush1.msra.mxu0 0.0
    %7238 = vmatprep.subr.mxu0 0.0
    %7239 = vmatpush1.msra.mxu0 0.0
    %7240 = vmatprep.subr.mxu0 0.0
    %7241 = vmatpush1.msra.mxu0 0.0
    %7242 = vmatprep.subr.mxu0 0.0
    %7243 = vmatpush1.msra.mxu0 0.0
    %7244 = vmatprep.subr.mxu0 0.0
    %7245 = vmatpush1.msra.mxu0 0.0
    %7246 = vmatprep.subr.mxu0 0.0
    %7247 = vmatpush1.msra.mxu0 0.0
    %7248 = vmatprep.mubr.f32.mxu0 0.0
    %7249 = vmatmul.mubr.f32.gmra.mrb[0].mxu0 %v7182
    %v7250 = vpop.f32.mrb[0].mxu0
    %v7251 = vadd.f32 0.0, %v7250
    %v7252 = vpop.f32.mrb[0].mxu0
    %7253 = vdwg.mxu0
    %v7254 = vadd.f32 %v6595, %v7251
    %v7255 = vxor.u32 %v7254, 2147483648
    %v7256 = vmul.f32 %v7255, 1.442695
    %v7257 = vpow.pop %v7256
    %v7258 = vadd.f32 %v7257, 1.0
    %v7259 = vrcp.pop %v7258
    %v7260 = vmul.f32 1.0, %v7259
    %v7261 = vtanh.pop %v7254
    %v7263 = vrot.slane %v7130, 6
    %v7265 = vmul.f32 %v7260, %v7263
    %7267 = vrot.lane.b32.xlu0 %v7261, 64
    %v7268 = vpop.permute.xlu0 %7267
    %v7270 = vmul.f32 %v7260, %v7268
    %7272 = vrot.lane.b32.xlu0 %v7270, 32
    %v7273 = vpop.permute.xlu0 %7272
    %v7275 = vadd.f32 %v7265, %v7273
    %v7276 = vtanh.pop %v7275
    %7278 = vrot.lane.b32.xlu0 %v7276, 64
    %v7279 = vpop.permute.xlu0 %7278
    %v7281 = vmul.f32 %v7260, %v7279
    %v7284 = vunpack.c.l.s4 1966171168
    %v7285 = vunpack.c.0.s8 %v7284
    %v7286 = vlaneseq
    %v7287 = vshrl.u32 %v7286, 7
    %v7288 = vsub.s32 %v7285, %v7287
    %v7289 = vrot.slane %v7281, %v7288
    %v7290 = vcombine.high %v7289, %v7289
    %v7292 = vunpack.c.l.s4 1966171168
    %v7293 = vunpack.c.0.s8 %v7292
    %v7294 = vlaneseq
    %v7295 = vshrl.u32 %v7294, 7
    %v7296 = vsub.s32 %v7293, %v7295
    %v7297 = vrot.slane %v7289, %v7296
    %v7299 = vunpack.c.l.s4 1966171168
    %v7300 = vunpack.c.0.s8 %v7299
    %v7301 = vlaneseq
    %v7302 = vshrl.u32 %v7301, 7
    %v7303 = vsub.s32 %v7300, %v7302
    %v7304 = vrot.slane %v7290, %v7303
    %v7305 = vlaneseq
    %v7306 = vshrl.u32 %v7305, 7
    %v7307 = vsub.s32 0, %v7306
    %v7308 = vrot.slane %v7297, %v7307
    %v7309 = vlaneseq
    %v7310 = vshrl.u32 %v7309, 7
    %v7311 = vsub.s32 0, %v7310
    %v7312 = vrot.slane %v7304, %v7311
    %7313 = vrot.lane.b32.xlu0 %v7308, 32
    %v7314 = vpop.permute.xlu0 %7313
    %7315 = vrot.lane.b32.xlu0 %v7312, 32
    %v7316 = vpop.permute.xlu0 %7315
    %7319 = vst.msk [vmem:[#allocation3 + $0x4] sm:$0x1] %vm6736, %v7314
    %7320 = vst.msk [vmem:[#allocation3 + $0xc] sm:$0x1] %vm6736, %v7316
    %7321 = vrot.lane.b32.xlu0 %v7281, 32
    %v7322 = vpop.permute.xlu0 %7321
    %v7323 = vsel %vm6600, %v7322, 0
    %7325 = vmatprep.subr.mxu0 0.0
    %7326 = vmatpush1.msra.mxu0 %v6596
    %7327 = vmatprep.subr.mxu0 0.0
    %7328 = vmatpush1.msra.mxu0 %v6597
    %7329 = vmatprep.subr.mxu0 0.0
    %7330 = vmatpush1.msra.mxu0 %v6598
    %7331 = vmatprep.subr.mxu0 0.0
    %7332 = vmatpush1.msra.mxu0 %v6599
    %7333 = vmatprep.subr.mxu0 0.0
    %7334 = vmatpush1.msra.mxu0 0.0
    %7335 = vmatprep.subr.mxu0 0.0
    %7336 = vmatpush1.msra.mxu0 0.0
    %7337 = vmatprep.subr.mxu0 0.0
    %7338 = vmatpush1.msra.mxu0 0.0
    %7339 = vmatprep.subr.mxu0 0.0
    %7340 = vmatpush1.msra.mxu0 0.0
    %7341 = vmatprep.subr.mxu0 0.0
    %7342 = vmatpush1.msra.mxu0 0.0
    %7343 = vmatprep.subr.mxu0 0.0
    %7344 = vmatpush1.msra.mxu0 0.0
    %7345 = vmatprep.subr.mxu0 0.0
    %7346 = vmatpush1.msra.mxu0 0.0
    %7347 = vmatprep.subr.mxu0 0.0
    %7348 = vmatpush1.msra.mxu0 0.0
    %7349 = vmatprep.subr.mxu0 0.0
    %7350 = vmatpush1.msra.mxu0 0.0
    %7351 = vmatprep.subr.mxu0 0.0
    %7352 = vmatpush1.msra.mxu0 0.0
    %7353 = vmatprep.subr.mxu0 0.0
    %7354 = vmatpush1.msra.mxu0 0.0
    %7355 = vmatprep.subr.mxu0 0.0
    %7356 = vmatpush1.msra.mxu0 0.0
    %7357 = vmatprep.subr.mxu0 0.0
    %7358 = vmatpush1.msra.mxu0 0.0
    %7359 = vmatprep.subr.mxu0 0.0
    %7360 = vmatpush1.msra.mxu0 0.0
    %7361 = vmatprep.subr.mxu0 0.0
    %7362 = vmatpush1.msra.mxu0 0.0
    %7363 = vmatprep.subr.mxu0 0.0
    %7364 = vmatpush1.msra.mxu0 0.0
    %7365 = vmatprep.subr.mxu0 0.0
    %7366 = vmatpush1.msra.mxu0 0.0
    %7367 = vmatprep.subr.mxu0 0.0
    %7368 = vmatpush1.msra.mxu0 0.0
    %7369 = vmatprep.subr.mxu0 0.0
    %7370 = vmatpush1.msra.mxu0 0.0
    %7371 = vmatprep.subr.mxu0 0.0
    %7372 = vmatpush1.msra.mxu0 0.0
    %7373 = vmatprep.subr.mxu0 0.0
    %7374 = vmatpush1.msra.mxu0 0.0
    %7375 = vmatprep.subr.mxu0 0.0
    %7376 = vmatpush1.msra.mxu0 0.0
    %7377 = vmatprep.subr.mxu0 0.0
    %7378 = vmatpush1.msra.mxu0 0.0
    %7379 = vmatprep.subr.mxu0 0.0
    %7380 = vmatpush1.msra.mxu0 0.0
    %7381 = vmatprep.subr.mxu0 0.0
    %7382 = vmatpush1.msra.mxu0 0.0
    %7383 = vmatprep.subr.mxu0 0.0
    %7384 = vmatpush1.msra.mxu0 0.0
    %7385 = vmatprep.subr.mxu0 0.0
    %7386 = vmatpush1.msra.mxu0 0.0
    %7387 = vmatprep.subr.mxu0 0.0
    %7388 = vmatpush1.msra.mxu0 0.0
    %7389 = vmatprep.mubr.f32.mxu0 0.0
    %7390 = vmatmul.mubr.f32.gmra.mrb[0].mxu0 %v7323
    %v7391 = vpop.f32.mrb[0].mxu0
    %v7392 = vadd.f32 0.0, %v7391
    %v7393 = vpop.f32.mrb[0].mxu0
    %7394 = vdwg.mxu0
    %v7396 = vrot.slane %v7392, 6
    %v7398 = vadd.f32 %v6595, %v7396
    %v7399 = vxor.u32 %v7398, 2147483648
    %v7400 = vmul.f32 %v7399, 1.442695
    %v7401 = vpow.pop %v7400
    %v7402 = vadd.f32 %v7401, 1.0
    %v7403 = vrcp.pop %v7402
    %v7404 = vmul.f32 1.0, %v7403
    %v7405 = vtanh.pop %v7398
    %v7407 = vrot.slane %v7275, 6
    %v7409 = vmul.f32 %v7404, %v7407
    %7411 = vrot.lane.b32.xlu0 %v7405, 64
    %v7412 = vpop.permute.xlu0 %7411
    %v7414 = vmul.f32 %v7404, %v7412
    %7416 = vrot.lane.b32.xlu0 %v7414, 32
    %v7417 = vpop.permute.xlu0 %7416
    %v7419 = vadd.f32 %v7409, %v7417
    %v7420 = vtanh.pop %v7419
    %7422 = vrot.lane.b32.xlu0 %v7420, 64
    %v7423 = vpop.permute.xlu0 %7422
    %v7425 = vmul.f32 %v7404, %v7423
    %v7428 = vunpack.c.l.s4 1966171168
    %v7429 = vunpack.c.0.s8 %v7428
    %v7430 = vlaneseq
    %v7431 = vshrl.u32 %v7430, 7
    %v7432 = vsub.s32 %v7429, %v7431
    %v7433 = vrot.slane %v7425, %v7432
    %v7434 = vcombine.high %v7433, %v7433
    %v7436 = vunpack.c.l.s4 1966171168
    %v7437 = vunpack.c.0.s8 %v7436
    %v7438 = vlaneseq
    %v7439 = vshrl.u32 %v7438, 7
    %v7440 = vsub.s32 %v7437, %v7439
    %v7441 = vrot.slane %v7433, %v7440
    %v7443 = vunpack.c.l.s4 1966171168
    %v7444 = vunpack.c.0.s8 %v7443
    %v7445 = vlaneseq
    %v7446 = vshrl.u32 %v7445, 7
    %v7447 = vsub.s32 %v7444, %v7446
    %v7448 = vrot.slane %v7434, %v7447
    %v7449 = vcombine.high %v7441, %v7441
    %v7450 = vcombine.high %v7448, %v7448
    %v7451 = vlaneseq
    %v7452 = vshrl.u32 %v7451, 7
    %v7453 = vsub.s32 0, %v7452
    %v7454 = vrot.slane %v7449, %v7453
    %v7455 = vlaneseq
    %v7456 = vshrl.u32 %v7455, 7
    %v7457 = vsub.s32 0, %v7456
    %v7458 = vrot.slane %v7450, %v7457
    %7459 = vrot.lane.b32.xlu0 %v7454, 32
    %v7460 = vpop.permute.xlu0 %7459
    %7461 = vrot.lane.b32.xlu0 %v7458, 32
    %v7462 = vpop.permute.xlu0 %7461
    %7465 = vst.msk [vmem:[#allocation3 + $0x5] sm:$0x1] %vm6736, %v7460
    %7466 = vst.msk [vmem:[#allocation3 + $0xd] sm:$0x1] %vm6736, %v7462
    %v7467 = vrot.slane %v7425, 2
    %7468 = vrot.lane.b32.xlu0 %v7467, 32
    %v7469 = vpop.permute.xlu0 %7468
    %v7470 = vsel %vm6600, %v7469, 0
    %7472 = vmatprep.subr.mxu0 0.0
    %7473 = vmatpush1.msra.mxu0 %v6596
    %7474 = vmatprep.subr.mxu0 0.0
    %7475 = vmatpush1.msra.mxu0 %v6597
    %7476 = vmatprep.subr.mxu0 0.0
    %7477 = vmatpush1.msra.mxu0 %v6598
    %7478 = vmatprep.subr.mxu0 0.0
    %7479 = vmatpush1.msra.mxu0 %v6599
    %7480 = vmatprep.subr.mxu0 0.0
    %7481 = vmatpush1.msra.mxu0 0.0
    %7482 = vmatprep.subr.mxu0 0.0
    %7483 = vmatpush1.msra.mxu0 0.0
    %7484 = vmatprep.subr.mxu0 0.0
    %7485 = vmatpush1.msra.mxu0 0.0
    %7486 = vmatprep.subr.mxu0 0.0
    %7487 = vmatpush1.msra.mxu0 0.0
    %7488 = vmatprep.subr.mxu0 0.0
    %7489 = vmatpush1.msra.mxu0 0.0
    %7490 = vmatprep.subr.mxu0 0.0
    %7491 = vmatpush1.msra.mxu0 0.0
    %7492 = vmatprep.subr.mxu0 0.0
    %7493 = vmatpush1.msra.mxu0 0.0
    %7494 = vmatprep.subr.mxu0 0.0
    %7495 = vmatpush1.msra.mxu0 0.0
    %7496 = vmatprep.subr.mxu0 0.0
    %7497 = vmatpush1.msra.mxu0 0.0
    %7498 = vmatprep.subr.mxu0 0.0
    %7499 = vmatpush1.msra.mxu0 0.0
    %7500 = vmatprep.subr.mxu0 0.0
    %7501 = vmatpush1.msra.mxu0 0.0
    %7502 = vmatprep.subr.mxu0 0.0
    %7503 = vmatpush1.msra.mxu0 0.0
    %7504 = vmatprep.subr.mxu0 0.0
    %7505 = vmatpush1.msra.mxu0 0.0
    %7506 = vmatprep.subr.mxu0 0.0
    %7507 = vmatpush1.msra.mxu0 0.0
    %7508 = vmatprep.subr.mxu0 0.0
    %7509 = vmatpush1.msra.mxu0 0.0
    %7510 = vmatprep.subr.mxu0 0.0
    %7511 = vmatpush1.msra.mxu0 0.0
    %7512 = vmatprep.subr.mxu0 0.0
    %7513 = vmatpush1.msra.mxu0 0.0
    %7514 = vmatprep.subr.mxu0 0.0
    %7515 = vmatpush1.msra.mxu0 0.0
    %7516 = vmatprep.subr.mxu0 0.0
    %7517 = vmatpush1.msra.mxu0 0.0
    %7518 = vmatprep.subr.mxu0 0.0
    %7519 = vmatpush1.msra.mxu0 0.0
    %7520 = vmatprep.subr.mxu0 0.0
    %7521 = vmatpush1.msra.mxu0 0.0
    %7522 = vmatprep.subr.mxu0 0.0
    %7523 = vmatpush1.msra.mxu0 0.0
    %7524 = vmatprep.subr.mxu0 0.0
    %7525 = vmatpush1.msra.mxu0 0.0
    %7526 = vmatprep.subr.mxu0 0.0
    %7527 = vmatpush1.msra.mxu0 0.0
    %7528 = vmatprep.subr.mxu0 0.0
    %7529 = vmatpush1.msra.mxu0 0.0
    %7530 = vmatprep.subr.mxu0 0.0
    %7531 = vmatpush1.msra.mxu0 0.0
    %7532 = vmatprep.subr.mxu0 0.0
    %7533 = vmatpush1.msra.mxu0 0.0
    %7534 = vmatprep.subr.mxu0 0.0
    %7535 = vmatpush1.msra.mxu0 0.0
    %7536 = vmatprep.mubr.f32.mxu0 0.0
    %7537 = vmatmul.mubr.f32.gmra.mrb[0].mxu0 %v7470
    %v7538 = vpop.f32.mrb[0].mxu0
    %v7539 = vadd.f32 0.0, %v7538
    %v7540 = vpop.f32.mrb[0].mxu0
    %7541 = vdwg.mxu0
    %v7543 = vrot.slane %v7539, 4
    %v7545 = vadd.f32 %v6595, %v7543
    %v7546 = vxor.u32 %v7545, 2147483648
    %v7547 = vmul.f32 %v7546, 1.442695
    %v7548 = vpow.pop %v7547
    %v7549 = vadd.f32 %v7548, 1.0
    %v7550 = vrcp.pop %v7549
    %v7551 = vmul.f32 1.0, %v7550
    %v7552 = vtanh.pop %v7545
    %v7554 = vrot.slane %v7419, 6
    %v7556 = vmul.f32 %v7551, %v7554
    %7558 = vrot.lane.b32.xlu0 %v7552, 64
    %v7559 = vpop.permute.xlu0 %7558
    %v7561 = vmul.f32 %v7551, %v7559
    %7563 = vrot.lane.b32.xlu0 %v7561, 32
    %v7564 = vpop.permute.xlu0 %7563
    %v7566 = vadd.f32 %v7556, %v7564
    %v7567 = vtanh.pop %v7566
    %7569 = vrot.lane.b32.xlu0 %v7567, 64
    %v7570 = vpop.permute.xlu0 %7569
    %v7572 = vmul.f32 %v7551, %v7570
    %v7574 = vcombine.high %v7572, %v7572
    %v7576 = vunpack.c.l.s4 1966171168
    %v7577 = vunpack.c.0.s8 %v7576
    %v7578 = vlaneseq
    %v7579 = vshrl.u32 %v7578, 7
    %v7580 = vsub.s32 %v7577, %v7579
    %v7581 = vrot.slane %v7574, %v7580
    %v7582 = vcombine.high %v7581, %v7581
    %v7584 = vunpack.c.l.s4 1966171168
    %v7585 = vunpack.c.0.s8 %v7584
    %v7586 = vlaneseq
    %v7587 = vshrl.u32 %v7586, 7
    %v7588 = vsub.s32 %v7585, %v7587
    %v7589 = vrot.slane %v7581, %v7588
    %v7591 = vunpack.c.l.s4 1966171168
    %v7592 = vunpack.c.0.s8 %v7591
    %v7593 = vlaneseq
    %v7594 = vshrl.u32 %v7593, 7
    %v7595 = vsub.s32 %v7592, %v7594
    %v7596 = vrot.slane %v7582, %v7595
    %v7597 = vlaneseq
    %v7598 = vshrl.u32 %v7597, 7
    %v7599 = vsub.s32 0, %v7598
    %v7600 = vrot.slane %v7589, %v7599
    %v7601 = vlaneseq
    %v7602 = vshrl.u32 %v7601, 7
    %v7603 = vsub.s32 0, %v7602
    %v7604 = vrot.slane %v7596, %v7603
    %7605 = vrot.lane.b32.xlu0 %v7600, 32
    %v7606 = vpop.permute.xlu0 %7605
    %7607 = vrot.lane.b32.xlu0 %v7604, 32
    %v7608 = vpop.permute.xlu0 %7607
    %7611 = vst.msk [vmem:[#allocation3 + $0x6] sm:$0x1] %vm6736, %v7606
    %7612 = vst.msk [vmem:[#allocation3 + $0xe] sm:$0x1] %vm6736, %v7608
    %v7613 = vrot.slane %v7572, 4
    %7614 = vrot.lane.b32.xlu0 %v7613, 32
    %v7615 = vpop.permute.xlu0 %7614
    %v7616 = vsel %vm6600, %v7615, 0
    %7618 = vmatprep.subr.mxu0 0.0
    %7619 = vmatpush1.msra.mxu0 %v6596
    %7620 = vmatprep.subr.mxu0 0.0
    %7621 = vmatpush1.msra.mxu0 %v6597
    %7622 = vmatprep.subr.mxu0 0.0
    %7623 = vmatpush1.msra.mxu0 %v6598
    %7624 = vmatprep.subr.mxu0 0.0
    %7625 = vmatpush1.msra.mxu0 %v6599
    %7626 = vmatprep.subr.mxu0 0.0
    %7627 = vmatpush1.msra.mxu0 0.0
    %7628 = vmatprep.subr.mxu0 0.0
    %7629 = vmatpush1.msra.mxu0 0.0
    %7630 = vmatprep.subr.mxu0 0.0
    %7631 = vmatpush1.msra.mxu0 0.0
    %7632 = vmatprep.subr.mxu0 0.0
    %7633 = vmatpush1.msra.mxu0 0.0
    %7634 = vmatprep.subr.mxu0 0.0
    %7635 = vmatpush1.msra.mxu0 0.0
    %7636 = vmatprep.subr.mxu0 0.0
    %7637 = vmatpush1.msra.mxu0 0.0
    %7638 = vmatprep.subr.mxu0 0.0
    %7639 = vmatpush1.msra.mxu0 0.0
    %7640 = vmatprep.subr.mxu0 0.0
    %7641 = vmatpush1.msra.mxu0 0.0
    %7642 = vmatprep.subr.mxu0 0.0
    %7643 = vmatpush1.msra.mxu0 0.0
    %7644 = vmatprep.subr.mxu0 0.0
    %7645 = vmatpush1.msra.mxu0 0.0
    %7646 = vmatprep.subr.mxu0 0.0
    %7647 = vmatpush1.msra.mxu0 0.0
    %7648 = vmatprep.subr.mxu0 0.0
    %7649 = vmatpush1.msra.mxu0 0.0
    %7650 = vmatprep.subr.mxu0 0.0
    %7651 = vmatpush1.msra.mxu0 0.0
    %7652 = vmatprep.subr.mxu0 0.0
    %7653 = vmatpush1.msra.mxu0 0.0
    %7654 = vmatprep.subr.mxu0 0.0
    %7655 = vmatpush1.msra.mxu0 0.0
    %7656 = vmatprep.subr.mxu0 0.0
    %7657 = vmatpush1.msra.mxu0 0.0
    %7658 = vmatprep.subr.mxu0 0.0
    %7659 = vmatpush1.msra.mxu0 0.0
    %7660 = vmatprep.subr.mxu0 0.0
    %7661 = vmatpush1.msra.mxu0 0.0
    %7662 = vmatprep.subr.mxu0 0.0
    %7663 = vmatpush1.msra.mxu0 0.0
    %7664 = vmatprep.subr.mxu0 0.0
    %7665 = vmatpush1.msra.mxu0 0.0
    %7666 = vmatprep.subr.mxu0 0.0
    %7667 = vmatpush1.msra.mxu0 0.0
    %7668 = vmatprep.subr.mxu0 0.0
    %7669 = vmatpush1.msra.mxu0 0.0
    %7670 = vmatprep.subr.mxu0 0.0
    %7671 = vmatpush1.msra.mxu0 0.0
    %7672 = vmatprep.subr.mxu0 0.0
    %7673 = vmatpush1.msra.mxu0 0.0
    %7674 = vmatprep.subr.mxu0 0.0
    %7675 = vmatpush1.msra.mxu0 0.0
    %7676 = vmatprep.subr.mxu0 0.0
    %7677 = vmatpush1.msra.mxu0 0.0
    %7678 = vmatprep.subr.mxu0 0.0
    %7679 = vmatpush1.msra.mxu0 0.0
    %7680 = vmatprep.subr.mxu0 0.0
    %7681 = vmatpush1.msra.mxu0 0.0
    %7682 = vmatprep.mubr.f32.mxu0 0.0
    %7683 = vmatmul.mubr.f32.gmra.mrb[0].mxu0 %v7616
    %v7684 = vpop.f32.mrb[0].mxu0
    %v7685 = vadd.f32 0.0, %v7684
    %v7686 = vpop.f32.mrb[0].mxu0
    %7687 = vdwg.mxu0
    %v7689 = vrot.slane %v7685, 2
    %v7691 = vadd.f32 %v6595, %v7689
    %v7692 = vxor.u32 %v7691, 2147483648
    %v7693 = vmul.f32 %v7692, 1.442695
    %v7694 = vpow.pop %v7693
    %v7695 = vadd.f32 %v7694, 1.0
    %v7696 = vrcp.pop %v7695
    %v7697 = vmul.f32 1.0, %v7696
    %v7698 = vtanh.pop %v7691
    %v7700 = vrot.slane %v7566, 6
    %v7702 = vmul.f32 %v7697, %v7700
    %7704 = vrot.lane.b32.xlu0 %v7698, 64
    %v7705 = vpop.permute.xlu0 %7704
    %v7707 = vmul.f32 %v7697, %v7705
    %7709 = vrot.lane.b32.xlu0 %v7707, 32
    %v7710 = vpop.permute.xlu0 %7709
    %v7712 = vadd.f32 %v7702, %v7710
    %v7713 = vtanh.pop %v7712
    %7715 = vrot.lane.b32.xlu0 %v7713, 64
    %v7716 = vpop.permute.xlu0 %7715
    %v7718 = vmul.f32 %v7697, %v7716
    %v7720 = vcombine.high %v7718, %v7718
    %v7722 = vunpack.c.l.s4 1966171168
    %v7723 = vunpack.c.0.s8 %v7722
    %v7724 = vlaneseq
    %v7725 = vshrl.u32 %v7724, 7
    %v7726 = vsub.s32 %v7723, %v7725
    %v7727 = vrot.slane %v7720, %v7726
    %v7728 = vcombine.high %v7727, %v7727
    %v7730 = vunpack.c.l.s4 1966171168
    %v7731 = vunpack.c.0.s8 %v7730
    %v7732 = vlaneseq
    %v7733 = vshrl.u32 %v7732, 7
    %v7734 = vsub.s32 %v7731, %v7733
    %v7735 = vrot.slane %v7727, %v7734
    %v7737 = vunpack.c.l.s4 1966171168
    %v7738 = vunpack.c.0.s8 %v7737
    %v7739 = vlaneseq
    %v7740 = vshrl.u32 %v7739, 7
    %v7741 = vsub.s32 %v7738, %v7740
    %v7742 = vrot.slane %v7728, %v7741
    %v7743 = vcombine.high %v7735, %v7735
    %v7744 = vcombine.high %v7742, %v7742
    %v7745 = vlaneseq
    %v7746 = vshrl.u32 %v7745, 7
    %v7747 = vsub.s32 0, %v7746
    %v7748 = vrot.slane %v7743, %v7747
    %v7749 = vlaneseq
    %v7750 = vshrl.u32 %v7749, 7
    %v7751 = vsub.s32 0, %v7750
    %v7752 = vrot.slane %v7744, %v7751
    %7753 = vrot.lane.b32.xlu0 %v7748, 32
    %v7754 = vpop.permute.xlu0 %7753
    %7755 = vrot.lane.b32.xlu0 %v7752, 32
    %v7756 = vpop.permute.xlu0 %7755
    %7759 = vst.msk [vmem:[#allocation3 + $0x7] sm:$0x1] %vm6736, %v7754
    %7760 = vst.msk [vmem:[#allocation3 + $0xf] sm:$0x1] %vm6736, %v7756
    // Predicated region
    $region34: #{feature_extractor_forward.1} parent=1 // pred_check
      _
    $region35: #{feature_extractor_forward.1} parent=1 // pred_check_branch
      %7762 = sbr.rel (0) target = $region37
    $region36: #{feature_extractor_forward.1} parent=1 // pred_region
      %s7764 = ssub.s32 256, 256
      %7765 = vsyncadd [#allocation4], %s7764
      %s7766 = sshll.u32 [#allocation3], 4
      %s7767 = int_to_ptr.vmem [resolvable:$true] %s7766
      %7772 = dma.vmem_to_hbm [thread:$0]  %s7767, 256, %s8, [#allocation4], 128, 128, 8
    $region37: #{feature_extractor_forward.1} parent=1 // pred_fallthru
      _
    // Predicated region
    $region38: #{feature_extractor_forward.1} parent=1 // pred_check
      _
    $region39: #{feature_extractor_forward.1} parent=1 // pred_check_branch
      %7774 = sbr.rel (0) target = $region41
    $region40: #{feature_extractor_forward.1} parent=1 // pred_region
      %7775 = dma.done [#allocation4], 256
    $region41: #{feature_extractor_forward.1} parent=1 // pred_fallthru
      _
    %7776 = vsyncpa [#allocation4], 1

</llo_original>
